<compile_context>
chip_gen: v7x
topology: tpu7x:2x2x1
jax: 0.10.0
libtpu: 0.0.40
codegen_flags: <defaults>
</compile_context>

<pallas_src>
import functools
import math

import jax
import jax.numpy as jnp
from jax.experimental import pallas as pl
from jax.experimental.pallas import tpu as pltpu

_BN_EPS = 1e-5
_LN_EPS = 1e-5
_VMEM_LIMIT = 40 * 1024 * 1024        # safe on v5e/v6e (128 MiB) and v7x (64 MiB) physical VMEM
_FULLK_BUF_LIMIT = 4 * 1024 * 1024    # single-buffer byte cap for a full-K operand block


def _round_up(x, m):
    return (x + m - 1) // m * m


def _pick_tile(dim, cap, align):
    """Full dim if it fits under cap, else the largest `align`-aligned divisor <= cap."""
    if dim <= cap:
        return dim
    t = (cap // align) * align
    while t >= align:
        if dim % t == 0:
            return t
        t -= align
    return None


# -----------------------------------------------------------------------------
# Generic tiled matmul kernel: o = act((a @ b) * scale + bias)
# -----------------------------------------------------------------------------
def _mm_kernel(a_ref, b_ref, s_ref, t_ref, o_ref, acc_ref, *, act):
    @pl.when(pl.program_id(2) == 0)
    def _():
        acc_ref[...] = jnp.zeros_like(acc_ref)

    acc_ref[...] += jnp.dot(a_ref[...], b_ref[...],
                            preferred_element_type=jnp.float32)

    @pl.when(pl.program_id(2) == pl.num_programs(2) - 1)
    def _():
        y = acc_ref[...] * s_ref[...] + t_ref[...]
        if act == "relu":
            y = jnp.maximum(y, 0.0)
        o_ref[...] = y.astype(o_ref.dtype)


@functools.partial(jax.jit, static_argnames=("act", "out_dtype"))
def _matmul_epi_impl(a, b, scale, bias, *, act, out_dtype):
    m, k = a.shape
    _, n = b.shape
    a = a.astype(jnp.bfloat16)
    b = b.astype(jnp.bfloat16)
    s = scale.astype(jnp.float32).reshape(1, n)
    t = bias.astype(jnp.float32).reshape(1, n)

    tm = _pick_tile(m, 1024, 8)
    tn = _pick_tile(n, 512, 128)
    mp, np_, kp = m, n, k
    if tm is None:                                   # pad fallback (not hit for these shapes)
        tm = 1024
        mp = _round_up(m, tm)
        a = jnp.pad(a, ((0, mp - m), (0, 0)))
    if tn is None:
        tn = 512
        np_ = _round_up(n, tn)
        b = jnp.pad(b, ((0, 0), (0, np_ - n)))
        s = jnp.pad(s, ((0, 0), (0, np_ - n)))
        t = jnp.pad(t, ((0, 0), (0, np_ - n)))

    # Full-K single block for small matmuls (removes per-step overhead); tile otherwise.
    if k <= 2048 or max(tm * k, k * tn) * 2 <= _FULLK_BUF_LIMIT:
        tk = k
    else:
        tk = _pick_tile(k, 1024, 128)
        if tk is None:
            tk = 1024
            kp = _round_up(k, tk)
            a = jnp.pad(a, ((0, 0), (0, kp - k)))
            b = jnp.pad(b, ((0, kp - k), (0, 0)))

    out = pl.pallas_call(
        functools.partial(_mm_kernel, act=act),
        out_shape=jax.ShapeDtypeStruct((mp, np_), out_dtype),
        grid_spec=pltpu.PrefetchScalarGridSpec(
            num_scalar_prefetch=0,
            grid=(mp // tm, np_ // tn, kp // tk),
            in_specs=[
                pl.BlockSpec((tm, tk), lambda i, j, kk: (i, kk)),
                pl.BlockSpec((tk, tn), lambda i, j, kk: (kk, j)),
                pl.BlockSpec((1, tn), lambda i, j, kk: (0, j)),
                pl.BlockSpec((1, tn), lambda i, j, kk: (0, j)),
            ],
            out_specs=pl.BlockSpec((tm, tn), lambda i, j, kk: (i, j)),
            scratch_shapes=[pltpu.VMEM((tm, tn), jnp.float32)],
        ),
        compiler_params=pltpu.CompilerParams(
            dimension_semantics=("parallel", "parallel", "arbitrary"),
            vmem_limit_bytes=_VMEM_LIMIT),
    )(a, b, s, t)
    if (mp, np_) != (m, n):
        out = out[:m, :n]
    return out


def matmul_epi(a, b, scale=None, bias=None, act="none", out_dtype=jnp.bfloat16):
    n = b.shape[1]
    if scale is None:
        scale = jnp.ones((n,), jnp.float32)
    if bias is None:
        bias = jnp.zeros((n,), jnp.float32)
    return _matmul_epi_impl(a, b, scale, bias, act=act, out_dtype=out_dtype)


# -----------------------------------------------------------------------------
# Fused 3x3x3 conv kernel (channels-last, in-kernel 27-tap accumulation, BN+ReLU epilogue)
# -----------------------------------------------------------------------------
def _conv3x3_kernel(xp_ref, w_ref, s_ref, t_ref, o_ref, *, D, H, W):
    # xp_ref : (B*(D+2), H+2, W+2, C) padded input, fully resident in VMEM
    # w_ref  : (27, C, Cout) ; s_ref/t_ref : (1, Cout) ; o_ref : (H*W, Cout) output plane
    i = pl.program_id(0)
    b = i // D
    d = i % D
    row0 = b * (D + 2) + d
    C = xp_ref.shape[-1]
    Cout = o_ref.shape[-1]
    acc = jnp.zeros((H * W, Cout), jnp.float32)
    for dz in range(3):
        plane = xp_ref[row0 + dz]                      # (H+2, W+2, C)
        for dy in range(3):
            for dx in range(3):
                tap = plane[dy:dy + H, dx:dx + W, :].reshape(H * W, C)
                wmat = w_ref[dz * 9 + dy * 3 + dx]     # (C, Cout)
                acc = acc + jnp.dot(tap, wmat, preferred_element_type=jnp.float32)
    y = acc * s_ref[...] + t_ref[...]
    y = jnp.maximum(y, 0.0)
    o_ref[...] = y.astype(o_ref.dtype)


def conv3x3_fused(x, w, scale, bias):
    """x: (B, D, H, W, C) bf16 channels-last; w: (Cout, Cin, 3, 3, 3)."""
    B, D, H, W, C = x.shape
    Cout = w.shape[0]
    Cp = -(-C // 8) * 8
    if Cp != C:                                        # pad tiny channel counts (first conv)
        x = jnp.pad(x, ((0, 0), (0, 0), (0, 0), (0, 0), (0, Cp - C)))
        w = jnp.pad(w, ((0, 0), (0, Cp - C), (0, 0), (0, 0), (0, 0)))
    xp = jnp.pad(x, ((0, 0), (1, 1), (1, 1), (1, 1), (0, 0)))
    xp = xp.reshape(B * (D + 2), H + 2, W + 2, Cp)
    wt = w.transpose(2, 3, 4, 1, 0).reshape(27, Cp, Cout).astype(jnp.bfloat16)
    s = scale.astype(jnp.float32).reshape(1, Cout)
    t = bias.astype(jnp.float32).reshape(1, Cout)
    M = B * D * H * W

    out = pl.pallas_call(
        functools.partial(_conv3x3_kernel, D=D, H=H, W=W),
        out_shape=jax.ShapeDtypeStruct((M, Cout), jnp.bfloat16),
        grid_spec=pltpu.PrefetchScalarGridSpec(
            num_scalar_prefetch=0,
            grid=(B * D,),
            in_specs=[
                pl.BlockSpec(xp.shape, lambda i: (0, 0, 0, 0)),   # whole padded input resident
                pl.BlockSpec(wt.shape, lambda i: (0, 0, 0)),      # whole weight resident
                pl.BlockSpec((1, Cout), lambda i: (0, 0)),
                pl.BlockSpec((1, Cout), lambda i: (0, 0)),
            ],
            out_specs=pl.BlockSpec((H * W, Cout), lambda i: (i, 0)),
        ),
        compiler_params=pltpu.CompilerParams(
            dimension_semantics=("parallel",),
            vmem_limit_bytes=_VMEM_LIMIT),
    )(xp, wt, s, t)
    return out.reshape(B, D, H, W, Cout)


# -----------------------------------------------------------------------------
# Fused transformer block kernel (pre-norm: LN1->MHSA->+x, LN2->MLP(GELU)->+y)
# -----------------------------------------------------------------------------
def _tblock_kernel(x_ref, ln1g_ref, ln1b_ref, wq_ref, wk_ref, wv_ref, wo_ref,
                   ln2g_ref, ln2b_ref, w1_ref, b1_ref, w2_ref, b2_ref, o_ref,
                   *, heads, dh, T, eps):
    x = x_ref[0].astype(jnp.float32)                   # (T, D)

    # LayerNorm 1
    mu = jnp.mean(x, axis=-1, keepdims=True)
    xc = x - mu
    var = jnp.mean(xc * xc, axis=-1, keepdims=True)
    xn = xc * jax.lax.rsqrt(var + eps) * ln1g_ref[...] + ln1b_ref[...]
    xb = xn.astype(jnp.bfloat16)

    # Multi-head self-attention (tiny T -> scores / softmax on the VPU)
    scale = float(dh) ** -0.5
    att = jnp.zeros_like(x)
    for h in range(heads):
        qh = jnp.dot(xb, wq_ref[h], preferred_element_type=jnp.float32) * scale   # (T, dh)
        kh = jnp.dot(xb, wk_ref[h], preferred_element_type=jnp.float32)
        vh = jnp.dot(xb, wv_ref[h], preferred_element_type=jnp.float32)
        logits = [jnp.sum(qh * kh[j:j + 1, :], axis=-1, keepdims=True) for j in range(T)]
        m = logits[0]
        for j in range(1, T):
            m = jnp.maximum(m, logits[j])
        exps = [jnp.exp(l - m) for l in logits]
        denom = exps[0]
        for j in range(1, T):
            denom = denom + exps[j]
        inv = 1.0 / denom
        oh = jnp.zeros_like(vh)
        for j in range(T):
            oh = oh + (exps[j] * inv) * vh[j:j + 1, :]
        att = att + jnp.dot(oh.astype(jnp.bfloat16), wo_ref[h],
                            preferred_element_type=jnp.float32)
    y = att + x

    # LayerNorm 2 + MLP
    mu2 = jnp.mean(y, axis=-1, keepdims=True)
    yc = y - mu2
    var2 = jnp.mean(yc * yc, axis=-1, keepdims=True)
    yn = yc * jax.lax.rsqrt(var2 + eps) * ln2g_ref[...] + ln2b_ref[...]
    hid = jnp.dot(yn.astype(jnp.bfloat16), w1_ref[...],
                  preferred_element_type=jnp.float32) + b1_ref[...]
    c = 0.7978845608028654                              # sqrt(2/pi), tanh-approx GELU
    hid = 0.5 * hid * (1.0 + jnp.tanh(c * (hid + 0.044715 * hid * hid * hid)))
    out = jnp.dot(hid.astype(jnp.bfloat16), w2_ref[...],
                  preferred_element_type=jnp.float32) + b2_ref[...] + y
    o_ref[0] = out.astype(o_ref.dtype)


def transformer_block_apply(x, p, heads):
    B, T, Dm = x.shape
    dh = Dm // heads

    def cspec(a):
        nd = a.ndim
        return pl.BlockSpec(a.shape, lambda i, _nd=nd: (0,) * _nd)

    args = (x, p["ln1_g"], p["ln1_b"], p["wq"], p["wk"], p["wv"], p["wo"],
            p["ln2_g"], p["ln2_b"], p["w1"], p["b1"], p["w2"], p["b2"])
    in_specs = [pl.BlockSpec((1, T, Dm), lambda i: (i, 0, 0))] + [cspec(a) for a in args[1:]]

    return pl.pallas_call(
        functools.partial(_tblock_kernel, heads=heads, dh=dh, T=T, eps=_LN_EPS),
        out_shape=jax.ShapeDtypeStruct((B, T, Dm), jnp.float32),
        grid_spec=pltpu.PrefetchScalarGridSpec(
            num_scalar_prefetch=0,
            grid=(B,),
            in_specs=in_specs,
            out_specs=pl.BlockSpec((1, T, Dm), lambda i: (i, 0, 0)),
        ),
        compiler_params=pltpu.CompilerParams(
            dimension_semantics=("parallel",),
            vmem_limit_bytes=_VMEM_LIMIT),
    )(*args)


# -----------------------------------------------------------------------------
# UNETR building blocks (channels-last glue in JAX; hot paths in Pallas)
# -----------------------------------------------------------------------------
def conv_bn_relu(x, cp):
    """Conv3d(k, stride=1, pad=(k-1)//2) + BatchNorm3d(eval) + ReLU; x: (B,D,H,W,C) bf16."""
    w = cp["w"]
    Cout, Cin, k = w.shape[0], w.shape[1], w.shape[2]
    B, D, H, W, C = x.shape
    scale = cp["gamma"] / jnp.sqrt(1.0 + _BN_EPS)       # running_mean=0, running_var=1
    bias = cp["b"] * scale + cp["beta"]

    if k == 1:
        rows = x.reshape(B * D * H * W, C)
        wm = w.reshape(Cout, Cin).T.astype(jnp.bfloat16)
        y = matmul_epi(rows, wm, scale=scale, bias=bias, act="relu")
        return y.reshape(B, D, H, W, Cout)

    xp_bytes = B * (D + 2) * (H + 2) * (W + 2) * max(8, C) * 2
    if H * W >= 64 and W % 8 == 0 and xp_bytes <= 8 * 1024 * 1024 \
            and 27 * max(8, C) * Cout * 2 <= 2 * 1024 * 1024:
        return conv3x3_fused(x, w, scale, bias)

    # Small-spatial fallback: im2col (columns stay small here) + tiled matmul.
    xp = jnp.pad(x, ((0, 0), (1, 1), (1, 1), (1, 1), (0, 0)))
    taps = [xp[:, a:a + D, b:b + H, c:c + W, :]
            for a in range(3) for b in range(3) for c in range(3)]
    cols = jnp.concatenate(taps, axis=-1).reshape(B * D * H * W, 27 * C)
    wm = w.transpose(2, 3, 4, 1, 0).reshape(27 * Cin, Cout).astype(jnp.bfloat16)
    y = matmul_epi(cols, wm, scale=scale, bias=bias, act="relu")
    return y.reshape(B, D, H, W, Cout)


def conv_block_apply(x, p):
    x = conv_bn_relu(x, p["c1"])
    if "c2" in p:
        x = conv_bn_relu(x, p["c2"])
    return x


def transp_apply(x, tp):
    """ConvTranspose3d(kernel=2, stride=2), channels-last: (B,D,H,W,Cin)->(B,2D,2H,2W,Cout)."""
    B, D, H, W, C = x.shape
    Cout = tp["w"].shape[1]
    rows = x.reshape(B * D * H * W, C)
    wm = tp["w"].transpose(0, 2, 3, 4, 1).reshape(C, 8 * Cout).astype(jnp.bfloat16)
    bias = jnp.tile(tp["b"], 8)
    y = matmul_epi(rows, wm, bias=bias, act="none")
    y = y.reshape(B, D, H, W, 2, 2, 2, Cout).transpose(0, 1, 4, 2, 5, 3, 6, 7)
    return y.reshape(B, 2 * D, 2 * H, 2 * W, Cout)


def blue_apply(x, p):
    return conv_block_apply(transp_apply(x, p["up"]), p["conv"])


def embed_apply(x, p, ps):
    """Embeddings3D: strided patch conv (bias=False) as matmul + position embeddings."""
    B, D, H, W, C = x.shape
    pd, ph, pw = D // ps, H // ps, W // ps
    Dm = p["w"].shape[0]
    patches = x.reshape(B, pd, ps, ph, ps, pw, ps, C).transpose(0, 1, 3, 5, 2, 4, 6, 7)
    rows = patches.reshape(B * pd * ph * pw, ps ** 3 * C)
    wm = p["w"].transpose(2, 3, 4, 1, 0).reshape(ps ** 3 * C, Dm).astype(jnp.bfloat16)
    emb = matmul_epi(rows, wm, out_dtype=jnp.float32).reshape(B, pd * ph * pw, Dm)
    return emb + p["pos"]


def unetr_forward(params, x, cfg):
    ps = cfg["patch_size"]
    heads = cfg["num_heads"]
    x = jnp.transpose(x, (0, 2, 3, 4, 1)).astype(jnp.bfloat16)        # NCDHW -> NDHWC
    B, D, H, W, C = x.shape
    pd = (D // ps, H // ps, W // ps)

    # encoder
    emb = embed_apply(x, params["embed"], ps)                          # (B, T, Dm) f32
    zs, h = [], emb
    for depth, lp in enumerate(params["layers"]):
        h = transformer_block_apply(h, lp, heads)
        if depth + 1 in cfg["ext_layers"]:
            zs.append(h)
    assert len(zs) == 4

    def to_vol(t):                                                     # 'b (x y z) d' -> NDHWC
        Bt, T, Dm = t.shape
        return t.reshape(Bt, pd[0], pd[1], pd[2], Dm).astype(jnp.bfloat16)

    z3, z6, z9, z12 = [to_vol(t) for t in zs]

    # decoder (channels-last throughout)
    z0 = conv_block_apply(x, params["init_conv"])
    for bp in params["z3_blue"]:
        z3 = blue_apply(z3, bp)
    for bp in params["z6_blue"]:
        z6 = blue_apply(z6, bp)
    z9 = blue_apply(z9, params["z9_blue"])
    z12 = transp_apply(z12, params["z12_deconv"])

    y = jnp.concatenate([z12, z9], axis=-1)
    y = conv_block_apply(y, params["z9_conv"])
    y = transp_apply(y, params["z9_deconv"])
    y = jnp.concatenate([y, z6], axis=-1)
    y = conv_block_apply(y, params["z6_conv"])
    y = transp_apply(y, params["z6_deconv"])
    y = jnp.concatenate([y, z3], axis=-1)
    y = conv_block_apply(y, params["z3_conv"])
    y = transp_apply(y, params["z3_deconv"])
    y = jnp.concatenate([y, z0], axis=-1)
    y = conv_block_apply(y, params["out1"])
    y = conv_block_apply(y, params["out2"])
    return jnp.transpose(y, (0, 4, 1, 2, 3)).astype(jnp.float32)       # NDHWC -> NCDHW


# -----------------------------------------------------------------------------
# Deterministic parameter initialization (synthetic, fan-in scaled)
# -----------------------------------------------------------------------------
class KeyGen:
    def __init__(self, key):
        self.key = key

    def __call__(self):
        self.key, sub = jax.random.split(self.key)
        return sub


def _init_conv3d(kg, cin, cout, k):
    fan = cin * k ** 3
    return {"w": (jax.random.normal(kg(), (cout, cin, k, k, k), jnp.float32)
                  / math.sqrt(fan)).astype(jnp.bfloat16),
            "b": jax.random.normal(kg(), (cout,), jnp.float32) * 0.01,
            "gamma": jnp.ones((cout,), jnp.float32),
            "beta": jnp.zeros((cout,), jnp.float32)}


def _init_conv_block(kg, cin, cout, k=3, double=True):
    p = {"c1": _init_conv3d(kg, cin, cout, k)}
    if double:
        p["c2"] = _init_conv3d(kg, cout, cout, k)
    return p


def _init_transp(kg, cin, cout):
    return {"w": (jax.random.normal(kg(), (cin, cout, 2, 2, 2), jnp.float32)
                  / math.sqrt(cin * 8)).astype(jnp.bfloat16),
            "b": jax.random.normal(kg(), (cout,), jnp.float32) * 0.01}


def _init_blue(kg, cin, cout):
    return {"up": _init_transp(kg, cin, cout),
            "conv": _init_conv_block(kg, cout, cout, 3, double=False)}


def _init_tlayer(kg, dim, heads, mlp=1024):
    dh = dim // heads
    s = 1.0 / math.sqrt(dim)
    return {"ln1_g": jnp.ones((1, dim), jnp.float32), "ln1_b": jnp.zeros((1, dim), jnp.float32),
            "wq": (jax.random.normal(kg(), (heads, dim, dh), jnp.float32) * s).astype(jnp.bfloat16),
            "wk": (jax.random.normal(kg(), (heads, dim, dh), jnp.float32) * s).astype(jnp.bfloat16),
            "wv": (jax.random.normal(kg(), (heads, dim, dh), jnp.float32) * s).astype(jnp.bfloat16),
            "wo": (jax.random.normal(kg(), (heads, dh, dim), jnp.float32) * s).astype(jnp.bfloat16),
            "ln2_g": jnp.ones((1, dim), jnp.float32), "ln2_b": jnp.zeros((1, dim), jnp.float32),
            "w1": (jax.random.normal(kg(), (dim, mlp), jnp.float32) * s).astype(jnp.bfloat16),
            "b1": jax.random.normal(kg(), (1, mlp), jnp.float32) * 0.01,
            "w2": (jax.random.normal(kg(), (mlp, dim), jnp.float32)
                   / math.sqrt(mlp)).astype(jnp.bfloat16),
            "b2": jax.random.normal(kg(), (1, dim), jnp.float32) * 0.01}


def init_unetr(kg, cfg):
    Dm = cfg["embed_dim"]
    cin, cout = cfg["input_dim"], cfg["output_dim"]
    ps = cfg["patch_size"]
    pd = tuple(s // ps for s in cfg["img_shape"])
    n_patches = pd[0] * pd[1] * pd[2]
    yellow = [256, 128, 64] if cfg["version"] == "light" else [512, 256, 128]
    p = {}
    p["embed"] = {"w": (jax.random.normal(kg(), (Dm, cin, ps, ps, ps), jnp.float32)
                        / math.sqrt(cin * ps ** 3)).astype(jnp.bfloat16),
                  "pos": jnp.zeros((1, n_patches, Dm), jnp.float32)}   # torch.zeros init
    p["layers"] = [_init_tlayer(kg, Dm, cfg["num_heads"]) for _ in range(cfg["num_layers"])]
    p["init_conv"] = _init_conv_block(kg, cin, 64, 3, True)
    p["z3_blue"] = [_init_blue(kg, Dm, 512), _init_blue(kg, 512, 256), _init_blue(kg, 256, 128)]
    p["z6_blue"] = [_init_blue(kg, Dm, 512), _init_blue(kg, 512, 256)]
    p["z9_blue"] = _init_blue(kg, Dm, 512)
    p["z12_deconv"] = _init_transp(kg, Dm, 512)
    p["z9_deconv"] = _init_transp(kg, yellow[0], 256)
    p["z6_deconv"] = _init_transp(kg, yellow[1], 128)
    p["z3_deconv"] = _init_transp(kg, yellow[2], 64)
    p["z9_conv"] = _init_conv_block(kg, 1024, yellow[0], 3, True)
    p["z6_conv"] = _init_conv_block(kg, 512, yellow[1], 3, True)
    p["z3_conv"] = _init_conv_block(kg, 256, yellow[2], 3, True)
    p["out1"] = _init_conv_block(kg, 128, 32, 3, True)
    p["out2"] = _init_conv_block(kg, 32, cout, 1, False)
    return p


# -----------------------------------------------------------------------------
# main
# -----------------------------------------------------------------------------
if __name__ == "__main__":
    # Small configuration.  patch_size must stay 16 (the decoder's 5 upsampling stages
    # hard-wire a 16x total factor); seq length = prod(img_shape)/16^3 = 2.
    cfg = dict(img_shape=(32, 16, 16), input_dim=4, output_dim=3, embed_dim=64,
               patch_size=16, num_heads=4, num_layers=4, ext_layers=[1, 2, 3, 4],
               version="light")

    root = jax.random.PRNGKey(0)
    pkey, xkey = jax.random.split(root)
    params = init_unetr(KeyGen(pkey), cfg)
    x = jax.random.normal(xkey, (2, cfg["input_dim"]) + cfg["img_shape"], jnp.float32)

    fwd = jax.jit(functools.partial(unetr_forward, cfg=cfg))
    out = jax.block_until_ready(fwd(params, x))

    assert out.shape == (2, cfg["output_dim"]) + cfg["img_shape"], out.shape
    assert out.dtype == jnp.float32
    assert bool(jnp.all(jnp.isfinite(out)))
    print("KERNEL_OK")
</pallas_src>

<mosaic_0001>
module attributes {stable_mosaic.version = 11 : i64} {
  func.func @_mm_kernel(%arg0: i32, %arg1: i32, %arg2: i32, %arg3: memref<4x16384xbf16, #tpu.memory_space<vmem>>, %arg4: memref<16384x64xbf16, #tpu.memory_space<vmem>>, %arg5: memref<1x64xf32, #tpu.memory_space<vmem>>, %arg6: memref<1x64xf32, #tpu.memory_space<vmem>>, %arg7: memref<4x64xf32, #tpu.memory_space<vmem>>, %arg8: memref<4x64xf32, #tpu.memory_space<vmem>>) attributes {dimension_semantics = [#tpu.dimension_semantics<parallel>, #tpu.dimension_semantics<parallel>, #tpu.dimension_semantics<arbitrary>], iteration_bounds = array<i64: 1, 1, 1>, scalar_prefetch = 0 : i64, scratch_operands = 1 : i64, tpu.core_type = #tpu.core_type<tc>, window_params = [{transform_indices = @transform_0, window_bounds = array<i64: 4, 16384>}, {transform_indices = @transform_1, window_bounds = array<i64: 16384, 64>}, {transform_indices = @transform_2, window_bounds = array<i64: 1, 64>}, {transform_indices = @transform_3, window_bounds = array<i64: 1, 64>}, {transform_indices = @transform_4, window_bounds = array<i64: 4, 64>}]} {
    %c0_i32 = arith.constant 0 : i32
    %0 = arith.cmpi eq, %arg2, %c0_i32 : i32
    %1 = arith.extui %0 : i1 to i32
    %c0_i32_0 = arith.constant 0 : i32
    %2 = arith.cmpi ne, %1, %c0_i32_0 : i32
    scf.if %2 {
      %cst_10 = arith.constant 0.000000e+00 : f32
      %12 = vector.broadcast %cst_10 : f32 to vector<4x64xf32>
      %c0_11 = arith.constant 0 : index
      %c0_12 = arith.constant 0 : index
      %13 = vector.load %arg8[%c0_11, %c0_12] : memref<4x64xf32, #tpu.memory_space<vmem>>, vector<4x64xf32>
      tpu.vector_store %arg8[%c0_11, %c0_12], %12 {strides = array<i32>} : memref<4x64xf32, #tpu.memory_space<vmem>>, vector<4x64xf32>,
    } else {
    }
    %c0 = arith.constant 0 : index
    %c0_1 = arith.constant 0 : index
    %3 = vector.load %arg8[%c0, %c0_1] : memref<4x64xf32, #tpu.memory_space<vmem>>, vector<4x64xf32>
    %c0_2 = arith.constant 0 : index
    %c0_3 = arith.constant 0 : index
    %4 = vector.load %arg3[%c0_2, %c0_3] : memref<4x16384xbf16, #tpu.memory_space<vmem>>, vector<4x16384xbf16>
    %c0_4 = arith.constant 0 : index
    %c0_5 = arith.constant 0 : index
    %5 = vector.load %arg4[%c0_4, %c0_5] : memref<16384x64xbf16, #tpu.memory_space<vmem>>, vector<16384x64xbf16>
    %cst = arith.constant dense<0.000000e+00> : vector<4x64xf32>
    %6 = tpu.matmul %4, %5, %cst {dimension_numbers = #tpu.dot_dimension_numbers<[1], [0], [0], [1], [0, 0, 1, 1], [], []>} : vector<4x16384xbf16>, vector<16384x64xbf16>, vector<4x64xf32> -> vector<4x64xf32>
    %7 = arith.addf %3, %6 : vector<4x64xf32>
    %c0_6 = arith.constant 0 : index
    %c0_7 = arith.constant 0 : index
    %8 = vector.load %arg8[%c0_6, %c0_7] : memref<4x64xf32, #tpu.memory_space<vmem>>, vector<4x64xf32>
    tpu.vector_store %arg8[%c0_6, %c0_7], %7 {strides = array<i32>} : memref<4x64xf32, #tpu.memory_space<vmem>>, vector<4x64xf32>,
    %c0_i32_8 = arith.constant 0 : i32
    %9 = arith.cmpi eq, %arg2, %c0_i32_8 : i32
    %10 = arith.extui %9 : i1 to i32
    %c0_i32_9 = arith.constant 0 : i32
    %11 = arith.cmpi ne, %10, %c0_i32_9 : i32
    scf.if %11 {
      %c0_10 = arith.constant 0 : index
      %c0_11 = arith.constant 0 : index
      %12 = vector.load %arg8[%c0_10, %c0_11] : memref<4x64xf32, #tpu.memory_space<vmem>>, vector<4x64xf32>
      %c0_12 = arith.constant 0 : index
      %c0_13 = arith.constant 0 : index
      %13 = vector.load %arg5[%c0_12, %c0_13] : memref<1x64xf32, #tpu.memory_space<vmem>>, vector<1x64xf32>
      %14 = vector.broadcast %13 : vector<1x64xf32> to vector<4x64xf32>
      %15 = arith.mulf %12, %14 : vector<4x64xf32>
      %c0_14 = arith.constant 0 : index
      %c0_15 = arith.constant 0 : index
      %16 = vector.load %arg6[%c0_14, %c0_15] : memref<1x64xf32, #tpu.memory_space<vmem>>, vector<1x64xf32>
      %17 = vector.broadcast %16 : vector<1x64xf32> to vector<4x64xf32>
      %18 = arith.addf %15, %17 : vector<4x64xf32>
      %c0_16 = arith.constant 0 : index
      %c0_17 = arith.constant 0 : index
      %19 = vector.load %arg7[%c0_16, %c0_17] : memref<4x64xf32, #tpu.memory_space<vmem>>, vector<4x64xf32>
      tpu.vector_store %arg7[%c0_16, %c0_17], %18 {strides = array<i32>} : memref<4x64xf32, #tpu.memory_space<vmem>>, vector<4x64xf32>,
    } else {
    }
    return
  }
  func.func @transform_0(%arg0: i32, %arg1: i32, %arg2: i32) -> (i32, i32) {
    %c0_i32 = arith.constant 0 : i32
    return %arg0, %arg2 : i32, i32
  }
  func.func @transform_1(%arg0: i32, %arg1: i32, %arg2: i32) -> (i32, i32) {
    %c0_i32 = arith.constant 0 : i32
    return %arg2, %arg1 : i32, i32
  }
  func.func @transform_2(%arg0: i32, %arg1: i32, %arg2: i32) -> (i32, i32) {
    %c0_i32 = arith.constant 0 : i32
    %c0_i32_0 = arith.constant 0 : i32
    return %c0_i32, %arg1 : i32, i32
  }
  func.func @transform_3(%arg0: i32, %arg1: i32, %arg2: i32) -> (i32, i32) {
    %c0_i32 = arith.constant 0 : i32
    %c0_i32_0 = arith.constant 0 : i32
    return %c0_i32, %arg1 : i32, i32
  }
  func.func @transform_4(%arg0: i32, %arg1: i32, %arg2: i32) -> (i32, i32) {
    %c0_i32 = arith.constant 0 : i32
    return %arg0, %arg1 : i32, i32
  }
}

</mosaic_0001>

<llo_original>
// kernel: _matmul_epi_impl.1
$region0: #{_matmul_epi_impl.1}
  #allocation0 [shape = 'u32[]', space=smem, size = 0x4, offset = 0x4, fixed_abs, tag = 'smem constant byte address 0x4 - core index']
  #allocation1 [shape = 'u32[144,128]{1,0:T(1,128)}', space=vmem, size = 0x12000, scoped, tag = 'internal scratch']
  #allocation2 [shape = 'f32[4,64]{1,0:T(4,128)}', space=vmem, size = 0x800, scoped, tag = 'scratch operand']
  %s0 = inlined_call_operand.vmem [shape: bf16[4,16384], index: 0, kind: input, shape index: {}]
  %s1 = inlined_call_operand.vmem [shape: bf16[16384,64], index: 1, kind: input, shape index: {}]
  %s2 = inlined_call_operand.vmem [shape: f32[1,64], index: 2, kind: input, shape index: {}]
  %s3 = inlined_call_operand.vmem [shape: f32[1,64], index: 3, kind: input, shape index: {}]
  %s4 = inlined_call_operand.hbm [shape: f32[4,64], index: 4, kind: output, shape index: {}]
  %s5 = sld [smem:[#allocation0]]
  $region34: #{_matmul_epi_impl.1} parent=0
    _
  %s7 = ssub.s32 1, %s5
  %s8 = scalar_select 0, %s7, %s5
  $region1: #{_matmul_epi_impl.1} parent=0
    #allocation3 [shape = 'u8[2048]{0}', space=vmem, size = 0x800, scoped, tag = 'output window, operand 0, single buffered']
    #allocation4 [shape = 's32[1]{0}', space=sflag, size = 0x4, scoped, tag = 'scoped memory for _matmul_epi_impl.1']
    %9 = vsyncpa [#allocation4], 0
    // Predicated region
    $region2: #{_matmul_epi_impl.1} parent=1 // pred_check
      _
    $region3: #{_matmul_epi_impl.1} parent=1 // pred_check_branch
      %11 = sbr.rel (0) target = $region5
    $region4: #{_matmul_epi_impl.1} parent=1 // pred_region
      _
    $region5: #{_matmul_epi_impl.1} parent=1 // pred_fallthru
      _
    // Predicated region
    $region6: #{_matmul_epi_impl.1} parent=1 // pred_check
      _
    $region7: #{_matmul_epi_impl.1} parent=1 // pred_check_branch
      %13 = sbr.rel (0) target = $region9
    $region8: #{_matmul_epi_impl.1} parent=1 // pred_region
      _
    $region9: #{_matmul_epi_impl.1} parent=1 // pred_fallthru
      _
    // Predicated region
    $region10: #{_matmul_epi_impl.1} parent=1 // pred_check
      _
    $region11: #{_matmul_epi_impl.1} parent=1 // pred_check_branch
      %15 = sbr.rel (0) target = $region13
    $region12: #{_matmul_epi_impl.1} parent=1 // pred_region
      _
    $region13: #{_matmul_epi_impl.1} parent=1 // pred_fallthru
      _
    // Predicated region
    $region14: #{_matmul_epi_impl.1} parent=1 // pred_check
      _
    $region15: #{_matmul_epi_impl.1} parent=1 // pred_check_branch
      %17 = sbr.rel (0) target = $region17
    $region16: #{_matmul_epi_impl.1} parent=1 // pred_region
      _
    $region17: #{_matmul_epi_impl.1} parent=1 // pred_fallthru
      _
    %p19 = scmp.eq.s32.totalorder 0, 0
    // Predicated region
    $region18: #{_matmul_epi_impl.1} parent=1 // pred_check
      %p20 = pneg %p19
    $region19: #{_matmul_epi_impl.1} parent=1 // pred_check_branch
      %22 = sbr.rel (%p20) target = $region21
    $region20: #{_matmul_epi_impl.1} parent=1 // pred_region
      %vm23 = vcmask 519168
      %24 = vst.msk [vmem:[#allocation2] sm:$0xf] %vm23, 0.0
    $region21: #{_matmul_epi_impl.1} parent=1 // pred_fallthru
      _
    %v25 = vld [vmem:[#allocation2] sm:$0xf]
    %v26 = vld [vmem:[%s0] sm:$0xff]
    %v27 = vld [vmem:[%s0 + $0x8] sm:$0xff]
    %v28 = vld [vmem:[%s0 + $0x10] sm:$0xff]
    %v29 = vld [vmem:[%s0 + $0x18] sm:$0xff]
    %v30 = vld [vmem:[%s0 + $0x20] sm:$0xff]
    %v31 = vld [vmem:[%s0 + $0x28] sm:$0xff]
    %v32 = vld [vmem:[%s0 + $0x30] sm:$0xff]
    %v33 = vld [vmem:[%s0 + $0x38] sm:$0xff]
    %v34 = vld [vmem:[%s0 + $0x40] sm:$0xff]
    %v35 = vld [vmem:[%s0 + $0x48] sm:$0xff]
    %v36 = vld [vmem:[%s0 + $0x50] sm:$0xff]
    %v37 = vld [vmem:[%s0 + $0x58] sm:$0xff]
    %v38 = vld [vmem:[%s0 + $0x60] sm:$0xff]
    %v39 = vld [vmem:[%s0 + $0x68] sm:$0xff]
    %v40 = vld [vmem:[%s0 + $0x70] sm:$0xff]
    %v41 = vld [vmem:[%s0 + $0x78] sm:$0xff]
    %v42 = vld [vmem:[%s0 + $0x80] sm:$0xff]
    %v43 = vld [vmem:[%s0 + $0x88] sm:$0xff]
    %v44 = vld [vmem:[%s0 + $0x90] sm:$0xff]
    %v45 = vld [vmem:[%s0 + $0x98] sm:$0xff]
    %v46 = vld [vmem:[%s0 + $0xa0] sm:$0xff]
    %v47 = vld [vmem:[%s0 + $0xa8] sm:$0xff]
    %v48 = vld [vmem:[%s0 + $0xb0] sm:$0xff]
    %v49 = vld [vmem:[%s0 + $0xb8] sm:$0xff]
    %v50 = vld [vmem:[%s0 + $0xc0] sm:$0xff]
    %v51 = vld [vmem:[%s0 + $0xc8] sm:$0xff]
    %v52 = vld [vmem:[%s0 + $0xd0] sm:$0xff]
    %v53 = vld [vmem:[%s0 + $0xd8] sm:$0xff]
    %v54 = vld [vmem:[%s0 + $0xe0] sm:$0xff]
    %v55 = vld [vmem:[%s0 + $0xe8] sm:$0xff]
    %v56 = vld [vmem:[%s0 + $0xf0] sm:$0xff]
    %v57 = vld [vmem:[%s0 + $0xf8] sm:$0xff]
    %v58 = vld [vmem:[%s1] sm:$0xf]
    %v59 = vld [vmem:[%s1 + $0x4] sm:$0xf]
    %v60 = vld [vmem:[%s1 + $0x8] sm:$0xf]
    %v61 = vld [vmem:[%s1 + $0xc] sm:$0xf]
    %v62 = vld [vmem:[%s1 + $0x10] sm:$0xf]
    %v63 = vld [vmem:[%s1 + $0x14] sm:$0xf]
    %v64 = vld [vmem:[%s1 + $0x18] sm:$0xf]
    %v65 = vld [vmem:[%s1 + $0x1c] sm:$0xf]
    %v66 = vld [vmem:[%s1 + $0x20] sm:$0xf]
    %v67 = vld [vmem:[%s1 + $0x24] sm:$0xf]
    %v68 = vld [vmem:[%s1 + $0x28] sm:$0xf]
    %v69 = vld [vmem:[%s1 + $0x2c] sm:$0xf]
    %v70 = vld [vmem:[%s1 + $0x30] sm:$0xf]
    %v71 = vld [vmem:[%s1 + $0x34] sm:$0xf]
    %v72 = vld [vmem:[%s1 + $0x38] sm:$0xf]
    %v73 = vld [vmem:[%s1 + $0x3c] sm:$0xf]
    %v74 = vld [vmem:[%s1 + $0x40] sm:$0xf]
    %v75 = vld [vmem:[%s1 + $0x44] sm:$0xf]
    %v76 = vld [vmem:[%s1 + $0x48] sm:$0xf]
    %v77 = vld [vmem:[%s1 + $0x4c] sm:$0xf]
    %v78 = vld [vmem:[%s1 + $0x50] sm:$0xf]
    %v79 = vld [vmem:[%s1 + $0x54] sm:$0xf]
    %v80 = vld [vmem:[%s1 + $0x58] sm:$0xf]
    %v81 = vld [vmem:[%s1 + $0x5c] sm:$0xf]
    %v82 = vld [vmem:[%s1 + $0x60] sm:$0xf]
    %v83 = vld [vmem:[%s1 + $0x64] sm:$0xf]
    %v84 = vld [vmem:[%s1 + $0x68] sm:$0xf]
    %v85 = vld [vmem:[%s1 + $0x6c] sm:$0xf]
    %v86 = vld [vmem:[%s1 + $0x70] sm:$0xf]
    %v87 = vld [vmem:[%s1 + $0x74] sm:$0xf]
    %v88 = vld [vmem:[%s1 + $0x78] sm:$0xf]
    %v89 = vld [vmem:[%s1 + $0x7c] sm:$0xf]
    %v90 = vld [vmem:[%s1 + $0x80] sm:$0xf]
    %v91 = vld [vmem:[%s1 + $0x84] sm:$0xf]
    %v92 = vld [vmem:[%s1 + $0x88] sm:$0xf]
    %v93 = vld [vmem:[%s1 + $0x8c] sm:$0xf]
    %v94 = vld [vmem:[%s1 + $0x90] sm:$0xf]
    %v95 = vld [vmem:[%s1 + $0x94] sm:$0xf]
    %v96 = vld [vmem:[%s1 + $0x98] sm:$0xf]
    %v97 = vld [vmem:[%s1 + $0x9c] sm:$0xf]
    %v98 = vld [vmem:[%s1 + $0xa0] sm:$0xf]
    %v99 = vld [vmem:[%s1 + $0xa4] sm:$0xf]
    %v100 = vld [vmem:[%s1 + $0xa8] sm:$0xf]
    %v101 = vld [vmem:[%s1 + $0xac] sm:$0xf]
    %v102 = vld [vmem:[%s1 + $0xb0] sm:$0xf]
    %v103 = vld [vmem:[%s1 + $0xb4] sm:$0xf]
    %v104 = vld [vmem:[%s1 + $0xb8] sm:$0xf]
    %v105 = vld [vmem:[%s1 + $0xbc] sm:$0xf]
    %v106 = vld [vmem:[%s1 + $0xc0] sm:$0xf]
    %v107 = vld [vmem:[%s1 + $0xc4] sm:$0xf]
    %v108 = vld [vmem:[%s1 + $0xc8] sm:$0xf]
    %v109 = vld [vmem:[%s1 + $0xcc] sm:$0xf]
    %v110 = vld [vmem:[%s1 + $0xd0] sm:$0xf]
    %v111 = vld [vmem:[%s1 + $0xd4] sm:$0xf]
    %v112 = vld [vmem:[%s1 + $0xd8] sm:$0xf]
    %v113 = vld [vmem:[%s1 + $0xdc] sm:$0xf]
    %v114 = vld [vmem:[%s1 + $0xe0] sm:$0xf]
    %v115 = vld [vmem:[%s1 + $0xe4] sm:$0xf]
    %v116 = vld [vmem:[%s1 + $0xe8] sm:$0xf]
    %v117 = vld [vmem:[%s1 + $0xec] sm:$0xf]
    %v118 = vld [vmem:[%s1 + $0xf0] sm:$0xf]
    %v119 = vld [vmem:[%s1 + $0xf4] sm:$0xf]
    %v120 = vld [vmem:[%s1 + $0xf8] sm:$0xf]
    %v121 = vld [vmem:[%s1 + $0xfc] sm:$0xf]
    %v122 = vld [vmem:[%s1 + $0x100] sm:$0xf]
    %v123 = vld [vmem:[%s1 + $0x104] sm:$0xf]
    %v124 = vld [vmem:[%s1 + $0x108] sm:$0xf]
    %v125 = vld [vmem:[%s1 + $0x10c] sm:$0xf]
    %v126 = vld [vmem:[%s1 + $0x110] sm:$0xf]
    %v127 = vld [vmem:[%s1 + $0x114] sm:$0xf]
    %v128 = vld [vmem:[%s1 + $0x118] sm:$0xf]
    %v129 = vld [vmem:[%s1 + $0x11c] sm:$0xf]
    %v130 = vld [vmem:[%s1 + $0x120] sm:$0xf]
    %v131 = vld [vmem:[%s1 + $0x124] sm:$0xf]
    %v132 = vld [vmem:[%s1 + $0x128] sm:$0xf]
    %v133 = vld [vmem:[%s1 + $0x12c] sm:$0xf]
    %v134 = vld [vmem:[%s1 + $0x130] sm:$0xf]
    %v135 = vld [vmem:[%s1 + $0x134] sm:$0xf]
    %v136 = vld [vmem:[%s1 + $0x138] sm:$0xf]
    %v137 = vld [vmem:[%s1 + $0x13c] sm:$0xf]
    %v138 = vld [vmem:[%s1 + $0x140] sm:$0xf]
    %v139 = vld [vmem:[%s1 + $0x144] sm:$0xf]
    %v140 = vld [vmem:[%s1 + $0x148] sm:$0xf]
    %v141 = vld [vmem:[%s1 + $0x14c] sm:$0xf]
    %v142 = vld [vmem:[%s1 + $0x150] sm:$0xf]
    %v143 = vld [vmem:[%s1 + $0x154] sm:$0xf]
    %v144 = vld [vmem:[%s1 + $0x158] sm:$0xf]
    %v145 = vld [vmem:[%s1 + $0x15c] sm:$0xf]
    %v146 = vld [vmem:[%s1 + $0x160] sm:$0xf]
    %v147 = vld [vmem:[%s1 + $0x164] sm:$0xf]
    %v148 = vld [vmem:[%s1 + $0x168] sm:$0xf]
    %v149 = vld [vmem:[%s1 + $0x16c] sm:$0xf]
    %v150 = vld [vmem:[%s1 + $0x170] sm:$0xf]
    %v151 = vld [vmem:[%s1 + $0x174] sm:$0xf]
    %v152 = vld [vmem:[%s1 + $0x178] sm:$0xf]
    %v153 = vld [vmem:[%s1 + $0x17c] sm:$0xf]
    %v154 = vld [vmem:[%s1 + $0x180] sm:$0xf]
    %v155 = vld [vmem:[%s1 + $0x184] sm:$0xf]
    %v156 = vld [vmem:[%s1 + $0x188] sm:$0xf]
    %v157 = vld [vmem:[%s1 + $0x18c] sm:$0xf]
    %v158 = vld [vmem:[%s1 + $0x190] sm:$0xf]
    %v159 = vld [vmem:[%s1 + $0x194] sm:$0xf]
    %v160 = vld [vmem:[%s1 + $0x198] sm:$0xf]
    %v161 = vld [vmem:[%s1 + $0x19c] sm:$0xf]
    %v162 = vld [vmem:[%s1 + $0x1a0] sm:$0xf]
    %v163 = vld [vmem:[%s1 + $0x1a4] sm:$0xf]
    %v164 = vld [vmem:[%s1 + $0x1a8] sm:$0xf]
    %v165 = vld [vmem:[%s1 + $0x1ac] sm:$0xf]
    %v166 = vld [vmem:[%s1 + $0x1b0] sm:$0xf]
    %v167 = vld [vmem:[%s1 + $0x1b4] sm:$0xf]
    %v168 = vld [vmem:[%s1 + $0x1b8] sm:$0xf]
    %v169 = vld [vmem:[%s1 + $0x1bc] sm:$0xf]
    %v170 = vld [vmem:[%s1 + $0x1c0] sm:$0xf]
    %v171 = vld [vmem:[%s1 + $0x1c4] sm:$0xf]
    %v172 = vld [vmem:[%s1 + $0x1c8] sm:$0xf]
    %v173 = vld [vmem:[%s1 + $0x1cc] sm:$0xf]
    %v174 = vld [vmem:[%s1 + $0x1d0] sm:$0xf]
    %v175 = vld [vmem:[%s1 + $0x1d4] sm:$0xf]
    %v176 = vld [vmem:[%s1 + $0x1d8] sm:$0xf]
    %v177 = vld [vmem:[%s1 + $0x1dc] sm:$0xf]
    %v178 = vld [vmem:[%s1 + $0x1e0] sm:$0xf]
    %v179 = vld [vmem:[%s1 + $0x1e4] sm:$0xf]
    %v180 = vld [vmem:[%s1 + $0x1e8] sm:$0xf]
    %v181 = vld [vmem:[%s1 + $0x1ec] sm:$0xf]
    %v182 = vld [vmem:[%s1 + $0x1f0] sm:$0xf]
    %v183 = vld [vmem:[%s1 + $0x1f4] sm:$0xf]
    %v184 = vld [vmem:[%s1 + $0x1f8] sm:$0xf]
    %v185 = vld [vmem:[%s1 + $0x1fc] sm:$0xf]
    %v186 = vld [vmem:[%s1 + $0x200] sm:$0xf]
    %v187 = vld [vmem:[%s1 + $0x204] sm:$0xf]
    %v188 = vld [vmem:[%s1 + $0x208] sm:$0xf]
    %v189 = vld [vmem:[%s1 + $0x20c] sm:$0xf]
    %v190 = vld [vmem:[%s1 + $0x210] sm:$0xf]
    %v191 = vld [vmem:[%s1 + $0x214] sm:$0xf]
    %v192 = vld [vmem:[%s1 + $0x218] sm:$0xf]
    %v193 = vld [vmem:[%s1 + $0x21c] sm:$0xf]
    %v194 = vld [vmem:[%s1 + $0x220] sm:$0xf]
    %v195 = vld [vmem:[%s1 + $0x224] sm:$0xf]
    %v196 = vld [vmem:[%s1 + $0x228] sm:$0xf]
    %v197 = vld [vmem:[%s1 + $0x22c] sm:$0xf]
    %v198 = vld [vmem:[%s1 + $0x230] sm:$0xf]
    %v199 = vld [vmem:[%s1 + $0x234] sm:$0xf]
    %v200 = vld [vmem:[%s1 + $0x238] sm:$0xf]
    %v201 = vld [vmem:[%s1 + $0x23c] sm:$0xf]
    %v202 = vld [vmem:[%s1 + $0x240] sm:$0xf]
    %v203 = vld [vmem:[%s1 + $0x244] sm:$0xf]
    %v204 = vld [vmem:[%s1 + $0x248] sm:$0xf]
    %v205 = vld [vmem:[%s1 + $0x24c] sm:$0xf]
    %v206 = vld [vmem:[%s1 + $0x250] sm:$0xf]
    %v207 = vld [vmem:[%s1 + $0x254] sm:$0xf]
    %v208 = vld [vmem:[%s1 + $0x258] sm:$0xf]
    %v209 = vld [vmem:[%s1 + $0x25c] sm:$0xf]
    %v210 = vld [vmem:[%s1 + $0x260] sm:$0xf]
    %v211 = vld [vmem:[%s1 + $0x264] sm:$0xf]
    %v212 = vld [vmem:[%s1 + $0x268] sm:$0xf]
    %v213 = vld [vmem:[%s1 + $0x26c] sm:$0xf]
    %v214 = vld [vmem:[%s1 + $0x270] sm:$0xf]
    %v215 = vld [vmem:[%s1 + $0x274] sm:$0xf]
    %v216 = vld [vmem:[%s1 + $0x278] sm:$0xf]
    %v217 = vld [vmem:[%s1 + $0x27c] sm:$0xf]
    %v218 = vld [vmem:[%s1 + $0x280] sm:$0xf]
    %v219 = vld [vmem:[%s1 + $0x284] sm:$0xf]
    %v220 = vld [vmem:[%s1 + $0x288] sm:$0xf]
    %v221 = vld [vmem:[%s1 + $0x28c] sm:$0xf]
    %v222 = vld [vmem:[%s1 + $0x290] sm:$0xf]
    %v223 = vld [vmem:[%s1 + $0x294] sm:$0xf]
    %v224 = vld [vmem:[%s1 + $0x298] sm:$0xf]
    %v225 = vld [vmem:[%s1 + $0x29c] sm:$0xf]
    %v226 = vld [vmem:[%s1 + $0x2a0] sm:$0xf]
    %v227 = vld [vmem:[%s1 + $0x2a4] sm:$0xf]
    %v228 = vld [vmem:[%s1 + $0x2a8] sm:$0xf]
    %v229 = vld [vmem:[%s1 + $0x2ac] sm:$0xf]
    %v230 = vld [vmem:[%s1 + $0x2b0] sm:$0xf]
    %v231 = vld [vmem:[%s1 + $0x2b4] sm:$0xf]
    %v232 = vld [vmem:[%s1 + $0x2b8] sm:$0xf]
    %v233 = vld [vmem:[%s1 + $0x2bc] sm:$0xf]
    %v234 = vld [vmem:[%s1 + $0x2c0] sm:$0xf]
    %v235 = vld [vmem:[%s1 + $0x2c4] sm:$0xf]
    %v236 = vld [vmem:[%s1 + $0x2c8] sm:$0xf]
    %v237 = vld [vmem:[%s1 + $0x2cc] sm:$0xf]
    %v238 = vld [vmem:[%s1 + $0x2d0] sm:$0xf]
    %v239 = vld [vmem:[%s1 + $0x2d4] sm:$0xf]
    %v240 = vld [vmem:[%s1 + $0x2d8] sm:$0xf]
    %v241 = vld [vmem:[%s1 + $0x2dc] sm:$0xf]
    %v242 = vld [vmem:[%s1 + $0x2e0] sm:$0xf]
    %v243 = vld [vmem:[%s1 + $0x2e4] sm:$0xf]
    %v244 = vld [vmem:[%s1 + $0x2e8] sm:$0xf]
    %v245 = vld [vmem:[%s1 + $0x2ec] sm:$0xf]
    %v246 = vld [vmem:[%s1 + $0x2f0] sm:$0xf]
    %v247 = vld [vmem:[%s1 + $0x2f4] sm:$0xf]
    %v248 = vld [vmem:[%s1 + $0x2f8] sm:$0xf]
    %v249 = vld [vmem:[%s1 + $0x2fc] sm:$0xf]
    %v250 = vld [vmem:[%s1 + $0x300] sm:$0xf]
    %v251 = vld [vmem:[%s1 + $0x304] sm:$0xf]
    %v252 = vld [vmem:[%s1 + $0x308] sm:$0xf]
    %v253 = vld [vmem:[%s1 + $0x30c] sm:$0xf]
    %v254 = vld [vmem:[%s1 + $0x310] sm:$0xf]
    %v255 = vld [vmem:[%s1 + $0x314] sm:$0xf]
    %v256 = vld [vmem:[%s1 + $0x318] sm:$0xf]
    %v257 = vld [vmem:[%s1 + $0x31c] sm:$0xf]
    %v258 = vld [vmem:[%s1 + $0x320] sm:$0xf]
    %v259 = vld [vmem:[%s1 + $0x324] sm:$0xf]
    %v260 = vld [vmem:[%s1 + $0x328] sm:$0xf]
    %v261 = vld [vmem:[%s1 + $0x32c] sm:$0xf]
    %v262 = vld [vmem:[%s1 + $0x330] sm:$0xf]
    %v263 = vld [vmem:[%s1 + $0x334] sm:$0xf]
    %v264 = vld [vmem:[%s1 + $0x338] sm:$0xf]
    %v265 = vld [vmem:[%s1 + $0x33c] sm:$0xf]
    %v266 = vld [vmem:[%s1 + $0x340] sm:$0xf]
    %v267 = vld [vmem:[%s1 + $0x344] sm:$0xf]
    %v268 = vld [vmem:[%s1 + $0x348] sm:$0xf]
    %v269 = vld [vmem:[%s1 + $0x34c] sm:$0xf]
    %v270 = vld [vmem:[%s1 + $0x350] sm:$0xf]
    %v271 = vld [vmem:[%s1 + $0x354] sm:$0xf]
    %v272 = vld [vmem:[%s1 + $0x358] sm:$0xf]
    %v273 = vld [vmem:[%s1 + $0x35c] sm:$0xf]
    %v274 = vld [vmem:[%s1 + $0x360] sm:$0xf]
    %v275 = vld [vmem:[%s1 + $0x364] sm:$0xf]
    %v276 = vld [vmem:[%s1 + $0x368] sm:$0xf]
    %v277 = vld [vmem:[%s1 + $0x36c] sm:$0xf]
    %v278 = vld [vmem:[%s1 + $0x370] sm:$0xf]
    %v279 = vld [vmem:[%s1 + $0x374] sm:$0xf]
    %v280 = vld [vmem:[%s1 + $0x378] sm:$0xf]
    %v281 = vld [vmem:[%s1 + $0x37c] sm:$0xf]
    %v282 = vld [vmem:[%s1 + $0x380] sm:$0xf]
    %v283 = vld [vmem:[%s1 + $0x384] sm:$0xf]
    %v284 = vld [vmem:[%s1 + $0x388] sm:$0xf]
    %v285 = vld [vmem:[%s1 + $0x38c] sm:$0xf]
    %v286 = vld [vmem:[%s1 + $0x390] sm:$0xf]
    %v287 = vld [vmem:[%s1 + $0x394] sm:$0xf]
    %v288 = vld [vmem:[%s1 + $0x398] sm:$0xf]
    %v289 = vld [vmem:[%s1 + $0x39c] sm:$0xf]
    %v290 = vld [vmem:[%s1 + $0x3a0] sm:$0xf]
    %v291 = vld [vmem:[%s1 + $0x3a4] sm:$0xf]
    %v292 = vld [vmem:[%s1 + $0x3a8] sm:$0xf]
    %v293 = vld [vmem:[%s1 + $0x3ac] sm:$0xf]
    %v294 = vld [vmem:[%s1 + $0x3b0] sm:$0xf]
    %v295 = vld [vmem:[%s1 + $0x3b4] sm:$0xf]
    %v296 = vld [vmem:[%s1 + $0x3b8] sm:$0xf]
    %v297 = vld [vmem:[%s1 + $0x3bc] sm:$0xf]
    %v298 = vld [vmem:[%s1 + $0x3c0] sm:$0xf]
    %v299 = vld [vmem:[%s1 + $0x3c4] sm:$0xf]
    %v300 = vld [vmem:[%s1 + $0x3c8] sm:$0xf]
    %v301 = vld [vmem:[%s1 + $0x3cc] sm:$0xf]
    %v302 = vld [vmem:[%s1 + $0x3d0] sm:$0xf]
    %v303 = vld [vmem:[%s1 + $0x3d4] sm:$0xf]
    %v304 = vld [vmem:[%s1 + $0x3d8] sm:$0xf]
    %v305 = vld [vmem:[%s1 + $0x3dc] sm:$0xf]
    %v306 = vld [vmem:[%s1 + $0x3e0] sm:$0xf]
    %v307 = vld [vmem:[%s1 + $0x3e4] sm:$0xf]
    %v308 = vld [vmem:[%s1 + $0x3e8] sm:$0xf]
    %v309 = vld [vmem:[%s1 + $0x3ec] sm:$0xf]
    %v310 = vld [vmem:[%s1 + $0x3f0] sm:$0xf]
    %v311 = vld [vmem:[%s1 + $0x3f4] sm:$0xf]
    %v312 = vld [vmem:[%s1 + $0x3f8] sm:$0xf]
    %v313 = vld [vmem:[%s1 + $0x3fc] sm:$0xf]
    %v314 = vld [vmem:[%s1 + $0x400] sm:$0xf]
    %v315 = vld [vmem:[%s1 + $0x404] sm:$0xf]
    %v316 = vld [vmem:[%s1 + $0x408] sm:$0xf]
    %v317 = vld [vmem:[%s1 + $0x40c] sm:$0xf]
    %v318 = vld [vmem:[%s1 + $0x410] sm:$0xf]
    %v319 = vld [vmem:[%s1 + $0x414] sm:$0xf]
    %v320 = vld [vmem:[%s1 + $0x418] sm:$0xf]
    %v321 = vld [vmem:[%s1 + $0x41c] sm:$0xf]
    %v322 = vld [vmem:[%s1 + $0x420] sm:$0xf]
    %v323 = vld [vmem:[%s1 + $0x424] sm:$0xf]
    %v324 = vld [vmem:[%s1 + $0x428] sm:$0xf]
    %v325 = vld [vmem:[%s1 + $0x42c] sm:$0xf]
    %v326 = vld [vmem:[%s1 + $0x430] sm:$0xf]
    %v327 = vld [vmem:[%s1 + $0x434] sm:$0xf]
    %v328 = vld [vmem:[%s1 + $0x438] sm:$0xf]
    %v329 = vld [vmem:[%s1 + $0x43c] sm:$0xf]
    %v330 = vld [vmem:[%s1 + $0x440] sm:$0xf]
    %v331 = vld [vmem:[%s1 + $0x444] sm:$0xf]
    %v332 = vld [vmem:[%s1 + $0x448] sm:$0xf]
    %v333 = vld [vmem:[%s1 + $0x44c] sm:$0xf]
    %v334 = vld [vmem:[%s1 + $0x450] sm:$0xf]
    %v335 = vld [vmem:[%s1 + $0x454] sm:$0xf]
    %v336 = vld [vmem:[%s1 + $0x458] sm:$0xf]
    %v337 = vld [vmem:[%s1 + $0x45c] sm:$0xf]
    %v338 = vld [vmem:[%s1 + $0x460] sm:$0xf]
    %v339 = vld [vmem:[%s1 + $0x464] sm:$0xf]
    %v340 = vld [vmem:[%s1 + $0x468] sm:$0xf]
    %v341 = vld [vmem:[%s1 + $0x46c] sm:$0xf]
    %v342 = vld [vmem:[%s1 + $0x470] sm:$0xf]
    %v343 = vld [vmem:[%s1 + $0x474] sm:$0xf]
    %v344 = vld [vmem:[%s1 + $0x478] sm:$0xf]
    %v345 = vld [vmem:[%s1 + $0x47c] sm:$0xf]
    %v346 = vld [vmem:[%s1 + $0x480] sm:$0xf]
    %v347 = vld [vmem:[%s1 + $0x484] sm:$0xf]
    %v348 = vld [vmem:[%s1 + $0x488] sm:$0xf]
    %v349 = vld [vmem:[%s1 + $0x48c] sm:$0xf]
    %v350 = vld [vmem:[%s1 + $0x490] sm:$0xf]
    %v351 = vld [vmem:[%s1 + $0x494] sm:$0xf]
    %v352 = vld [vmem:[%s1 + $0x498] sm:$0xf]
    %v353 = vld [vmem:[%s1 + $0x49c] sm:$0xf]
    %v354 = vld [vmem:[%s1 + $0x4a0] sm:$0xf]
    %v355 = vld [vmem:[%s1 + $0x4a4] sm:$0xf]
    %v356 = vld [vmem:[%s1 + $0x4a8] sm:$0xf]
    %v357 = vld [vmem:[%s1 + $0x4ac] sm:$0xf]
    %v358 = vld [vmem:[%s1 + $0x4b0] sm:$0xf]
    %v359 = vld [vmem:[%s1 + $0x4b4] sm:$0xf]
    %v360 = vld [vmem:[%s1 + $0x4b8] sm:$0xf]
    %v361 = vld [vmem:[%s1 + $0x4bc] sm:$0xf]
    %v362 = vld [vmem:[%s1 + $0x4c0] sm:$0xf]
    %v363 = vld [vmem:[%s1 + $0x4c4] sm:$0xf]
    %v364 = vld [vmem:[%s1 + $0x4c8] sm:$0xf]
    %v365 = vld [vmem:[%s1 + $0x4cc] sm:$0xf]
    %v366 = vld [vmem:[%s1 + $0x4d0] sm:$0xf]
    %v367 = vld [vmem:[%s1 + $0x4d4] sm:$0xf]
    %v368 = vld [vmem:[%s1 + $0x4d8] sm:$0xf]
    %v369 = vld [vmem:[%s1 + $0x4dc] sm:$0xf]
    %v370 = vld [vmem:[%s1 + $0x4e0] sm:$0xf]
    %v371 = vld [vmem:[%s1 + $0x4e4] sm:$0xf]
    %v372 = vld [vmem:[%s1 + $0x4e8] sm:$0xf]
    %v373 = vld [vmem:[%s1 + $0x4ec] sm:$0xf]
    %v374 = vld [vmem:[%s1 + $0x4f0] sm:$0xf]
    %v375 = vld [vmem:[%s1 + $0x4f4] sm:$0xf]
    %v376 = vld [vmem:[%s1 + $0x4f8] sm:$0xf]
    %v377 = vld [vmem:[%s1 + $0x4fc] sm:$0xf]
    %v378 = vld [vmem:[%s1 + $0x500] sm:$0xf]
    %v379 = vld [vmem:[%s1 + $0x504] sm:$0xf]
    %v380 = vld [vmem:[%s1 + $0x508] sm:$0xf]
    %v381 = vld [vmem:[%s1 + $0x50c] sm:$0xf]
    %v382 = vld [vmem:[%s1 + $0x510] sm:$0xf]
    %v383 = vld [vmem:[%s1 + $0x514] sm:$0xf]
    %v384 = vld [vmem:[%s1 + $0x518] sm:$0xf]
    %v385 = vld [vmem:[%s1 + $0x51c] sm:$0xf]
    %v386 = vld [vmem:[%s1 + $0x520] sm:$0xf]
    %v387 = vld [vmem:[%s1 + $0x524] sm:$0xf]
    %v388 = vld [vmem:[%s1 + $0x528] sm:$0xf]
    %v389 = vld [vmem:[%s1 + $0x52c] sm:$0xf]
    %v390 = vld [vmem:[%s1 + $0x530] sm:$0xf]
    %v391 = vld [vmem:[%s1 + $0x534] sm:$0xf]
    %v392 = vld [vmem:[%s1 + $0x538] sm:$0xf]
    %v393 = vld [vmem:[%s1 + $0x53c] sm:$0xf]
    %v394 = vld [vmem:[%s1 + $0x540] sm:$0xf]
    %v395 = vld [vmem:[%s1 + $0x544] sm:$0xf]
    %v396 = vld [vmem:[%s1 + $0x548] sm:$0xf]
    %v397 = vld [vmem:[%s1 + $0x54c] sm:$0xf]
    %v398 = vld [vmem:[%s1 + $0x550] sm:$0xf]
    %v399 = vld [vmem:[%s1 + $0x554] sm:$0xf]
    %v400 = vld [vmem:[%s1 + $0x558] sm:$0xf]
    %v401 = vld [vmem:[%s1 + $0x55c] sm:$0xf]
    %v402 = vld [vmem:[%s1 + $0x560] sm:$0xf]
    %v403 = vld [vmem:[%s1 + $0x564] sm:$0xf]
    %v404 = vld [vmem:[%s1 + $0x568] sm:$0xf]
    %v405 = vld [vmem:[%s1 + $0x56c] sm:$0xf]
    %v406 = vld [vmem:[%s1 + $0x570] sm:$0xf]
    %v407 = vld [vmem:[%s1 + $0x574] sm:$0xf]
    %v408 = vld [vmem:[%s1 + $0x578] sm:$0xf]
    %v409 = vld [vmem:[%s1 + $0x57c] sm:$0xf]
    %v410 = vld [vmem:[%s1 + $0x580] sm:$0xf]
    %v411 = vld [vmem:[%s1 + $0x584] sm:$0xf]
    %v412 = vld [vmem:[%s1 + $0x588] sm:$0xf]
    %v413 = vld [vmem:[%s1 + $0x58c] sm:$0xf]
    %v414 = vld [vmem:[%s1 + $0x590] sm:$0xf]
    %v415 = vld [vmem:[%s1 + $0x594] sm:$0xf]
    %v416 = vld [vmem:[%s1 + $0x598] sm:$0xf]
    %v417 = vld [vmem:[%s1 + $0x59c] sm:$0xf]
    %v418 = vld [vmem:[%s1 + $0x5a0] sm:$0xf]
    %v419 = vld [vmem:[%s1 + $0x5a4] sm:$0xf]
    %v420 = vld [vmem:[%s1 + $0x5a8] sm:$0xf]
    %v421 = vld [vmem:[%s1 + $0x5ac] sm:$0xf]
    %v422 = vld [vmem:[%s1 + $0x5b0] sm:$0xf]
    %v423 = vld [vmem:[%s1 + $0x5b4] sm:$0xf]
    %v424 = vld [vmem:[%s1 + $0x5b8] sm:$0xf]
    %v425 = vld [vmem:[%s1 + $0x5bc] sm:$0xf]
    %v426 = vld [vmem:[%s1 + $0x5c0] sm:$0xf]
    %v427 = vld [vmem:[%s1 + $0x5c4] sm:$0xf]
    %v428 = vld [vmem:[%s1 + $0x5c8] sm:$0xf]
    %v429 = vld [vmem:[%s1 + $0x5cc] sm:$0xf]
    %v430 = vld [vmem:[%s1 + $0x5d0] sm:$0xf]
    %v431 = vld [vmem:[%s1 + $0x5d4] sm:$0xf]
    %v432 = vld [vmem:[%s1 + $0x5d8] sm:$0xf]
    %v433 = vld [vmem:[%s1 + $0x5dc] sm:$0xf]
    %v434 = vld [vmem:[%s1 + $0x5e0] sm:$0xf]
    %v435 = vld [vmem:[%s1 + $0x5e4] sm:$0xf]
    %v436 = vld [vmem:[%s1 + $0x5e8] sm:$0xf]
    %v437 = vld [vmem:[%s1 + $0x5ec] sm:$0xf]
    %v438 = vld [vmem:[%s1 + $0x5f0] sm:$0xf]
    %v439 = vld [vmem:[%s1 + $0x5f4] sm:$0xf]
    %v440 = vld [vmem:[%s1 + $0x5f8] sm:$0xf]
    %v441 = vld [vmem:[%s1 + $0x5fc] sm:$0xf]
    %v442 = vld [vmem:[%s1 + $0x600] sm:$0xf]
    %v443 = vld [vmem:[%s1 + $0x604] sm:$0xf]
    %v444 = vld [vmem:[%s1 + $0x608] sm:$0xf]
    %v445 = vld [vmem:[%s1 + $0x60c] sm:$0xf]
    %v446 = vld [vmem:[%s1 + $0x610] sm:$0xf]
    %v447 = vld [vmem:[%s1 + $0x614] sm:$0xf]
    %v448 = vld [vmem:[%s1 + $0x618] sm:$0xf]
    %v449 = vld [vmem:[%s1 + $0x61c] sm:$0xf]
    %v450 = vld [vmem:[%s1 + $0x620] sm:$0xf]
    %v451 = vld [vmem:[%s1 + $0x624] sm:$0xf]
    %v452 = vld [vmem:[%s1 + $0x628] sm:$0xf]
    %v453 = vld [vmem:[%s1 + $0x62c] sm:$0xf]
    %v454 = vld [vmem:[%s1 + $0x630] sm:$0xf]
    %v455 = vld [vmem:[%s1 + $0x634] sm:$0xf]
    %v456 = vld [vmem:[%s1 + $0x638] sm:$0xf]
    %v457 = vld [vmem:[%s1 + $0x63c] sm:$0xf]
    %v458 = vld [vmem:[%s1 + $0x640] sm:$0xf]
    %v459 = vld [vmem:[%s1 + $0x644] sm:$0xf]
    %v460 = vld [vmem:[%s1 + $0x648] sm:$0xf]
    %v461 = vld [vmem:[%s1 + $0x64c] sm:$0xf]
    %v462 = vld [vmem:[%s1 + $0x650] sm:$0xf]
    %v463 = vld [vmem:[%s1 + $0x654] sm:$0xf]
    %v464 = vld [vmem:[%s1 + $0x658] sm:$0xf]
    %v465 = vld [vmem:[%s1 + $0x65c] sm:$0xf]
    %v466 = vld [vmem:[%s1 + $0x660] sm:$0xf]
    %v467 = vld [vmem:[%s1 + $0x664] sm:$0xf]
    %v468 = vld [vmem:[%s1 + $0x668] sm:$0xf]
    %v469 = vld [vmem:[%s1 + $0x66c] sm:$0xf]
    %v470 = vld [vmem:[%s1 + $0x670] sm:$0xf]
    %v471 = vld [vmem:[%s1 + $0x674] sm:$0xf]
    %v472 = vld [vmem:[%s1 + $0x678] sm:$0xf]
    %v473 = vld [vmem:[%s1 + $0x67c] sm:$0xf]
    %v474 = vld [vmem:[%s1 + $0x680] sm:$0xf]
    %v475 = vld [vmem:[%s1 + $0x684] sm:$0xf]
    %v476 = vld [vmem:[%s1 + $0x688] sm:$0xf]
    %v477 = vld [vmem:[%s1 + $0x68c] sm:$0xf]
    %v478 = vld [vmem:[%s1 + $0x690] sm:$0xf]
    %v479 = vld [vmem:[%s1 + $0x694] sm:$0xf]
    %v480 = vld [vmem:[%s1 + $0x698] sm:$0xf]
    %v481 = vld [vmem:[%s1 + $0x69c] sm:$0xf]
    %v482 = vld [vmem:[%s1 + $0x6a0] sm:$0xf]
    %v483 = vld [vmem:[%s1 + $0x6a4] sm:$0xf]
    %v484 = vld [vmem:[%s1 + $0x6a8] sm:$0xf]
    %v485 = vld [vmem:[%s1 + $0x6ac] sm:$0xf]
    %v486 = vld [vmem:[%s1 + $0x6b0] sm:$0xf]
    %v487 = vld [vmem:[%s1 + $0x6b4] sm:$0xf]
    %v488 = vld [vmem:[%s1 + $0x6b8] sm:$0xf]
    %v489 = vld [vmem:[%s1 + $0x6bc] sm:$0xf]
    %v490 = vld [vmem:[%s1 + $0x6c0] sm:$0xf]
    %v491 = vld [vmem:[%s1 + $0x6c4] sm:$0xf]
    %v492 = vld [vmem:[%s1 + $0x6c8] sm:$0xf]
    %v493 = vld [vmem:[%s1 + $0x6cc] sm:$0xf]
    %v494 = vld [vmem:[%s1 + $0x6d0] sm:$0xf]
    %v495 = vld [vmem:[%s1 + $0x6d4] sm:$0xf]
    %v496 = vld [vmem:[%s1 + $0x6d8] sm:$0xf]
    %v497 = vld [vmem:[%s1 + $0x6dc] sm:$0xf]
    %v498 = vld [vmem:[%s1 + $0x6e0] sm:$0xf]
    %v499 = vld [vmem:[%s1 + $0x6e4] sm:$0xf]
    %v500 = vld [vmem:[%s1 + $0x6e8] sm:$0xf]
    %v501 = vld [vmem:[%s1 + $0x6ec] sm:$0xf]
    %v502 = vld [vmem:[%s1 + $0x6f0] sm:$0xf]
    %v503 = vld [vmem:[%s1 + $0x6f4] sm:$0xf]
    %v504 = vld [vmem:[%s1 + $0x6f8] sm:$0xf]
    %v505 = vld [vmem:[%s1 + $0x6fc] sm:$0xf]
    %v506 = vld [vmem:[%s1 + $0x700] sm:$0xf]
    %v507 = vld [vmem:[%s1 + $0x704] sm:$0xf]
    %v508 = vld [vmem:[%s1 + $0x708] sm:$0xf]
    %v509 = vld [vmem:[%s1 + $0x70c] sm:$0xf]
    %v510 = vld [vmem:[%s1 + $0x710] sm:$0xf]
    %v511 = vld [vmem:[%s1 + $0x714] sm:$0xf]
    %v512 = vld [vmem:[%s1 + $0x718] sm:$0xf]
    %v513 = vld [vmem:[%s1 + $0x71c] sm:$0xf]
    %v514 = vld [vmem:[%s1 + $0x720] sm:$0xf]
    %v515 = vld [vmem:[%s1 + $0x724] sm:$0xf]
    %v516 = vld [vmem:[%s1 + $0x728] sm:$0xf]
    %v517 = vld [vmem:[%s1 + $0x72c] sm:$0xf]
    %v518 = vld [vmem:[%s1 + $0x730] sm:$0xf]
    %v519 = vld [vmem:[%s1 + $0x734] sm:$0xf]
    %v520 = vld [vmem:[%s1 + $0x738] sm:$0xf]
    %v521 = vld [vmem:[%s1 + $0x73c] sm:$0xf]
    %v522 = vld [vmem:[%s1 + $0x740] sm:$0xf]
    %v523 = vld [vmem:[%s1 + $0x744] sm:$0xf]
    %v524 = vld [vmem:[%s1 + $0x748] sm:$0xf]
    %v525 = vld [vmem:[%s1 + $0x74c] sm:$0xf]
    %v526 = vld [vmem:[%s1 + $0x750] sm:$0xf]
    %v527 = vld [vmem:[%s1 + $0x754] sm:$0xf]
    %v528 = vld [vmem:[%s1 + $0x758] sm:$0xf]
    %v529 = vld [vmem:[%s1 + $0x75c] sm:$0xf]
    %v530 = vld [vmem:[%s1 + $0x760] sm:$0xf]
    %v531 = vld [vmem:[%s1 + $0x764] sm:$0xf]
    %v532 = vld [vmem:[%s1 + $0x768] sm:$0xf]
    %v533 = vld [vmem:[%s1 + $0x76c] sm:$0xf]
    %v534 = vld [vmem:[%s1 + $0x770] sm:$0xf]
    %v535 = vld [vmem:[%s1 + $0x774] sm:$0xf]
    %v536 = vld [vmem:[%s1 + $0x778] sm:$0xf]
    %v537 = vld [vmem:[%s1 + $0x77c] sm:$0xf]
    %v538 = vld [vmem:[%s1 + $0x780] sm:$0xf]
    %v539 = vld [vmem:[%s1 + $0x784] sm:$0xf]
    %v540 = vld [vmem:[%s1 + $0x788] sm:$0xf]
    %v541 = vld [vmem:[%s1 + $0x78c] sm:$0xf]
    %v542 = vld [vmem:[%s1 + $0x790] sm:$0xf]
    %v543 = vld [vmem:[%s1 + $0x794] sm:$0xf]
    %v544 = vld [vmem:[%s1 + $0x798] sm:$0xf]
    %v545 = vld [vmem:[%s1 + $0x79c] sm:$0xf]
    %v546 = vld [vmem:[%s1 + $0x7a0] sm:$0xf]
    %v547 = vld [vmem:[%s1 + $0x7a4] sm:$0xf]
    %v548 = vld [vmem:[%s1 + $0x7a8] sm:$0xf]
    %v549 = vld [vmem:[%s1 + $0x7ac] sm:$0xf]
    %v550 = vld [vmem:[%s1 + $0x7b0] sm:$0xf]
    %v551 = vld [vmem:[%s1 + $0x7b4] sm:$0xf]
    %v552 = vld [vmem:[%s1 + $0x7b8] sm:$0xf]
    %v553 = vld [vmem:[%s1 + $0x7bc] sm:$0xf]
    %v554 = vld [vmem:[%s1 + $0x7c0] sm:$0xf]
    %v555 = vld [vmem:[%s1 + $0x7c4] sm:$0xf]
    %v556 = vld [vmem:[%s1 + $0x7c8] sm:$0xf]
    %v557 = vld [vmem:[%s1 + $0x7cc] sm:$0xf]
    %v558 = vld [vmem:[%s1 + $0x7d0] sm:$0xf]
    %v559 = vld [vmem:[%s1 + $0x7d4] sm:$0xf]
    %v560 = vld [vmem:[%s1 + $0x7d8] sm:$0xf]
    %v561 = vld [vmem:[%s1 + $0x7dc] sm:$0xf]
    %v562 = vld [vmem:[%s1 + $0x7e0] sm:$0xf]
    %v563 = vld [vmem:[%s1 + $0x7e4] sm:$0xf]
    %v564 = vld [vmem:[%s1 + $0x7e8] sm:$0xf]
    %v565 = vld [vmem:[%s1 + $0x7ec] sm:$0xf]
    %v566 = vld [vmem:[%s1 + $0x7f0] sm:$0xf]
    %v567 = vld [vmem:[%s1 + $0x7f4] sm:$0xf]
    %v568 = vld [vmem:[%s1 + $0x7f8] sm:$0xf]
    %v569 = vld [vmem:[%s1 + $0x7fc] sm:$0xf]
    %v570 = vld [vmem:[%s1 + $0x800] sm:$0xf]
    %v571 = vld [vmem:[%s1 + $0x804] sm:$0xf]
    %v572 = vld [vmem:[%s1 + $0x808] sm:$0xf]
    %v573 = vld [vmem:[%s1 + $0x80c] sm:$0xf]
    %v574 = vld [vmem:[%s1 + $0x810] sm:$0xf]
    %v575 = vld [vmem:[%s1 + $0x814] sm:$0xf]
    %v576 = vld [vmem:[%s1 + $0x818] sm:$0xf]
    %v577 = vld [vmem:[%s1 + $0x81c] sm:$0xf]
    %v578 = vld [vmem:[%s1 + $0x820] sm:$0xf]
    %v579 = vld [vmem:[%s1 + $0x824] sm:$0xf]
    %v580 = vld [vmem:[%s1 + $0x828] sm:$0xf]
    %v581 = vld [vmem:[%s1 + $0x82c] sm:$0xf]
    %v582 = vld [vmem:[%s1 + $0x830] sm:$0xf]
    %v583 = vld [vmem:[%s1 + $0x834] sm:$0xf]
    %v584 = vld [vmem:[%s1 + $0x838] sm:$0xf]
    %v585 = vld [vmem:[%s1 + $0x83c] sm:$0xf]
    %v586 = vld [vmem:[%s1 + $0x840] sm:$0xf]
    %v587 = vld [vmem:[%s1 + $0x844] sm:$0xf]
    %v588 = vld [vmem:[%s1 + $0x848] sm:$0xf]
    %v589 = vld [vmem:[%s1 + $0x84c] sm:$0xf]
    %v590 = vld [vmem:[%s1 + $0x850] sm:$0xf]
    %v591 = vld [vmem:[%s1 + $0x854] sm:$0xf]
    %v592 = vld [vmem:[%s1 + $0x858] sm:$0xf]
    %v593 = vld [vmem:[%s1 + $0x85c] sm:$0xf]
    %v594 = vld [vmem:[%s1 + $0x860] sm:$0xf]
    %v595 = vld [vmem:[%s1 + $0x864] sm:$0xf]
    %v596 = vld [vmem:[%s1 + $0x868] sm:$0xf]
    %v597 = vld [vmem:[%s1 + $0x86c] sm:$0xf]
    %v598 = vld [vmem:[%s1 + $0x870] sm:$0xf]
    %v599 = vld [vmem:[%s1 + $0x874] sm:$0xf]
    %v600 = vld [vmem:[%s1 + $0x878] sm:$0xf]
    %v601 = vld [vmem:[%s1 + $0x87c] sm:$0xf]
    %v602 = vld [vmem:[%s1 + $0x880] sm:$0xf]
    %v603 = vld [vmem:[%s1 + $0x884] sm:$0xf]
    %v604 = vld [vmem:[%s1 + $0x888] sm:$0xf]
    %v605 = vld [vmem:[%s1 + $0x88c] sm:$0xf]
    %v606 = vld [vmem:[%s1 + $0x890] sm:$0xf]
    %v607 = vld [vmem:[%s1 + $0x894] sm:$0xf]
    %v608 = vld [vmem:[%s1 + $0x898] sm:$0xf]
    %v609 = vld [vmem:[%s1 + $0x89c] sm:$0xf]
    %v610 = vld [vmem:[%s1 + $0x8a0] sm:$0xf]
    %v611 = vld [vmem:[%s1 + $0x8a4] sm:$0xf]
    %v612 = vld [vmem:[%s1 + $0x8a8] sm:$0xf]
    %v613 = vld [vmem:[%s1 + $0x8ac] sm:$0xf]
    %v614 = vld [vmem:[%s1 + $0x8b0] sm:$0xf]
    %v615 = vld [vmem:[%s1 + $0x8b4] sm:$0xf]
    %v616 = vld [vmem:[%s1 + $0x8b8] sm:$0xf]
    %v617 = vld [vmem:[%s1 + $0x8bc] sm:$0xf]
    %v618 = vld [vmem:[%s1 + $0x8c0] sm:$0xf]
    %v619 = vld [vmem:[%s1 + $0x8c4] sm:$0xf]
    %v620 = vld [vmem:[%s1 + $0x8c8] sm:$0xf]
    %v621 = vld [vmem:[%s1 + $0x8cc] sm:$0xf]
    %v622 = vld [vmem:[%s1 + $0x8d0] sm:$0xf]
    %v623 = vld [vmem:[%s1 + $0x8d4] sm:$0xf]
    %v624 = vld [vmem:[%s1 + $0x8d8] sm:$0xf]
    %v625 = vld [vmem:[%s1 + $0x8dc] sm:$0xf]
    %v626 = vld [vmem:[%s1 + $0x8e0] sm:$0xf]
    %v627 = vld [vmem:[%s1 + $0x8e4] sm:$0xf]
    %v628 = vld [vmem:[%s1 + $0x8e8] sm:$0xf]
    %v629 = vld [vmem:[%s1 + $0x8ec] sm:$0xf]
    %v630 = vld [vmem:[%s1 + $0x8f0] sm:$0xf]
    %v631 = vld [vmem:[%s1 + $0x8f4] sm:$0xf]
    %v632 = vld [vmem:[%s1 + $0x8f8] sm:$0xf]
    %v633 = vld [vmem:[%s1 + $0x8fc] sm:$0xf]
    %v634 = vld [vmem:[%s1 + $0x900] sm:$0xf]
    %v635 = vld [vmem:[%s1 + $0x904] sm:$0xf]
    %v636 = vld [vmem:[%s1 + $0x908] sm:$0xf]
    %v637 = vld [vmem:[%s1 + $0x90c] sm:$0xf]
    %v638 = vld [vmem:[%s1 + $0x910] sm:$0xf]
    %v639 = vld [vmem:[%s1 + $0x914] sm:$0xf]
    %v640 = vld [vmem:[%s1 + $0x918] sm:$0xf]
    %v641 = vld [vmem:[%s1 + $0x91c] sm:$0xf]
    %v642 = vld [vmem:[%s1 + $0x920] sm:$0xf]
    %v643 = vld [vmem:[%s1 + $0x924] sm:$0xf]
    %v644 = vld [vmem:[%s1 + $0x928] sm:$0xf]
    %v645 = vld [vmem:[%s1 + $0x92c] sm:$0xf]
    %v646 = vld [vmem:[%s1 + $0x930] sm:$0xf]
    %v647 = vld [vmem:[%s1 + $0x934] sm:$0xf]
    %v648 = vld [vmem:[%s1 + $0x938] sm:$0xf]
    %v649 = vld [vmem:[%s1 + $0x93c] sm:$0xf]
    %v650 = vld [vmem:[%s1 + $0x940] sm:$0xf]
    %v651 = vld [vmem:[%s1 + $0x944] sm:$0xf]
    %v652 = vld [vmem:[%s1 + $0x948] sm:$0xf]
    %v653 = vld [vmem:[%s1 + $0x94c] sm:$0xf]
    %v654 = vld [vmem:[%s1 + $0x950] sm:$0xf]
    %v655 = vld [vmem:[%s1 + $0x954] sm:$0xf]
    %v656 = vld [vmem:[%s1 + $0x958] sm:$0xf]
    %v657 = vld [vmem:[%s1 + $0x95c] sm:$0xf]
    %v658 = vld [vmem:[%s1 + $0x960] sm:$0xf]
    %v659 = vld [vmem:[%s1 + $0x964] sm:$0xf]
    %v660 = vld [vmem:[%s1 + $0x968] sm:$0xf]
    %v661 = vld [vmem:[%s1 + $0x96c] sm:$0xf]
    %v662 = vld [vmem:[%s1 + $0x970] sm:$0xf]
    %v663 = vld [vmem:[%s1 + $0x974] sm:$0xf]
    %v664 = vld [vmem:[%s1 + $0x978] sm:$0xf]
    %v665 = vld [vmem:[%s1 + $0x97c] sm:$0xf]
    %v666 = vld [vmem:[%s1 + $0x980] sm:$0xf]
    %v667 = vld [vmem:[%s1 + $0x984] sm:$0xf]
    %v668 = vld [vmem:[%s1 + $0x988] sm:$0xf]
    %v669 = vld [vmem:[%s1 + $0x98c] sm:$0xf]
    %v670 = vld [vmem:[%s1 + $0x990] sm:$0xf]
    %v671 = vld [vmem:[%s1 + $0x994] sm:$0xf]
    %v672 = vld [vmem:[%s1 + $0x998] sm:$0xf]
    %v673 = vld [vmem:[%s1 + $0x99c] sm:$0xf]
    %v674 = vld [vmem:[%s1 + $0x9a0] sm:$0xf]
    %v675 = vld [vmem:[%s1 + $0x9a4] sm:$0xf]
    %v676 = vld [vmem:[%s1 + $0x9a8] sm:$0xf]
    %v677 = vld [vmem:[%s1 + $0x9ac] sm:$0xf]
    %v678 = vld [vmem:[%s1 + $0x9b0] sm:$0xf]
    %v679 = vld [vmem:[%s1 + $0x9b4] sm:$0xf]
    %v680 = vld [vmem:[%s1 + $0x9b8] sm:$0xf]
    %v681 = vld [vmem:[%s1 + $0x9bc] sm:$0xf]
    %v682 = vld [vmem:[%s1 + $0x9c0] sm:$0xf]
    %v683 = vld [vmem:[%s1 + $0x9c4] sm:$0xf]
    %v684 = vld [vmem:[%s1 + $0x9c8] sm:$0xf]
    %v685 = vld [vmem:[%s1 + $0x9cc] sm:$0xf]
    %v686 = vld [vmem:[%s1 + $0x9d0] sm:$0xf]
    %v687 = vld [vmem:[%s1 + $0x9d4] sm:$0xf]
    %v688 = vld [vmem:[%s1 + $0x9d8] sm:$0xf]
    %v689 = vld [vmem:[%s1 + $0x9dc] sm:$0xf]
    %v690 = vld [vmem:[%s1 + $0x9e0] sm:$0xf]
    %v691 = vld [vmem:[%s1 + $0x9e4] sm:$0xf]
    %v692 = vld [vmem:[%s1 + $0x9e8] sm:$0xf]
    %v693 = vld [vmem:[%s1 + $0x9ec] sm:$0xf]
    %v694 = vld [vmem:[%s1 + $0x9f0] sm:$0xf]
    %v695 = vld [vmem:[%s1 + $0x9f4] sm:$0xf]
    %v696 = vld [vmem:[%s1 + $0x9f8] sm:$0xf]
    %v697 = vld [vmem:[%s1 + $0x9fc] sm:$0xf]
    %v698 = vld [vmem:[%s1 + $0xa00] sm:$0xf]
    %v699 = vld [vmem:[%s1 + $0xa04] sm:$0xf]
    %v700 = vld [vmem:[%s1 + $0xa08] sm:$0xf]
    %v701 = vld [vmem:[%s1 + $0xa0c] sm:$0xf]
    %v702 = vld [vmem:[%s1 + $0xa10] sm:$0xf]
    %v703 = vld [vmem:[%s1 + $0xa14] sm:$0xf]
    %v704 = vld [vmem:[%s1 + $0xa18] sm:$0xf]
    %v705 = vld [vmem:[%s1 + $0xa1c] sm:$0xf]
    %v706 = vld [vmem:[%s1 + $0xa20] sm:$0xf]
    %v707 = vld [vmem:[%s1 + $0xa24] sm:$0xf]
    %v708 = vld [vmem:[%s1 + $0xa28] sm:$0xf]
    %v709 = vld [vmem:[%s1 + $0xa2c] sm:$0xf]
    %v710 = vld [vmem:[%s1 + $0xa30] sm:$0xf]
    %v711 = vld [vmem:[%s1 + $0xa34] sm:$0xf]
    %v712 = vld [vmem:[%s1 + $0xa38] sm:$0xf]
    %v713 = vld [vmem:[%s1 + $0xa3c] sm:$0xf]
    %v714 = vld [vmem:[%s1 + $0xa40] sm:$0xf]
    %v715 = vld [vmem:[%s1 + $0xa44] sm:$0xf]
    %v716 = vld [vmem:[%s1 + $0xa48] sm:$0xf]
    %v717 = vld [vmem:[%s1 + $0xa4c] sm:$0xf]
    %v718 = vld [vmem:[%s1 + $0xa50] sm:$0xf]
    %v719 = vld [vmem:[%s1 + $0xa54] sm:$0xf]
    %v720 = vld [vmem:[%s1 + $0xa58] sm:$0xf]
    %v721 = vld [vmem:[%s1 + $0xa5c] sm:$0xf]
    %v722 = vld [vmem:[%s1 + $0xa60] sm:$0xf]
    %v723 = vld [vmem:[%s1 + $0xa64] sm:$0xf]
    %v724 = vld [vmem:[%s1 + $0xa68] sm:$0xf]
    %v725 = vld [vmem:[%s1 + $0xa6c] sm:$0xf]
    %v726 = vld [vmem:[%s1 + $0xa70] sm:$0xf]
    %v727 = vld [vmem:[%s1 + $0xa74] sm:$0xf]
    %v728 = vld [vmem:[%s1 + $0xa78] sm:$0xf]
    %v729 = vld [vmem:[%s1 + $0xa7c] sm:$0xf]
    %v730 = vld [vmem:[%s1 + $0xa80] sm:$0xf]
    %v731 = vld [vmem:[%s1 + $0xa84] sm:$0xf]
    %v732 = vld [vmem:[%s1 + $0xa88] sm:$0xf]
    %v733 = vld [vmem:[%s1 + $0xa8c] sm:$0xf]
    %v734 = vld [vmem:[%s1 + $0xa90] sm:$0xf]
    %v735 = vld [vmem:[%s1 + $0xa94] sm:$0xf]
    %v736 = vld [vmem:[%s1 + $0xa98] sm:$0xf]
    %v737 = vld [vmem:[%s1 + $0xa9c] sm:$0xf]
    %v738 = vld [vmem:[%s1 + $0xaa0] sm:$0xf]
    %v739 = vld [vmem:[%s1 + $0xaa4] sm:$0xf]
    %v740 = vld [vmem:[%s1 + $0xaa8] sm:$0xf]
    %v741 = vld [vmem:[%s1 + $0xaac] sm:$0xf]
    %v742 = vld [vmem:[%s1 + $0xab0] sm:$0xf]
    %v743 = vld [vmem:[%s1 + $0xab4] sm:$0xf]
    %v744 = vld [vmem:[%s1 + $0xab8] sm:$0xf]
    %v745 = vld [vmem:[%s1 + $0xabc] sm:$0xf]
    %v746 = vld [vmem:[%s1 + $0xac0] sm:$0xf]
    %v747 = vld [vmem:[%s1 + $0xac4] sm:$0xf]
    %v748 = vld [vmem:[%s1 + $0xac8] sm:$0xf]
    %v749 = vld [vmem:[%s1 + $0xacc] sm:$0xf]
    %v750 = vld [vmem:[%s1 + $0xad0] sm:$0xf]
    %v751 = vld [vmem:[%s1 + $0xad4] sm:$0xf]
    %v752 = vld [vmem:[%s1 + $0xad8] sm:$0xf]
    %v753 = vld [vmem:[%s1 + $0xadc] sm:$0xf]
    %v754 = vld [vmem:[%s1 + $0xae0] sm:$0xf]
    %v755 = vld [vmem:[%s1 + $0xae4] sm:$0xf]
    %v756 = vld [vmem:[%s1 + $0xae8] sm:$0xf]
    %v757 = vld [vmem:[%s1 + $0xaec] sm:$0xf]
    %v758 = vld [vmem:[%s1 + $0xaf0] sm:$0xf]
    %v759 = vld [vmem:[%s1 + $0xaf4] sm:$0xf]
    %v760 = vld [vmem:[%s1 + $0xaf8] sm:$0xf]
    %v761 = vld [vmem:[%s1 + $0xafc] sm:$0xf]
    %v762 = vld [vmem:[%s1 + $0xb00] sm:$0xf]
    %v763 = vld [vmem:[%s1 + $0xb04] sm:$0xf]
    %v764 = vld [vmem:[%s1 + $0xb08] sm:$0xf]
    %v765 = vld [vmem:[%s1 + $0xb0c] sm:$0xf]
    %v766 = vld [vmem:[%s1 + $0xb10] sm:$0xf]
    %v767 = vld [vmem:[%s1 + $0xb14] sm:$0xf]
    %v768 = vld [vmem:[%s1 + $0xb18] sm:$0xf]
    %v769 = vld [vmem:[%s1 + $0xb1c] sm:$0xf]
    %v770 = vld [vmem:[%s1 + $0xb20] sm:$0xf]
    %v771 = vld [vmem:[%s1 + $0xb24] sm:$0xf]
    %v772 = vld [vmem:[%s1 + $0xb28] sm:$0xf]
    %v773 = vld [vmem:[%s1 + $0xb2c] sm:$0xf]
    %v774 = vld [vmem:[%s1 + $0xb30] sm:$0xf]
    %v775 = vld [vmem:[%s1 + $0xb34] sm:$0xf]
    %v776 = vld [vmem:[%s1 + $0xb38] sm:$0xf]
    %v777 = vld [vmem:[%s1 + $0xb3c] sm:$0xf]
    %v778 = vld [vmem:[%s1 + $0xb40] sm:$0xf]
    %v779 = vld [vmem:[%s1 + $0xb44] sm:$0xf]
    %v780 = vld [vmem:[%s1 + $0xb48] sm:$0xf]
    %v781 = vld [vmem:[%s1 + $0xb4c] sm:$0xf]
    %v782 = vld [vmem:[%s1 + $0xb50] sm:$0xf]
    %v783 = vld [vmem:[%s1 + $0xb54] sm:$0xf]
    %v784 = vld [vmem:[%s1 + $0xb58] sm:$0xf]
    %v785 = vld [vmem:[%s1 + $0xb5c] sm:$0xf]
    %v786 = vld [vmem:[%s1 + $0xb60] sm:$0xf]
    %v787 = vld [vmem:[%s1 + $0xb64] sm:$0xf]
    %v788 = vld [vmem:[%s1 + $0xb68] sm:$0xf]
    %v789 = vld [vmem:[%s1 + $0xb6c] sm:$0xf]
    %v790 = vld [vmem:[%s1 + $0xb70] sm:$0xf]
    %v791 = vld [vmem:[%s1 + $0xb74] sm:$0xf]
    %v792 = vld [vmem:[%s1 + $0xb78] sm:$0xf]
    %v793 = vld [vmem:[%s1 + $0xb7c] sm:$0xf]
    %v794 = vld [vmem:[%s1 + $0xb80] sm:$0xf]
    %v795 = vld [vmem:[%s1 + $0xb84] sm:$0xf]
    %v796 = vld [vmem:[%s1 + $0xb88] sm:$0xf]
    %v797 = vld [vmem:[%s1 + $0xb8c] sm:$0xf]
    %v798 = vld [vmem:[%s1 + $0xb90] sm:$0xf]
    %v799 = vld [vmem:[%s1 + $0xb94] sm:$0xf]
    %v800 = vld [vmem:[%s1 + $0xb98] sm:$0xf]
    %v801 = vld [vmem:[%s1 + $0xb9c] sm:$0xf]
    %v802 = vld [vmem:[%s1 + $0xba0] sm:$0xf]
    %v803 = vld [vmem:[%s1 + $0xba4] sm:$0xf]
    %v804 = vld [vmem:[%s1 + $0xba8] sm:$0xf]
    %v805 = vld [vmem:[%s1 + $0xbac] sm:$0xf]
    %v806 = vld [vmem:[%s1 + $0xbb0] sm:$0xf]
    %v807 = vld [vmem:[%s1 + $0xbb4] sm:$0xf]
    %v808 = vld [vmem:[%s1 + $0xbb8] sm:$0xf]
    %v809 = vld [vmem:[%s1 + $0xbbc] sm:$0xf]
    %v810 = vld [vmem:[%s1 + $0xbc0] sm:$0xf]
    %v811 = vld [vmem:[%s1 + $0xbc4] sm:$0xf]
    %v812 = vld [vmem:[%s1 + $0xbc8] sm:$0xf]
    %v813 = vld [vmem:[%s1 + $0xbcc] sm:$0xf]
    %v814 = vld [vmem:[%s1 + $0xbd0] sm:$0xf]
    %v815 = vld [vmem:[%s1 + $0xbd4] sm:$0xf]
    %v816 = vld [vmem:[%s1 + $0xbd8] sm:$0xf]
    %v817 = vld [vmem:[%s1 + $0xbdc] sm:$0xf]
    %v818 = vld [vmem:[%s1 + $0xbe0] sm:$0xf]
    %v819 = vld [vmem:[%s1 + $0xbe4] sm:$0xf]
    %v820 = vld [vmem:[%s1 + $0xbe8] sm:$0xf]
    %v821 = vld [vmem:[%s1 + $0xbec] sm:$0xf]
    %v822 = vld [vmem:[%s1 + $0xbf0] sm:$0xf]
    %v823 = vld [vmem:[%s1 + $0xbf4] sm:$0xf]
    %v824 = vld [vmem:[%s1 + $0xbf8] sm:$0xf]
    %v825 = vld [vmem:[%s1 + $0xbfc] sm:$0xf]
    %v826 = vld [vmem:[%s1 + $0xc00] sm:$0xf]
    %v827 = vld [vmem:[%s1 + $0xc04] sm:$0xf]
    %v828 = vld [vmem:[%s1 + $0xc08] sm:$0xf]
    %v829 = vld [vmem:[%s1 + $0xc0c] sm:$0xf]
    %v830 = vld [vmem:[%s1 + $0xc10] sm:$0xf]
    %v831 = vld [vmem:[%s1 + $0xc14] sm:$0xf]
    %v832 = vld [vmem:[%s1 + $0xc18] sm:$0xf]
    %v833 = vld [vmem:[%s1 + $0xc1c] sm:$0xf]
    %v834 = vld [vmem:[%s1 + $0xc20] sm:$0xf]
    %v835 = vld [vmem:[%s1 + $0xc24] sm:$0xf]
    %v836 = vld [vmem:[%s1 + $0xc28] sm:$0xf]
    %v837 = vld [vmem:[%s1 + $0xc2c] sm:$0xf]
    %v838 = vld [vmem:[%s1 + $0xc30] sm:$0xf]
    %v839 = vld [vmem:[%s1 + $0xc34] sm:$0xf]
    %v840 = vld [vmem:[%s1 + $0xc38] sm:$0xf]
    %v841 = vld [vmem:[%s1 + $0xc3c] sm:$0xf]
    %v842 = vld [vmem:[%s1 + $0xc40] sm:$0xf]
    %v843 = vld [vmem:[%s1 + $0xc44] sm:$0xf]
    %v844 = vld [vmem:[%s1 + $0xc48] sm:$0xf]
    %v845 = vld [vmem:[%s1 + $0xc4c] sm:$0xf]
    %v846 = vld [vmem:[%s1 + $0xc50] sm:$0xf]
    %v847 = vld [vmem:[%s1 + $0xc54] sm:$0xf]
    %v848 = vld [vmem:[%s1 + $0xc58] sm:$0xf]
    %v849 = vld [vmem:[%s1 + $0xc5c] sm:$0xf]
    %v850 = vld [vmem:[%s1 + $0xc60] sm:$0xf]
    %v851 = vld [vmem:[%s1 + $0xc64] sm:$0xf]
    %v852 = vld [vmem:[%s1 + $0xc68] sm:$0xf]
    %v853 = vld [vmem:[%s1 + $0xc6c] sm:$0xf]
    %v854 = vld [vmem:[%s1 + $0xc70] sm:$0xf]
    %v855 = vld [vmem:[%s1 + $0xc74] sm:$0xf]
    %v856 = vld [vmem:[%s1 + $0xc78] sm:$0xf]
    %v857 = vld [vmem:[%s1 + $0xc7c] sm:$0xf]
    %v858 = vld [vmem:[%s1 + $0xc80] sm:$0xf]
    %v859 = vld [vmem:[%s1 + $0xc84] sm:$0xf]
    %v860 = vld [vmem:[%s1 + $0xc88] sm:$0xf]
    %v861 = vld [vmem:[%s1 + $0xc8c] sm:$0xf]
    %v862 = vld [vmem:[%s1 + $0xc90] sm:$0xf]
    %v863 = vld [vmem:[%s1 + $0xc94] sm:$0xf]
    %v864 = vld [vmem:[%s1 + $0xc98] sm:$0xf]
    %v865 = vld [vmem:[%s1 + $0xc9c] sm:$0xf]
    %v866 = vld [vmem:[%s1 + $0xca0] sm:$0xf]
    %v867 = vld [vmem:[%s1 + $0xca4] sm:$0xf]
    %v868 = vld [vmem:[%s1 + $0xca8] sm:$0xf]
    %v869 = vld [vmem:[%s1 + $0xcac] sm:$0xf]
    %v870 = vld [vmem:[%s1 + $0xcb0] sm:$0xf]
    %v871 = vld [vmem:[%s1 + $0xcb4] sm:$0xf]
    %v872 = vld [vmem:[%s1 + $0xcb8] sm:$0xf]
    %v873 = vld [vmem:[%s1 + $0xcbc] sm:$0xf]
    %v874 = vld [vmem:[%s1 + $0xcc0] sm:$0xf]
    %v875 = vld [vmem:[%s1 + $0xcc4] sm:$0xf]
    %v876 = vld [vmem:[%s1 + $0xcc8] sm:$0xf]
    %v877 = vld [vmem:[%s1 + $0xccc] sm:$0xf]
    %v878 = vld [vmem:[%s1 + $0xcd0] sm:$0xf]
    %v879 = vld [vmem:[%s1 + $0xcd4] sm:$0xf]
    %v880 = vld [vmem:[%s1 + $0xcd8] sm:$0xf]
    %v881 = vld [vmem:[%s1 + $0xcdc] sm:$0xf]
    %v882 = vld [vmem:[%s1 + $0xce0] sm:$0xf]
    %v883 = vld [vmem:[%s1 + $0xce4] sm:$0xf]
    %v884 = vld [vmem:[%s1 + $0xce8] sm:$0xf]
    %v885 = vld [vmem:[%s1 + $0xcec] sm:$0xf]
    %v886 = vld [vmem:[%s1 + $0xcf0] sm:$0xf]
    %v887 = vld [vmem:[%s1 + $0xcf4] sm:$0xf]
    %v888 = vld [vmem:[%s1 + $0xcf8] sm:$0xf]
    %v889 = vld [vmem:[%s1 + $0xcfc] sm:$0xf]
    %v890 = vld [vmem:[%s1 + $0xd00] sm:$0xf]
    %v891 = vld [vmem:[%s1 + $0xd04] sm:$0xf]
    %v892 = vld [vmem:[%s1 + $0xd08] sm:$0xf]
    %v893 = vld [vmem:[%s1 + $0xd0c] sm:$0xf]
    %v894 = vld [vmem:[%s1 + $0xd10] sm:$0xf]
    %v895 = vld [vmem:[%s1 + $0xd14] sm:$0xf]
    %v896 = vld [vmem:[%s1 + $0xd18] sm:$0xf]
    %v897 = vld [vmem:[%s1 + $0xd1c] sm:$0xf]
    %v898 = vld [vmem:[%s1 + $0xd20] sm:$0xf]
    %v899 = vld [vmem:[%s1 + $0xd24] sm:$0xf]
    %v900 = vld [vmem:[%s1 + $0xd28] sm:$0xf]
    %v901 = vld [vmem:[%s1 + $0xd2c] sm:$0xf]
    %v902 = vld [vmem:[%s1 + $0xd30] sm:$0xf]
    %v903 = vld [vmem:[%s1 + $0xd34] sm:$0xf]
    %v904 = vld [vmem:[%s1 + $0xd38] sm:$0xf]
    %v905 = vld [vmem:[%s1 + $0xd3c] sm:$0xf]
    %v906 = vld [vmem:[%s1 + $0xd40] sm:$0xf]
    %v907 = vld [vmem:[%s1 + $0xd44] sm:$0xf]
    %v908 = vld [vmem:[%s1 + $0xd48] sm:$0xf]
    %v909 = vld [vmem:[%s1 + $0xd4c] sm:$0xf]
    %v910 = vld [vmem:[%s1 + $0xd50] sm:$0xf]
    %v911 = vld [vmem:[%s1 + $0xd54] sm:$0xf]
    %v912 = vld [vmem:[%s1 + $0xd58] sm:$0xf]
    %v913 = vld [vmem:[%s1 + $0xd5c] sm:$0xf]
    %v914 = vld [vmem:[%s1 + $0xd60] sm:$0xf]
    %v915 = vld [vmem:[%s1 + $0xd64] sm:$0xf]
    %v916 = vld [vmem:[%s1 + $0xd68] sm:$0xf]
    %v917 = vld [vmem:[%s1 + $0xd6c] sm:$0xf]
    %v918 = vld [vmem:[%s1 + $0xd70] sm:$0xf]
    %v919 = vld [vmem:[%s1 + $0xd74] sm:$0xf]
    %v920 = vld [vmem:[%s1 + $0xd78] sm:$0xf]
    %v921 = vld [vmem:[%s1 + $0xd7c] sm:$0xf]
    %v922 = vld [vmem:[%s1 + $0xd80] sm:$0xf]
    %v923 = vld [vmem:[%s1 + $0xd84] sm:$0xf]
    %v924 = vld [vmem:[%s1 + $0xd88] sm:$0xf]
    %v925 = vld [vmem:[%s1 + $0xd8c] sm:$0xf]
    %v926 = vld [vmem:[%s1 + $0xd90] sm:$0xf]
    %v927 = vld [vmem:[%s1 + $0xd94] sm:$0xf]
    %v928 = vld [vmem:[%s1 + $0xd98] sm:$0xf]
    %v929 = vld [vmem:[%s1 + $0xd9c] sm:$0xf]
    %v930 = vld [vmem:[%s1 + $0xda0] sm:$0xf]
    %v931 = vld [vmem:[%s1 + $0xda4] sm:$0xf]
    %v932 = vld [vmem:[%s1 + $0xda8] sm:$0xf]
    %v933 = vld [vmem:[%s1 + $0xdac] sm:$0xf]
    %v934 = vld [vmem:[%s1 + $0xdb0] sm:$0xf]
    %v935 = vld [vmem:[%s1 + $0xdb4] sm:$0xf]
    %v936 = vld [vmem:[%s1 + $0xdb8] sm:$0xf]
    %v937 = vld [vmem:[%s1 + $0xdbc] sm:$0xf]
    %v938 = vld [vmem:[%s1 + $0xdc0] sm:$0xf]
    %v939 = vld [vmem:[%s1 + $0xdc4] sm:$0xf]
    %v940 = vld [vmem:[%s1 + $0xdc8] sm:$0xf]
    %v941 = vld [vmem:[%s1 + $0xdcc] sm:$0xf]
    %v942 = vld [vmem:[%s1 + $0xdd0] sm:$0xf]
    %v943 = vld [vmem:[%s1 + $0xdd4] sm:$0xf]
    %v944 = vld [vmem:[%s1 + $0xdd8] sm:$0xf]
    %v945 = vld [vmem:[%s1 + $0xddc] sm:$0xf]
    %v946 = vld [vmem:[%s1 + $0xde0] sm:$0xf]
    %v947 = vld [vmem:[%s1 + $0xde4] sm:$0xf]
    %v948 = vld [vmem:[%s1 + $0xde8] sm:$0xf]
    %v949 = vld [vmem:[%s1 + $0xdec] sm:$0xf]
    %v950 = vld [vmem:[%s1 + $0xdf0] sm:$0xf]
    %v951 = vld [vmem:[%s1 + $0xdf4] sm:$0xf]
    %v952 = vld [vmem:[%s1 + $0xdf8] sm:$0xf]
    %v953 = vld [vmem:[%s1 + $0xdfc] sm:$0xf]
    %v954 = vld [vmem:[%s1 + $0xe00] sm:$0xf]
    %v955 = vld [vmem:[%s1 + $0xe04] sm:$0xf]
    %v956 = vld [vmem:[%s1 + $0xe08] sm:$0xf]
    %v957 = vld [vmem:[%s1 + $0xe0c] sm:$0xf]
    %v958 = vld [vmem:[%s1 + $0xe10] sm:$0xf]
    %v959 = vld [vmem:[%s1 + $0xe14] sm:$0xf]
    %v960 = vld [vmem:[%s1 + $0xe18] sm:$0xf]
    %v961 = vld [vmem:[%s1 + $0xe1c] sm:$0xf]
    %v962 = vld [vmem:[%s1 + $0xe20] sm:$0xf]
    %v963 = vld [vmem:[%s1 + $0xe24] sm:$0xf]
    %v964 = vld [vmem:[%s1 + $0xe28] sm:$0xf]
    %v965 = vld [vmem:[%s1 + $0xe2c] sm:$0xf]
    %v966 = vld [vmem:[%s1 + $0xe30] sm:$0xf]
    %v967 = vld [vmem:[%s1 + $0xe34] sm:$0xf]
    %v968 = vld [vmem:[%s1 + $0xe38] sm:$0xf]
    %v969 = vld [vmem:[%s1 + $0xe3c] sm:$0xf]
    %v970 = vld [vmem:[%s1 + $0xe40] sm:$0xf]
    %v971 = vld [vmem:[%s1 + $0xe44] sm:$0xf]
    %v972 = vld [vmem:[%s1 + $0xe48] sm:$0xf]
    %v973 = vld [vmem:[%s1 + $0xe4c] sm:$0xf]
    %v974 = vld [vmem:[%s1 + $0xe50] sm:$0xf]
    %v975 = vld [vmem:[%s1 + $0xe54] sm:$0xf]
    %v976 = vld [vmem:[%s1 + $0xe58] sm:$0xf]
    %v977 = vld [vmem:[%s1 + $0xe5c] sm:$0xf]
    %v978 = vld [vmem:[%s1 + $0xe60] sm:$0xf]
    %v979 = vld [vmem:[%s1 + $0xe64] sm:$0xf]
    %v980 = vld [vmem:[%s1 + $0xe68] sm:$0xf]
    %v981 = vld [vmem:[%s1 + $0xe6c] sm:$0xf]
    %v982 = vld [vmem:[%s1 + $0xe70] sm:$0xf]
    %v983 = vld [vmem:[%s1 + $0xe74] sm:$0xf]
    %v984 = vld [vmem:[%s1 + $0xe78] sm:$0xf]
    %v985 = vld [vmem:[%s1 + $0xe7c] sm:$0xf]
    %v986 = vld [vmem:[%s1 + $0xe80] sm:$0xf]
    %v987 = vld [vmem:[%s1 + $0xe84] sm:$0xf]
    %v988 = vld [vmem:[%s1 + $0xe88] sm:$0xf]
    %v989 = vld [vmem:[%s1 + $0xe8c] sm:$0xf]
    %v990 = vld [vmem:[%s1 + $0xe90] sm:$0xf]
    %v991 = vld [vmem:[%s1 + $0xe94] sm:$0xf]
    %v992 = vld [vmem:[%s1 + $0xe98] sm:$0xf]
    %v993 = vld [vmem:[%s1 + $0xe9c] sm:$0xf]
    %v994 = vld [vmem:[%s1 + $0xea0] sm:$0xf]
    %v995 = vld [vmem:[%s1 + $0xea4] sm:$0xf]
    %v996 = vld [vmem:[%s1 + $0xea8] sm:$0xf]
    %v997 = vld [vmem:[%s1 + $0xeac] sm:$0xf]
    %v998 = vld [vmem:[%s1 + $0xeb0] sm:$0xf]
    %v999 = vld [vmem:[%s1 + $0xeb4] sm:$0xf]
    %v1000 = vld [vmem:[%s1 + $0xeb8] sm:$0xf]
    %v1001 = vld [vmem:[%s1 + $0xebc] sm:$0xf]
    %v1002 = vld [vmem:[%s1 + $0xec0] sm:$0xf]
    %v1003 = vld [vmem:[%s1 + $0xec4] sm:$0xf]
    %v1004 = vld [vmem:[%s1 + $0xec8] sm:$0xf]
    %v1005 = vld [vmem:[%s1 + $0xecc] sm:$0xf]
    %v1006 = vld [vmem:[%s1 + $0xed0] sm:$0xf]
    %v1007 = vld [vmem:[%s1 + $0xed4] sm:$0xf]
    %v1008 = vld [vmem:[%s1 + $0xed8] sm:$0xf]
    %v1009 = vld [vmem:[%s1 + $0xedc] sm:$0xf]
    %v1010 = vld [vmem:[%s1 + $0xee0] sm:$0xf]
    %v1011 = vld [vmem:[%s1 + $0xee4] sm:$0xf]
    %v1012 = vld [vmem:[%s1 + $0xee8] sm:$0xf]
    %v1013 = vld [vmem:[%s1 + $0xeec] sm:$0xf]
    %v1014 = vld [vmem:[%s1 + $0xef0] sm:$0xf]
    %v1015 = vld [vmem:[%s1 + $0xef4] sm:$0xf]
    %v1016 = vld [vmem:[%s1 + $0xef8] sm:$0xf]
    %v1017 = vld [vmem:[%s1 + $0xefc] sm:$0xf]
    %v1018 = vld [vmem:[%s1 + $0xf00] sm:$0xf]
    %v1019 = vld [vmem:[%s1 + $0xf04] sm:$0xf]
    %v1020 = vld [vmem:[%s1 + $0xf08] sm:$0xf]
    %v1021 = vld [vmem:[%s1 + $0xf0c] sm:$0xf]
    %v1022 = vld [vmem:[%s1 + $0xf10] sm:$0xf]
    %v1023 = vld [vmem:[%s1 + $0xf14] sm:$0xf]
    %v1024 = vld [vmem:[%s1 + $0xf18] sm:$0xf]
    %v1025 = vld [vmem:[%s1 + $0xf1c] sm:$0xf]
    %v1026 = vld [vmem:[%s1 + $0xf20] sm:$0xf]
    %v1027 = vld [vmem:[%s1 + $0xf24] sm:$0xf]
    %v1028 = vld [vmem:[%s1 + $0xf28] sm:$0xf]
    %v1029 = vld [vmem:[%s1 + $0xf2c] sm:$0xf]
    %v1030 = vld [vmem:[%s1 + $0xf30] sm:$0xf]
    %v1031 = vld [vmem:[%s1 + $0xf34] sm:$0xf]
    %v1032 = vld [vmem:[%s1 + $0xf38] sm:$0xf]
    %v1033 = vld [vmem:[%s1 + $0xf3c] sm:$0xf]
    %v1034 = vld [vmem:[%s1 + $0xf40] sm:$0xf]
    %v1035 = vld [vmem:[%s1 + $0xf44] sm:$0xf]
    %v1036 = vld [vmem:[%s1 + $0xf48] sm:$0xf]
    %v1037 = vld [vmem:[%s1 + $0xf4c] sm:$0xf]
    %v1038 = vld [vmem:[%s1 + $0xf50] sm:$0xf]
    %v1039 = vld [vmem:[%s1 + $0xf54] sm:$0xf]
    %v1040 = vld [vmem:[%s1 + $0xf58] sm:$0xf]
    %v1041 = vld [vmem:[%s1 + $0xf5c] sm:$0xf]
    %v1042 = vld [vmem:[%s1 + $0xf60] sm:$0xf]
    %v1043 = vld [vmem:[%s1 + $0xf64] sm:$0xf]
    %v1044 = vld [vmem:[%s1 + $0xf68] sm:$0xf]
    %v1045 = vld [vmem:[%s1 + $0xf6c] sm:$0xf]
    %v1046 = vld [vmem:[%s1 + $0xf70] sm:$0xf]
    %v1047 = vld [vmem:[%s1 + $0xf74] sm:$0xf]
    %v1048 = vld [vmem:[%s1 + $0xf78] sm:$0xf]
    %v1049 = vld [vmem:[%s1 + $0xf7c] sm:$0xf]
    %v1050 = vld [vmem:[%s1 + $0xf80] sm:$0xf]
    %v1051 = vld [vmem:[%s1 + $0xf84] sm:$0xf]
    %v1052 = vld [vmem:[%s1 + $0xf88] sm:$0xf]
    %v1053 = vld [vmem:[%s1 + $0xf8c] sm:$0xf]
    %v1054 = vld [vmem:[%s1 + $0xf90] sm:$0xf]
    %v1055 = vld [vmem:[%s1 + $0xf94] sm:$0xf]
    %v1056 = vld [vmem:[%s1 + $0xf98] sm:$0xf]
    %v1057 = vld [vmem:[%s1 + $0xf9c] sm:$0xf]
    %v1058 = vld [vmem:[%s1 + $0xfa0] sm:$0xf]
    %v1059 = vld [vmem:[%s1 + $0xfa4] sm:$0xf]
    %v1060 = vld [vmem:[%s1 + $0xfa8] sm:$0xf]
    %v1061 = vld [vmem:[%s1 + $0xfac] sm:$0xf]
    %v1062 = vld [vmem:[%s1 + $0xfb0] sm:$0xf]
    %v1063 = vld [vmem:[%s1 + $0xfb4] sm:$0xf]
    %v1064 = vld [vmem:[%s1 + $0xfb8] sm:$0xf]
    %v1065 = vld [vmem:[%s1 + $0xfbc] sm:$0xf]
    %v1066 = vld [vmem:[%s1 + $0xfc0] sm:$0xf]
    %v1067 = vld [vmem:[%s1 + $0xfc4] sm:$0xf]
    %v1068 = vld [vmem:[%s1 + $0xfc8] sm:$0xf]
    %v1069 = vld [vmem:[%s1 + $0xfcc] sm:$0xf]
    %v1070 = vld [vmem:[%s1 + $0xfd0] sm:$0xf]
    %v1071 = vld [vmem:[%s1 + $0xfd4] sm:$0xf]
    %v1072 = vld [vmem:[%s1 + $0xfd8] sm:$0xf]
    %v1073 = vld [vmem:[%s1 + $0xfdc] sm:$0xf]
    %v1074 = vld [vmem:[%s1 + $0xfe0] sm:$0xf]
    %v1075 = vld [vmem:[%s1 + $0xfe4] sm:$0xf]
    %v1076 = vld [vmem:[%s1 + $0xfe8] sm:$0xf]
    %v1077 = vld [vmem:[%s1 + $0xfec] sm:$0xf]
    %v1078 = vld [vmem:[%s1 + $0xff0] sm:$0xf]
    %v1079 = vld [vmem:[%s1 + $0xff4] sm:$0xf]
    %v1080 = vld [vmem:[%s1 + $0xff8] sm:$0xf]
    %v1081 = vld [vmem:[%s1 + $0xffc] sm:$0xf]
    %v1082 = vld [vmem:[%s1 + $0x1000] sm:$0xf]
    %v1083 = vld [vmem:[%s1 + $0x1004] sm:$0xf]
    %v1084 = vld [vmem:[%s1 + $0x1008] sm:$0xf]
    %v1085 = vld [vmem:[%s1 + $0x100c] sm:$0xf]
    %v1086 = vld [vmem:[%s1 + $0x1010] sm:$0xf]
    %v1087 = vld [vmem:[%s1 + $0x1014] sm:$0xf]
    %v1088 = vld [vmem:[%s1 + $0x1018] sm:$0xf]
    %v1089 = vld [vmem:[%s1 + $0x101c] sm:$0xf]
    %v1090 = vld [vmem:[%s1 + $0x1020] sm:$0xf]
    %v1091 = vld [vmem:[%s1 + $0x1024] sm:$0xf]
    %v1092 = vld [vmem:[%s1 + $0x1028] sm:$0xf]
    %v1093 = vld [vmem:[%s1 + $0x102c] sm:$0xf]
    %v1094 = vld [vmem:[%s1 + $0x1030] sm:$0xf]
    %v1095 = vld [vmem:[%s1 + $0x1034] sm:$0xf]
    %v1096 = vld [vmem:[%s1 + $0x1038] sm:$0xf]
    %v1097 = vld [vmem:[%s1 + $0x103c] sm:$0xf]
    %v1098 = vld [vmem:[%s1 + $0x1040] sm:$0xf]
    %v1099 = vld [vmem:[%s1 + $0x1044] sm:$0xf]
    %v1100 = vld [vmem:[%s1 + $0x1048] sm:$0xf]
    %v1101 = vld [vmem:[%s1 + $0x104c] sm:$0xf]
    %v1102 = vld [vmem:[%s1 + $0x1050] sm:$0xf]
    %v1103 = vld [vmem:[%s1 + $0x1054] sm:$0xf]
    %v1104 = vld [vmem:[%s1 + $0x1058] sm:$0xf]
    %v1105 = vld [vmem:[%s1 + $0x105c] sm:$0xf]
    %v1106 = vld [vmem:[%s1 + $0x1060] sm:$0xf]
    %v1107 = vld [vmem:[%s1 + $0x1064] sm:$0xf]
    %v1108 = vld [vmem:[%s1 + $0x1068] sm:$0xf]
    %v1109 = vld [vmem:[%s1 + $0x106c] sm:$0xf]
    %v1110 = vld [vmem:[%s1 + $0x1070] sm:$0xf]
    %v1111 = vld [vmem:[%s1 + $0x1074] sm:$0xf]
    %v1112 = vld [vmem:[%s1 + $0x1078] sm:$0xf]
    %v1113 = vld [vmem:[%s1 + $0x107c] sm:$0xf]
    %v1114 = vld [vmem:[%s1 + $0x1080] sm:$0xf]
    %v1115 = vld [vmem:[%s1 + $0x1084] sm:$0xf]
    %v1116 = vld [vmem:[%s1 + $0x1088] sm:$0xf]
    %v1117 = vld [vmem:[%s1 + $0x108c] sm:$0xf]
    %v1118 = vld [vmem:[%s1 + $0x1090] sm:$0xf]
    %v1119 = vld [vmem:[%s1 + $0x1094] sm:$0xf]
    %v1120 = vld [vmem:[%s1 + $0x1098] sm:$0xf]
    %v1121 = vld [vmem:[%s1 + $0x109c] sm:$0xf]
    %v1122 = vld [vmem:[%s1 + $0x10a0] sm:$0xf]
    %v1123 = vld [vmem:[%s1 + $0x10a4] sm:$0xf]
    %v1124 = vld [vmem:[%s1 + $0x10a8] sm:$0xf]
    %v1125 = vld [vmem:[%s1 + $0x10ac] sm:$0xf]
    %v1126 = vld [vmem:[%s1 + $0x10b0] sm:$0xf]
    %v1127 = vld [vmem:[%s1 + $0x10b4] sm:$0xf]
    %v1128 = vld [vmem:[%s1 + $0x10b8] sm:$0xf]
    %v1129 = vld [vmem:[%s1 + $0x10bc] sm:$0xf]
    %v1130 = vld [vmem:[%s1 + $0x10c0] sm:$0xf]
    %v1131 = vld [vmem:[%s1 + $0x10c4] sm:$0xf]
    %v1132 = vld [vmem:[%s1 + $0x10c8] sm:$0xf]
    %v1133 = vld [vmem:[%s1 + $0x10cc] sm:$0xf]
    %v1134 = vld [vmem:[%s1 + $0x10d0] sm:$0xf]
    %v1135 = vld [vmem:[%s1 + $0x10d4] sm:$0xf]
    %v1136 = vld [vmem:[%s1 + $0x10d8] sm:$0xf]
    %v1137 = vld [vmem:[%s1 + $0x10dc] sm:$0xf]
    %v1138 = vld [vmem:[%s1 + $0x10e0] sm:$0xf]
    %v1139 = vld [vmem:[%s1 + $0x10e4] sm:$0xf]
    %v1140 = vld [vmem:[%s1 + $0x10e8] sm:$0xf]
    %v1141 = vld [vmem:[%s1 + $0x10ec] sm:$0xf]
    %v1142 = vld [vmem:[%s1 + $0x10f0] sm:$0xf]
    %v1143 = vld [vmem:[%s1 + $0x10f4] sm:$0xf]
    %v1144 = vld [vmem:[%s1 + $0x10f8] sm:$0xf]
    %v1145 = vld [vmem:[%s1 + $0x10fc] sm:$0xf]
    %v1146 = vld [vmem:[%s1 + $0x1100] sm:$0xf]
    %v1147 = vld [vmem:[%s1 + $0x1104] sm:$0xf]
    %v1148 = vld [vmem:[%s1 + $0x1108] sm:$0xf]
    %v1149 = vld [vmem:[%s1 + $0x110c] sm:$0xf]
    %v1150 = vld [vmem:[%s1 + $0x1110] sm:$0xf]
    %v1151 = vld [vmem:[%s1 + $0x1114] sm:$0xf]
    %v1152 = vld [vmem:[%s1 + $0x1118] sm:$0xf]
    %v1153 = vld [vmem:[%s1 + $0x111c] sm:$0xf]
    %v1154 = vld [vmem:[%s1 + $0x1120] sm:$0xf]
    %v1155 = vld [vmem:[%s1 + $0x1124] sm:$0xf]
    %v1156 = vld [vmem:[%s1 + $0x1128] sm:$0xf]
    %v1157 = vld [vmem:[%s1 + $0x112c] sm:$0xf]
    %v1158 = vld [vmem:[%s1 + $0x1130] sm:$0xf]
    %v1159 = vld [vmem:[%s1 + $0x1134] sm:$0xf]
    %v1160 = vld [vmem:[%s1 + $0x1138] sm:$0xf]
    %v1161 = vld [vmem:[%s1 + $0x113c] sm:$0xf]
    %v1162 = vld [vmem:[%s1 + $0x1140] sm:$0xf]
    %v1163 = vld [vmem:[%s1 + $0x1144] sm:$0xf]
    %v1164 = vld [vmem:[%s1 + $0x1148] sm:$0xf]
    %v1165 = vld [vmem:[%s1 + $0x114c] sm:$0xf]
    %v1166 = vld [vmem:[%s1 + $0x1150] sm:$0xf]
    %v1167 = vld [vmem:[%s1 + $0x1154] sm:$0xf]
    %v1168 = vld [vmem:[%s1 + $0x1158] sm:$0xf]
    %v1169 = vld [vmem:[%s1 + $0x115c] sm:$0xf]
    %v1170 = vld [vmem:[%s1 + $0x1160] sm:$0xf]
    %v1171 = vld [vmem:[%s1 + $0x1164] sm:$0xf]
    %v1172 = vld [vmem:[%s1 + $0x1168] sm:$0xf]
    %v1173 = vld [vmem:[%s1 + $0x116c] sm:$0xf]
    %v1174 = vld [vmem:[%s1 + $0x1170] sm:$0xf]
    %v1175 = vld [vmem:[%s1 + $0x1174] sm:$0xf]
    %v1176 = vld [vmem:[%s1 + $0x1178] sm:$0xf]
    %v1177 = vld [vmem:[%s1 + $0x117c] sm:$0xf]
    %v1178 = vld [vmem:[%s1 + $0x1180] sm:$0xf]
    %v1179 = vld [vmem:[%s1 + $0x1184] sm:$0xf]
    %v1180 = vld [vmem:[%s1 + $0x1188] sm:$0xf]
    %v1181 = vld [vmem:[%s1 + $0x118c] sm:$0xf]
    %v1182 = vld [vmem:[%s1 + $0x1190] sm:$0xf]
    %v1183 = vld [vmem:[%s1 + $0x1194] sm:$0xf]
    %v1184 = vld [vmem:[%s1 + $0x1198] sm:$0xf]
    %v1185 = vld [vmem:[%s1 + $0x119c] sm:$0xf]
    %v1186 = vld [vmem:[%s1 + $0x11a0] sm:$0xf]
    %v1187 = vld [vmem:[%s1 + $0x11a4] sm:$0xf]
    %v1188 = vld [vmem:[%s1 + $0x11a8] sm:$0xf]
    %v1189 = vld [vmem:[%s1 + $0x11ac] sm:$0xf]
    %v1190 = vld [vmem:[%s1 + $0x11b0] sm:$0xf]
    %v1191 = vld [vmem:[%s1 + $0x11b4] sm:$0xf]
    %v1192 = vld [vmem:[%s1 + $0x11b8] sm:$0xf]
    %v1193 = vld [vmem:[%s1 + $0x11bc] sm:$0xf]
    %v1194 = vld [vmem:[%s1 + $0x11c0] sm:$0xf]
    %v1195 = vld [vmem:[%s1 + $0x11c4] sm:$0xf]
    %v1196 = vld [vmem:[%s1 + $0x11c8] sm:$0xf]
    %v1197 = vld [vmem:[%s1 + $0x11cc] sm:$0xf]
    %v1198 = vld [vmem:[%s1 + $0x11d0] sm:$0xf]
    %v1199 = vld [vmem:[%s1 + $0x11d4] sm:$0xf]
    %v1200 = vld [vmem:[%s1 + $0x11d8] sm:$0xf]
    %v1201 = vld [vmem:[%s1 + $0x11dc] sm:$0xf]
    %v1202 = vld [vmem:[%s1 + $0x11e0] sm:$0xf]
    %v1203 = vld [vmem:[%s1 + $0x11e4] sm:$0xf]
    %v1204 = vld [vmem:[%s1 + $0x11e8] sm:$0xf]
    %v1205 = vld [vmem:[%s1 + $0x11ec] sm:$0xf]
    %v1206 = vld [vmem:[%s1 + $0x11f0] sm:$0xf]
    %v1207 = vld [vmem:[%s1 + $0x11f4] sm:$0xf]
    %v1208 = vld [vmem:[%s1 + $0x11f8] sm:$0xf]
    %v1209 = vld [vmem:[%s1 + $0x11fc] sm:$0xf]
    %v1210 = vld [vmem:[%s1 + $0x1200] sm:$0xf]
    %v1211 = vld [vmem:[%s1 + $0x1204] sm:$0xf]
    %v1212 = vld [vmem:[%s1 + $0x1208] sm:$0xf]
    %v1213 = vld [vmem:[%s1 + $0x120c] sm:$0xf]
    %v1214 = vld [vmem:[%s1 + $0x1210] sm:$0xf]
    %v1215 = vld [vmem:[%s1 + $0x1214] sm:$0xf]
    %v1216 = vld [vmem:[%s1 + $0x1218] sm:$0xf]
    %v1217 = vld [vmem:[%s1 + $0x121c] sm:$0xf]
    %v1218 = vld [vmem:[%s1 + $0x1220] sm:$0xf]
    %v1219 = vld [vmem:[%s1 + $0x1224] sm:$0xf]
    %v1220 = vld [vmem:[%s1 + $0x1228] sm:$0xf]
    %v1221 = vld [vmem:[%s1 + $0x122c] sm:$0xf]
    %v1222 = vld [vmem:[%s1 + $0x1230] sm:$0xf]
    %v1223 = vld [vmem:[%s1 + $0x1234] sm:$0xf]
    %v1224 = vld [vmem:[%s1 + $0x1238] sm:$0xf]
    %v1225 = vld [vmem:[%s1 + $0x123c] sm:$0xf]
    %v1226 = vld [vmem:[%s1 + $0x1240] sm:$0xf]
    %v1227 = vld [vmem:[%s1 + $0x1244] sm:$0xf]
    %v1228 = vld [vmem:[%s1 + $0x1248] sm:$0xf]
    %v1229 = vld [vmem:[%s1 + $0x124c] sm:$0xf]
    %v1230 = vld [vmem:[%s1 + $0x1250] sm:$0xf]
    %v1231 = vld [vmem:[%s1 + $0x1254] sm:$0xf]
    %v1232 = vld [vmem:[%s1 + $0x1258] sm:$0xf]
    %v1233 = vld [vmem:[%s1 + $0x125c] sm:$0xf]
    %v1234 = vld [vmem:[%s1 + $0x1260] sm:$0xf]
    %v1235 = vld [vmem:[%s1 + $0x1264] sm:$0xf]
    %v1236 = vld [vmem:[%s1 + $0x1268] sm:$0xf]
    %v1237 = vld [vmem:[%s1 + $0x126c] sm:$0xf]
    %v1238 = vld [vmem:[%s1 + $0x1270] sm:$0xf]
    %v1239 = vld [vmem:[%s1 + $0x1274] sm:$0xf]
    %v1240 = vld [vmem:[%s1 + $0x1278] sm:$0xf]
    %v1241 = vld [vmem:[%s1 + $0x127c] sm:$0xf]
    %v1242 = vld [vmem:[%s1 + $0x1280] sm:$0xf]
    %v1243 = vld [vmem:[%s1 + $0x1284] sm:$0xf]
    %v1244 = vld [vmem:[%s1 + $0x1288] sm:$0xf]
    %v1245 = vld [vmem:[%s1 + $0x128c] sm:$0xf]
    %v1246 = vld [vmem:[%s1 + $0x1290] sm:$0xf]
    %v1247 = vld [vmem:[%s1 + $0x1294] sm:$0xf]
    %v1248 = vld [vmem:[%s1 + $0x1298] sm:$0xf]
    %v1249 = vld [vmem:[%s1 + $0x129c] sm:$0xf]
    %v1250 = vld [vmem:[%s1 + $0x12a0] sm:$0xf]
    %v1251 = vld [vmem:[%s1 + $0x12a4] sm:$0xf]
    %v1252 = vld [vmem:[%s1 + $0x12a8] sm:$0xf]
    %v1253 = vld [vmem:[%s1 + $0x12ac] sm:$0xf]
    %v1254 = vld [vmem:[%s1 + $0x12b0] sm:$0xf]
    %v1255 = vld [vmem:[%s1 + $0x12b4] sm:$0xf]
    %v1256 = vld [vmem:[%s1 + $0x12b8] sm:$0xf]
    %v1257 = vld [vmem:[%s1 + $0x12bc] sm:$0xf]
    %v1258 = vld [vmem:[%s1 + $0x12c0] sm:$0xf]
    %v1259 = vld [vmem:[%s1 + $0x12c4] sm:$0xf]
    %v1260 = vld [vmem:[%s1 + $0x12c8] sm:$0xf]
    %v1261 = vld [vmem:[%s1 + $0x12cc] sm:$0xf]
    %v1262 = vld [vmem:[%s1 + $0x12d0] sm:$0xf]
    %v1263 = vld [vmem:[%s1 + $0x12d4] sm:$0xf]
    %v1264 = vld [vmem:[%s1 + $0x12d8] sm:$0xf]
    %v1265 = vld [vmem:[%s1 + $0x12dc] sm:$0xf]
    %v1266 = vld [vmem:[%s1 + $0x12e0] sm:$0xf]
    %v1267 = vld [vmem:[%s1 + $0x12e4] sm:$0xf]
    %v1268 = vld [vmem:[%s1 + $0x12e8] sm:$0xf]
    %v1269 = vld [vmem:[%s1 + $0x12ec] sm:$0xf]
    %v1270 = vld [vmem:[%s1 + $0x12f0] sm:$0xf]
    %v1271 = vld [vmem:[%s1 + $0x12f4] sm:$0xf]
    %v1272 = vld [vmem:[%s1 + $0x12f8] sm:$0xf]
    %v1273 = vld [vmem:[%s1 + $0x12fc] sm:$0xf]
    %v1274 = vld [vmem:[%s1 + $0x1300] sm:$0xf]
    %v1275 = vld [vmem:[%s1 + $0x1304] sm:$0xf]
    %v1276 = vld [vmem:[%s1 + $0x1308] sm:$0xf]
    %v1277 = vld [vmem:[%s1 + $0x130c] sm:$0xf]
    %v1278 = vld [vmem:[%s1 + $0x1310] sm:$0xf]
    %v1279 = vld [vmem:[%s1 + $0x1314] sm:$0xf]
    %v1280 = vld [vmem:[%s1 + $0x1318] sm:$0xf]
    %v1281 = vld [vmem:[%s1 + $0x131c] sm:$0xf]
    %v1282 = vld [vmem:[%s1 + $0x1320] sm:$0xf]
    %v1283 = vld [vmem:[%s1 + $0x1324] sm:$0xf]
    %v1284 = vld [vmem:[%s1 + $0x1328] sm:$0xf]
    %v1285 = vld [vmem:[%s1 + $0x132c] sm:$0xf]
    %v1286 = vld [vmem:[%s1 + $0x1330] sm:$0xf]
    %v1287 = vld [vmem:[%s1 + $0x1334] sm:$0xf]
    %v1288 = vld [vmem:[%s1 + $0x1338] sm:$0xf]
    %v1289 = vld [vmem:[%s1 + $0x133c] sm:$0xf]
    %v1290 = vld [vmem:[%s1 + $0x1340] sm:$0xf]
    %v1291 = vld [vmem:[%s1 + $0x1344] sm:$0xf]
    %v1292 = vld [vmem:[%s1 + $0x1348] sm:$0xf]
    %v1293 = vld [vmem:[%s1 + $0x134c] sm:$0xf]
    %v1294 = vld [vmem:[%s1 + $0x1350] sm:$0xf]
    %v1295 = vld [vmem:[%s1 + $0x1354] sm:$0xf]
    %v1296 = vld [vmem:[%s1 + $0x1358] sm:$0xf]
    %v1297 = vld [vmem:[%s1 + $0x135c] sm:$0xf]
    %v1298 = vld [vmem:[%s1 + $0x1360] sm:$0xf]
    %v1299 = vld [vmem:[%s1 + $0x1364] sm:$0xf]
    %v1300 = vld [vmem:[%s1 + $0x1368] sm:$0xf]
    %v1301 = vld [vmem:[%s1 + $0x136c] sm:$0xf]
    %v1302 = vld [vmem:[%s1 + $0x1370] sm:$0xf]
    %v1303 = vld [vmem:[%s1 + $0x1374] sm:$0xf]
    %v1304 = vld [vmem:[%s1 + $0x1378] sm:$0xf]
    %v1305 = vld [vmem:[%s1 + $0x137c] sm:$0xf]
    %v1306 = vld [vmem:[%s1 + $0x1380] sm:$0xf]
    %v1307 = vld [vmem:[%s1 + $0x1384] sm:$0xf]
    %v1308 = vld [vmem:[%s1 + $0x1388] sm:$0xf]
    %v1309 = vld [vmem:[%s1 + $0x138c] sm:$0xf]
    %v1310 = vld [vmem:[%s1 + $0x1390] sm:$0xf]
    %v1311 = vld [vmem:[%s1 + $0x1394] sm:$0xf]
    %v1312 = vld [vmem:[%s1 + $0x1398] sm:$0xf]
    %v1313 = vld [vmem:[%s1 + $0x139c] sm:$0xf]
    %v1314 = vld [vmem:[%s1 + $0x13a0] sm:$0xf]
    %v1315 = vld [vmem:[%s1 + $0x13a4] sm:$0xf]
    %v1316 = vld [vmem:[%s1 + $0x13a8] sm:$0xf]
    %v1317 = vld [vmem:[%s1 + $0x13ac] sm:$0xf]
    %v1318 = vld [vmem:[%s1 + $0x13b0] sm:$0xf]
    %v1319 = vld [vmem:[%s1 + $0x13b4] sm:$0xf]
    %v1320 = vld [vmem:[%s1 + $0x13b8] sm:$0xf]
    %v1321 = vld [vmem:[%s1 + $0x13bc] sm:$0xf]
    %v1322 = vld [vmem:[%s1 + $0x13c0] sm:$0xf]
    %v1323 = vld [vmem:[%s1 + $0x13c4] sm:$0xf]
    %v1324 = vld [vmem:[%s1 + $0x13c8] sm:$0xf]
    %v1325 = vld [vmem:[%s1 + $0x13cc] sm:$0xf]
    %v1326 = vld [vmem:[%s1 + $0x13d0] sm:$0xf]
    %v1327 = vld [vmem:[%s1 + $0x13d4] sm:$0xf]
    %v1328 = vld [vmem:[%s1 + $0x13d8] sm:$0xf]
    %v1329 = vld [vmem:[%s1 + $0x13dc] sm:$0xf]
    %v1330 = vld [vmem:[%s1 + $0x13e0] sm:$0xf]
    %v1331 = vld [vmem:[%s1 + $0x13e4] sm:$0xf]
    %v1332 = vld [vmem:[%s1 + $0x13e8] sm:$0xf]
    %v1333 = vld [vmem:[%s1 + $0x13ec] sm:$0xf]
    %v1334 = vld [vmem:[%s1 + $0x13f0] sm:$0xf]
    %v1335 = vld [vmem:[%s1 + $0x13f4] sm:$0xf]
    %v1336 = vld [vmem:[%s1 + $0x13f8] sm:$0xf]
    %v1337 = vld [vmem:[%s1 + $0x13fc] sm:$0xf]
    %v1338 = vld [vmem:[%s1 + $0x1400] sm:$0xf]
    %v1339 = vld [vmem:[%s1 + $0x1404] sm:$0xf]
    %v1340 = vld [vmem:[%s1 + $0x1408] sm:$0xf]
    %v1341 = vld [vmem:[%s1 + $0x140c] sm:$0xf]
    %v1342 = vld [vmem:[%s1 + $0x1410] sm:$0xf]
    %v1343 = vld [vmem:[%s1 + $0x1414] sm:$0xf]
    %v1344 = vld [vmem:[%s1 + $0x1418] sm:$0xf]
    %v1345 = vld [vmem:[%s1 + $0x141c] sm:$0xf]
    %v1346 = vld [vmem:[%s1 + $0x1420] sm:$0xf]
    %v1347 = vld [vmem:[%s1 + $0x1424] sm:$0xf]
    %v1348 = vld [vmem:[%s1 + $0x1428] sm:$0xf]
    %v1349 = vld [vmem:[%s1 + $0x142c] sm:$0xf]
    %v1350 = vld [vmem:[%s1 + $0x1430] sm:$0xf]
    %v1351 = vld [vmem:[%s1 + $0x1434] sm:$0xf]
    %v1352 = vld [vmem:[%s1 + $0x1438] sm:$0xf]
    %v1353 = vld [vmem:[%s1 + $0x143c] sm:$0xf]
    %v1354 = vld [vmem:[%s1 + $0x1440] sm:$0xf]
    %v1355 = vld [vmem:[%s1 + $0x1444] sm:$0xf]
    %v1356 = vld [vmem:[%s1 + $0x1448] sm:$0xf]
    %v1357 = vld [vmem:[%s1 + $0x144c] sm:$0xf]
    %v1358 = vld [vmem:[%s1 + $0x1450] sm:$0xf]
    %v1359 = vld [vmem:[%s1 + $0x1454] sm:$0xf]
    %v1360 = vld [vmem:[%s1 + $0x1458] sm:$0xf]
    %v1361 = vld [vmem:[%s1 + $0x145c] sm:$0xf]
    %v1362 = vld [vmem:[%s1 + $0x1460] sm:$0xf]
    %v1363 = vld [vmem:[%s1 + $0x1464] sm:$0xf]
    %v1364 = vld [vmem:[%s1 + $0x1468] sm:$0xf]
    %v1365 = vld [vmem:[%s1 + $0x146c] sm:$0xf]
    %v1366 = vld [vmem:[%s1 + $0x1470] sm:$0xf]
    %v1367 = vld [vmem:[%s1 + $0x1474] sm:$0xf]
    %v1368 = vld [vmem:[%s1 + $0x1478] sm:$0xf]
    %v1369 = vld [vmem:[%s1 + $0x147c] sm:$0xf]
    %v1370 = vld [vmem:[%s1 + $0x1480] sm:$0xf]
    %v1371 = vld [vmem:[%s1 + $0x1484] sm:$0xf]
    %v1372 = vld [vmem:[%s1 + $0x1488] sm:$0xf]
    %v1373 = vld [vmem:[%s1 + $0x148c] sm:$0xf]
    %v1374 = vld [vmem:[%s1 + $0x1490] sm:$0xf]
    %v1375 = vld [vmem:[%s1 + $0x1494] sm:$0xf]
    %v1376 = vld [vmem:[%s1 + $0x1498] sm:$0xf]
    %v1377 = vld [vmem:[%s1 + $0x149c] sm:$0xf]
    %v1378 = vld [vmem:[%s1 + $0x14a0] sm:$0xf]
    %v1379 = vld [vmem:[%s1 + $0x14a4] sm:$0xf]
    %v1380 = vld [vmem:[%s1 + $0x14a8] sm:$0xf]
    %v1381 = vld [vmem:[%s1 + $0x14ac] sm:$0xf]
    %v1382 = vld [vmem:[%s1 + $0x14b0] sm:$0xf]
    %v1383 = vld [vmem:[%s1 + $0x14b4] sm:$0xf]
    %v1384 = vld [vmem:[%s1 + $0x14b8] sm:$0xf]
    %v1385 = vld [vmem:[%s1 + $0x14bc] sm:$0xf]
    %v1386 = vld [vmem:[%s1 + $0x14c0] sm:$0xf]
    %v1387 = vld [vmem:[%s1 + $0x14c4] sm:$0xf]
    %v1388 = vld [vmem:[%s1 + $0x14c8] sm:$0xf]
    %v1389 = vld [vmem:[%s1 + $0x14cc] sm:$0xf]
    %v1390 = vld [vmem:[%s1 + $0x14d0] sm:$0xf]
    %v1391 = vld [vmem:[%s1 + $0x14d4] sm:$0xf]
    %v1392 = vld [vmem:[%s1 + $0x14d8] sm:$0xf]
    %v1393 = vld [vmem:[%s1 + $0x14dc] sm:$0xf]
    %v1394 = vld [vmem:[%s1 + $0x14e0] sm:$0xf]
    %v1395 = vld [vmem:[%s1 + $0x14e4] sm:$0xf]
    %v1396 = vld [vmem:[%s1 + $0x14e8] sm:$0xf]
    %v1397 = vld [vmem:[%s1 + $0x14ec] sm:$0xf]
    %v1398 = vld [vmem:[%s1 + $0x14f0] sm:$0xf]
    %v1399 = vld [vmem:[%s1 + $0x14f4] sm:$0xf]
    %v1400 = vld [vmem:[%s1 + $0x14f8] sm:$0xf]
    %v1401 = vld [vmem:[%s1 + $0x14fc] sm:$0xf]
    %v1402 = vld [vmem:[%s1 + $0x1500] sm:$0xf]
    %v1403 = vld [vmem:[%s1 + $0x1504] sm:$0xf]
    %v1404 = vld [vmem:[%s1 + $0x1508] sm:$0xf]
    %v1405 = vld [vmem:[%s1 + $0x150c] sm:$0xf]
    %v1406 = vld [vmem:[%s1 + $0x1510] sm:$0xf]
    %v1407 = vld [vmem:[%s1 + $0x1514] sm:$0xf]
    %v1408 = vld [vmem:[%s1 + $0x1518] sm:$0xf]
    %v1409 = vld [vmem:[%s1 + $0x151c] sm:$0xf]
    %v1410 = vld [vmem:[%s1 + $0x1520] sm:$0xf]
    %v1411 = vld [vmem:[%s1 + $0x1524] sm:$0xf]
    %v1412 = vld [vmem:[%s1 + $0x1528] sm:$0xf]
    %v1413 = vld [vmem:[%s1 + $0x152c] sm:$0xf]
    %v1414 = vld [vmem:[%s1 + $0x1530] sm:$0xf]
    %v1415 = vld [vmem:[%s1 + $0x1534] sm:$0xf]
    %v1416 = vld [vmem:[%s1 + $0x1538] sm:$0xf]
    %v1417 = vld [vmem:[%s1 + $0x153c] sm:$0xf]
    %v1418 = vld [vmem:[%s1 + $0x1540] sm:$0xf]
    %v1419 = vld [vmem:[%s1 + $0x1544] sm:$0xf]
    %v1420 = vld [vmem:[%s1 + $0x1548] sm:$0xf]
    %v1421 = vld [vmem:[%s1 + $0x154c] sm:$0xf]
    %v1422 = vld [vmem:[%s1 + $0x1550] sm:$0xf]
    %v1423 = vld [vmem:[%s1 + $0x1554] sm:$0xf]
    %v1424 = vld [vmem:[%s1 + $0x1558] sm:$0xf]
    %v1425 = vld [vmem:[%s1 + $0x155c] sm:$0xf]
    %v1426 = vld [vmem:[%s1 + $0x1560] sm:$0xf]
    %v1427 = vld [vmem:[%s1 + $0x1564] sm:$0xf]
    %v1428 = vld [vmem:[%s1 + $0x1568] sm:$0xf]
    %v1429 = vld [vmem:[%s1 + $0x156c] sm:$0xf]
    %v1430 = vld [vmem:[%s1 + $0x1570] sm:$0xf]
    %v1431 = vld [vmem:[%s1 + $0x1574] sm:$0xf]
    %v1432 = vld [vmem:[%s1 + $0x1578] sm:$0xf]
    %v1433 = vld [vmem:[%s1 + $0x157c] sm:$0xf]
    %v1434 = vld [vmem:[%s1 + $0x1580] sm:$0xf]
    %v1435 = vld [vmem:[%s1 + $0x1584] sm:$0xf]
    %v1436 = vld [vmem:[%s1 + $0x1588] sm:$0xf]
    %v1437 = vld [vmem:[%s1 + $0x158c] sm:$0xf]
    %v1438 = vld [vmem:[%s1 + $0x1590] sm:$0xf]
    %v1439 = vld [vmem:[%s1 + $0x1594] sm:$0xf]
    %v1440 = vld [vmem:[%s1 + $0x1598] sm:$0xf]
    %v1441 = vld [vmem:[%s1 + $0x159c] sm:$0xf]
    %v1442 = vld [vmem:[%s1 + $0x15a0] sm:$0xf]
    %v1443 = vld [vmem:[%s1 + $0x15a4] sm:$0xf]
    %v1444 = vld [vmem:[%s1 + $0x15a8] sm:$0xf]
    %v1445 = vld [vmem:[%s1 + $0x15ac] sm:$0xf]
    %v1446 = vld [vmem:[%s1 + $0x15b0] sm:$0xf]
    %v1447 = vld [vmem:[%s1 + $0x15b4] sm:$0xf]
    %v1448 = vld [vmem:[%s1 + $0x15b8] sm:$0xf]
    %v1449 = vld [vmem:[%s1 + $0x15bc] sm:$0xf]
    %v1450 = vld [vmem:[%s1 + $0x15c0] sm:$0xf]
    %v1451 = vld [vmem:[%s1 + $0x15c4] sm:$0xf]
    %v1452 = vld [vmem:[%s1 + $0x15c8] sm:$0xf]
    %v1453 = vld [vmem:[%s1 + $0x15cc] sm:$0xf]
    %v1454 = vld [vmem:[%s1 + $0x15d0] sm:$0xf]
    %v1455 = vld [vmem:[%s1 + $0x15d4] sm:$0xf]
    %v1456 = vld [vmem:[%s1 + $0x15d8] sm:$0xf]
    %v1457 = vld [vmem:[%s1 + $0x15dc] sm:$0xf]
    %v1458 = vld [vmem:[%s1 + $0x15e0] sm:$0xf]
    %v1459 = vld [vmem:[%s1 + $0x15e4] sm:$0xf]
    %v1460 = vld [vmem:[%s1 + $0x15e8] sm:$0xf]
    %v1461 = vld [vmem:[%s1 + $0x15ec] sm:$0xf]
    %v1462 = vld [vmem:[%s1 + $0x15f0] sm:$0xf]
    %v1463 = vld [vmem:[%s1 + $0x15f4] sm:$0xf]
    %v1464 = vld [vmem:[%s1 + $0x15f8] sm:$0xf]
    %v1465 = vld [vmem:[%s1 + $0x15fc] sm:$0xf]
    %v1466 = vld [vmem:[%s1 + $0x1600] sm:$0xf]
    %v1467 = vld [vmem:[%s1 + $0x1604] sm:$0xf]
    %v1468 = vld [vmem:[%s1 + $0x1608] sm:$0xf]
    %v1469 = vld [vmem:[%s1 + $0x160c] sm:$0xf]
    %v1470 = vld [vmem:[%s1 + $0x1610] sm:$0xf]
    %v1471 = vld [vmem:[%s1 + $0x1614] sm:$0xf]
    %v1472 = vld [vmem:[%s1 + $0x1618] sm:$0xf]
    %v1473 = vld [vmem:[%s1 + $0x161c] sm:$0xf]
    %v1474 = vld [vmem:[%s1 + $0x1620] sm:$0xf]
    %v1475 = vld [vmem:[%s1 + $0x1624] sm:$0xf]
    %v1476 = vld [vmem:[%s1 + $0x1628] sm:$0xf]
    %v1477 = vld [vmem:[%s1 + $0x162c] sm:$0xf]
    %v1478 = vld [vmem:[%s1 + $0x1630] sm:$0xf]
    %v1479 = vld [vmem:[%s1 + $0x1634] sm:$0xf]
    %v1480 = vld [vmem:[%s1 + $0x1638] sm:$0xf]
    %v1481 = vld [vmem:[%s1 + $0x163c] sm:$0xf]
    %v1482 = vld [vmem:[%s1 + $0x1640] sm:$0xf]
    %v1483 = vld [vmem:[%s1 + $0x1644] sm:$0xf]
    %v1484 = vld [vmem:[%s1 + $0x1648] sm:$0xf]
    %v1485 = vld [vmem:[%s1 + $0x164c] sm:$0xf]
    %v1486 = vld [vmem:[%s1 + $0x1650] sm:$0xf]
    %v1487 = vld [vmem:[%s1 + $0x1654] sm:$0xf]
    %v1488 = vld [vmem:[%s1 + $0x1658] sm:$0xf]
    %v1489 = vld [vmem:[%s1 + $0x165c] sm:$0xf]
    %v1490 = vld [vmem:[%s1 + $0x1660] sm:$0xf]
    %v1491 = vld [vmem:[%s1 + $0x1664] sm:$0xf]
    %v1492 = vld [vmem:[%s1 + $0x1668] sm:$0xf]
    %v1493 = vld [vmem:[%s1 + $0x166c] sm:$0xf]
    %v1494 = vld [vmem:[%s1 + $0x1670] sm:$0xf]
    %v1495 = vld [vmem:[%s1 + $0x1674] sm:$0xf]
    %v1496 = vld [vmem:[%s1 + $0x1678] sm:$0xf]
    %v1497 = vld [vmem:[%s1 + $0x167c] sm:$0xf]
    %v1498 = vld [vmem:[%s1 + $0x1680] sm:$0xf]
    %v1499 = vld [vmem:[%s1 + $0x1684] sm:$0xf]
    %v1500 = vld [vmem:[%s1 + $0x1688] sm:$0xf]
    %v1501 = vld [vmem:[%s1 + $0x168c] sm:$0xf]
    %v1502 = vld [vmem:[%s1 + $0x1690] sm:$0xf]
    %v1503 = vld [vmem:[%s1 + $0x1694] sm:$0xf]
    %v1504 = vld [vmem:[%s1 + $0x1698] sm:$0xf]
    %v1505 = vld [vmem:[%s1 + $0x169c] sm:$0xf]
    %v1506 = vld [vmem:[%s1 + $0x16a0] sm:$0xf]
    %v1507 = vld [vmem:[%s1 + $0x16a4] sm:$0xf]
    %v1508 = vld [vmem:[%s1 + $0x16a8] sm:$0xf]
    %v1509 = vld [vmem:[%s1 + $0x16ac] sm:$0xf]
    %v1510 = vld [vmem:[%s1 + $0x16b0] sm:$0xf]
    %v1511 = vld [vmem:[%s1 + $0x16b4] sm:$0xf]
    %v1512 = vld [vmem:[%s1 + $0x16b8] sm:$0xf]
    %v1513 = vld [vmem:[%s1 + $0x16bc] sm:$0xf]
    %v1514 = vld [vmem:[%s1 + $0x16c0] sm:$0xf]
    %v1515 = vld [vmem:[%s1 + $0x16c4] sm:$0xf]
    %v1516 = vld [vmem:[%s1 + $0x16c8] sm:$0xf]
    %v1517 = vld [vmem:[%s1 + $0x16cc] sm:$0xf]
    %v1518 = vld [vmem:[%s1 + $0x16d0] sm:$0xf]
    %v1519 = vld [vmem:[%s1 + $0x16d4] sm:$0xf]
    %v1520 = vld [vmem:[%s1 + $0x16d8] sm:$0xf]
    %v1521 = vld [vmem:[%s1 + $0x16dc] sm:$0xf]
    %v1522 = vld [vmem:[%s1 + $0x16e0] sm:$0xf]
    %v1523 = vld [vmem:[%s1 + $0x16e4] sm:$0xf]
    %v1524 = vld [vmem:[%s1 + $0x16e8] sm:$0xf]
    %v1525 = vld [vmem:[%s1 + $0x16ec] sm:$0xf]
    %v1526 = vld [vmem:[%s1 + $0x16f0] sm:$0xf]
    %v1527 = vld [vmem:[%s1 + $0x16f4] sm:$0xf]
    %v1528 = vld [vmem:[%s1 + $0x16f8] sm:$0xf]
    %v1529 = vld [vmem:[%s1 + $0x16fc] sm:$0xf]
    %v1530 = vld [vmem:[%s1 + $0x1700] sm:$0xf]
    %v1531 = vld [vmem:[%s1 + $0x1704] sm:$0xf]
    %v1532 = vld [vmem:[%s1 + $0x1708] sm:$0xf]
    %v1533 = vld [vmem:[%s1 + $0x170c] sm:$0xf]
    %v1534 = vld [vmem:[%s1 + $0x1710] sm:$0xf]
    %v1535 = vld [vmem:[%s1 + $0x1714] sm:$0xf]
    %v1536 = vld [vmem:[%s1 + $0x1718] sm:$0xf]
    %v1537 = vld [vmem:[%s1 + $0x171c] sm:$0xf]
    %v1538 = vld [vmem:[%s1 + $0x1720] sm:$0xf]
    %v1539 = vld [vmem:[%s1 + $0x1724] sm:$0xf]
    %v1540 = vld [vmem:[%s1 + $0x1728] sm:$0xf]
    %v1541 = vld [vmem:[%s1 + $0x172c] sm:$0xf]
    %v1542 = vld [vmem:[%s1 + $0x1730] sm:$0xf]
    %v1543 = vld [vmem:[%s1 + $0x1734] sm:$0xf]
    %v1544 = vld [vmem:[%s1 + $0x1738] sm:$0xf]
    %v1545 = vld [vmem:[%s1 + $0x173c] sm:$0xf]
    %v1546 = vld [vmem:[%s1 + $0x1740] sm:$0xf]
    %v1547 = vld [vmem:[%s1 + $0x1744] sm:$0xf]
    %v1548 = vld [vmem:[%s1 + $0x1748] sm:$0xf]
    %v1549 = vld [vmem:[%s1 + $0x174c] sm:$0xf]
    %v1550 = vld [vmem:[%s1 + $0x1750] sm:$0xf]
    %v1551 = vld [vmem:[%s1 + $0x1754] sm:$0xf]
    %v1552 = vld [vmem:[%s1 + $0x1758] sm:$0xf]
    %v1553 = vld [vmem:[%s1 + $0x175c] sm:$0xf]
    %v1554 = vld [vmem:[%s1 + $0x1760] sm:$0xf]
    %v1555 = vld [vmem:[%s1 + $0x1764] sm:$0xf]
    %v1556 = vld [vmem:[%s1 + $0x1768] sm:$0xf]
    %v1557 = vld [vmem:[%s1 + $0x176c] sm:$0xf]
    %v1558 = vld [vmem:[%s1 + $0x1770] sm:$0xf]
    %v1559 = vld [vmem:[%s1 + $0x1774] sm:$0xf]
    %v1560 = vld [vmem:[%s1 + $0x1778] sm:$0xf]
    %v1561 = vld [vmem:[%s1 + $0x177c] sm:$0xf]
    %v1562 = vld [vmem:[%s1 + $0x1780] sm:$0xf]
    %v1563 = vld [vmem:[%s1 + $0x1784] sm:$0xf]
    %v1564 = vld [vmem:[%s1 + $0x1788] sm:$0xf]
    %v1565 = vld [vmem:[%s1 + $0x178c] sm:$0xf]
    %v1566 = vld [vmem:[%s1 + $0x1790] sm:$0xf]
    %v1567 = vld [vmem:[%s1 + $0x1794] sm:$0xf]
    %v1568 = vld [vmem:[%s1 + $0x1798] sm:$0xf]
    %v1569 = vld [vmem:[%s1 + $0x179c] sm:$0xf]
    %v1570 = vld [vmem:[%s1 + $0x17a0] sm:$0xf]
    %v1571 = vld [vmem:[%s1 + $0x17a4] sm:$0xf]
    %v1572 = vld [vmem:[%s1 + $0x17a8] sm:$0xf]
    %v1573 = vld [vmem:[%s1 + $0x17ac] sm:$0xf]
    %v1574 = vld [vmem:[%s1 + $0x17b0] sm:$0xf]
    %v1575 = vld [vmem:[%s1 + $0x17b4] sm:$0xf]
    %v1576 = vld [vmem:[%s1 + $0x17b8] sm:$0xf]
    %v1577 = vld [vmem:[%s1 + $0x17bc] sm:$0xf]
    %v1578 = vld [vmem:[%s1 + $0x17c0] sm:$0xf]
    %v1579 = vld [vmem:[%s1 + $0x17c4] sm:$0xf]
    %v1580 = vld [vmem:[%s1 + $0x17c8] sm:$0xf]
    %v1581 = vld [vmem:[%s1 + $0x17cc] sm:$0xf]
    %v1582 = vld [vmem:[%s1 + $0x17d0] sm:$0xf]
    %v1583 = vld [vmem:[%s1 + $0x17d4] sm:$0xf]
    %v1584 = vld [vmem:[%s1 + $0x17d8] sm:$0xf]
    %v1585 = vld [vmem:[%s1 + $0x17dc] sm:$0xf]
    %v1586 = vld [vmem:[%s1 + $0x17e0] sm:$0xf]
    %v1587 = vld [vmem:[%s1 + $0x17e4] sm:$0xf]
    %v1588 = vld [vmem:[%s1 + $0x17e8] sm:$0xf]
    %v1589 = vld [vmem:[%s1 + $0x17ec] sm:$0xf]
    %v1590 = vld [vmem:[%s1 + $0x17f0] sm:$0xf]
    %v1591 = vld [vmem:[%s1 + $0x17f4] sm:$0xf]
    %v1592 = vld [vmem:[%s1 + $0x17f8] sm:$0xf]
    %v1593 = vld [vmem:[%s1 + $0x17fc] sm:$0xf]
    %v1594 = vld [vmem:[%s1 + $0x1800] sm:$0xf]
    %v1595 = vld [vmem:[%s1 + $0x1804] sm:$0xf]
    %v1596 = vld [vmem:[%s1 + $0x1808] sm:$0xf]
    %v1597 = vld [vmem:[%s1 + $0x180c] sm:$0xf]
    %v1598 = vld [vmem:[%s1 + $0x1810] sm:$0xf]
    %v1599 = vld [vmem:[%s1 + $0x1814] sm:$0xf]
    %v1600 = vld [vmem:[%s1 + $0x1818] sm:$0xf]
    %v1601 = vld [vmem:[%s1 + $0x181c] sm:$0xf]
    %v1602 = vld [vmem:[%s1 + $0x1820] sm:$0xf]
    %v1603 = vld [vmem:[%s1 + $0x1824] sm:$0xf]
    %v1604 = vld [vmem:[%s1 + $0x1828] sm:$0xf]
    %v1605 = vld [vmem:[%s1 + $0x182c] sm:$0xf]
    %v1606 = vld [vmem:[%s1 + $0x1830] sm:$0xf]
    %v1607 = vld [vmem:[%s1 + $0x1834] sm:$0xf]
    %v1608 = vld [vmem:[%s1 + $0x1838] sm:$0xf]
    %v1609 = vld [vmem:[%s1 + $0x183c] sm:$0xf]
    %v1610 = vld [vmem:[%s1 + $0x1840] sm:$0xf]
    %v1611 = vld [vmem:[%s1 + $0x1844] sm:$0xf]
    %v1612 = vld [vmem:[%s1 + $0x1848] sm:$0xf]
    %v1613 = vld [vmem:[%s1 + $0x184c] sm:$0xf]
    %v1614 = vld [vmem:[%s1 + $0x1850] sm:$0xf]
    %v1615 = vld [vmem:[%s1 + $0x1854] sm:$0xf]
    %v1616 = vld [vmem:[%s1 + $0x1858] sm:$0xf]
    %v1617 = vld [vmem:[%s1 + $0x185c] sm:$0xf]
    %v1618 = vld [vmem:[%s1 + $0x1860] sm:$0xf]
    %v1619 = vld [vmem:[%s1 + $0x1864] sm:$0xf]
    %v1620 = vld [vmem:[%s1 + $0x1868] sm:$0xf]
    %v1621 = vld [vmem:[%s1 + $0x186c] sm:$0xf]
    %v1622 = vld [vmem:[%s1 + $0x1870] sm:$0xf]
    %v1623 = vld [vmem:[%s1 + $0x1874] sm:$0xf]
    %v1624 = vld [vmem:[%s1 + $0x1878] sm:$0xf]
    %v1625 = vld [vmem:[%s1 + $0x187c] sm:$0xf]
    %v1626 = vld [vmem:[%s1 + $0x1880] sm:$0xf]
    %v1627 = vld [vmem:[%s1 + $0x1884] sm:$0xf]
    %v1628 = vld [vmem:[%s1 + $0x1888] sm:$0xf]
    %v1629 = vld [vmem:[%s1 + $0x188c] sm:$0xf]
    %v1630 = vld [vmem:[%s1 + $0x1890] sm:$0xf]
    %v1631 = vld [vmem:[%s1 + $0x1894] sm:$0xf]
    %v1632 = vld [vmem:[%s1 + $0x1898] sm:$0xf]
    %v1633 = vld [vmem:[%s1 + $0x189c] sm:$0xf]
    %v1634 = vld [vmem:[%s1 + $0x18a0] sm:$0xf]
    %v1635 = vld [vmem:[%s1 + $0x18a4] sm:$0xf]
    %v1636 = vld [vmem:[%s1 + $0x18a8] sm:$0xf]
    %v1637 = vld [vmem:[%s1 + $0x18ac] sm:$0xf]
    %v1638 = vld [vmem:[%s1 + $0x18b0] sm:$0xf]
    %v1639 = vld [vmem:[%s1 + $0x18b4] sm:$0xf]
    %v1640 = vld [vmem:[%s1 + $0x18b8] sm:$0xf]
    %v1641 = vld [vmem:[%s1 + $0x18bc] sm:$0xf]
    %v1642 = vld [vmem:[%s1 + $0x18c0] sm:$0xf]
    %v1643 = vld [vmem:[%s1 + $0x18c4] sm:$0xf]
    %v1644 = vld [vmem:[%s1 + $0x18c8] sm:$0xf]
    %v1645 = vld [vmem:[%s1 + $0x18cc] sm:$0xf]
    %v1646 = vld [vmem:[%s1 + $0x18d0] sm:$0xf]
    %v1647 = vld [vmem:[%s1 + $0x18d4] sm:$0xf]
    %v1648 = vld [vmem:[%s1 + $0x18d8] sm:$0xf]
    %v1649 = vld [vmem:[%s1 + $0x18dc] sm:$0xf]
    %v1650 = vld [vmem:[%s1 + $0x18e0] sm:$0xf]
    %v1651 = vld [vmem:[%s1 + $0x18e4] sm:$0xf]
    %v1652 = vld [vmem:[%s1 + $0x18e8] sm:$0xf]
    %v1653 = vld [vmem:[%s1 + $0x18ec] sm:$0xf]
    %v1654 = vld [vmem:[%s1 + $0x18f0] sm:$0xf]
    %v1655 = vld [vmem:[%s1 + $0x18f4] sm:$0xf]
    %v1656 = vld [vmem:[%s1 + $0x18f8] sm:$0xf]
    %v1657 = vld [vmem:[%s1 + $0x18fc] sm:$0xf]
    %v1658 = vld [vmem:[%s1 + $0x1900] sm:$0xf]
    %v1659 = vld [vmem:[%s1 + $0x1904] sm:$0xf]
    %v1660 = vld [vmem:[%s1 + $0x1908] sm:$0xf]
    %v1661 = vld [vmem:[%s1 + $0x190c] sm:$0xf]
    %v1662 = vld [vmem:[%s1 + $0x1910] sm:$0xf]
    %v1663 = vld [vmem:[%s1 + $0x1914] sm:$0xf]
    %v1664 = vld [vmem:[%s1 + $0x1918] sm:$0xf]
    %v1665 = vld [vmem:[%s1 + $0x191c] sm:$0xf]
    %v1666 = vld [vmem:[%s1 + $0x1920] sm:$0xf]
    %v1667 = vld [vmem:[%s1 + $0x1924] sm:$0xf]
    %v1668 = vld [vmem:[%s1 + $0x1928] sm:$0xf]
    %v1669 = vld [vmem:[%s1 + $0x192c] sm:$0xf]
    %v1670 = vld [vmem:[%s1 + $0x1930] sm:$0xf]
    %v1671 = vld [vmem:[%s1 + $0x1934] sm:$0xf]
    %v1672 = vld [vmem:[%s1 + $0x1938] sm:$0xf]
    %v1673 = vld [vmem:[%s1 + $0x193c] sm:$0xf]
    %v1674 = vld [vmem:[%s1 + $0x1940] sm:$0xf]
    %v1675 = vld [vmem:[%s1 + $0x1944] sm:$0xf]
    %v1676 = vld [vmem:[%s1 + $0x1948] sm:$0xf]
    %v1677 = vld [vmem:[%s1 + $0x194c] sm:$0xf]
    %v1678 = vld [vmem:[%s1 + $0x1950] sm:$0xf]
    %v1679 = vld [vmem:[%s1 + $0x1954] sm:$0xf]
    %v1680 = vld [vmem:[%s1 + $0x1958] sm:$0xf]
    %v1681 = vld [vmem:[%s1 + $0x195c] sm:$0xf]
    %v1682 = vld [vmem:[%s1 + $0x1960] sm:$0xf]
    %v1683 = vld [vmem:[%s1 + $0x1964] sm:$0xf]
    %v1684 = vld [vmem:[%s1 + $0x1968] sm:$0xf]
    %v1685 = vld [vmem:[%s1 + $0x196c] sm:$0xf]
    %v1686 = vld [vmem:[%s1 + $0x1970] sm:$0xf]
    %v1687 = vld [vmem:[%s1 + $0x1974] sm:$0xf]
    %v1688 = vld [vmem:[%s1 + $0x1978] sm:$0xf]
    %v1689 = vld [vmem:[%s1 + $0x197c] sm:$0xf]
    %v1690 = vld [vmem:[%s1 + $0x1980] sm:$0xf]
    %v1691 = vld [vmem:[%s1 + $0x1984] sm:$0xf]
    %v1692 = vld [vmem:[%s1 + $0x1988] sm:$0xf]
    %v1693 = vld [vmem:[%s1 + $0x198c] sm:$0xf]
    %v1694 = vld [vmem:[%s1 + $0x1990] sm:$0xf]
    %v1695 = vld [vmem:[%s1 + $0x1994] sm:$0xf]
    %v1696 = vld [vmem:[%s1 + $0x1998] sm:$0xf]
    %v1697 = vld [vmem:[%s1 + $0x199c] sm:$0xf]
    %v1698 = vld [vmem:[%s1 + $0x19a0] sm:$0xf]
    %v1699 = vld [vmem:[%s1 + $0x19a4] sm:$0xf]
    %v1700 = vld [vmem:[%s1 + $0x19a8] sm:$0xf]
    %v1701 = vld [vmem:[%s1 + $0x19ac] sm:$0xf]
    %v1702 = vld [vmem:[%s1 + $0x19b0] sm:$0xf]
    %v1703 = vld [vmem:[%s1 + $0x19b4] sm:$0xf]
    %v1704 = vld [vmem:[%s1 + $0x19b8] sm:$0xf]
    %v1705 = vld [vmem:[%s1 + $0x19bc] sm:$0xf]
    %v1706 = vld [vmem:[%s1 + $0x19c0] sm:$0xf]
    %v1707 = vld [vmem:[%s1 + $0x19c4] sm:$0xf]
    %v1708 = vld [vmem:[%s1 + $0x19c8] sm:$0xf]
    %v1709 = vld [vmem:[%s1 + $0x19cc] sm:$0xf]
    %v1710 = vld [vmem:[%s1 + $0x19d0] sm:$0xf]
    %v1711 = vld [vmem:[%s1 + $0x19d4] sm:$0xf]
    %v1712 = vld [vmem:[%s1 + $0x19d8] sm:$0xf]
    %v1713 = vld [vmem:[%s1 + $0x19dc] sm:$0xf]
    %v1714 = vld [vmem:[%s1 + $0x19e0] sm:$0xf]
    %v1715 = vld [vmem:[%s1 + $0x19e4] sm:$0xf]
    %v1716 = vld [vmem:[%s1 + $0x19e8] sm:$0xf]
    %v1717 = vld [vmem:[%s1 + $0x19ec] sm:$0xf]
    %v1718 = vld [vmem:[%s1 + $0x19f0] sm:$0xf]
    %v1719 = vld [vmem:[%s1 + $0x19f4] sm:$0xf]
    %v1720 = vld [vmem:[%s1 + $0x19f8] sm:$0xf]
    %v1721 = vld [vmem:[%s1 + $0x19fc] sm:$0xf]
    %v1722 = vld [vmem:[%s1 + $0x1a00] sm:$0xf]
    %v1723 = vld [vmem:[%s1 + $0x1a04] sm:$0xf]
    %v1724 = vld [vmem:[%s1 + $0x1a08] sm:$0xf]
    %v1725 = vld [vmem:[%s1 + $0x1a0c] sm:$0xf]
    %v1726 = vld [vmem:[%s1 + $0x1a10] sm:$0xf]
    %v1727 = vld [vmem:[%s1 + $0x1a14] sm:$0xf]
    %v1728 = vld [vmem:[%s1 + $0x1a18] sm:$0xf]
    %v1729 = vld [vmem:[%s1 + $0x1a1c] sm:$0xf]
    %v1730 = vld [vmem:[%s1 + $0x1a20] sm:$0xf]
    %v1731 = vld [vmem:[%s1 + $0x1a24] sm:$0xf]
    %v1732 = vld [vmem:[%s1 + $0x1a28] sm:$0xf]
    %v1733 = vld [vmem:[%s1 + $0x1a2c] sm:$0xf]
    %v1734 = vld [vmem:[%s1 + $0x1a30] sm:$0xf]
    %v1735 = vld [vmem:[%s1 + $0x1a34] sm:$0xf]
    %v1736 = vld [vmem:[%s1 + $0x1a38] sm:$0xf]
    %v1737 = vld [vmem:[%s1 + $0x1a3c] sm:$0xf]
    %v1738 = vld [vmem:[%s1 + $0x1a40] sm:$0xf]
    %v1739 = vld [vmem:[%s1 + $0x1a44] sm:$0xf]
    %v1740 = vld [vmem:[%s1 + $0x1a48] sm:$0xf]
    %v1741 = vld [vmem:[%s1 + $0x1a4c] sm:$0xf]
    %v1742 = vld [vmem:[%s1 + $0x1a50] sm:$0xf]
    %v1743 = vld [vmem:[%s1 + $0x1a54] sm:$0xf]
    %v1744 = vld [vmem:[%s1 + $0x1a58] sm:$0xf]
    %v1745 = vld [vmem:[%s1 + $0x1a5c] sm:$0xf]
    %v1746 = vld [vmem:[%s1 + $0x1a60] sm:$0xf]
    %v1747 = vld [vmem:[%s1 + $0x1a64] sm:$0xf]
    %v1748 = vld [vmem:[%s1 + $0x1a68] sm:$0xf]
    %v1749 = vld [vmem:[%s1 + $0x1a6c] sm:$0xf]
    %v1750 = vld [vmem:[%s1 + $0x1a70] sm:$0xf]
    %v1751 = vld [vmem:[%s1 + $0x1a74] sm:$0xf]
    %v1752 = vld [vmem:[%s1 + $0x1a78] sm:$0xf]
    %v1753 = vld [vmem:[%s1 + $0x1a7c] sm:$0xf]
    %v1754 = vld [vmem:[%s1 + $0x1a80] sm:$0xf]
    %v1755 = vld [vmem:[%s1 + $0x1a84] sm:$0xf]
    %v1756 = vld [vmem:[%s1 + $0x1a88] sm:$0xf]
    %v1757 = vld [vmem:[%s1 + $0x1a8c] sm:$0xf]
    %v1758 = vld [vmem:[%s1 + $0x1a90] sm:$0xf]
    %v1759 = vld [vmem:[%s1 + $0x1a94] sm:$0xf]
    %v1760 = vld [vmem:[%s1 + $0x1a98] sm:$0xf]
    %v1761 = vld [vmem:[%s1 + $0x1a9c] sm:$0xf]
    %v1762 = vld [vmem:[%s1 + $0x1aa0] sm:$0xf]
    %v1763 = vld [vmem:[%s1 + $0x1aa4] sm:$0xf]
    %v1764 = vld [vmem:[%s1 + $0x1aa8] sm:$0xf]
    %v1765 = vld [vmem:[%s1 + $0x1aac] sm:$0xf]
    %v1766 = vld [vmem:[%s1 + $0x1ab0] sm:$0xf]
    %v1767 = vld [vmem:[%s1 + $0x1ab4] sm:$0xf]
    %v1768 = vld [vmem:[%s1 + $0x1ab8] sm:$0xf]
    %v1769 = vld [vmem:[%s1 + $0x1abc] sm:$0xf]
    %v1770 = vld [vmem:[%s1 + $0x1ac0] sm:$0xf]
    %v1771 = vld [vmem:[%s1 + $0x1ac4] sm:$0xf]
    %v1772 = vld [vmem:[%s1 + $0x1ac8] sm:$0xf]
    %v1773 = vld [vmem:[%s1 + $0x1acc] sm:$0xf]
    %v1774 = vld [vmem:[%s1 + $0x1ad0] sm:$0xf]
    %v1775 = vld [vmem:[%s1 + $0x1ad4] sm:$0xf]
    %v1776 = vld [vmem:[%s1 + $0x1ad8] sm:$0xf]
    %v1777 = vld [vmem:[%s1 + $0x1adc] sm:$0xf]
    %v1778 = vld [vmem:[%s1 + $0x1ae0] sm:$0xf]
    %v1779 = vld [vmem:[%s1 + $0x1ae4] sm:$0xf]
    %v1780 = vld [vmem:[%s1 + $0x1ae8] sm:$0xf]
    %v1781 = vld [vmem:[%s1 + $0x1aec] sm:$0xf]
    %v1782 = vld [vmem:[%s1 + $0x1af0] sm:$0xf]
    %v1783 = vld [vmem:[%s1 + $0x1af4] sm:$0xf]
    %v1784 = vld [vmem:[%s1 + $0x1af8] sm:$0xf]
    %v1785 = vld [vmem:[%s1 + $0x1afc] sm:$0xf]
    %v1786 = vld [vmem:[%s1 + $0x1b00] sm:$0xf]
    %v1787 = vld [vmem:[%s1 + $0x1b04] sm:$0xf]
    %v1788 = vld [vmem:[%s1 + $0x1b08] sm:$0xf]
    %v1789 = vld [vmem:[%s1 + $0x1b0c] sm:$0xf]
    %v1790 = vld [vmem:[%s1 + $0x1b10] sm:$0xf]
    %v1791 = vld [vmem:[%s1 + $0x1b14] sm:$0xf]
    %v1792 = vld [vmem:[%s1 + $0x1b18] sm:$0xf]
    %v1793 = vld [vmem:[%s1 + $0x1b1c] sm:$0xf]
    %v1794 = vld [vmem:[%s1 + $0x1b20] sm:$0xf]
    %v1795 = vld [vmem:[%s1 + $0x1b24] sm:$0xf]
    %v1796 = vld [vmem:[%s1 + $0x1b28] sm:$0xf]
    %v1797 = vld [vmem:[%s1 + $0x1b2c] sm:$0xf]
    %v1798 = vld [vmem:[%s1 + $0x1b30] sm:$0xf]
    %v1799 = vld [vmem:[%s1 + $0x1b34] sm:$0xf]
    %v1800 = vld [vmem:[%s1 + $0x1b38] sm:$0xf]
    %v1801 = vld [vmem:[%s1 + $0x1b3c] sm:$0xf]
    %v1802 = vld [vmem:[%s1 + $0x1b40] sm:$0xf]
    %v1803 = vld [vmem:[%s1 + $0x1b44] sm:$0xf]
    %v1804 = vld [vmem:[%s1 + $0x1b48] sm:$0xf]
    %v1805 = vld [vmem:[%s1 + $0x1b4c] sm:$0xf]
    %v1806 = vld [vmem:[%s1 + $0x1b50] sm:$0xf]
    %v1807 = vld [vmem:[%s1 + $0x1b54] sm:$0xf]
    %v1808 = vld [vmem:[%s1 + $0x1b58] sm:$0xf]
    %v1809 = vld [vmem:[%s1 + $0x1b5c] sm:$0xf]
    %v1810 = vld [vmem:[%s1 + $0x1b60] sm:$0xf]
    %v1811 = vld [vmem:[%s1 + $0x1b64] sm:$0xf]
    %v1812 = vld [vmem:[%s1 + $0x1b68] sm:$0xf]
    %v1813 = vld [vmem:[%s1 + $0x1b6c] sm:$0xf]
    %v1814 = vld [vmem:[%s1 + $0x1b70] sm:$0xf]
    %v1815 = vld [vmem:[%s1 + $0x1b74] sm:$0xf]
    %v1816 = vld [vmem:[%s1 + $0x1b78] sm:$0xf]
    %v1817 = vld [vmem:[%s1 + $0x1b7c] sm:$0xf]
    %v1818 = vld [vmem:[%s1 + $0x1b80] sm:$0xf]
    %v1819 = vld [vmem:[%s1 + $0x1b84] sm:$0xf]
    %v1820 = vld [vmem:[%s1 + $0x1b88] sm:$0xf]
    %v1821 = vld [vmem:[%s1 + $0x1b8c] sm:$0xf]
    %v1822 = vld [vmem:[%s1 + $0x1b90] sm:$0xf]
    %v1823 = vld [vmem:[%s1 + $0x1b94] sm:$0xf]
    %v1824 = vld [vmem:[%s1 + $0x1b98] sm:$0xf]
    %v1825 = vld [vmem:[%s1 + $0x1b9c] sm:$0xf]
    %v1826 = vld [vmem:[%s1 + $0x1ba0] sm:$0xf]
    %v1827 = vld [vmem:[%s1 + $0x1ba4] sm:$0xf]
    %v1828 = vld [vmem:[%s1 + $0x1ba8] sm:$0xf]
    %v1829 = vld [vmem:[%s1 + $0x1bac] sm:$0xf]
    %v1830 = vld [vmem:[%s1 + $0x1bb0] sm:$0xf]
    %v1831 = vld [vmem:[%s1 + $0x1bb4] sm:$0xf]
    %v1832 = vld [vmem:[%s1 + $0x1bb8] sm:$0xf]
    %v1833 = vld [vmem:[%s1 + $0x1bbc] sm:$0xf]
    %v1834 = vld [vmem:[%s1 + $0x1bc0] sm:$0xf]
    %v1835 = vld [vmem:[%s1 + $0x1bc4] sm:$0xf]
    %v1836 = vld [vmem:[%s1 + $0x1bc8] sm:$0xf]
    %v1837 = vld [vmem:[%s1 + $0x1bcc] sm:$0xf]
    %v1838 = vld [vmem:[%s1 + $0x1bd0] sm:$0xf]
    %v1839 = vld [vmem:[%s1 + $0x1bd4] sm:$0xf]
    %v1840 = vld [vmem:[%s1 + $0x1bd8] sm:$0xf]
    %v1841 = vld [vmem:[%s1 + $0x1bdc] sm:$0xf]
    %v1842 = vld [vmem:[%s1 + $0x1be0] sm:$0xf]
    %v1843 = vld [vmem:[%s1 + $0x1be4] sm:$0xf]
    %v1844 = vld [vmem:[%s1 + $0x1be8] sm:$0xf]
    %v1845 = vld [vmem:[%s1 + $0x1bec] sm:$0xf]
    %v1846 = vld [vmem:[%s1 + $0x1bf0] sm:$0xf]
    %v1847 = vld [vmem:[%s1 + $0x1bf4] sm:$0xf]
    %v1848 = vld [vmem:[%s1 + $0x1bf8] sm:$0xf]
    %v1849 = vld [vmem:[%s1 + $0x1bfc] sm:$0xf]
    %v1850 = vld [vmem:[%s1 + $0x1c00] sm:$0xf]
    %v1851 = vld [vmem:[%s1 + $0x1c04] sm:$0xf]
    %v1852 = vld [vmem:[%s1 + $0x1c08] sm:$0xf]
    %v1853 = vld [vmem:[%s1 + $0x1c0c] sm:$0xf]
    %v1854 = vld [vmem:[%s1 + $0x1c10] sm:$0xf]
    %v1855 = vld [vmem:[%s1 + $0x1c14] sm:$0xf]
    %v1856 = vld [vmem:[%s1 + $0x1c18] sm:$0xf]
    %v1857 = vld [vmem:[%s1 + $0x1c1c] sm:$0xf]
    %v1858 = vld [vmem:[%s1 + $0x1c20] sm:$0xf]
    %v1859 = vld [vmem:[%s1 + $0x1c24] sm:$0xf]
    %v1860 = vld [vmem:[%s1 + $0x1c28] sm:$0xf]
    %v1861 = vld [vmem:[%s1 + $0x1c2c] sm:$0xf]
    %v1862 = vld [vmem:[%s1 + $0x1c30] sm:$0xf]
    %v1863 = vld [vmem:[%s1 + $0x1c34] sm:$0xf]
    %v1864 = vld [vmem:[%s1 + $0x1c38] sm:$0xf]
    %v1865 = vld [vmem:[%s1 + $0x1c3c] sm:$0xf]
    %v1866 = vld [vmem:[%s1 + $0x1c40] sm:$0xf]
    %v1867 = vld [vmem:[%s1 + $0x1c44] sm:$0xf]
    %v1868 = vld [vmem:[%s1 + $0x1c48] sm:$0xf]
    %v1869 = vld [vmem:[%s1 + $0x1c4c] sm:$0xf]
    %v1870 = vld [vmem:[%s1 + $0x1c50] sm:$0xf]
    %v1871 = vld [vmem:[%s1 + $0x1c54] sm:$0xf]
    %v1872 = vld [vmem:[%s1 + $0x1c58] sm:$0xf]
    %v1873 = vld [vmem:[%s1 + $0x1c5c] sm:$0xf]
    %v1874 = vld [vmem:[%s1 + $0x1c60] sm:$0xf]
    %v1875 = vld [vmem:[%s1 + $0x1c64] sm:$0xf]
    %v1876 = vld [vmem:[%s1 + $0x1c68] sm:$0xf]
    %v1877 = vld [vmem:[%s1 + $0x1c6c] sm:$0xf]
    %v1878 = vld [vmem:[%s1 + $0x1c70] sm:$0xf]
    %v1879 = vld [vmem:[%s1 + $0x1c74] sm:$0xf]
    %v1880 = vld [vmem:[%s1 + $0x1c78] sm:$0xf]
    %v1881 = vld [vmem:[%s1 + $0x1c7c] sm:$0xf]
    %v1882 = vld [vmem:[%s1 + $0x1c80] sm:$0xf]
    %v1883 = vld [vmem:[%s1 + $0x1c84] sm:$0xf]
    %v1884 = vld [vmem:[%s1 + $0x1c88] sm:$0xf]
    %v1885 = vld [vmem:[%s1 + $0x1c8c] sm:$0xf]
    %v1886 = vld [vmem:[%s1 + $0x1c90] sm:$0xf]
    %v1887 = vld [vmem:[%s1 + $0x1c94] sm:$0xf]
    %v1888 = vld [vmem:[%s1 + $0x1c98] sm:$0xf]
    %v1889 = vld [vmem:[%s1 + $0x1c9c] sm:$0xf]
    %v1890 = vld [vmem:[%s1 + $0x1ca0] sm:$0xf]
    %v1891 = vld [vmem:[%s1 + $0x1ca4] sm:$0xf]
    %v1892 = vld [vmem:[%s1 + $0x1ca8] sm:$0xf]
    %v1893 = vld [vmem:[%s1 + $0x1cac] sm:$0xf]
    %v1894 = vld [vmem:[%s1 + $0x1cb0] sm:$0xf]
    %v1895 = vld [vmem:[%s1 + $0x1cb4] sm:$0xf]
    %v1896 = vld [vmem:[%s1 + $0x1cb8] sm:$0xf]
    %v1897 = vld [vmem:[%s1 + $0x1cbc] sm:$0xf]
    %v1898 = vld [vmem:[%s1 + $0x1cc0] sm:$0xf]
    %v1899 = vld [vmem:[%s1 + $0x1cc4] sm:$0xf]
    %v1900 = vld [vmem:[%s1 + $0x1cc8] sm:$0xf]
    %v1901 = vld [vmem:[%s1 + $0x1ccc] sm:$0xf]
    %v1902 = vld [vmem:[%s1 + $0x1cd0] sm:$0xf]
    %v1903 = vld [vmem:[%s1 + $0x1cd4] sm:$0xf]
    %v1904 = vld [vmem:[%s1 + $0x1cd8] sm:$0xf]
    %v1905 = vld [vmem:[%s1 + $0x1cdc] sm:$0xf]
    %v1906 = vld [vmem:[%s1 + $0x1ce0] sm:$0xf]
    %v1907 = vld [vmem:[%s1 + $0x1ce4] sm:$0xf]
    %v1908 = vld [vmem:[%s1 + $0x1ce8] sm:$0xf]
    %v1909 = vld [vmem:[%s1 + $0x1cec] sm:$0xf]
    %v1910 = vld [vmem:[%s1 + $0x1cf0] sm:$0xf]
    %v1911 = vld [vmem:[%s1 + $0x1cf4] sm:$0xf]
    %v1912 = vld [vmem:[%s1 + $0x1cf8] sm:$0xf]
    %v1913 = vld [vmem:[%s1 + $0x1cfc] sm:$0xf]
    %v1914 = vld [vmem:[%s1 + $0x1d00] sm:$0xf]
    %v1915 = vld [vmem:[%s1 + $0x1d04] sm:$0xf]
    %v1916 = vld [vmem:[%s1 + $0x1d08] sm:$0xf]
    %v1917 = vld [vmem:[%s1 + $0x1d0c] sm:$0xf]
    %v1918 = vld [vmem:[%s1 + $0x1d10] sm:$0xf]
    %v1919 = vld [vmem:[%s1 + $0x1d14] sm:$0xf]
    %v1920 = vld [vmem:[%s1 + $0x1d18] sm:$0xf]
    %v1921 = vld [vmem:[%s1 + $0x1d1c] sm:$0xf]
    %v1922 = vld [vmem:[%s1 + $0x1d20] sm:$0xf]
    %v1923 = vld [vmem:[%s1 + $0x1d24] sm:$0xf]
    %v1924 = vld [vmem:[%s1 + $0x1d28] sm:$0xf]
    %v1925 = vld [vmem:[%s1 + $0x1d2c] sm:$0xf]
    %v1926 = vld [vmem:[%s1 + $0x1d30] sm:$0xf]
    %v1927 = vld [vmem:[%s1 + $0x1d34] sm:$0xf]
    %v1928 = vld [vmem:[%s1 + $0x1d38] sm:$0xf]
    %v1929 = vld [vmem:[%s1 + $0x1d3c] sm:$0xf]
    %v1930 = vld [vmem:[%s1 + $0x1d40] sm:$0xf]
    %v1931 = vld [vmem:[%s1 + $0x1d44] sm:$0xf]
    %v1932 = vld [vmem:[%s1 + $0x1d48] sm:$0xf]
    %v1933 = vld [vmem:[%s1 + $0x1d4c] sm:$0xf]
    %v1934 = vld [vmem:[%s1 + $0x1d50] sm:$0xf]
    %v1935 = vld [vmem:[%s1 + $0x1d54] sm:$0xf]
    %v1936 = vld [vmem:[%s1 + $0x1d58] sm:$0xf]
    %v1937 = vld [vmem:[%s1 + $0x1d5c] sm:$0xf]
    %v1938 = vld [vmem:[%s1 + $0x1d60] sm:$0xf]
    %v1939 = vld [vmem:[%s1 + $0x1d64] sm:$0xf]
    %v1940 = vld [vmem:[%s1 + $0x1d68] sm:$0xf]
    %v1941 = vld [vmem:[%s1 + $0x1d6c] sm:$0xf]
    %v1942 = vld [vmem:[%s1 + $0x1d70] sm:$0xf]
    %v1943 = vld [vmem:[%s1 + $0x1d74] sm:$0xf]
    %v1944 = vld [vmem:[%s1 + $0x1d78] sm:$0xf]
    %v1945 = vld [vmem:[%s1 + $0x1d7c] sm:$0xf]
    %v1946 = vld [vmem:[%s1 + $0x1d80] sm:$0xf]
    %v1947 = vld [vmem:[%s1 + $0x1d84] sm:$0xf]
    %v1948 = vld [vmem:[%s1 + $0x1d88] sm:$0xf]
    %v1949 = vld [vmem:[%s1 + $0x1d8c] sm:$0xf]
    %v1950 = vld [vmem:[%s1 + $0x1d90] sm:$0xf]
    %v1951 = vld [vmem:[%s1 + $0x1d94] sm:$0xf]
    %v1952 = vld [vmem:[%s1 + $0x1d98] sm:$0xf]
    %v1953 = vld [vmem:[%s1 + $0x1d9c] sm:$0xf]
    %v1954 = vld [vmem:[%s1 + $0x1da0] sm:$0xf]
    %v1955 = vld [vmem:[%s1 + $0x1da4] sm:$0xf]
    %v1956 = vld [vmem:[%s1 + $0x1da8] sm:$0xf]
    %v1957 = vld [vmem:[%s1 + $0x1dac] sm:$0xf]
    %v1958 = vld [vmem:[%s1 + $0x1db0] sm:$0xf]
    %v1959 = vld [vmem:[%s1 + $0x1db4] sm:$0xf]
    %v1960 = vld [vmem:[%s1 + $0x1db8] sm:$0xf]
    %v1961 = vld [vmem:[%s1 + $0x1dbc] sm:$0xf]
    %v1962 = vld [vmem:[%s1 + $0x1dc0] sm:$0xf]
    %v1963 = vld [vmem:[%s1 + $0x1dc4] sm:$0xf]
    %v1964 = vld [vmem:[%s1 + $0x1dc8] sm:$0xf]
    %v1965 = vld [vmem:[%s1 + $0x1dcc] sm:$0xf]
    %v1966 = vld [vmem:[%s1 + $0x1dd0] sm:$0xf]
    %v1967 = vld [vmem:[%s1 + $0x1dd4] sm:$0xf]
    %v1968 = vld [vmem:[%s1 + $0x1dd8] sm:$0xf]
    %v1969 = vld [vmem:[%s1 + $0x1ddc] sm:$0xf]
    %v1970 = vld [vmem:[%s1 + $0x1de0] sm:$0xf]
    %v1971 = vld [vmem:[%s1 + $0x1de4] sm:$0xf]
    %v1972 = vld [vmem:[%s1 + $0x1de8] sm:$0xf]
    %v1973 = vld [vmem:[%s1 + $0x1dec] sm:$0xf]
    %v1974 = vld [vmem:[%s1 + $0x1df0] sm:$0xf]
    %v1975 = vld [vmem:[%s1 + $0x1df4] sm:$0xf]
    %v1976 = vld [vmem:[%s1 + $0x1df8] sm:$0xf]
    %v1977 = vld [vmem:[%s1 + $0x1dfc] sm:$0xf]
    %v1978 = vld [vmem:[%s1 + $0x1e00] sm:$0xf]
    %v1979 = vld [vmem:[%s1 + $0x1e04] sm:$0xf]
    %v1980 = vld [vmem:[%s1 + $0x1e08] sm:$0xf]
    %v1981 = vld [vmem:[%s1 + $0x1e0c] sm:$0xf]
    %v1982 = vld [vmem:[%s1 + $0x1e10] sm:$0xf]
    %v1983 = vld [vmem:[%s1 + $0x1e14] sm:$0xf]
    %v1984 = vld [vmem:[%s1 + $0x1e18] sm:$0xf]
    %v1985 = vld [vmem:[%s1 + $0x1e1c] sm:$0xf]
    %v1986 = vld [vmem:[%s1 + $0x1e20] sm:$0xf]
    %v1987 = vld [vmem:[%s1 + $0x1e24] sm:$0xf]
    %v1988 = vld [vmem:[%s1 + $0x1e28] sm:$0xf]
    %v1989 = vld [vmem:[%s1 + $0x1e2c] sm:$0xf]
    %v1990 = vld [vmem:[%s1 + $0x1e30] sm:$0xf]
    %v1991 = vld [vmem:[%s1 + $0x1e34] sm:$0xf]
    %v1992 = vld [vmem:[%s1 + $0x1e38] sm:$0xf]
    %v1993 = vld [vmem:[%s1 + $0x1e3c] sm:$0xf]
    %v1994 = vld [vmem:[%s1 + $0x1e40] sm:$0xf]
    %v1995 = vld [vmem:[%s1 + $0x1e44] sm:$0xf]
    %v1996 = vld [vmem:[%s1 + $0x1e48] sm:$0xf]
    %v1997 = vld [vmem:[%s1 + $0x1e4c] sm:$0xf]
    %v1998 = vld [vmem:[%s1 + $0x1e50] sm:$0xf]
    %v1999 = vld [vmem:[%s1 + $0x1e54] sm:$0xf]
    %v2000 = vld [vmem:[%s1 + $0x1e58] sm:$0xf]
    %v2001 = vld [vmem:[%s1 + $0x1e5c] sm:$0xf]
    %v2002 = vld [vmem:[%s1 + $0x1e60] sm:$0xf]
    %v2003 = vld [vmem:[%s1 + $0x1e64] sm:$0xf]
    %v2004 = vld [vmem:[%s1 + $0x1e68] sm:$0xf]
    %v2005 = vld [vmem:[%s1 + $0x1e6c] sm:$0xf]
    %v2006 = vld [vmem:[%s1 + $0x1e70] sm:$0xf]
    %v2007 = vld [vmem:[%s1 + $0x1e74] sm:$0xf]
    %v2008 = vld [vmem:[%s1 + $0x1e78] sm:$0xf]
    %v2009 = vld [vmem:[%s1 + $0x1e7c] sm:$0xf]
    %v2010 = vld [vmem:[%s1 + $0x1e80] sm:$0xf]
    %v2011 = vld [vmem:[%s1 + $0x1e84] sm:$0xf]
    %v2012 = vld [vmem:[%s1 + $0x1e88] sm:$0xf]
    %v2013 = vld [vmem:[%s1 + $0x1e8c] sm:$0xf]
    %v2014 = vld [vmem:[%s1 + $0x1e90] sm:$0xf]
    %v2015 = vld [vmem:[%s1 + $0x1e94] sm:$0xf]
    %v2016 = vld [vmem:[%s1 + $0x1e98] sm:$0xf]
    %v2017 = vld [vmem:[%s1 + $0x1e9c] sm:$0xf]
    %v2018 = vld [vmem:[%s1 + $0x1ea0] sm:$0xf]
    %v2019 = vld [vmem:[%s1 + $0x1ea4] sm:$0xf]
    %v2020 = vld [vmem:[%s1 + $0x1ea8] sm:$0xf]
    %v2021 = vld [vmem:[%s1 + $0x1eac] sm:$0xf]
    %v2022 = vld [vmem:[%s1 + $0x1eb0] sm:$0xf]
    %v2023 = vld [vmem:[%s1 + $0x1eb4] sm:$0xf]
    %v2024 = vld [vmem:[%s1 + $0x1eb8] sm:$0xf]
    %v2025 = vld [vmem:[%s1 + $0x1ebc] sm:$0xf]
    %v2026 = vld [vmem:[%s1 + $0x1ec0] sm:$0xf]
    %v2027 = vld [vmem:[%s1 + $0x1ec4] sm:$0xf]
    %v2028 = vld [vmem:[%s1 + $0x1ec8] sm:$0xf]
    %v2029 = vld [vmem:[%s1 + $0x1ecc] sm:$0xf]
    %v2030 = vld [vmem:[%s1 + $0x1ed0] sm:$0xf]
    %v2031 = vld [vmem:[%s1 + $0x1ed4] sm:$0xf]
    %v2032 = vld [vmem:[%s1 + $0x1ed8] sm:$0xf]
    %v2033 = vld [vmem:[%s1 + $0x1edc] sm:$0xf]
    %v2034 = vld [vmem:[%s1 + $0x1ee0] sm:$0xf]
    %v2035 = vld [vmem:[%s1 + $0x1ee4] sm:$0xf]
    %v2036 = vld [vmem:[%s1 + $0x1ee8] sm:$0xf]
    %v2037 = vld [vmem:[%s1 + $0x1eec] sm:$0xf]
    %v2038 = vld [vmem:[%s1 + $0x1ef0] sm:$0xf]
    %v2039 = vld [vmem:[%s1 + $0x1ef4] sm:$0xf]
    %v2040 = vld [vmem:[%s1 + $0x1ef8] sm:$0xf]
    %v2041 = vld [vmem:[%s1 + $0x1efc] sm:$0xf]
    %v2042 = vld [vmem:[%s1 + $0x1f00] sm:$0xf]
    %v2043 = vld [vmem:[%s1 + $0x1f04] sm:$0xf]
    %v2044 = vld [vmem:[%s1 + $0x1f08] sm:$0xf]
    %v2045 = vld [vmem:[%s1 + $0x1f0c] sm:$0xf]
    %v2046 = vld [vmem:[%s1 + $0x1f10] sm:$0xf]
    %v2047 = vld [vmem:[%s1 + $0x1f14] sm:$0xf]
    %v2048 = vld [vmem:[%s1 + $0x1f18] sm:$0xf]
    %v2049 = vld [vmem:[%s1 + $0x1f1c] sm:$0xf]
    %v2050 = vld [vmem:[%s1 + $0x1f20] sm:$0xf]
    %v2051 = vld [vmem:[%s1 + $0x1f24] sm:$0xf]
    %v2052 = vld [vmem:[%s1 + $0x1f28] sm:$0xf]
    %v2053 = vld [vmem:[%s1 + $0x1f2c] sm:$0xf]
    %v2054 = vld [vmem:[%s1 + $0x1f30] sm:$0xf]
    %v2055 = vld [vmem:[%s1 + $0x1f34] sm:$0xf]
    %v2056 = vld [vmem:[%s1 + $0x1f38] sm:$0xf]
    %v2057 = vld [vmem:[%s1 + $0x1f3c] sm:$0xf]
    %v2058 = vld [vmem:[%s1 + $0x1f40] sm:$0xf]
    %v2059 = vld [vmem:[%s1 + $0x1f44] sm:$0xf]
    %v2060 = vld [vmem:[%s1 + $0x1f48] sm:$0xf]
    %v2061 = vld [vmem:[%s1 + $0x1f4c] sm:$0xf]
    %v2062 = vld [vmem:[%s1 + $0x1f50] sm:$0xf]
    %v2063 = vld [vmem:[%s1 + $0x1f54] sm:$0xf]
    %v2064 = vld [vmem:[%s1 + $0x1f58] sm:$0xf]
    %v2065 = vld [vmem:[%s1 + $0x1f5c] sm:$0xf]
    %v2066 = vld [vmem:[%s1 + $0x1f60] sm:$0xf]
    %v2067 = vld [vmem:[%s1 + $0x1f64] sm:$0xf]
    %v2068 = vld [vmem:[%s1 + $0x1f68] sm:$0xf]
    %v2069 = vld [vmem:[%s1 + $0x1f6c] sm:$0xf]
    %v2070 = vld [vmem:[%s1 + $0x1f70] sm:$0xf]
    %v2071 = vld [vmem:[%s1 + $0x1f74] sm:$0xf]
    %v2072 = vld [vmem:[%s1 + $0x1f78] sm:$0xf]
    %v2073 = vld [vmem:[%s1 + $0x1f7c] sm:$0xf]
    %v2074 = vld [vmem:[%s1 + $0x1f80] sm:$0xf]
    %v2075 = vld [vmem:[%s1 + $0x1f84] sm:$0xf]
    %v2076 = vld [vmem:[%s1 + $0x1f88] sm:$0xf]
    %v2077 = vld [vmem:[%s1 + $0x1f8c] sm:$0xf]
    %v2078 = vld [vmem:[%s1 + $0x1f90] sm:$0xf]
    %v2079 = vld [vmem:[%s1 + $0x1f94] sm:$0xf]
    %v2080 = vld [vmem:[%s1 + $0x1f98] sm:$0xf]
    %v2081 = vld [vmem:[%s1 + $0x1f9c] sm:$0xf]
    %v2082 = vld [vmem:[%s1 + $0x1fa0] sm:$0xf]
    %v2083 = vld [vmem:[%s1 + $0x1fa4] sm:$0xf]
    %v2084 = vld [vmem:[%s1 + $0x1fa8] sm:$0xf]
    %v2085 = vld [vmem:[%s1 + $0x1fac] sm:$0xf]
    %v2086 = vld [vmem:[%s1 + $0x1fb0] sm:$0xf]
    %v2087 = vld [vmem:[%s1 + $0x1fb4] sm:$0xf]
    %v2088 = vld [vmem:[%s1 + $0x1fb8] sm:$0xf]
    %v2089 = vld [vmem:[%s1 + $0x1fbc] sm:$0xf]
    %v2090 = vld [vmem:[%s1 + $0x1fc0] sm:$0xf]
    %v2091 = vld [vmem:[%s1 + $0x1fc4] sm:$0xf]
    %v2092 = vld [vmem:[%s1 + $0x1fc8] sm:$0xf]
    %v2093 = vld [vmem:[%s1 + $0x1fcc] sm:$0xf]
    %v2094 = vld [vmem:[%s1 + $0x1fd0] sm:$0xf]
    %v2095 = vld [vmem:[%s1 + $0x1fd4] sm:$0xf]
    %v2096 = vld [vmem:[%s1 + $0x1fd8] sm:$0xf]
    %v2097 = vld [vmem:[%s1 + $0x1fdc] sm:$0xf]
    %v2098 = vld [vmem:[%s1 + $0x1fe0] sm:$0xf]
    %v2099 = vld [vmem:[%s1 + $0x1fe4] sm:$0xf]
    %v2100 = vld [vmem:[%s1 + $0x1fe8] sm:$0xf]
    %v2101 = vld [vmem:[%s1 + $0x1fec] sm:$0xf]
    %v2102 = vld [vmem:[%s1 + $0x1ff0] sm:$0xf]
    %v2103 = vld [vmem:[%s1 + $0x1ff4] sm:$0xf]
    %v2104 = vld [vmem:[%s1 + $0x1ff8] sm:$0xf]
    %v2105 = vld [vmem:[%s1 + $0x1ffc] sm:$0xf]
    %v2138 = vcombine.high %v26, %v26
    %v2140 = vunpack.c.l.s4 1983009808
    %v2141 = vunpack.c.0.s8 %v2140
    %v2142 = vlaneseq
    %v2143 = vshrl.u32 %v2142, 7
    %v2144 = vsub.s32 %v2141, %v2143
    %v2145 = vrot.slane %v26, %v2144
    %v2147 = vunpack.c.l.s4 1983009808
    %v2148 = vunpack.c.0.s8 %v2147
    %v2149 = vlaneseq
    %v2150 = vshrl.u32 %v2149, 7
    %v2151 = vsub.s32 %v2148, %v2150
    %v2152 = vrot.slane %v2138, %v2151
    %v2153 = vcombine.high %v2145, %v2145
    %v2154 = vcombine.high %v2152, %v2152
    %v2155 = vcombine.high %v27, %v27
    %v2157 = vunpack.c.l.s4 1983009808
    %v2158 = vunpack.c.0.s8 %v2157
    %v2159 = vlaneseq
    %v2160 = vshrl.u32 %v2159, 7
    %v2161 = vsub.s32 %v2158, %v2160
    %v2162 = vrot.slane %v27, %v2161
    %v2164 = vunpack.c.l.s4 1983009808
    %v2165 = vunpack.c.0.s8 %v2164
    %v2166 = vlaneseq
    %v2167 = vshrl.u32 %v2166, 7
    %v2168 = vsub.s32 %v2165, %v2167
    %v2169 = vrot.slane %v2155, %v2168
    %v2170 = vcombine.high %v2162, %v2162
    %v2171 = vcombine.high %v2169, %v2169
    %v2172 = vcombine.high %v28, %v28
    %v2174 = vunpack.c.l.s4 1983009808
    %v2175 = vunpack.c.0.s8 %v2174
    %v2176 = vlaneseq
    %v2177 = vshrl.u32 %v2176, 7
    %v2178 = vsub.s32 %v2175, %v2177
    %v2179 = vrot.slane %v28, %v2178
    %v2181 = vunpack.c.l.s4 1983009808
    %v2182 = vunpack.c.0.s8 %v2181
    %v2183 = vlaneseq
    %v2184 = vshrl.u32 %v2183, 7
    %v2185 = vsub.s32 %v2182, %v2184
    %v2186 = vrot.slane %v2172, %v2185
    %v2187 = vcombine.high %v2179, %v2179
    %v2188 = vcombine.high %v2186, %v2186
    %v2189 = vcombine.high %v29, %v29
    %v2191 = vunpack.c.l.s4 1983009808
    %v2192 = vunpack.c.0.s8 %v2191
    %v2193 = vlaneseq
    %v2194 = vshrl.u32 %v2193, 7
    %v2195 = vsub.s32 %v2192, %v2194
    %v2196 = vrot.slane %v29, %v2195
    %v2198 = vunpack.c.l.s4 1983009808
    %v2199 = vunpack.c.0.s8 %v2198
    %v2200 = vlaneseq
    %v2201 = vshrl.u32 %v2200, 7
    %v2202 = vsub.s32 %v2199, %v2201
    %v2203 = vrot.slane %v2189, %v2202
    %v2204 = vcombine.high %v2196, %v2196
    %v2205 = vcombine.high %v2203, %v2203
    %v2206 = vcombine.high %v30, %v30
    %v2208 = vunpack.c.l.s4 1983009808
    %v2209 = vunpack.c.0.s8 %v2208
    %v2210 = vlaneseq
    %v2211 = vshrl.u32 %v2210, 7
    %v2212 = vsub.s32 %v2209, %v2211
    %v2213 = vrot.slane %v30, %v2212
    %v2215 = vunpack.c.l.s4 1983009808
    %v2216 = vunpack.c.0.s8 %v2215
    %v2217 = vlaneseq
    %v2218 = vshrl.u32 %v2217, 7
    %v2219 = vsub.s32 %v2216, %v2218
    %v2220 = vrot.slane %v2206, %v2219
    %v2221 = vcombine.high %v2213, %v2213
    %v2222 = vcombine.high %v2220, %v2220
    %v2223 = vcombine.high %v31, %v31
    %v2225 = vunpack.c.l.s4 1983009808
    %v2226 = vunpack.c.0.s8 %v2225
    %v2227 = vlaneseq
    %v2228 = vshrl.u32 %v2227, 7
    %v2229 = vsub.s32 %v2226, %v2228
    %v2230 = vrot.slane %v31, %v2229
    %v2232 = vunpack.c.l.s4 1983009808
    %v2233 = vunpack.c.0.s8 %v2232
    %v2234 = vlaneseq
    %v2235 = vshrl.u32 %v2234, 7
    %v2236 = vsub.s32 %v2233, %v2235
    %v2237 = vrot.slane %v2223, %v2236
    %v2238 = vcombine.high %v2230, %v2230
    %v2239 = vcombine.high %v2237, %v2237
    %v2240 = vcombine.high %v32, %v32
    %v2242 = vunpack.c.l.s4 1983009808
    %v2243 = vunpack.c.0.s8 %v2242
    %v2244 = vlaneseq
    %v2245 = vshrl.u32 %v2244, 7
    %v2246 = vsub.s32 %v2243, %v2245
    %v2247 = vrot.slane %v32, %v2246
    %v2249 = vunpack.c.l.s4 1983009808
    %v2250 = vunpack.c.0.s8 %v2249
    %v2251 = vlaneseq
    %v2252 = vshrl.u32 %v2251, 7
    %v2253 = vsub.s32 %v2250, %v2252
    %v2254 = vrot.slane %v2240, %v2253
    %v2255 = vcombine.high %v2247, %v2247
    %v2256 = vcombine.high %v2254, %v2254
    %v2257 = vcombine.high %v33, %v33
    %v2259 = vunpack.c.l.s4 1983009808
    %v2260 = vunpack.c.0.s8 %v2259
    %v2261 = vlaneseq
    %v2262 = vshrl.u32 %v2261, 7
    %v2263 = vsub.s32 %v2260, %v2262
    %v2264 = vrot.slane %v33, %v2263
    %v2266 = vunpack.c.l.s4 1983009808
    %v2267 = vunpack.c.0.s8 %v2266
    %v2268 = vlaneseq
    %v2269 = vshrl.u32 %v2268, 7
    %v2270 = vsub.s32 %v2267, %v2269
    %v2271 = vrot.slane %v2257, %v2270
    %v2272 = vcombine.high %v2264, %v2264
    %v2273 = vcombine.high %v2271, %v2271
    %v2274 = vcombine.high %v34, %v34
    %v2276 = vunpack.c.l.s4 1983009808
    %v2277 = vunpack.c.0.s8 %v2276
    %v2278 = vlaneseq
    %v2279 = vshrl.u32 %v2278, 7
    %v2280 = vsub.s32 %v2277, %v2279
    %v2281 = vrot.slane %v34, %v2280
    %v2283 = vunpack.c.l.s4 1983009808
    %v2284 = vunpack.c.0.s8 %v2283
    %v2285 = vlaneseq
    %v2286 = vshrl.u32 %v2285, 7
    %v2287 = vsub.s32 %v2284, %v2286
    %v2288 = vrot.slane %v2274, %v2287
    %v2289 = vcombine.high %v2281, %v2281
    %v2290 = vcombine.high %v2288, %v2288
    %v2291 = vcombine.high %v35, %v35
    %v2293 = vunpack.c.l.s4 1983009808
    %v2294 = vunpack.c.0.s8 %v2293
    %v2295 = vlaneseq
    %v2296 = vshrl.u32 %v2295, 7
    %v2297 = vsub.s32 %v2294, %v2296
    %v2298 = vrot.slane %v35, %v2297
    %v2300 = vunpack.c.l.s4 1983009808
    %v2301 = vunpack.c.0.s8 %v2300
    %v2302 = vlaneseq
    %v2303 = vshrl.u32 %v2302, 7
    %v2304 = vsub.s32 %v2301, %v2303
    %v2305 = vrot.slane %v2291, %v2304
    %v2306 = vcombine.high %v2298, %v2298
    %v2307 = vcombine.high %v2305, %v2305
    %v2308 = vcombine.high %v36, %v36
    %v2310 = vunpack.c.l.s4 1983009808
    %v2311 = vunpack.c.0.s8 %v2310
    %v2312 = vlaneseq
    %v2313 = vshrl.u32 %v2312, 7
    %v2314 = vsub.s32 %v2311, %v2313
    %v2315 = vrot.slane %v36, %v2314
    %v2317 = vunpack.c.l.s4 1983009808
    %v2318 = vunpack.c.0.s8 %v2317
    %v2319 = vlaneseq
    %v2320 = vshrl.u32 %v2319, 7
    %v2321 = vsub.s32 %v2318, %v2320
    %v2322 = vrot.slane %v2308, %v2321
    %v2323 = vcombine.high %v2315, %v2315
    %v2324 = vcombine.high %v2322, %v2322
    %v2325 = vcombine.high %v37, %v37
    %v2327 = vunpack.c.l.s4 1983009808
    %v2328 = vunpack.c.0.s8 %v2327
    %v2329 = vlaneseq
    %v2330 = vshrl.u32 %v2329, 7
    %v2331 = vsub.s32 %v2328, %v2330
    %v2332 = vrot.slane %v37, %v2331
    %v2334 = vunpack.c.l.s4 1983009808
    %v2335 = vunpack.c.0.s8 %v2334
    %v2336 = vlaneseq
    %v2337 = vshrl.u32 %v2336, 7
    %v2338 = vsub.s32 %v2335, %v2337
    %v2339 = vrot.slane %v2325, %v2338
    %v2340 = vcombine.high %v2332, %v2332
    %v2341 = vcombine.high %v2339, %v2339
    %v2342 = vcombine.high %v38, %v38
    %v2344 = vunpack.c.l.s4 1983009808
    %v2345 = vunpack.c.0.s8 %v2344
    %v2346 = vlaneseq
    %v2347 = vshrl.u32 %v2346, 7
    %v2348 = vsub.s32 %v2345, %v2347
    %v2349 = vrot.slane %v38, %v2348
    %v2351 = vunpack.c.l.s4 1983009808
    %v2352 = vunpack.c.0.s8 %v2351
    %v2353 = vlaneseq
    %v2354 = vshrl.u32 %v2353, 7
    %v2355 = vsub.s32 %v2352, %v2354
    %v2356 = vrot.slane %v2342, %v2355
    %v2357 = vcombine.high %v2349, %v2349
    %v2358 = vcombine.high %v2356, %v2356
    %v2359 = vcombine.high %v39, %v39
    %v2361 = vunpack.c.l.s4 1983009808
    %v2362 = vunpack.c.0.s8 %v2361
    %v2363 = vlaneseq
    %v2364 = vshrl.u32 %v2363, 7
    %v2365 = vsub.s32 %v2362, %v2364
    %v2366 = vrot.slane %v39, %v2365
    %v2368 = vunpack.c.l.s4 1983009808
    %v2369 = vunpack.c.0.s8 %v2368
    %v2370 = vlaneseq
    %v2371 = vshrl.u32 %v2370, 7
    %v2372 = vsub.s32 %v2369, %v2371
    %v2373 = vrot.slane %v2359, %v2372
    %v2374 = vcombine.high %v2366, %v2366
    %v2375 = vcombine.high %v2373, %v2373
    %v2376 = vcombine.high %v40, %v40
    %v2378 = vunpack.c.l.s4 1983009808
    %v2379 = vunpack.c.0.s8 %v2378
    %v2380 = vlaneseq
    %v2381 = vshrl.u32 %v2380, 7
    %v2382 = vsub.s32 %v2379, %v2381
    %v2383 = vrot.slane %v40, %v2382
    %v2385 = vunpack.c.l.s4 1983009808
    %v2386 = vunpack.c.0.s8 %v2385
    %v2387 = vlaneseq
    %v2388 = vshrl.u32 %v2387, 7
    %v2389 = vsub.s32 %v2386, %v2388
    %v2390 = vrot.slane %v2376, %v2389
    %v2391 = vcombine.high %v2383, %v2383
    %v2392 = vcombine.high %v2390, %v2390
    %v2393 = vcombine.high %v41, %v41
    %v2395 = vunpack.c.l.s4 1983009808
    %v2396 = vunpack.c.0.s8 %v2395
    %v2397 = vlaneseq
    %v2398 = vshrl.u32 %v2397, 7
    %v2399 = vsub.s32 %v2396, %v2398
    %v2400 = vrot.slane %v41, %v2399
    %v2402 = vunpack.c.l.s4 1983009808
    %v2403 = vunpack.c.0.s8 %v2402
    %v2404 = vlaneseq
    %v2405 = vshrl.u32 %v2404, 7
    %v2406 = vsub.s32 %v2403, %v2405
    %v2407 = vrot.slane %v2393, %v2406
    %v2408 = vcombine.high %v2400, %v2400
    %v2409 = vcombine.high %v2407, %v2407
    %v2410 = vcombine.high %v42, %v42
    %v2412 = vunpack.c.l.s4 1983009808
    %v2413 = vunpack.c.0.s8 %v2412
    %v2414 = vlaneseq
    %v2415 = vshrl.u32 %v2414, 7
    %v2416 = vsub.s32 %v2413, %v2415
    %v2417 = vrot.slane %v42, %v2416
    %v2419 = vunpack.c.l.s4 1983009808
    %v2420 = vunpack.c.0.s8 %v2419
    %v2421 = vlaneseq
    %v2422 = vshrl.u32 %v2421, 7
    %v2423 = vsub.s32 %v2420, %v2422
    %v2424 = vrot.slane %v2410, %v2423
    %v2425 = vcombine.high %v2417, %v2417
    %v2426 = vcombine.high %v2424, %v2424
    %v2427 = vcombine.high %v43, %v43
    %v2429 = vunpack.c.l.s4 1983009808
    %v2430 = vunpack.c.0.s8 %v2429
    %v2431 = vlaneseq
    %v2432 = vshrl.u32 %v2431, 7
    %v2433 = vsub.s32 %v2430, %v2432
    %v2434 = vrot.slane %v43, %v2433
    %v2436 = vunpack.c.l.s4 1983009808
    %v2437 = vunpack.c.0.s8 %v2436
    %v2438 = vlaneseq
    %v2439 = vshrl.u32 %v2438, 7
    %v2440 = vsub.s32 %v2437, %v2439
    %v2441 = vrot.slane %v2427, %v2440
    %v2442 = vcombine.high %v2434, %v2434
    %v2443 = vcombine.high %v2441, %v2441
    %v2444 = vcombine.high %v44, %v44
    %v2446 = vunpack.c.l.s4 1983009808
    %v2447 = vunpack.c.0.s8 %v2446
    %v2448 = vlaneseq
    %v2449 = vshrl.u32 %v2448, 7
    %v2450 = vsub.s32 %v2447, %v2449
    %v2451 = vrot.slane %v44, %v2450
    %v2453 = vunpack.c.l.s4 1983009808
    %v2454 = vunpack.c.0.s8 %v2453
    %v2455 = vlaneseq
    %v2456 = vshrl.u32 %v2455, 7
    %v2457 = vsub.s32 %v2454, %v2456
    %v2458 = vrot.slane %v2444, %v2457
    %v2459 = vcombine.high %v2451, %v2451
    %v2460 = vcombine.high %v2458, %v2458
    %v2461 = vcombine.high %v45, %v45
    %v2463 = vunpack.c.l.s4 1983009808
    %v2464 = vunpack.c.0.s8 %v2463
    %v2465 = vlaneseq
    %v2466 = vshrl.u32 %v2465, 7
    %v2467 = vsub.s32 %v2464, %v2466
    %v2468 = vrot.slane %v45, %v2467
    %v2470 = vunpack.c.l.s4 1983009808
    %v2471 = vunpack.c.0.s8 %v2470
    %v2472 = vlaneseq
    %v2473 = vshrl.u32 %v2472, 7
    %v2474 = vsub.s32 %v2471, %v2473
    %v2475 = vrot.slane %v2461, %v2474
    %v2476 = vcombine.high %v2468, %v2468
    %v2477 = vcombine.high %v2475, %v2475
    %v2478 = vcombine.high %v46, %v46
    %v2480 = vunpack.c.l.s4 1983009808
    %v2481 = vunpack.c.0.s8 %v2480
    %v2482 = vlaneseq
    %v2483 = vshrl.u32 %v2482, 7
    %v2484 = vsub.s32 %v2481, %v2483
    %v2485 = vrot.slane %v46, %v2484
    %v2487 = vunpack.c.l.s4 1983009808
    %v2488 = vunpack.c.0.s8 %v2487
    %v2489 = vlaneseq
    %v2490 = vshrl.u32 %v2489, 7
    %v2491 = vsub.s32 %v2488, %v2490
    %v2492 = vrot.slane %v2478, %v2491
    %v2493 = vcombine.high %v2485, %v2485
    %v2494 = vcombine.high %v2492, %v2492
    %v2495 = vcombine.high %v47, %v47
    %v2497 = vunpack.c.l.s4 1983009808
    %v2498 = vunpack.c.0.s8 %v2497
    %v2499 = vlaneseq
    %v2500 = vshrl.u32 %v2499, 7
    %v2501 = vsub.s32 %v2498, %v2500
    %v2502 = vrot.slane %v47, %v2501
    %v2504 = vunpack.c.l.s4 1983009808
    %v2505 = vunpack.c.0.s8 %v2504
    %v2506 = vlaneseq
    %v2507 = vshrl.u32 %v2506, 7
    %v2508 = vsub.s32 %v2505, %v2507
    %v2509 = vrot.slane %v2495, %v2508
    %v2510 = vcombine.high %v2502, %v2502
    %v2511 = vcombine.high %v2509, %v2509
    %v2512 = vcombine.high %v48, %v48
    %v2514 = vunpack.c.l.s4 1983009808
    %v2515 = vunpack.c.0.s8 %v2514
    %v2516 = vlaneseq
    %v2517 = vshrl.u32 %v2516, 7
    %v2518 = vsub.s32 %v2515, %v2517
    %v2519 = vrot.slane %v48, %v2518
    %v2521 = vunpack.c.l.s4 1983009808
    %v2522 = vunpack.c.0.s8 %v2521
    %v2523 = vlaneseq
    %v2524 = vshrl.u32 %v2523, 7
    %v2525 = vsub.s32 %v2522, %v2524
    %v2526 = vrot.slane %v2512, %v2525
    %v2527 = vcombine.high %v2519, %v2519
    %v2528 = vcombine.high %v2526, %v2526
    %v2529 = vcombine.high %v49, %v49
    %v2531 = vunpack.c.l.s4 1983009808
    %v2532 = vunpack.c.0.s8 %v2531
    %v2533 = vlaneseq
    %v2534 = vshrl.u32 %v2533, 7
    %v2535 = vsub.s32 %v2532, %v2534
    %v2536 = vrot.slane %v49, %v2535
    %v2538 = vunpack.c.l.s4 1983009808
    %v2539 = vunpack.c.0.s8 %v2538
    %v2540 = vlaneseq
    %v2541 = vshrl.u32 %v2540, 7
    %v2542 = vsub.s32 %v2539, %v2541
    %v2543 = vrot.slane %v2529, %v2542
    %v2544 = vcombine.high %v2536, %v2536
    %v2545 = vcombine.high %v2543, %v2543
    %v2546 = vcombine.high %v50, %v50
    %v2548 = vunpack.c.l.s4 1983009808
    %v2549 = vunpack.c.0.s8 %v2548
    %v2550 = vlaneseq
    %v2551 = vshrl.u32 %v2550, 7
    %v2552 = vsub.s32 %v2549, %v2551
    %v2553 = vrot.slane %v50, %v2552
    %v2555 = vunpack.c.l.s4 1983009808
    %v2556 = vunpack.c.0.s8 %v2555
    %v2557 = vlaneseq
    %v2558 = vshrl.u32 %v2557, 7
    %v2559 = vsub.s32 %v2556, %v2558
    %v2560 = vrot.slane %v2546, %v2559
    %v2561 = vcombine.high %v2553, %v2553
    %v2562 = vcombine.high %v2560, %v2560
    %v2563 = vcombine.high %v51, %v51
    %v2565 = vunpack.c.l.s4 1983009808
    %v2566 = vunpack.c.0.s8 %v2565
    %v2567 = vlaneseq
    %v2568 = vshrl.u32 %v2567, 7
    %v2569 = vsub.s32 %v2566, %v2568
    %v2570 = vrot.slane %v51, %v2569
    %v2572 = vunpack.c.l.s4 1983009808
    %v2573 = vunpack.c.0.s8 %v2572
    %v2574 = vlaneseq
    %v2575 = vshrl.u32 %v2574, 7
    %v2576 = vsub.s32 %v2573, %v2575
    %v2577 = vrot.slane %v2563, %v2576
    %v2578 = vcombine.high %v2570, %v2570
    %v2579 = vcombine.high %v2577, %v2577
    %v2580 = vcombine.high %v52, %v52
    %v2582 = vunpack.c.l.s4 1983009808
    %v2583 = vunpack.c.0.s8 %v2582
    %v2584 = vlaneseq
    %v2585 = vshrl.u32 %v2584, 7
    %v2586 = vsub.s32 %v2583, %v2585
    %v2587 = vrot.slane %v52, %v2586
    %v2589 = vunpack.c.l.s4 1983009808
    %v2590 = vunpack.c.0.s8 %v2589
    %v2591 = vlaneseq
    %v2592 = vshrl.u32 %v2591, 7
    %v2593 = vsub.s32 %v2590, %v2592
    %v2594 = vrot.slane %v2580, %v2593
    %v2595 = vcombine.high %v2587, %v2587
    %v2596 = vcombine.high %v2594, %v2594
    %v2597 = vcombine.high %v53, %v53
    %v2599 = vunpack.c.l.s4 1983009808
    %v2600 = vunpack.c.0.s8 %v2599
    %v2601 = vlaneseq
    %v2602 = vshrl.u32 %v2601, 7
    %v2603 = vsub.s32 %v2600, %v2602
    %v2604 = vrot.slane %v53, %v2603
    %v2606 = vunpack.c.l.s4 1983009808
    %v2607 = vunpack.c.0.s8 %v2606
    %v2608 = vlaneseq
    %v2609 = vshrl.u32 %v2608, 7
    %v2610 = vsub.s32 %v2607, %v2609
    %v2611 = vrot.slane %v2597, %v2610
    %v2612 = vcombine.high %v2604, %v2604
    %v2613 = vcombine.high %v2611, %v2611
    %v2614 = vcombine.high %v54, %v54
    %v2616 = vunpack.c.l.s4 1983009808
    %v2617 = vunpack.c.0.s8 %v2616
    %v2618 = vlaneseq
    %v2619 = vshrl.u32 %v2618, 7
    %v2620 = vsub.s32 %v2617, %v2619
    %v2621 = vrot.slane %v54, %v2620
    %v2623 = vunpack.c.l.s4 1983009808
    %v2624 = vunpack.c.0.s8 %v2623
    %v2625 = vlaneseq
    %v2626 = vshrl.u32 %v2625, 7
    %v2627 = vsub.s32 %v2624, %v2626
    %v2628 = vrot.slane %v2614, %v2627
    %v2629 = vcombine.high %v2621, %v2621
    %v2630 = vcombine.high %v2628, %v2628
    %v2631 = vcombine.high %v55, %v55
    %v2633 = vunpack.c.l.s4 1983009808
    %v2634 = vunpack.c.0.s8 %v2633
    %v2635 = vlaneseq
    %v2636 = vshrl.u32 %v2635, 7
    %v2637 = vsub.s32 %v2634, %v2636
    %v2638 = vrot.slane %v55, %v2637
    %v2640 = vunpack.c.l.s4 1983009808
    %v2641 = vunpack.c.0.s8 %v2640
    %v2642 = vlaneseq
    %v2643 = vshrl.u32 %v2642, 7
    %v2644 = vsub.s32 %v2641, %v2643
    %v2645 = vrot.slane %v2631, %v2644
    %v2646 = vcombine.high %v2638, %v2638
    %v2647 = vcombine.high %v2645, %v2645
    %v2648 = vcombine.high %v56, %v56
    %v2650 = vunpack.c.l.s4 1983009808
    %v2651 = vunpack.c.0.s8 %v2650
    %v2652 = vlaneseq
    %v2653 = vshrl.u32 %v2652, 7
    %v2654 = vsub.s32 %v2651, %v2653
    %v2655 = vrot.slane %v56, %v2654
    %v2657 = vunpack.c.l.s4 1983009808
    %v2658 = vunpack.c.0.s8 %v2657
    %v2659 = vlaneseq
    %v2660 = vshrl.u32 %v2659, 7
    %v2661 = vsub.s32 %v2658, %v2660
    %v2662 = vrot.slane %v2648, %v2661
    %v2663 = vcombine.high %v2655, %v2655
    %v2664 = vcombine.high %v2662, %v2662
    %v2665 = vcombine.high %v57, %v57
    %v2667 = vunpack.c.l.s4 1983009808
    %v2668 = vunpack.c.0.s8 %v2667
    %v2669 = vlaneseq
    %v2670 = vshrl.u32 %v2669, 7
    %v2671 = vsub.s32 %v2668, %v2670
    %v2672 = vrot.slane %v57, %v2671
    %v2674 = vunpack.c.l.s4 1983009808
    %v2675 = vunpack.c.0.s8 %v2674
    %v2676 = vlaneseq
    %v2677 = vshrl.u32 %v2676, 7
    %v2678 = vsub.s32 %v2675, %v2677
    %v2679 = vrot.slane %v2665, %v2678
    %v2680 = vcombine.high %v2672, %v2672
    %v2681 = vcombine.high %v2679, %v2679
    %v4858 = vunpack.c.l.b16 %v58
    %v4859 = vunpack.c.l.b16 %v59
    %v4860 = vunpack.c.l.b16 %v60
    %v4861 = vunpack.c.l.b16 %v61
    %v4862 = vunpack.c.l.b16 %v62
    %v4863 = vunpack.c.l.b16 %v63
    %v4864 = vunpack.c.l.b16 %v64
    %v4865 = vunpack.c.l.b16 %v65
    %v4866 = vunpack.c.l.b16 %v66
    %v4867 = vunpack.c.l.b16 %v67
    %v4868 = vunpack.c.l.b16 %v68
    %v4869 = vunpack.c.l.b16 %v69
    %v4870 = vunpack.c.l.b16 %v70
    %v4871 = vunpack.c.l.b16 %v71
    %v4872 = vunpack.c.l.b16 %v72
    %v4873 = vunpack.c.l.b16 %v73
    %v4874 = vunpack.c.l.b16 %v74
    %v4875 = vunpack.c.l.b16 %v75
    %v4876 = vunpack.c.l.b16 %v76
    %v4877 = vunpack.c.l.b16 %v77
    %v4878 = vunpack.c.l.b16 %v78
    %v4879 = vunpack.c.l.b16 %v79
    %v4880 = vunpack.c.l.b16 %v80
    %v4881 = vunpack.c.l.b16 %v81
    %v4882 = vunpack.c.l.b16 %v82
    %v4883 = vunpack.c.l.b16 %v83
    %v4884 = vunpack.c.l.b16 %v84
    %v4885 = vunpack.c.l.b16 %v85
    %v4886 = vunpack.c.l.b16 %v86
    %v4887 = vunpack.c.l.b16 %v87
    %v4888 = vunpack.c.l.b16 %v88
    %v4889 = vunpack.c.l.b16 %v89
    %v4890 = vunpack.c.l.b16 %v90
    %v4891 = vunpack.c.l.b16 %v91
    %v4892 = vunpack.c.l.b16 %v92
    %v4893 = vunpack.c.l.b16 %v93
    %v4894 = vunpack.c.l.b16 %v94
    %v4895 = vunpack.c.l.b16 %v95
    %v4896 = vunpack.c.l.b16 %v96
    %v4897 = vunpack.c.l.b16 %v97
    %v4898 = vunpack.c.l.b16 %v98
    %v4899 = vunpack.c.l.b16 %v99
    %v4900 = vunpack.c.l.b16 %v100
    %v4901 = vunpack.c.l.b16 %v101
    %v4902 = vunpack.c.l.b16 %v102
    %v4903 = vunpack.c.l.b16 %v103
    %v4904 = vunpack.c.l.b16 %v104
    %v4905 = vunpack.c.l.b16 %v105
    %v4906 = vunpack.c.l.b16 %v106
    %v4907 = vunpack.c.l.b16 %v107
    %v4908 = vunpack.c.l.b16 %v108
    %v4909 = vunpack.c.l.b16 %v109
    %v4910 = vunpack.c.l.b16 %v110
    %v4911 = vunpack.c.l.b16 %v111
    %v4912 = vunpack.c.l.b16 %v112
    %v4913 = vunpack.c.l.b16 %v113
    %v4914 = vunpack.c.l.b16 %v114
    %v4915 = vunpack.c.l.b16 %v115
    %v4916 = vunpack.c.l.b16 %v116
    %v4917 = vunpack.c.l.b16 %v117
    %v4918 = vunpack.c.l.b16 %v118
    %v4919 = vunpack.c.l.b16 %v119
    %v4920 = vunpack.c.l.b16 %v120
    %v4921 = vunpack.c.l.b16 %v121
    %v4922 = vunpack.c.l.b16 %v122
    %v4923 = vunpack.c.l.b16 %v123
    %v4924 = vunpack.c.l.b16 %v124
    %v4925 = vunpack.c.l.b16 %v125
    %v4926 = vunpack.c.l.b16 %v126
    %v4927 = vunpack.c.l.b16 %v127
    %v4928 = vunpack.c.l.b16 %v128
    %v4929 = vunpack.c.l.b16 %v129
    %v4930 = vunpack.c.l.b16 %v130
    %v4931 = vunpack.c.l.b16 %v131
    %v4932 = vunpack.c.l.b16 %v132
    %v4933 = vunpack.c.l.b16 %v133
    %v4934 = vunpack.c.l.b16 %v134
    %v4935 = vunpack.c.l.b16 %v135
    %v4936 = vunpack.c.l.b16 %v136
    %v4937 = vunpack.c.l.b16 %v137
    %v4938 = vunpack.c.l.b16 %v138
    %v4939 = vunpack.c.l.b16 %v139
    %v4940 = vunpack.c.l.b16 %v140
    %v4941 = vunpack.c.l.b16 %v141
    %v4942 = vunpack.c.l.b16 %v142
    %v4943 = vunpack.c.l.b16 %v143
    %v4944 = vunpack.c.l.b16 %v144
    %v4945 = vunpack.c.l.b16 %v145
    %v4946 = vunpack.c.l.b16 %v146
    %v4947 = vunpack.c.l.b16 %v147
    %v4948 = vunpack.c.l.b16 %v148
    %v4949 = vunpack.c.l.b16 %v149
    %v4950 = vunpack.c.l.b16 %v150
    %v4951 = vunpack.c.l.b16 %v151
    %v4952 = vunpack.c.l.b16 %v152
    %v4953 = vunpack.c.l.b16 %v153
    %v4954 = vunpack.c.l.b16 %v154
    %v4955 = vunpack.c.l.b16 %v155
    %v4956 = vunpack.c.l.b16 %v156
    %v4957 = vunpack.c.l.b16 %v157
    %v4958 = vunpack.c.l.b16 %v158
    %v4959 = vunpack.c.l.b16 %v159
    %v4960 = vunpack.c.l.b16 %v160
    %v4961 = vunpack.c.l.b16 %v161
    %v4962 = vunpack.c.l.b16 %v162
    %v4963 = vunpack.c.l.b16 %v163
    %v4964 = vunpack.c.l.b16 %v164
    %v4965 = vunpack.c.l.b16 %v165
    %v4966 = vunpack.c.l.b16 %v166
    %v4967 = vunpack.c.l.b16 %v167
    %v4968 = vunpack.c.l.b16 %v168
    %v4969 = vunpack.c.l.b16 %v169
    %v4970 = vunpack.c.l.b16 %v170
    %v4971 = vunpack.c.l.b16 %v171
    %v4972 = vunpack.c.l.b16 %v172
    %v4973 = vunpack.c.l.b16 %v173
    %v4974 = vunpack.c.l.b16 %v174
    %v4975 = vunpack.c.l.b16 %v175
    %v4976 = vunpack.c.l.b16 %v176
    %v4977 = vunpack.c.l.b16 %v177
    %v4978 = vunpack.c.l.b16 %v178
    %v4979 = vunpack.c.l.b16 %v179
    %v4980 = vunpack.c.l.b16 %v180
    %v4981 = vunpack.c.l.b16 %v181
    %v4982 = vunpack.c.l.b16 %v182
    %v4983 = vunpack.c.l.b16 %v183
    %v4984 = vunpack.c.l.b16 %v184
    %v4985 = vunpack.c.l.b16 %v185
    %v4986 = vunpack.c.l.b16 %v186
    %v4987 = vunpack.c.l.b16 %v187
    %v4988 = vunpack.c.l.b16 %v188
    %v4989 = vunpack.c.l.b16 %v189
    %v4990 = vunpack.c.l.b16 %v190
    %v4991 = vunpack.c.l.b16 %v191
    %v4992 = vunpack.c.l.b16 %v192
    %v4993 = vunpack.c.l.b16 %v193
    %v4994 = vunpack.c.l.b16 %v194
    %v4995 = vunpack.c.l.b16 %v195
    %v4996 = vunpack.c.l.b16 %v196
    %v4997 = vunpack.c.l.b16 %v197
    %v4998 = vunpack.c.l.b16 %v198
    %v4999 = vunpack.c.l.b16 %v199
    %v5000 = vunpack.c.l.b16 %v200
    %v5001 = vunpack.c.l.b16 %v201
    %v5002 = vunpack.c.l.b16 %v202
    %v5003 = vunpack.c.l.b16 %v203
    %v5004 = vunpack.c.l.b16 %v204
    %v5005 = vunpack.c.l.b16 %v205
    %v5006 = vunpack.c.l.b16 %v206
    %v5007 = vunpack.c.l.b16 %v207
    %v5008 = vunpack.c.l.b16 %v208
    %v5009 = vunpack.c.l.b16 %v209
    %v5010 = vunpack.c.l.b16 %v210
    %v5011 = vunpack.c.l.b16 %v211
    %v5012 = vunpack.c.l.b16 %v212
    %v5013 = vunpack.c.l.b16 %v213
    %v5014 = vunpack.c.l.b16 %v214
    %v5015 = vunpack.c.l.b16 %v215
    %v5016 = vunpack.c.l.b16 %v216
    %v5017 = vunpack.c.l.b16 %v217
    %v5018 = vunpack.c.l.b16 %v218
    %v5019 = vunpack.c.l.b16 %v219
    %v5020 = vunpack.c.l.b16 %v220
    %v5021 = vunpack.c.l.b16 %v221
    %v5022 = vunpack.c.l.b16 %v222
    %v5023 = vunpack.c.l.b16 %v223
    %v5024 = vunpack.c.l.b16 %v224
    %v5025 = vunpack.c.l.b16 %v225
    %v5026 = vunpack.c.l.b16 %v226
    %v5027 = vunpack.c.l.b16 %v227
    %v5028 = vunpack.c.l.b16 %v228
    %v5029 = vunpack.c.l.b16 %v229
    %v5030 = vunpack.c.l.b16 %v230
    %v5031 = vunpack.c.l.b16 %v231
    %v5032 = vunpack.c.l.b16 %v232
    %v5033 = vunpack.c.l.b16 %v233
    %v5034 = vunpack.c.l.b16 %v234
    %v5035 = vunpack.c.l.b16 %v235
    %v5036 = vunpack.c.l.b16 %v236
    %v5037 = vunpack.c.l.b16 %v237
    %v5038 = vunpack.c.l.b16 %v238
    %v5039 = vunpack.c.l.b16 %v239
    %v5040 = vunpack.c.l.b16 %v240
    %v5041 = vunpack.c.l.b16 %v241
    %v5042 = vunpack.c.l.b16 %v242
    %v5043 = vunpack.c.l.b16 %v243
    %v5044 = vunpack.c.l.b16 %v244
    %v5045 = vunpack.c.l.b16 %v245
    %v5046 = vunpack.c.l.b16 %v246
    %v5047 = vunpack.c.l.b16 %v247
    %v5048 = vunpack.c.l.b16 %v248
    %v5049 = vunpack.c.l.b16 %v249
    %v5050 = vunpack.c.l.b16 %v250
    %v5051 = vunpack.c.l.b16 %v251
    %v5052 = vunpack.c.l.b16 %v252
    %v5053 = vunpack.c.l.b16 %v253
    %v5054 = vunpack.c.l.b16 %v254
    %v5055 = vunpack.c.l.b16 %v255
    %v5056 = vunpack.c.l.b16 %v256
    %v5057 = vunpack.c.l.b16 %v257
    %v5058 = vunpack.c.l.b16 %v258
    %v5059 = vunpack.c.l.b16 %v259
    %v5060 = vunpack.c.l.b16 %v260
    %v5061 = vunpack.c.l.b16 %v261
    %v5062 = vunpack.c.l.b16 %v262
    %v5063 = vunpack.c.l.b16 %v263
    %v5064 = vunpack.c.l.b16 %v264
    %v5065 = vunpack.c.l.b16 %v265
    %v5066 = vunpack.c.l.b16 %v266
    %v5067 = vunpack.c.l.b16 %v267
    %v5068 = vunpack.c.l.b16 %v268
    %v5069 = vunpack.c.l.b16 %v269
    %v5070 = vunpack.c.l.b16 %v270
    %v5071 = vunpack.c.l.b16 %v271
    %v5072 = vunpack.c.l.b16 %v272
    %v5073 = vunpack.c.l.b16 %v273
    %v5074 = vunpack.c.l.b16 %v274
    %v5075 = vunpack.c.l.b16 %v275
    %v5076 = vunpack.c.l.b16 %v276
    %v5077 = vunpack.c.l.b16 %v277
    %v5078 = vunpack.c.l.b16 %v278
    %v5079 = vunpack.c.l.b16 %v279
    %v5080 = vunpack.c.l.b16 %v280
    %v5081 = vunpack.c.l.b16 %v281
    %v5082 = vunpack.c.l.b16 %v282
    %v5083 = vunpack.c.l.b16 %v283
    %v5084 = vunpack.c.l.b16 %v284
    %v5085 = vunpack.c.l.b16 %v285
    %v5086 = vunpack.c.l.b16 %v286
    %v5087 = vunpack.c.l.b16 %v287
    %v5088 = vunpack.c.l.b16 %v288
    %v5089 = vunpack.c.l.b16 %v289
    %v5090 = vunpack.c.l.b16 %v290
    %v5091 = vunpack.c.l.b16 %v291
    %v5092 = vunpack.c.l.b16 %v292
    %v5093 = vunpack.c.l.b16 %v293
    %v5094 = vunpack.c.l.b16 %v294
    %v5095 = vunpack.c.l.b16 %v295
    %v5096 = vunpack.c.l.b16 %v296
    %v5097 = vunpack.c.l.b16 %v297
    %v5098 = vunpack.c.l.b16 %v298
    %v5099 = vunpack.c.l.b16 %v299
    %v5100 = vunpack.c.l.b16 %v300
    %v5101 = vunpack.c.l.b16 %v301
    %v5102 = vunpack.c.l.b16 %v302
    %v5103 = vunpack.c.l.b16 %v303
    %v5104 = vunpack.c.l.b16 %v304
    %v5105 = vunpack.c.l.b16 %v305
    %v5106 = vunpack.c.l.b16 %v306
    %v5107 = vunpack.c.l.b16 %v307
    %v5108 = vunpack.c.l.b16 %v308
    %v5109 = vunpack.c.l.b16 %v309
    %v5110 = vunpack.c.l.b16 %v310
    %v5111 = vunpack.c.l.b16 %v311
    %v5112 = vunpack.c.l.b16 %v312
    %v5113 = vunpack.c.l.b16 %v313
    %v5114 = vunpack.c.l.b16 %v314
    %v5115 = vunpack.c.l.b16 %v315
    %v5116 = vunpack.c.l.b16 %v316
    %v5117 = vunpack.c.l.b16 %v317
    %v5118 = vunpack.c.l.b16 %v318
    %v5119 = vunpack.c.l.b16 %v319
    %v5120 = vunpack.c.l.b16 %v320
    %v5121 = vunpack.c.l.b16 %v321
    %v5122 = vunpack.c.l.b16 %v322
    %v5123 = vunpack.c.l.b16 %v323
    %v5124 = vunpack.c.l.b16 %v324
    %v5125 = vunpack.c.l.b16 %v325
    %v5126 = vunpack.c.l.b16 %v326
    %v5127 = vunpack.c.l.b16 %v327
    %v5128 = vunpack.c.l.b16 %v328
    %v5129 = vunpack.c.l.b16 %v329
    %v5130 = vunpack.c.l.b16 %v330
    %v5131 = vunpack.c.l.b16 %v331
    %v5132 = vunpack.c.l.b16 %v332
    %v5133 = vunpack.c.l.b16 %v333
    %v5134 = vunpack.c.l.b16 %v334
    %v5135 = vunpack.c.l.b16 %v335
    %v5136 = vunpack.c.l.b16 %v336
    %v5137 = vunpack.c.l.b16 %v337
    %v5138 = vunpack.c.l.b16 %v338
    %v5139 = vunpack.c.l.b16 %v339
    %v5140 = vunpack.c.l.b16 %v340
    %v5141 = vunpack.c.l.b16 %v341
    %v5142 = vunpack.c.l.b16 %v342
    %v5143 = vunpack.c.l.b16 %v343
    %v5144 = vunpack.c.l.b16 %v344
    %v5145 = vunpack.c.l.b16 %v345
    %v5146 = vunpack.c.l.b16 %v346
    %v5147 = vunpack.c.l.b16 %v347
    %v5148 = vunpack.c.l.b16 %v348
    %v5149 = vunpack.c.l.b16 %v349
    %v5150 = vunpack.c.l.b16 %v350
    %v5151 = vunpack.c.l.b16 %v351
    %v5152 = vunpack.c.l.b16 %v352
    %v5153 = vunpack.c.l.b16 %v353
    %v5154 = vunpack.c.l.b16 %v354
    %v5155 = vunpack.c.l.b16 %v355
    %v5156 = vunpack.c.l.b16 %v356
    %v5157 = vunpack.c.l.b16 %v357
    %v5158 = vunpack.c.l.b16 %v358
    %v5159 = vunpack.c.l.b16 %v359
    %v5160 = vunpack.c.l.b16 %v360
    %v5161 = vunpack.c.l.b16 %v361
    %v5162 = vunpack.c.l.b16 %v362
    %v5163 = vunpack.c.l.b16 %v363
    %v5164 = vunpack.c.l.b16 %v364
    %v5165 = vunpack.c.l.b16 %v365
    %v5166 = vunpack.c.l.b16 %v366
    %v5167 = vunpack.c.l.b16 %v367
    %v5168 = vunpack.c.l.b16 %v368
    %v5169 = vunpack.c.l.b16 %v369
    %v5170 = vunpack.c.l.b16 %v370
    %v5171 = vunpack.c.l.b16 %v371
    %v5172 = vunpack.c.l.b16 %v372
    %v5173 = vunpack.c.l.b16 %v373
    %v5174 = vunpack.c.l.b16 %v374
    %v5175 = vunpack.c.l.b16 %v375
    %v5176 = vunpack.c.l.b16 %v376
    %v5177 = vunpack.c.l.b16 %v377
    %v5178 = vunpack.c.l.b16 %v378
    %v5179 = vunpack.c.l.b16 %v379
    %v5180 = vunpack.c.l.b16 %v380
    %v5181 = vunpack.c.l.b16 %v381
    %v5182 = vunpack.c.l.b16 %v382
    %v5183 = vunpack.c.l.b16 %v383
    %v5184 = vunpack.c.l.b16 %v384
    %v5185 = vunpack.c.l.b16 %v385
    %v5186 = vunpack.c.l.b16 %v386
    %v5187 = vunpack.c.l.b16 %v387
    %v5188 = vunpack.c.l.b16 %v388
    %v5189 = vunpack.c.l.b16 %v389
    %v5190 = vunpack.c.l.b16 %v390
    %v5191 = vunpack.c.l.b16 %v391
    %v5192 = vunpack.c.l.b16 %v392
    %v5193 = vunpack.c.l.b16 %v393
    %v5194 = vunpack.c.l.b16 %v394
    %v5195 = vunpack.c.l.b16 %v395
    %v5196 = vunpack.c.l.b16 %v396
    %v5197 = vunpack.c.l.b16 %v397
    %v5198 = vunpack.c.l.b16 %v398
    %v5199 = vunpack.c.l.b16 %v399
    %v5200 = vunpack.c.l.b16 %v400
    %v5201 = vunpack.c.l.b16 %v401
    %v5202 = vunpack.c.l.b16 %v402
    %v5203 = vunpack.c.l.b16 %v403
    %v5204 = vunpack.c.l.b16 %v404
    %v5205 = vunpack.c.l.b16 %v405
    %v5206 = vunpack.c.l.b16 %v406
    %v5207 = vunpack.c.l.b16 %v407
    %v5208 = vunpack.c.l.b16 %v408
    %v5209 = vunpack.c.l.b16 %v409
    %v5210 = vunpack.c.l.b16 %v410
    %v5211 = vunpack.c.l.b16 %v411
    %v5212 = vunpack.c.l.b16 %v412
    %v5213 = vunpack.c.l.b16 %v413
    %v5214 = vunpack.c.l.b16 %v414
    %v5215 = vunpack.c.l.b16 %v415
    %v5216 = vunpack.c.l.b16 %v416
    %v5217 = vunpack.c.l.b16 %v417
    %v5218 = vunpack.c.l.b16 %v418
    %v5219 = vunpack.c.l.b16 %v419
    %v5220 = vunpack.c.l.b16 %v420
    %v5221 = vunpack.c.l.b16 %v421
    %v5222 = vunpack.c.l.b16 %v422
    %v5223 = vunpack.c.l.b16 %v423
    %v5224 = vunpack.c.l.b16 %v424
    %v5225 = vunpack.c.l.b16 %v425
    %v5226 = vunpack.c.l.b16 %v426
    %v5227 = vunpack.c.l.b16 %v427
    %v5228 = vunpack.c.l.b16 %v428
    %v5229 = vunpack.c.l.b16 %v429
    %v5230 = vunpack.c.l.b16 %v430
    %v5231 = vunpack.c.l.b16 %v431
    %v5232 = vunpack.c.l.b16 %v432
    %v5233 = vunpack.c.l.b16 %v433
    %v5234 = vunpack.c.l.b16 %v434
    %v5235 = vunpack.c.l.b16 %v435
    %v5236 = vunpack.c.l.b16 %v436
    %v5237 = vunpack.c.l.b16 %v437
    %v5238 = vunpack.c.l.b16 %v438
    %v5239 = vunpack.c.l.b16 %v439
    %v5240 = vunpack.c.l.b16 %v440
    %v5241 = vunpack.c.l.b16 %v441
    %v5242 = vunpack.c.l.b16 %v442
    %v5243 = vunpack.c.l.b16 %v443
    %v5244 = vunpack.c.l.b16 %v444
    %v5245 = vunpack.c.l.b16 %v445
    %v5246 = vunpack.c.l.b16 %v446
    %v5247 = vunpack.c.l.b16 %v447
    %v5248 = vunpack.c.l.b16 %v448
    %v5249 = vunpack.c.l.b16 %v449
    %v5250 = vunpack.c.l.b16 %v450
    %v5251 = vunpack.c.l.b16 %v451
    %v5252 = vunpack.c.l.b16 %v452
    %v5253 = vunpack.c.l.b16 %v453
    %v5254 = vunpack.c.l.b16 %v454
    %v5255 = vunpack.c.l.b16 %v455
    %v5256 = vunpack.c.l.b16 %v456
    %v5257 = vunpack.c.l.b16 %v457
    %v5258 = vunpack.c.l.b16 %v458
    %v5259 = vunpack.c.l.b16 %v459
    %v5260 = vunpack.c.l.b16 %v460
    %v5261 = vunpack.c.l.b16 %v461
    %v5262 = vunpack.c.l.b16 %v462
    %v5263 = vunpack.c.l.b16 %v463
    %v5264 = vunpack.c.l.b16 %v464
    %v5265 = vunpack.c.l.b16 %v465
    %v5266 = vunpack.c.l.b16 %v466
    %v5267 = vunpack.c.l.b16 %v467
    %v5268 = vunpack.c.l.b16 %v468
    %v5269 = vunpack.c.l.b16 %v469
    %v5270 = vunpack.c.l.b16 %v470
    %v5271 = vunpack.c.l.b16 %v471
    %v5272 = vunpack.c.l.b16 %v472
    %v5273 = vunpack.c.l.b16 %v473
    %v5274 = vunpack.c.l.b16 %v474
    %v5275 = vunpack.c.l.b16 %v475
    %v5276 = vunpack.c.l.b16 %v476
    %v5277 = vunpack.c.l.b16 %v477
    %v5278 = vunpack.c.l.b16 %v478
    %v5279 = vunpack.c.l.b16 %v479
    %v5280 = vunpack.c.l.b16 %v480
    %v5281 = vunpack.c.l.b16 %v481
    %v5282 = vunpack.c.l.b16 %v482
    %v5283 = vunpack.c.l.b16 %v483
    %v5284 = vunpack.c.l.b16 %v484
    %v5285 = vunpack.c.l.b16 %v485
    %v5286 = vunpack.c.l.b16 %v486
    %v5287 = vunpack.c.l.b16 %v487
    %v5288 = vunpack.c.l.b16 %v488
    %v5289 = vunpack.c.l.b16 %v489
    %v5290 = vunpack.c.l.b16 %v490
    %v5291 = vunpack.c.l.b16 %v491
    %v5292 = vunpack.c.l.b16 %v492
    %v5293 = vunpack.c.l.b16 %v493
    %v5294 = vunpack.c.l.b16 %v494
    %v5295 = vunpack.c.l.b16 %v495
    %v5296 = vunpack.c.l.b16 %v496
    %v5297 = vunpack.c.l.b16 %v497
    %v5298 = vunpack.c.l.b16 %v498
    %v5299 = vunpack.c.l.b16 %v499
    %v5300 = vunpack.c.l.b16 %v500
    %v5301 = vunpack.c.l.b16 %v501
    %v5302 = vunpack.c.l.b16 %v502
    %v5303 = vunpack.c.l.b16 %v503
    %v5304 = vunpack.c.l.b16 %v504
    %v5305 = vunpack.c.l.b16 %v505
    %v5306 = vunpack.c.l.b16 %v506
    %v5307 = vunpack.c.l.b16 %v507
    %v5308 = vunpack.c.l.b16 %v508
    %v5309 = vunpack.c.l.b16 %v509
    %v5310 = vunpack.c.l.b16 %v510
    %v5311 = vunpack.c.l.b16 %v511
    %v5312 = vunpack.c.l.b16 %v512
    %v5313 = vunpack.c.l.b16 %v513
    %v5314 = vunpack.c.l.b16 %v514
    %v5315 = vunpack.c.l.b16 %v515
    %v5316 = vunpack.c.l.b16 %v516
    %v5317 = vunpack.c.l.b16 %v517
    %v5318 = vunpack.c.l.b16 %v518
    %v5319 = vunpack.c.l.b16 %v519
    %v5320 = vunpack.c.l.b16 %v520
    %v5321 = vunpack.c.l.b16 %v521
    %v5322 = vunpack.c.l.b16 %v522
    %v5323 = vunpack.c.l.b16 %v523
    %v5324 = vunpack.c.l.b16 %v524
    %v5325 = vunpack.c.l.b16 %v525
    %v5326 = vunpack.c.l.b16 %v526
    %v5327 = vunpack.c.l.b16 %v527
    %v5328 = vunpack.c.l.b16 %v528
    %v5329 = vunpack.c.l.b16 %v529
    %v5330 = vunpack.c.l.b16 %v530
    %v5331 = vunpack.c.l.b16 %v531
    %v5332 = vunpack.c.l.b16 %v532
    %v5333 = vunpack.c.l.b16 %v533
    %v5334 = vunpack.c.l.b16 %v534
    %v5335 = vunpack.c.l.b16 %v535
    %v5336 = vunpack.c.l.b16 %v536
    %v5337 = vunpack.c.l.b16 %v537
    %v5338 = vunpack.c.l.b16 %v538
    %v5339 = vunpack.c.l.b16 %v539
    %v5340 = vunpack.c.l.b16 %v540
    %v5341 = vunpack.c.l.b16 %v541
    %v5342 = vunpack.c.l.b16 %v542
    %v5343 = vunpack.c.l.b16 %v543
    %v5344 = vunpack.c.l.b16 %v544
    %v5345 = vunpack.c.l.b16 %v545
    %v5346 = vunpack.c.l.b16 %v546
    %v5347 = vunpack.c.l.b16 %v547
    %v5348 = vunpack.c.l.b16 %v548
    %v5349 = vunpack.c.l.b16 %v549
    %v5350 = vunpack.c.l.b16 %v550
    %v5351 = vunpack.c.l.b16 %v551
    %v5352 = vunpack.c.l.b16 %v552
    %v5353 = vunpack.c.l.b16 %v553
    %v5354 = vunpack.c.l.b16 %v554
    %v5355 = vunpack.c.l.b16 %v555
    %v5356 = vunpack.c.l.b16 %v556
    %v5357 = vunpack.c.l.b16 %v557
    %v5358 = vunpack.c.l.b16 %v558
    %v5359 = vunpack.c.l.b16 %v559
    %v5360 = vunpack.c.l.b16 %v560
    %v5361 = vunpack.c.l.b16 %v561
    %v5362 = vunpack.c.l.b16 %v562
    %v5363 = vunpack.c.l.b16 %v563
    %v5364 = vunpack.c.l.b16 %v564
    %v5365 = vunpack.c.l.b16 %v565
    %v5366 = vunpack.c.l.b16 %v566
    %v5367 = vunpack.c.l.b16 %v567
    %v5368 = vunpack.c.l.b16 %v568
    %v5369 = vunpack.c.l.b16 %v569
    %v5370 = vunpack.c.l.b16 %v570
    %v5371 = vunpack.c.l.b16 %v571
    %v5372 = vunpack.c.l.b16 %v572
    %v5373 = vunpack.c.l.b16 %v573
    %v5374 = vunpack.c.l.b16 %v574
    %v5375 = vunpack.c.l.b16 %v575
    %v5376 = vunpack.c.l.b16 %v576
    %v5377 = vunpack.c.l.b16 %v577
    %v5378 = vunpack.c.l.b16 %v578
    %v5379 = vunpack.c.l.b16 %v579
    %v5380 = vunpack.c.l.b16 %v580
    %v5381 = vunpack.c.l.b16 %v581
    %v5382 = vunpack.c.l.b16 %v582
    %v5383 = vunpack.c.l.b16 %v583
    %v5384 = vunpack.c.l.b16 %v584
    %v5385 = vunpack.c.l.b16 %v585
    %v5386 = vunpack.c.l.b16 %v586
    %v5387 = vunpack.c.l.b16 %v587
    %v5388 = vunpack.c.l.b16 %v588
    %v5389 = vunpack.c.l.b16 %v589
    %v5390 = vunpack.c.l.b16 %v590
    %v5391 = vunpack.c.l.b16 %v591
    %v5392 = vunpack.c.l.b16 %v592
    %v5393 = vunpack.c.l.b16 %v593
    %v5394 = vunpack.c.l.b16 %v594
    %v5395 = vunpack.c.l.b16 %v595
    %v5396 = vunpack.c.l.b16 %v596
    %v5397 = vunpack.c.l.b16 %v597
    %v5398 = vunpack.c.l.b16 %v598
    %v5399 = vunpack.c.l.b16 %v599
    %v5400 = vunpack.c.l.b16 %v600
    %v5401 = vunpack.c.l.b16 %v601
    %v5402 = vunpack.c.l.b16 %v602
    %v5403 = vunpack.c.l.b16 %v603
    %v5404 = vunpack.c.l.b16 %v604
    %v5405 = vunpack.c.l.b16 %v605
    %v5406 = vunpack.c.l.b16 %v606
    %v5407 = vunpack.c.l.b16 %v607
    %v5408 = vunpack.c.l.b16 %v608
    %v5409 = vunpack.c.l.b16 %v609
    %v5410 = vunpack.c.l.b16 %v610
    %v5411 = vunpack.c.l.b16 %v611
    %v5412 = vunpack.c.l.b16 %v612
    %v5413 = vunpack.c.l.b16 %v613
    %v5414 = vunpack.c.l.b16 %v614
    %v5415 = vunpack.c.l.b16 %v615
    %v5416 = vunpack.c.l.b16 %v616
    %v5417 = vunpack.c.l.b16 %v617
    %v5418 = vunpack.c.l.b16 %v618
    %v5419 = vunpack.c.l.b16 %v619
    %v5420 = vunpack.c.l.b16 %v620
    %v5421 = vunpack.c.l.b16 %v621
    %v5422 = vunpack.c.l.b16 %v622
    %v5423 = vunpack.c.l.b16 %v623
    %v5424 = vunpack.c.l.b16 %v624
    %v5425 = vunpack.c.l.b16 %v625
    %v5426 = vunpack.c.l.b16 %v626
    %v5427 = vunpack.c.l.b16 %v627
    %v5428 = vunpack.c.l.b16 %v628
    %v5429 = vunpack.c.l.b16 %v629
    %v5430 = vunpack.c.l.b16 %v630
    %v5431 = vunpack.c.l.b16 %v631
    %v5432 = vunpack.c.l.b16 %v632
    %v5433 = vunpack.c.l.b16 %v633
    %v5434 = vunpack.c.l.b16 %v634
    %v5435 = vunpack.c.l.b16 %v635
    %v5436 = vunpack.c.l.b16 %v636
    %v5437 = vunpack.c.l.b16 %v637
    %v5438 = vunpack.c.l.b16 %v638
    %v5439 = vunpack.c.l.b16 %v639
    %v5440 = vunpack.c.l.b16 %v640
    %v5441 = vunpack.c.l.b16 %v641
    %v5442 = vunpack.c.l.b16 %v642
    %v5443 = vunpack.c.l.b16 %v643
    %v5444 = vunpack.c.l.b16 %v644
    %v5445 = vunpack.c.l.b16 %v645
    %v5446 = vunpack.c.l.b16 %v646
    %v5447 = vunpack.c.l.b16 %v647
    %v5448 = vunpack.c.l.b16 %v648
    %v5449 = vunpack.c.l.b16 %v649
    %v5450 = vunpack.c.l.b16 %v650
    %v5451 = vunpack.c.l.b16 %v651
    %v5452 = vunpack.c.l.b16 %v652
    %v5453 = vunpack.c.l.b16 %v653
    %v5454 = vunpack.c.l.b16 %v654
    %v5455 = vunpack.c.l.b16 %v655
    %v5456 = vunpack.c.l.b16 %v656
    %v5457 = vunpack.c.l.b16 %v657
    %v5458 = vunpack.c.l.b16 %v658
    %v5459 = vunpack.c.l.b16 %v659
    %v5460 = vunpack.c.l.b16 %v660
    %v5461 = vunpack.c.l.b16 %v661
    %v5462 = vunpack.c.l.b16 %v662
    %v5463 = vunpack.c.l.b16 %v663
    %v5464 = vunpack.c.l.b16 %v664
    %v5465 = vunpack.c.l.b16 %v665
    %v5466 = vunpack.c.l.b16 %v666
    %v5467 = vunpack.c.l.b16 %v667
    %v5468 = vunpack.c.l.b16 %v668
    %v5469 = vunpack.c.l.b16 %v669
    %v5470 = vunpack.c.l.b16 %v670
    %v5471 = vunpack.c.l.b16 %v671
    %v5472 = vunpack.c.l.b16 %v672
    %v5473 = vunpack.c.l.b16 %v673
    %v5474 = vunpack.c.l.b16 %v674
    %v5475 = vunpack.c.l.b16 %v675
    %v5476 = vunpack.c.l.b16 %v676
    %v5477 = vunpack.c.l.b16 %v677
    %v5478 = vunpack.c.l.b16 %v678
    %v5479 = vunpack.c.l.b16 %v679
    %v5480 = vunpack.c.l.b16 %v680
    %v5481 = vunpack.c.l.b16 %v681
    %v5482 = vunpack.c.l.b16 %v682
    %v5483 = vunpack.c.l.b16 %v683
    %v5484 = vunpack.c.l.b16 %v684
    %v5485 = vunpack.c.l.b16 %v685
    %v5486 = vunpack.c.l.b16 %v686
    %v5487 = vunpack.c.l.b16 %v687
    %v5488 = vunpack.c.l.b16 %v688
    %v5489 = vunpack.c.l.b16 %v689
    %v5490 = vunpack.c.l.b16 %v690
    %v5491 = vunpack.c.l.b16 %v691
    %v5492 = vunpack.c.l.b16 %v692
    %v5493 = vunpack.c.l.b16 %v693
    %v5494 = vunpack.c.l.b16 %v694
    %v5495 = vunpack.c.l.b16 %v695
    %v5496 = vunpack.c.l.b16 %v696
    %v5497 = vunpack.c.l.b16 %v697
    %v5498 = vunpack.c.l.b16 %v698
    %v5499 = vunpack.c.l.b16 %v699
    %v5500 = vunpack.c.l.b16 %v700
    %v5501 = vunpack.c.l.b16 %v701
    %v5502 = vunpack.c.l.b16 %v702
    %v5503 = vunpack.c.l.b16 %v703
    %v5504 = vunpack.c.l.b16 %v704
    %v5505 = vunpack.c.l.b16 %v705
    %v5506 = vunpack.c.l.b16 %v706
    %v5507 = vunpack.c.l.b16 %v707
    %v5508 = vunpack.c.l.b16 %v708
    %v5509 = vunpack.c.l.b16 %v709
    %v5510 = vunpack.c.l.b16 %v710
    %v5511 = vunpack.c.l.b16 %v711
    %v5512 = vunpack.c.l.b16 %v712
    %v5513 = vunpack.c.l.b16 %v713
    %v5514 = vunpack.c.l.b16 %v714
    %v5515 = vunpack.c.l.b16 %v715
    %v5516 = vunpack.c.l.b16 %v716
    %v5517 = vunpack.c.l.b16 %v717
    %v5518 = vunpack.c.l.b16 %v718
    %v5519 = vunpack.c.l.b16 %v719
    %v5520 = vunpack.c.l.b16 %v720
    %v5521 = vunpack.c.l.b16 %v721
    %v5522 = vunpack.c.l.b16 %v722
    %v5523 = vunpack.c.l.b16 %v723
    %v5524 = vunpack.c.l.b16 %v724
    %v5525 = vunpack.c.l.b16 %v725
    %v5526 = vunpack.c.l.b16 %v726
    %v5527 = vunpack.c.l.b16 %v727
    %v5528 = vunpack.c.l.b16 %v728
    %v5529 = vunpack.c.l.b16 %v729
    %v5530 = vunpack.c.l.b16 %v730
    %v5531 = vunpack.c.l.b16 %v731
    %v5532 = vunpack.c.l.b16 %v732
    %v5533 = vunpack.c.l.b16 %v733
    %v5534 = vunpack.c.l.b16 %v734
    %v5535 = vunpack.c.l.b16 %v735
    %v5536 = vunpack.c.l.b16 %v736
    %v5537 = vunpack.c.l.b16 %v737
    %v5538 = vunpack.c.l.b16 %v738
    %v5539 = vunpack.c.l.b16 %v739
    %v5540 = vunpack.c.l.b16 %v740
    %v5541 = vunpack.c.l.b16 %v741
    %v5542 = vunpack.c.l.b16 %v742
    %v5543 = vunpack.c.l.b16 %v743
    %v5544 = vunpack.c.l.b16 %v744
    %v5545 = vunpack.c.l.b16 %v745
    %v5546 = vunpack.c.l.b16 %v746
    %v5547 = vunpack.c.l.b16 %v747
    %v5548 = vunpack.c.l.b16 %v748
    %v5549 = vunpack.c.l.b16 %v749
    %v5550 = vunpack.c.l.b16 %v750
    %v5551 = vunpack.c.l.b16 %v751
    %v5552 = vunpack.c.l.b16 %v752
    %v5553 = vunpack.c.l.b16 %v753
    %v5554 = vunpack.c.l.b16 %v754
    %v5555 = vunpack.c.l.b16 %v755
    %v5556 = vunpack.c.l.b16 %v756
    %v5557 = vunpack.c.l.b16 %v757
    %v5558 = vunpack.c.l.b16 %v758
    %v5559 = vunpack.c.l.b16 %v759
    %v5560 = vunpack.c.l.b16 %v760
    %v5561 = vunpack.c.l.b16 %v761
    %v5562 = vunpack.c.l.b16 %v762
    %v5563 = vunpack.c.l.b16 %v763
    %v5564 = vunpack.c.l.b16 %v764
    %v5565 = vunpack.c.l.b16 %v765
    %v5566 = vunpack.c.l.b16 %v766
    %v5567 = vunpack.c.l.b16 %v767
    %v5568 = vunpack.c.l.b16 %v768
    %v5569 = vunpack.c.l.b16 %v769
    %v5570 = vunpack.c.l.b16 %v770
    %v5571 = vunpack.c.l.b16 %v771
    %v5572 = vunpack.c.l.b16 %v772
    %v5573 = vunpack.c.l.b16 %v773
    %v5574 = vunpack.c.l.b16 %v774
    %v5575 = vunpack.c.l.b16 %v775
    %v5576 = vunpack.c.l.b16 %v776
    %v5577 = vunpack.c.l.b16 %v777
    %v5578 = vunpack.c.l.b16 %v778
    %v5579 = vunpack.c.l.b16 %v779
    %v5580 = vunpack.c.l.b16 %v780
    %v5581 = vunpack.c.l.b16 %v781
    %v5582 = vunpack.c.l.b16 %v782
    %v5583 = vunpack.c.l.b16 %v783
    %v5584 = vunpack.c.l.b16 %v784
    %v5585 = vunpack.c.l.b16 %v785
    %v5586 = vunpack.c.l.b16 %v786
    %v5587 = vunpack.c.l.b16 %v787
    %v5588 = vunpack.c.l.b16 %v788
    %v5589 = vunpack.c.l.b16 %v789
    %v5590 = vunpack.c.l.b16 %v790
    %v5591 = vunpack.c.l.b16 %v791
    %v5592 = vunpack.c.l.b16 %v792
    %v5593 = vunpack.c.l.b16 %v793
    %v5594 = vunpack.c.l.b16 %v794
    %v5595 = vunpack.c.l.b16 %v795
    %v5596 = vunpack.c.l.b16 %v796
    %v5597 = vunpack.c.l.b16 %v797
    %v5598 = vunpack.c.l.b16 %v798
    %v5599 = vunpack.c.l.b16 %v799
    %v5600 = vunpack.c.l.b16 %v800
    %v5601 = vunpack.c.l.b16 %v801
    %v5602 = vunpack.c.l.b16 %v802
    %v5603 = vunpack.c.l.b16 %v803
    %v5604 = vunpack.c.l.b16 %v804
    %v5605 = vunpack.c.l.b16 %v805
    %v5606 = vunpack.c.l.b16 %v806
    %v5607 = vunpack.c.l.b16 %v807
    %v5608 = vunpack.c.l.b16 %v808
    %v5609 = vunpack.c.l.b16 %v809
    %v5610 = vunpack.c.l.b16 %v810
    %v5611 = vunpack.c.l.b16 %v811
    %v5612 = vunpack.c.l.b16 %v812
    %v5613 = vunpack.c.l.b16 %v813
    %v5614 = vunpack.c.l.b16 %v814
    %v5615 = vunpack.c.l.b16 %v815
    %v5616 = vunpack.c.l.b16 %v816
    %v5617 = vunpack.c.l.b16 %v817
    %v5618 = vunpack.c.l.b16 %v818
    %v5619 = vunpack.c.l.b16 %v819
    %v5620 = vunpack.c.l.b16 %v820
    %v5621 = vunpack.c.l.b16 %v821
    %v5622 = vunpack.c.l.b16 %v822
    %v5623 = vunpack.c.l.b16 %v823
    %v5624 = vunpack.c.l.b16 %v824
    %v5625 = vunpack.c.l.b16 %v825
    %v5626 = vunpack.c.l.b16 %v826
    %v5627 = vunpack.c.l.b16 %v827
    %v5628 = vunpack.c.l.b16 %v828
    %v5629 = vunpack.c.l.b16 %v829
    %v5630 = vunpack.c.l.b16 %v830
    %v5631 = vunpack.c.l.b16 %v831
    %v5632 = vunpack.c.l.b16 %v832
    %v5633 = vunpack.c.l.b16 %v833
    %v5634 = vunpack.c.l.b16 %v834
    %v5635 = vunpack.c.l.b16 %v835
    %v5636 = vunpack.c.l.b16 %v836
    %v5637 = vunpack.c.l.b16 %v837
    %v5638 = vunpack.c.l.b16 %v838
    %v5639 = vunpack.c.l.b16 %v839
    %v5640 = vunpack.c.l.b16 %v840
    %v5641 = vunpack.c.l.b16 %v841
    %v5642 = vunpack.c.l.b16 %v842
    %v5643 = vunpack.c.l.b16 %v843
    %v5644 = vunpack.c.l.b16 %v844
    %v5645 = vunpack.c.l.b16 %v845
    %v5646 = vunpack.c.l.b16 %v846
    %v5647 = vunpack.c.l.b16 %v847
    %v5648 = vunpack.c.l.b16 %v848
    %v5649 = vunpack.c.l.b16 %v849
    %v5650 = vunpack.c.l.b16 %v850
    %v5651 = vunpack.c.l.b16 %v851
    %v5652 = vunpack.c.l.b16 %v852
    %v5653 = vunpack.c.l.b16 %v853
    %v5654 = vunpack.c.l.b16 %v854
    %v5655 = vunpack.c.l.b16 %v855
    %v5656 = vunpack.c.l.b16 %v856
    %v5657 = vunpack.c.l.b16 %v857
    %v5658 = vunpack.c.l.b16 %v858
    %v5659 = vunpack.c.l.b16 %v859
    %v5660 = vunpack.c.l.b16 %v860
    %v5661 = vunpack.c.l.b16 %v861
    %v5662 = vunpack.c.l.b16 %v862
    %v5663 = vunpack.c.l.b16 %v863
    %v5664 = vunpack.c.l.b16 %v864
    %v5665 = vunpack.c.l.b16 %v865
    %v5666 = vunpack.c.l.b16 %v866
    %v5667 = vunpack.c.l.b16 %v867
    %v5668 = vunpack.c.l.b16 %v868
    %v5669 = vunpack.c.l.b16 %v869
    %v5670 = vunpack.c.l.b16 %v870
    %v5671 = vunpack.c.l.b16 %v871
    %v5672 = vunpack.c.l.b16 %v872
    %v5673 = vunpack.c.l.b16 %v873
    %v5674 = vunpack.c.l.b16 %v874
    %v5675 = vunpack.c.l.b16 %v875
    %v5676 = vunpack.c.l.b16 %v876
    %v5677 = vunpack.c.l.b16 %v877
    %v5678 = vunpack.c.l.b16 %v878
    %v5679 = vunpack.c.l.b16 %v879
    %v5680 = vunpack.c.l.b16 %v880
    %v5681 = vunpack.c.l.b16 %v881
    %v5682 = vunpack.c.l.b16 %v882
    %v5683 = vunpack.c.l.b16 %v883
    %v5684 = vunpack.c.l.b16 %v884
    %v5685 = vunpack.c.l.b16 %v885
    %v5686 = vunpack.c.l.b16 %v886
    %v5687 = vunpack.c.l.b16 %v887
    %v5688 = vunpack.c.l.b16 %v888
    %v5689 = vunpack.c.l.b16 %v889
    %v5690 = vunpack.c.l.b16 %v890
    %v5691 = vunpack.c.l.b16 %v891
    %v5692 = vunpack.c.l.b16 %v892
    %v5693 = vunpack.c.l.b16 %v893
    %v5694 = vunpack.c.l.b16 %v894
    %v5695 = vunpack.c.l.b16 %v895
    %v5696 = vunpack.c.l.b16 %v896
    %v5697 = vunpack.c.l.b16 %v897
    %v5698 = vunpack.c.l.b16 %v898
    %v5699 = vunpack.c.l.b16 %v899
    %v5700 = vunpack.c.l.b16 %v900
    %v5701 = vunpack.c.l.b16 %v901
    %v5702 = vunpack.c.l.b16 %v902
    %v5703 = vunpack.c.l.b16 %v903
    %v5704 = vunpack.c.l.b16 %v904
    %v5705 = vunpack.c.l.b16 %v905
    %v5706 = vunpack.c.l.b16 %v906
    %v5707 = vunpack.c.l.b16 %v907
    %v5708 = vunpack.c.l.b16 %v908
    %v5709 = vunpack.c.l.b16 %v909
    %v5710 = vunpack.c.l.b16 %v910
    %v5711 = vunpack.c.l.b16 %v911
    %v5712 = vunpack.c.l.b16 %v912
    %v5713 = vunpack.c.l.b16 %v913
    %v5714 = vunpack.c.l.b16 %v914
    %v5715 = vunpack.c.l.b16 %v915
    %v5716 = vunpack.c.l.b16 %v916
    %v5717 = vunpack.c.l.b16 %v917
    %v5718 = vunpack.c.l.b16 %v918
    %v5719 = vunpack.c.l.b16 %v919
    %v5720 = vunpack.c.l.b16 %v920
    %v5721 = vunpack.c.l.b16 %v921
    %v5722 = vunpack.c.l.b16 %v922
    %v5723 = vunpack.c.l.b16 %v923
    %v5724 = vunpack.c.l.b16 %v924
    %v5725 = vunpack.c.l.b16 %v925
    %v5726 = vunpack.c.l.b16 %v926
    %v5727 = vunpack.c.l.b16 %v927
    %v5728 = vunpack.c.l.b16 %v928
    %v5729 = vunpack.c.l.b16 %v929
    %v5730 = vunpack.c.l.b16 %v930
    %v5731 = vunpack.c.l.b16 %v931
    %v5732 = vunpack.c.l.b16 %v932
    %v5733 = vunpack.c.l.b16 %v933
    %v5734 = vunpack.c.l.b16 %v934
    %v5735 = vunpack.c.l.b16 %v935
    %v5736 = vunpack.c.l.b16 %v936
    %v5737 = vunpack.c.l.b16 %v937
    %v5738 = vunpack.c.l.b16 %v938
    %v5739 = vunpack.c.l.b16 %v939
    %v5740 = vunpack.c.l.b16 %v940
    %v5741 = vunpack.c.l.b16 %v941
    %v5742 = vunpack.c.l.b16 %v942
    %v5743 = vunpack.c.l.b16 %v943
    %v5744 = vunpack.c.l.b16 %v944
    %v5745 = vunpack.c.l.b16 %v945
    %v5746 = vunpack.c.l.b16 %v946
    %v5747 = vunpack.c.l.b16 %v947
    %v5748 = vunpack.c.l.b16 %v948
    %v5749 = vunpack.c.l.b16 %v949
    %v5750 = vunpack.c.l.b16 %v950
    %v5751 = vunpack.c.l.b16 %v951
    %v5752 = vunpack.c.l.b16 %v952
    %v5753 = vunpack.c.l.b16 %v953
    %v5754 = vunpack.c.l.b16 %v954
    %v5755 = vunpack.c.l.b16 %v955
    %v5756 = vunpack.c.l.b16 %v956
    %v5757 = vunpack.c.l.b16 %v957
    %v5758 = vunpack.c.l.b16 %v958
    %v5759 = vunpack.c.l.b16 %v959
    %v5760 = vunpack.c.l.b16 %v960
    %v5761 = vunpack.c.l.b16 %v961
    %v5762 = vunpack.c.l.b16 %v962
    %v5763 = vunpack.c.l.b16 %v963
    %v5764 = vunpack.c.l.b16 %v964
    %v5765 = vunpack.c.l.b16 %v965
    %v5766 = vunpack.c.l.b16 %v966
    %v5767 = vunpack.c.l.b16 %v967
    %v5768 = vunpack.c.l.b16 %v968
    %v5769 = vunpack.c.l.b16 %v969
    %v5770 = vunpack.c.l.b16 %v970
    %v5771 = vunpack.c.l.b16 %v971
    %v5772 = vunpack.c.l.b16 %v972
    %v5773 = vunpack.c.l.b16 %v973
    %v5774 = vunpack.c.l.b16 %v974
    %v5775 = vunpack.c.l.b16 %v975
    %v5776 = vunpack.c.l.b16 %v976
    %v5777 = vunpack.c.l.b16 %v977
    %v5778 = vunpack.c.l.b16 %v978
    %v5779 = vunpack.c.l.b16 %v979
    %v5780 = vunpack.c.l.b16 %v980
    %v5781 = vunpack.c.l.b16 %v981
    %v5782 = vunpack.c.l.b16 %v982
    %v5783 = vunpack.c.l.b16 %v983
    %v5784 = vunpack.c.l.b16 %v984
    %v5785 = vunpack.c.l.b16 %v985
    %v5786 = vunpack.c.l.b16 %v986
    %v5787 = vunpack.c.l.b16 %v987
    %v5788 = vunpack.c.l.b16 %v988
    %v5789 = vunpack.c.l.b16 %v989
    %v5790 = vunpack.c.l.b16 %v990
    %v5791 = vunpack.c.l.b16 %v991
    %v5792 = vunpack.c.l.b16 %v992
    %v5793 = vunpack.c.l.b16 %v993
    %v5794 = vunpack.c.l.b16 %v994
    %v5795 = vunpack.c.l.b16 %v995
    %v5796 = vunpack.c.l.b16 %v996
    %v5797 = vunpack.c.l.b16 %v997
    %v5798 = vunpack.c.l.b16 %v998
    %v5799 = vunpack.c.l.b16 %v999
    %v5800 = vunpack.c.l.b16 %v1000
    %v5801 = vunpack.c.l.b16 %v1001
    %v5802 = vunpack.c.l.b16 %v1002
    %v5803 = vunpack.c.l.b16 %v1003
    %v5804 = vunpack.c.l.b16 %v1004
    %v5805 = vunpack.c.l.b16 %v1005
    %v5806 = vunpack.c.l.b16 %v1006
    %v5807 = vunpack.c.l.b16 %v1007
    %v5808 = vunpack.c.l.b16 %v1008
    %v5809 = vunpack.c.l.b16 %v1009
    %v5810 = vunpack.c.l.b16 %v1010
    %v5811 = vunpack.c.l.b16 %v1011
    %v5812 = vunpack.c.l.b16 %v1012
    %v5813 = vunpack.c.l.b16 %v1013
    %v5814 = vunpack.c.l.b16 %v1014
    %v5815 = vunpack.c.l.b16 %v1015
    %v5816 = vunpack.c.l.b16 %v1016
    %v5817 = vunpack.c.l.b16 %v1017
    %v5818 = vunpack.c.l.b16 %v1018
    %v5819 = vunpack.c.l.b16 %v1019
    %v5820 = vunpack.c.l.b16 %v1020
    %v5821 = vunpack.c.l.b16 %v1021
    %v5822 = vunpack.c.l.b16 %v1022
    %v5823 = vunpack.c.l.b16 %v1023
    %v5824 = vunpack.c.l.b16 %v1024
    %v5825 = vunpack.c.l.b16 %v1025
    %v5826 = vunpack.c.l.b16 %v1026
    %v5827 = vunpack.c.l.b16 %v1027
    %v5828 = vunpack.c.l.b16 %v1028
    %v5829 = vunpack.c.l.b16 %v1029
    %v5830 = vunpack.c.l.b16 %v1030
    %v5831 = vunpack.c.l.b16 %v1031
    %v5832 = vunpack.c.l.b16 %v1032
    %v5833 = vunpack.c.l.b16 %v1033
    %v5834 = vunpack.c.l.b16 %v1034
    %v5835 = vunpack.c.l.b16 %v1035
    %v5836 = vunpack.c.l.b16 %v1036
    %v5837 = vunpack.c.l.b16 %v1037
    %v5838 = vunpack.c.l.b16 %v1038
    %v5839 = vunpack.c.l.b16 %v1039
    %v5840 = vunpack.c.l.b16 %v1040
    %v5841 = vunpack.c.l.b16 %v1041
    %v5842 = vunpack.c.l.b16 %v1042
    %v5843 = vunpack.c.l.b16 %v1043
    %v5844 = vunpack.c.l.b16 %v1044
    %v5845 = vunpack.c.l.b16 %v1045
    %v5846 = vunpack.c.l.b16 %v1046
    %v5847 = vunpack.c.l.b16 %v1047
    %v5848 = vunpack.c.l.b16 %v1048
    %v5849 = vunpack.c.l.b16 %v1049
    %v5850 = vunpack.c.l.b16 %v1050
    %v5851 = vunpack.c.l.b16 %v1051
    %v5852 = vunpack.c.l.b16 %v1052
    %v5853 = vunpack.c.l.b16 %v1053
    %v5854 = vunpack.c.l.b16 %v1054
    %v5855 = vunpack.c.l.b16 %v1055
    %v5856 = vunpack.c.l.b16 %v1056
    %v5857 = vunpack.c.l.b16 %v1057
    %v5858 = vunpack.c.l.b16 %v1058
    %v5859 = vunpack.c.l.b16 %v1059
    %v5860 = vunpack.c.l.b16 %v1060
    %v5861 = vunpack.c.l.b16 %v1061
    %v5862 = vunpack.c.l.b16 %v1062
    %v5863 = vunpack.c.l.b16 %v1063
    %v5864 = vunpack.c.l.b16 %v1064
    %v5865 = vunpack.c.l.b16 %v1065
    %v5866 = vunpack.c.l.b16 %v1066
    %v5867 = vunpack.c.l.b16 %v1067
    %v5868 = vunpack.c.l.b16 %v1068
    %v5869 = vunpack.c.l.b16 %v1069
    %v5870 = vunpack.c.l.b16 %v1070
    %v5871 = vunpack.c.l.b16 %v1071
    %v5872 = vunpack.c.l.b16 %v1072
    %v5873 = vunpack.c.l.b16 %v1073
    %v5874 = vunpack.c.l.b16 %v1074
    %v5875 = vunpack.c.l.b16 %v1075
    %v5876 = vunpack.c.l.b16 %v1076
    %v5877 = vunpack.c.l.b16 %v1077
    %v5878 = vunpack.c.l.b16 %v1078
    %v5879 = vunpack.c.l.b16 %v1079
    %v5880 = vunpack.c.l.b16 %v1080
    %v5881 = vunpack.c.l.b16 %v1081
    %v5882 = vunpack.c.l.b16 %v1082
    %v5883 = vunpack.c.l.b16 %v1083
    %v5884 = vunpack.c.l.b16 %v1084
    %v5885 = vunpack.c.l.b16 %v1085
    %v5886 = vunpack.c.l.b16 %v1086
    %v5887 = vunpack.c.l.b16 %v1087
    %v5888 = vunpack.c.l.b16 %v1088
    %v5889 = vunpack.c.l.b16 %v1089
    %v5890 = vunpack.c.l.b16 %v1090
    %v5891 = vunpack.c.l.b16 %v1091
    %v5892 = vunpack.c.l.b16 %v1092
    %v5893 = vunpack.c.l.b16 %v1093
    %v5894 = vunpack.c.l.b16 %v1094
    %v5895 = vunpack.c.l.b16 %v1095
    %v5896 = vunpack.c.l.b16 %v1096
    %v5897 = vunpack.c.l.b16 %v1097
    %v5898 = vunpack.c.l.b16 %v1098
    %v5899 = vunpack.c.l.b16 %v1099
    %v5900 = vunpack.c.l.b16 %v1100
    %v5901 = vunpack.c.l.b16 %v1101
    %v5902 = vunpack.c.l.b16 %v1102
    %v5903 = vunpack.c.l.b16 %v1103
    %v5904 = vunpack.c.l.b16 %v1104
    %v5905 = vunpack.c.l.b16 %v1105
    %v5906 = vunpack.c.l.b16 %v1106
    %v5907 = vunpack.c.l.b16 %v1107
    %v5908 = vunpack.c.l.b16 %v1108
    %v5909 = vunpack.c.l.b16 %v1109
    %v5910 = vunpack.c.l.b16 %v1110
    %v5911 = vunpack.c.l.b16 %v1111
    %v5912 = vunpack.c.l.b16 %v1112
    %v5913 = vunpack.c.l.b16 %v1113
    %v5914 = vunpack.c.l.b16 %v1114
    %v5915 = vunpack.c.l.b16 %v1115
    %v5916 = vunpack.c.l.b16 %v1116
    %v5917 = vunpack.c.l.b16 %v1117
    %v5918 = vunpack.c.l.b16 %v1118
    %v5919 = vunpack.c.l.b16 %v1119
    %v5920 = vunpack.c.l.b16 %v1120
    %v5921 = vunpack.c.l.b16 %v1121
    %v5922 = vunpack.c.l.b16 %v1122
    %v5923 = vunpack.c.l.b16 %v1123
    %v5924 = vunpack.c.l.b16 %v1124
    %v5925 = vunpack.c.l.b16 %v1125
    %v5926 = vunpack.c.l.b16 %v1126
    %v5927 = vunpack.c.l.b16 %v1127
    %v5928 = vunpack.c.l.b16 %v1128
    %v5929 = vunpack.c.l.b16 %v1129
    %v5930 = vunpack.c.l.b16 %v1130
    %v5931 = vunpack.c.l.b16 %v1131
    %v5932 = vunpack.c.l.b16 %v1132
    %v5933 = vunpack.c.l.b16 %v1133
    %v5934 = vunpack.c.l.b16 %v1134
    %v5935 = vunpack.c.l.b16 %v1135
    %v5936 = vunpack.c.l.b16 %v1136
    %v5937 = vunpack.c.l.b16 %v1137
    %v5938 = vunpack.c.l.b16 %v1138
    %v5939 = vunpack.c.l.b16 %v1139
    %v5940 = vunpack.c.l.b16 %v1140
    %v5941 = vunpack.c.l.b16 %v1141
    %v5942 = vunpack.c.l.b16 %v1142
    %v5943 = vunpack.c.l.b16 %v1143
    %v5944 = vunpack.c.l.b16 %v1144
    %v5945 = vunpack.c.l.b16 %v1145
    %v5946 = vunpack.c.l.b16 %v1146
    %v5947 = vunpack.c.l.b16 %v1147
    %v5948 = vunpack.c.l.b16 %v1148
    %v5949 = vunpack.c.l.b16 %v1149
    %v5950 = vunpack.c.l.b16 %v1150
    %v5951 = vunpack.c.l.b16 %v1151
    %v5952 = vunpack.c.l.b16 %v1152
    %v5953 = vunpack.c.l.b16 %v1153
    %v5954 = vunpack.c.l.b16 %v1154
    %v5955 = vunpack.c.l.b16 %v1155
    %v5956 = vunpack.c.l.b16 %v1156
    %v5957 = vunpack.c.l.b16 %v1157
    %v5958 = vunpack.c.l.b16 %v1158
    %v5959 = vunpack.c.l.b16 %v1159
    %v5960 = vunpack.c.l.b16 %v1160
    %v5961 = vunpack.c.l.b16 %v1161
    %v5962 = vunpack.c.l.b16 %v1162
    %v5963 = vunpack.c.l.b16 %v1163
    %v5964 = vunpack.c.l.b16 %v1164
    %v5965 = vunpack.c.l.b16 %v1165
    %v5966 = vunpack.c.l.b16 %v1166
    %v5967 = vunpack.c.l.b16 %v1167
    %v5968 = vunpack.c.l.b16 %v1168
    %v5969 = vunpack.c.l.b16 %v1169
    %v5970 = vunpack.c.l.b16 %v1170
    %v5971 = vunpack.c.l.b16 %v1171
    %v5972 = vunpack.c.l.b16 %v1172
    %v5973 = vunpack.c.l.b16 %v1173
    %v5974 = vunpack.c.l.b16 %v1174
    %v5975 = vunpack.c.l.b16 %v1175
    %v5976 = vunpack.c.l.b16 %v1176
    %v5977 = vunpack.c.l.b16 %v1177
    %v5978 = vunpack.c.l.b16 %v1178
    %v5979 = vunpack.c.l.b16 %v1179
    %v5980 = vunpack.c.l.b16 %v1180
    %v5981 = vunpack.c.l.b16 %v1181
    %v5982 = vunpack.c.l.b16 %v1182
    %v5983 = vunpack.c.l.b16 %v1183
    %v5984 = vunpack.c.l.b16 %v1184
    %v5985 = vunpack.c.l.b16 %v1185
    %v5986 = vunpack.c.l.b16 %v1186
    %v5987 = vunpack.c.l.b16 %v1187
    %v5988 = vunpack.c.l.b16 %v1188
    %v5989 = vunpack.c.l.b16 %v1189
    %v5990 = vunpack.c.l.b16 %v1190
    %v5991 = vunpack.c.l.b16 %v1191
    %v5992 = vunpack.c.l.b16 %v1192
    %v5993 = vunpack.c.l.b16 %v1193
    %v5994 = vunpack.c.l.b16 %v1194
    %v5995 = vunpack.c.l.b16 %v1195
    %v5996 = vunpack.c.l.b16 %v1196
    %v5997 = vunpack.c.l.b16 %v1197
    %v5998 = vunpack.c.l.b16 %v1198
    %v5999 = vunpack.c.l.b16 %v1199
    %v6000 = vunpack.c.l.b16 %v1200
    %v6001 = vunpack.c.l.b16 %v1201
    %v6002 = vunpack.c.l.b16 %v1202
    %v6003 = vunpack.c.l.b16 %v1203
    %v6004 = vunpack.c.l.b16 %v1204
    %v6005 = vunpack.c.l.b16 %v1205
    %v6006 = vunpack.c.l.b16 %v1206
    %v6007 = vunpack.c.l.b16 %v1207
    %v6008 = vunpack.c.l.b16 %v1208
    %v6009 = vunpack.c.l.b16 %v1209
    %v6010 = vunpack.c.l.b16 %v1210
    %v6011 = vunpack.c.l.b16 %v1211
    %v6012 = vunpack.c.l.b16 %v1212
    %v6013 = vunpack.c.l.b16 %v1213
    %v6014 = vunpack.c.l.b16 %v1214
    %v6015 = vunpack.c.l.b16 %v1215
    %v6016 = vunpack.c.l.b16 %v1216
    %v6017 = vunpack.c.l.b16 %v1217
    %v6018 = vunpack.c.l.b16 %v1218
    %v6019 = vunpack.c.l.b16 %v1219
    %v6020 = vunpack.c.l.b16 %v1220
    %v6021 = vunpack.c.l.b16 %v1221
    %v6022 = vunpack.c.l.b16 %v1222
    %v6023 = vunpack.c.l.b16 %v1223
    %v6024 = vunpack.c.l.b16 %v1224
    %v6025 = vunpack.c.l.b16 %v1225
    %v6026 = vunpack.c.l.b16 %v1226
    %v6027 = vunpack.c.l.b16 %v1227
    %v6028 = vunpack.c.l.b16 %v1228
    %v6029 = vunpack.c.l.b16 %v1229
    %v6030 = vunpack.c.l.b16 %v1230
    %v6031 = vunpack.c.l.b16 %v1231
    %v6032 = vunpack.c.l.b16 %v1232
    %v6033 = vunpack.c.l.b16 %v1233
    %v6034 = vunpack.c.l.b16 %v1234
    %v6035 = vunpack.c.l.b16 %v1235
    %v6036 = vunpack.c.l.b16 %v1236
    %v6037 = vunpack.c.l.b16 %v1237
    %v6038 = vunpack.c.l.b16 %v1238
    %v6039 = vunpack.c.l.b16 %v1239
    %v6040 = vunpack.c.l.b16 %v1240
    %v6041 = vunpack.c.l.b16 %v1241
    %v6042 = vunpack.c.l.b16 %v1242
    %v6043 = vunpack.c.l.b16 %v1243
    %v6044 = vunpack.c.l.b16 %v1244
    %v6045 = vunpack.c.l.b16 %v1245
    %v6046 = vunpack.c.l.b16 %v1246
    %v6047 = vunpack.c.l.b16 %v1247
    %v6048 = vunpack.c.l.b16 %v1248
    %v6049 = vunpack.c.l.b16 %v1249
    %v6050 = vunpack.c.l.b16 %v1250
    %v6051 = vunpack.c.l.b16 %v1251
    %v6052 = vunpack.c.l.b16 %v1252
    %v6053 = vunpack.c.l.b16 %v1253
    %v6054 = vunpack.c.l.b16 %v1254
    %v6055 = vunpack.c.l.b16 %v1255
    %v6056 = vunpack.c.l.b16 %v1256
    %v6057 = vunpack.c.l.b16 %v1257
    %v6058 = vunpack.c.l.b16 %v1258
    %v6059 = vunpack.c.l.b16 %v1259
    %v6060 = vunpack.c.l.b16 %v1260
    %v6061 = vunpack.c.l.b16 %v1261
    %v6062 = vunpack.c.l.b16 %v1262
    %v6063 = vunpack.c.l.b16 %v1263
    %v6064 = vunpack.c.l.b16 %v1264
    %v6065 = vunpack.c.l.b16 %v1265
    %v6066 = vunpack.c.l.b16 %v1266
    %v6067 = vunpack.c.l.b16 %v1267
    %v6068 = vunpack.c.l.b16 %v1268
    %v6069 = vunpack.c.l.b16 %v1269
    %v6070 = vunpack.c.l.b16 %v1270
    %v6071 = vunpack.c.l.b16 %v1271
    %v6072 = vunpack.c.l.b16 %v1272
    %v6073 = vunpack.c.l.b16 %v1273
    %v6074 = vunpack.c.l.b16 %v1274
    %v6075 = vunpack.c.l.b16 %v1275
    %v6076 = vunpack.c.l.b16 %v1276
    %v6077 = vunpack.c.l.b16 %v1277
    %v6078 = vunpack.c.l.b16 %v1278
    %v6079 = vunpack.c.l.b16 %v1279
    %v6080 = vunpack.c.l.b16 %v1280
    %v6081 = vunpack.c.l.b16 %v1281
    %v6082 = vunpack.c.l.b16 %v1282
    %v6083 = vunpack.c.l.b16 %v1283
    %v6084 = vunpack.c.l.b16 %v1284
    %v6085 = vunpack.c.l.b16 %v1285
    %v6086 = vunpack.c.l.b16 %v1286
    %v6087 = vunpack.c.l.b16 %v1287
    %v6088 = vunpack.c.l.b16 %v1288
    %v6089 = vunpack.c.l.b16 %v1289
    %v6090 = vunpack.c.l.b16 %v1290
    %v6091 = vunpack.c.l.b16 %v1291
    %v6092 = vunpack.c.l.b16 %v1292
    %v6093 = vunpack.c.l.b16 %v1293
    %v6094 = vunpack.c.l.b16 %v1294
    %v6095 = vunpack.c.l.b16 %v1295
    %v6096 = vunpack.c.l.b16 %v1296
    %v6097 = vunpack.c.l.b16 %v1297
    %v6098 = vunpack.c.l.b16 %v1298
    %v6099 = vunpack.c.l.b16 %v1299
    %v6100 = vunpack.c.l.b16 %v1300
    %v6101 = vunpack.c.l.b16 %v1301
    %v6102 = vunpack.c.l.b16 %v1302
    %v6103 = vunpack.c.l.b16 %v1303
    %v6104 = vunpack.c.l.b16 %v1304
    %v6105 = vunpack.c.l.b16 %v1305
    %v6106 = vunpack.c.l.b16 %v1306
    %v6107 = vunpack.c.l.b16 %v1307
    %v6108 = vunpack.c.l.b16 %v1308
    %v6109 = vunpack.c.l.b16 %v1309
    %v6110 = vunpack.c.l.b16 %v1310
    %v6111 = vunpack.c.l.b16 %v1311
    %v6112 = vunpack.c.l.b16 %v1312
    %v6113 = vunpack.c.l.b16 %v1313
    %v6114 = vunpack.c.l.b16 %v1314
    %v6115 = vunpack.c.l.b16 %v1315
    %v6116 = vunpack.c.l.b16 %v1316
    %v6117 = vunpack.c.l.b16 %v1317
    %v6118 = vunpack.c.l.b16 %v1318
    %v6119 = vunpack.c.l.b16 %v1319
    %v6120 = vunpack.c.l.b16 %v1320
    %v6121 = vunpack.c.l.b16 %v1321
    %v6122 = vunpack.c.l.b16 %v1322
    %v6123 = vunpack.c.l.b16 %v1323
    %v6124 = vunpack.c.l.b16 %v1324
    %v6125 = vunpack.c.l.b16 %v1325
    %v6126 = vunpack.c.l.b16 %v1326
    %v6127 = vunpack.c.l.b16 %v1327
    %v6128 = vunpack.c.l.b16 %v1328
    %v6129 = vunpack.c.l.b16 %v1329
    %v6130 = vunpack.c.l.b16 %v1330
    %v6131 = vunpack.c.l.b16 %v1331
    %v6132 = vunpack.c.l.b16 %v1332
    %v6133 = vunpack.c.l.b16 %v1333
    %v6134 = vunpack.c.l.b16 %v1334
    %v6135 = vunpack.c.l.b16 %v1335
    %v6136 = vunpack.c.l.b16 %v1336
    %v6137 = vunpack.c.l.b16 %v1337
    %v6138 = vunpack.c.l.b16 %v1338
    %v6139 = vunpack.c.l.b16 %v1339
    %v6140 = vunpack.c.l.b16 %v1340
    %v6141 = vunpack.c.l.b16 %v1341
    %v6142 = vunpack.c.l.b16 %v1342
    %v6143 = vunpack.c.l.b16 %v1343
    %v6144 = vunpack.c.l.b16 %v1344
    %v6145 = vunpack.c.l.b16 %v1345
    %v6146 = vunpack.c.l.b16 %v1346
    %v6147 = vunpack.c.l.b16 %v1347
    %v6148 = vunpack.c.l.b16 %v1348
    %v6149 = vunpack.c.l.b16 %v1349
    %v6150 = vunpack.c.l.b16 %v1350
    %v6151 = vunpack.c.l.b16 %v1351
    %v6152 = vunpack.c.l.b16 %v1352
    %v6153 = vunpack.c.l.b16 %v1353
    %v6154 = vunpack.c.l.b16 %v1354
    %v6155 = vunpack.c.l.b16 %v1355
    %v6156 = vunpack.c.l.b16 %v1356
    %v6157 = vunpack.c.l.b16 %v1357
    %v6158 = vunpack.c.l.b16 %v1358
    %v6159 = vunpack.c.l.b16 %v1359
    %v6160 = vunpack.c.l.b16 %v1360
    %v6161 = vunpack.c.l.b16 %v1361
    %v6162 = vunpack.c.l.b16 %v1362
    %v6163 = vunpack.c.l.b16 %v1363
    %v6164 = vunpack.c.l.b16 %v1364
    %v6165 = vunpack.c.l.b16 %v1365
    %v6166 = vunpack.c.l.b16 %v1366
    %v6167 = vunpack.c.l.b16 %v1367
    %v6168 = vunpack.c.l.b16 %v1368
    %v6169 = vunpack.c.l.b16 %v1369
    %v6170 = vunpack.c.l.b16 %v1370
    %v6171 = vunpack.c.l.b16 %v1371
    %v6172 = vunpack.c.l.b16 %v1372
    %v6173 = vunpack.c.l.b16 %v1373
    %v6174 = vunpack.c.l.b16 %v1374
    %v6175 = vunpack.c.l.b16 %v1375
    %v6176 = vunpack.c.l.b16 %v1376
    %v6177 = vunpack.c.l.b16 %v1377
    %v6178 = vunpack.c.l.b16 %v1378
    %v6179 = vunpack.c.l.b16 %v1379
    %v6180 = vunpack.c.l.b16 %v1380
    %v6181 = vunpack.c.l.b16 %v1381
    %v6182 = vunpack.c.l.b16 %v1382
    %v6183 = vunpack.c.l.b16 %v1383
    %v6184 = vunpack.c.l.b16 %v1384
    %v6185 = vunpack.c.l.b16 %v1385
    %v6186 = vunpack.c.l.b16 %v1386
    %v6187 = vunpack.c.l.b16 %v1387
    %v6188 = vunpack.c.l.b16 %v1388
    %v6189 = vunpack.c.l.b16 %v1389
    %v6190 = vunpack.c.l.b16 %v1390
    %v6191 = vunpack.c.l.b16 %v1391
    %v6192 = vunpack.c.l.b16 %v1392
    %v6193 = vunpack.c.l.b16 %v1393
    %v6194 = vunpack.c.l.b16 %v1394
    %v6195 = vunpack.c.l.b16 %v1395
    %v6196 = vunpack.c.l.b16 %v1396
    %v6197 = vunpack.c.l.b16 %v1397
    %v6198 = vunpack.c.l.b16 %v1398
    %v6199 = vunpack.c.l.b16 %v1399
    %v6200 = vunpack.c.l.b16 %v1400
    %v6201 = vunpack.c.l.b16 %v1401
    %v6202 = vunpack.c.l.b16 %v1402
    %v6203 = vunpack.c.l.b16 %v1403
    %v6204 = vunpack.c.l.b16 %v1404
    %v6205 = vunpack.c.l.b16 %v1405
    %v6206 = vunpack.c.l.b16 %v1406
    %v6207 = vunpack.c.l.b16 %v1407
    %v6208 = vunpack.c.l.b16 %v1408
    %v6209 = vunpack.c.l.b16 %v1409
    %v6210 = vunpack.c.l.b16 %v1410
    %v6211 = vunpack.c.l.b16 %v1411
    %v6212 = vunpack.c.l.b16 %v1412
    %v6213 = vunpack.c.l.b16 %v1413
    %v6214 = vunpack.c.l.b16 %v1414
    %v6215 = vunpack.c.l.b16 %v1415
    %v6216 = vunpack.c.l.b16 %v1416
    %v6217 = vunpack.c.l.b16 %v1417
    %v6218 = vunpack.c.l.b16 %v1418
    %v6219 = vunpack.c.l.b16 %v1419
    %v6220 = vunpack.c.l.b16 %v1420
    %v6221 = vunpack.c.l.b16 %v1421
    %v6222 = vunpack.c.l.b16 %v1422
    %v6223 = vunpack.c.l.b16 %v1423
    %v6224 = vunpack.c.l.b16 %v1424
    %v6225 = vunpack.c.l.b16 %v1425
    %v6226 = vunpack.c.l.b16 %v1426
    %v6227 = vunpack.c.l.b16 %v1427
    %v6228 = vunpack.c.l.b16 %v1428
    %v6229 = vunpack.c.l.b16 %v1429
    %v6230 = vunpack.c.l.b16 %v1430
    %v6231 = vunpack.c.l.b16 %v1431
    %v6232 = vunpack.c.l.b16 %v1432
    %v6233 = vunpack.c.l.b16 %v1433
    %v6234 = vunpack.c.l.b16 %v1434
    %v6235 = vunpack.c.l.b16 %v1435
    %v6236 = vunpack.c.l.b16 %v1436
    %v6237 = vunpack.c.l.b16 %v1437
    %v6238 = vunpack.c.l.b16 %v1438
    %v6239 = vunpack.c.l.b16 %v1439
    %v6240 = vunpack.c.l.b16 %v1440
    %v6241 = vunpack.c.l.b16 %v1441
    %v6242 = vunpack.c.l.b16 %v1442
    %v6243 = vunpack.c.l.b16 %v1443
    %v6244 = vunpack.c.l.b16 %v1444
    %v6245 = vunpack.c.l.b16 %v1445
    %v6246 = vunpack.c.l.b16 %v1446
    %v6247 = vunpack.c.l.b16 %v1447
    %v6248 = vunpack.c.l.b16 %v1448
    %v6249 = vunpack.c.l.b16 %v1449
    %v6250 = vunpack.c.l.b16 %v1450
    %v6251 = vunpack.c.l.b16 %v1451
    %v6252 = vunpack.c.l.b16 %v1452
    %v6253 = vunpack.c.l.b16 %v1453
    %v6254 = vunpack.c.l.b16 %v1454
    %v6255 = vunpack.c.l.b16 %v1455
    %v6256 = vunpack.c.l.b16 %v1456
    %v6257 = vunpack.c.l.b16 %v1457
    %v6258 = vunpack.c.l.b16 %v1458
    %v6259 = vunpack.c.l.b16 %v1459
    %v6260 = vunpack.c.l.b16 %v1460
    %v6261 = vunpack.c.l.b16 %v1461
    %v6262 = vunpack.c.l.b16 %v1462
    %v6263 = vunpack.c.l.b16 %v1463
    %v6264 = vunpack.c.l.b16 %v1464
    %v6265 = vunpack.c.l.b16 %v1465
    %v6266 = vunpack.c.l.b16 %v1466
    %v6267 = vunpack.c.l.b16 %v1467
    %v6268 = vunpack.c.l.b16 %v1468
    %v6269 = vunpack.c.l.b16 %v1469
    %v6270 = vunpack.c.l.b16 %v1470
    %v6271 = vunpack.c.l.b16 %v1471
    %v6272 = vunpack.c.l.b16 %v1472
    %v6273 = vunpack.c.l.b16 %v1473
    %v6274 = vunpack.c.l.b16 %v1474
    %v6275 = vunpack.c.l.b16 %v1475
    %v6276 = vunpack.c.l.b16 %v1476
    %v6277 = vunpack.c.l.b16 %v1477
    %v6278 = vunpack.c.l.b16 %v1478
    %v6279 = vunpack.c.l.b16 %v1479
    %v6280 = vunpack.c.l.b16 %v1480
    %v6281 = vunpack.c.l.b16 %v1481
    %v6282 = vunpack.c.l.b16 %v1482
    %v6283 = vunpack.c.l.b16 %v1483
    %v6284 = vunpack.c.l.b16 %v1484
    %v6285 = vunpack.c.l.b16 %v1485
    %v6286 = vunpack.c.l.b16 %v1486
    %v6287 = vunpack.c.l.b16 %v1487
    %v6288 = vunpack.c.l.b16 %v1488
    %v6289 = vunpack.c.l.b16 %v1489
    %v6290 = vunpack.c.l.b16 %v1490
    %v6291 = vunpack.c.l.b16 %v1491
    %v6292 = vunpack.c.l.b16 %v1492
    %v6293 = vunpack.c.l.b16 %v1493
    %v6294 = vunpack.c.l.b16 %v1494
    %v6295 = vunpack.c.l.b16 %v1495
    %v6296 = vunpack.c.l.b16 %v1496
    %v6297 = vunpack.c.l.b16 %v1497
    %v6298 = vunpack.c.l.b16 %v1498
    %v6299 = vunpack.c.l.b16 %v1499
    %v6300 = vunpack.c.l.b16 %v1500
    %v6301 = vunpack.c.l.b16 %v1501
    %v6302 = vunpack.c.l.b16 %v1502
    %v6303 = vunpack.c.l.b16 %v1503
    %v6304 = vunpack.c.l.b16 %v1504
    %v6305 = vunpack.c.l.b16 %v1505
    %v6306 = vunpack.c.l.b16 %v1506
    %v6307 = vunpack.c.l.b16 %v1507
    %v6308 = vunpack.c.l.b16 %v1508
    %v6309 = vunpack.c.l.b16 %v1509
    %v6310 = vunpack.c.l.b16 %v1510
    %v6311 = vunpack.c.l.b16 %v1511
    %v6312 = vunpack.c.l.b16 %v1512
    %v6313 = vunpack.c.l.b16 %v1513
    %v6314 = vunpack.c.l.b16 %v1514
    %v6315 = vunpack.c.l.b16 %v1515
    %v6316 = vunpack.c.l.b16 %v1516
    %v6317 = vunpack.c.l.b16 %v1517
    %v6318 = vunpack.c.l.b16 %v1518
    %v6319 = vunpack.c.l.b16 %v1519
    %v6320 = vunpack.c.l.b16 %v1520
    %v6321 = vunpack.c.l.b16 %v1521
    %v6322 = vunpack.c.l.b16 %v1522
    %v6323 = vunpack.c.l.b16 %v1523
    %v6324 = vunpack.c.l.b16 %v1524
    %v6325 = vunpack.c.l.b16 %v1525
    %v6326 = vunpack.c.l.b16 %v1526
    %v6327 = vunpack.c.l.b16 %v1527
    %v6328 = vunpack.c.l.b16 %v1528
    %v6329 = vunpack.c.l.b16 %v1529
    %v6330 = vunpack.c.l.b16 %v1530
    %v6331 = vunpack.c.l.b16 %v1531
    %v6332 = vunpack.c.l.b16 %v1532
    %v6333 = vunpack.c.l.b16 %v1533
    %v6334 = vunpack.c.l.b16 %v1534
    %v6335 = vunpack.c.l.b16 %v1535
    %v6336 = vunpack.c.l.b16 %v1536
    %v6337 = vunpack.c.l.b16 %v1537
    %v6338 = vunpack.c.l.b16 %v1538
    %v6339 = vunpack.c.l.b16 %v1539
    %v6340 = vunpack.c.l.b16 %v1540
    %v6341 = vunpack.c.l.b16 %v1541
    %v6342 = vunpack.c.l.b16 %v1542
    %v6343 = vunpack.c.l.b16 %v1543
    %v6344 = vunpack.c.l.b16 %v1544
    %v6345 = vunpack.c.l.b16 %v1545
    %v6346 = vunpack.c.l.b16 %v1546
    %v6347 = vunpack.c.l.b16 %v1547
    %v6348 = vunpack.c.l.b16 %v1548
    %v6349 = vunpack.c.l.b16 %v1549
    %v6350 = vunpack.c.l.b16 %v1550
    %v6351 = vunpack.c.l.b16 %v1551
    %v6352 = vunpack.c.l.b16 %v1552
    %v6353 = vunpack.c.l.b16 %v1553
    %v6354 = vunpack.c.l.b16 %v1554
    %v6355 = vunpack.c.l.b16 %v1555
    %v6356 = vunpack.c.l.b16 %v1556
    %v6357 = vunpack.c.l.b16 %v1557
    %v6358 = vunpack.c.l.b16 %v1558
    %v6359 = vunpack.c.l.b16 %v1559
    %v6360 = vunpack.c.l.b16 %v1560
    %v6361 = vunpack.c.l.b16 %v1561
    %v6362 = vunpack.c.l.b16 %v1562
    %v6363 = vunpack.c.l.b16 %v1563
    %v6364 = vunpack.c.l.b16 %v1564
    %v6365 = vunpack.c.l.b16 %v1565
    %v6366 = vunpack.c.l.b16 %v1566
    %v6367 = vunpack.c.l.b16 %v1567
    %v6368 = vunpack.c.l.b16 %v1568
    %v6369 = vunpack.c.l.b16 %v1569
    %v6370 = vunpack.c.l.b16 %v1570
    %v6371 = vunpack.c.l.b16 %v1571
    %v6372 = vunpack.c.l.b16 %v1572
    %v6373 = vunpack.c.l.b16 %v1573
    %v6374 = vunpack.c.l.b16 %v1574
    %v6375 = vunpack.c.l.b16 %v1575
    %v6376 = vunpack.c.l.b16 %v1576
    %v6377 = vunpack.c.l.b16 %v1577
    %v6378 = vunpack.c.l.b16 %v1578
    %v6379 = vunpack.c.l.b16 %v1579
    %v6380 = vunpack.c.l.b16 %v1580
    %v6381 = vunpack.c.l.b16 %v1581
    %v6382 = vunpack.c.l.b16 %v1582
    %v6383 = vunpack.c.l.b16 %v1583
    %v6384 = vunpack.c.l.b16 %v1584
    %v6385 = vunpack.c.l.b16 %v1585
    %v6386 = vunpack.c.l.b16 %v1586
    %v6387 = vunpack.c.l.b16 %v1587
    %v6388 = vunpack.c.l.b16 %v1588
    %v6389 = vunpack.c.l.b16 %v1589
    %v6390 = vunpack.c.l.b16 %v1590
    %v6391 = vunpack.c.l.b16 %v1591
    %v6392 = vunpack.c.l.b16 %v1592
    %v6393 = vunpack.c.l.b16 %v1593
    %v6394 = vunpack.c.l.b16 %v1594
    %v6395 = vunpack.c.l.b16 %v1595
    %v6396 = vunpack.c.l.b16 %v1596
    %v6397 = vunpack.c.l.b16 %v1597
    %v6398 = vunpack.c.l.b16 %v1598
    %v6399 = vunpack.c.l.b16 %v1599
    %v6400 = vunpack.c.l.b16 %v1600
    %v6401 = vunpack.c.l.b16 %v1601
    %v6402 = vunpack.c.l.b16 %v1602
    %v6403 = vunpack.c.l.b16 %v1603
    %v6404 = vunpack.c.l.b16 %v1604
    %v6405 = vunpack.c.l.b16 %v1605
    %v6406 = vunpack.c.l.b16 %v1606
    %v6407 = vunpack.c.l.b16 %v1607
    %v6408 = vunpack.c.l.b16 %v1608
    %v6409 = vunpack.c.l.b16 %v1609
    %v6410 = vunpack.c.l.b16 %v1610
    %v6411 = vunpack.c.l.b16 %v1611
    %v6412 = vunpack.c.l.b16 %v1612
    %v6413 = vunpack.c.l.b16 %v1613
    %v6414 = vunpack.c.l.b16 %v1614
    %v6415 = vunpack.c.l.b16 %v1615
    %v6416 = vunpack.c.l.b16 %v1616
    %v6417 = vunpack.c.l.b16 %v1617
    %v6418 = vunpack.c.l.b16 %v1618
    %v6419 = vunpack.c.l.b16 %v1619
    %v6420 = vunpack.c.l.b16 %v1620
    %v6421 = vunpack.c.l.b16 %v1621
    %v6422 = vunpack.c.l.b16 %v1622
    %v6423 = vunpack.c.l.b16 %v1623
    %v6424 = vunpack.c.l.b16 %v1624
    %v6425 = vunpack.c.l.b16 %v1625
    %v6426 = vunpack.c.l.b16 %v1626
    %v6427 = vunpack.c.l.b16 %v1627
    %v6428 = vunpack.c.l.b16 %v1628
    %v6429 = vunpack.c.l.b16 %v1629
    %v6430 = vunpack.c.l.b16 %v1630
    %v6431 = vunpack.c.l.b16 %v1631
    %v6432 = vunpack.c.l.b16 %v1632
    %v6433 = vunpack.c.l.b16 %v1633
    %v6434 = vunpack.c.l.b16 %v1634
    %v6435 = vunpack.c.l.b16 %v1635
    %v6436 = vunpack.c.l.b16 %v1636
    %v6437 = vunpack.c.l.b16 %v1637
    %v6438 = vunpack.c.l.b16 %v1638
    %v6439 = vunpack.c.l.b16 %v1639
    %v6440 = vunpack.c.l.b16 %v1640
    %v6441 = vunpack.c.l.b16 %v1641
    %v6442 = vunpack.c.l.b16 %v1642
    %v6443 = vunpack.c.l.b16 %v1643
    %v6444 = vunpack.c.l.b16 %v1644
    %v6445 = vunpack.c.l.b16 %v1645
    %v6446 = vunpack.c.l.b16 %v1646
    %v6447 = vunpack.c.l.b16 %v1647
    %v6448 = vunpack.c.l.b16 %v1648
    %v6449 = vunpack.c.l.b16 %v1649
    %v6450 = vunpack.c.l.b16 %v1650
    %v6451 = vunpack.c.l.b16 %v1651
    %v6452 = vunpack.c.l.b16 %v1652
    %v6453 = vunpack.c.l.b16 %v1653
    %v6454 = vunpack.c.l.b16 %v1654
    %v6455 = vunpack.c.l.b16 %v1655
    %v6456 = vunpack.c.l.b16 %v1656
    %v6457 = vunpack.c.l.b16 %v1657
    %v6458 = vunpack.c.l.b16 %v1658
    %v6459 = vunpack.c.l.b16 %v1659
    %v6460 = vunpack.c.l.b16 %v1660
    %v6461 = vunpack.c.l.b16 %v1661
    %v6462 = vunpack.c.l.b16 %v1662
    %v6463 = vunpack.c.l.b16 %v1663
    %v6464 = vunpack.c.l.b16 %v1664
    %v6465 = vunpack.c.l.b16 %v1665
    %v6466 = vunpack.c.l.b16 %v1666
    %v6467 = vunpack.c.l.b16 %v1667
    %v6468 = vunpack.c.l.b16 %v1668
    %v6469 = vunpack.c.l.b16 %v1669
    %v6470 = vunpack.c.l.b16 %v1670
    %v6471 = vunpack.c.l.b16 %v1671
    %v6472 = vunpack.c.l.b16 %v1672
    %v6473 = vunpack.c.l.b16 %v1673
    %v6474 = vunpack.c.l.b16 %v1674
    %v6475 = vunpack.c.l.b16 %v1675
    %v6476 = vunpack.c.l.b16 %v1676
    %v6477 = vunpack.c.l.b16 %v1677
    %v6478 = vunpack.c.l.b16 %v1678
    %v6479 = vunpack.c.l.b16 %v1679
    %v6480 = vunpack.c.l.b16 %v1680
    %v6481 = vunpack.c.l.b16 %v1681
    %v6482 = vunpack.c.l.b16 %v1682
    %v6483 = vunpack.c.l.b16 %v1683
    %v6484 = vunpack.c.l.b16 %v1684
    %v6485 = vunpack.c.l.b16 %v1685
    %v6486 = vunpack.c.l.b16 %v1686
    %v6487 = vunpack.c.l.b16 %v1687
    %v6488 = vunpack.c.l.b16 %v1688
    %v6489 = vunpack.c.l.b16 %v1689
    %v6490 = vunpack.c.l.b16 %v1690
    %v6491 = vunpack.c.l.b16 %v1691
    %v6492 = vunpack.c.l.b16 %v1692
    %v6493 = vunpack.c.l.b16 %v1693
    %v6494 = vunpack.c.l.b16 %v1694
    %v6495 = vunpack.c.l.b16 %v1695
    %v6496 = vunpack.c.l.b16 %v1696
    %v6497 = vunpack.c.l.b16 %v1697
    %v6498 = vunpack.c.l.b16 %v1698
    %v6499 = vunpack.c.l.b16 %v1699
    %v6500 = vunpack.c.l.b16 %v1700
    %v6501 = vunpack.c.l.b16 %v1701
    %v6502 = vunpack.c.l.b16 %v1702
    %v6503 = vunpack.c.l.b16 %v1703
    %v6504 = vunpack.c.l.b16 %v1704
    %v6505 = vunpack.c.l.b16 %v1705
    %v6506 = vunpack.c.l.b16 %v1706
    %v6507 = vunpack.c.l.b16 %v1707
    %v6508 = vunpack.c.l.b16 %v1708
    %v6509 = vunpack.c.l.b16 %v1709
    %v6510 = vunpack.c.l.b16 %v1710
    %v6511 = vunpack.c.l.b16 %v1711
    %v6512 = vunpack.c.l.b16 %v1712
    %v6513 = vunpack.c.l.b16 %v1713
    %v6514 = vunpack.c.l.b16 %v1714
    %v6515 = vunpack.c.l.b16 %v1715
    %v6516 = vunpack.c.l.b16 %v1716
    %v6517 = vunpack.c.l.b16 %v1717
    %v6518 = vunpack.c.l.b16 %v1718
    %v6519 = vunpack.c.l.b16 %v1719
    %v6520 = vunpack.c.l.b16 %v1720
    %v6521 = vunpack.c.l.b16 %v1721
    %v6522 = vunpack.c.l.b16 %v1722
    %v6523 = vunpack.c.l.b16 %v1723
    %v6524 = vunpack.c.l.b16 %v1724
    %v6525 = vunpack.c.l.b16 %v1725
    %v6526 = vunpack.c.l.b16 %v1726
    %v6527 = vunpack.c.l.b16 %v1727
    %v6528 = vunpack.c.l.b16 %v1728
    %v6529 = vunpack.c.l.b16 %v1729
    %v6530 = vunpack.c.l.b16 %v1730
    %v6531 = vunpack.c.l.b16 %v1731
    %v6532 = vunpack.c.l.b16 %v1732
    %v6533 = vunpack.c.l.b16 %v1733
    %v6534 = vunpack.c.l.b16 %v1734
    %v6535 = vunpack.c.l.b16 %v1735
    %v6536 = vunpack.c.l.b16 %v1736
    %v6537 = vunpack.c.l.b16 %v1737
    %v6538 = vunpack.c.l.b16 %v1738
    %v6539 = vunpack.c.l.b16 %v1739
    %v6540 = vunpack.c.l.b16 %v1740
    %v6541 = vunpack.c.l.b16 %v1741
    %v6542 = vunpack.c.l.b16 %v1742
    %v6543 = vunpack.c.l.b16 %v1743
    %v6544 = vunpack.c.l.b16 %v1744
    %v6545 = vunpack.c.l.b16 %v1745
    %v6546 = vunpack.c.l.b16 %v1746
    %v6547 = vunpack.c.l.b16 %v1747
    %v6548 = vunpack.c.l.b16 %v1748
    %v6549 = vunpack.c.l.b16 %v1749
    %v6550 = vunpack.c.l.b16 %v1750
    %v6551 = vunpack.c.l.b16 %v1751
    %v6552 = vunpack.c.l.b16 %v1752
    %v6553 = vunpack.c.l.b16 %v1753
    %v6554 = vunpack.c.l.b16 %v1754
    %v6555 = vunpack.c.l.b16 %v1755
    %v6556 = vunpack.c.l.b16 %v1756
    %v6557 = vunpack.c.l.b16 %v1757
    %v6558 = vunpack.c.l.b16 %v1758
    %v6559 = vunpack.c.l.b16 %v1759
    %v6560 = vunpack.c.l.b16 %v1760
    %v6561 = vunpack.c.l.b16 %v1761
    %v6562 = vunpack.c.l.b16 %v1762
    %v6563 = vunpack.c.l.b16 %v1763
    %v6564 = vunpack.c.l.b16 %v1764
    %v6565 = vunpack.c.l.b16 %v1765
    %v6566 = vunpack.c.l.b16 %v1766
    %v6567 = vunpack.c.l.b16 %v1767
    %v6568 = vunpack.c.l.b16 %v1768
    %v6569 = vunpack.c.l.b16 %v1769
    %v6570 = vunpack.c.l.b16 %v1770
    %v6571 = vunpack.c.l.b16 %v1771
    %v6572 = vunpack.c.l.b16 %v1772
    %v6573 = vunpack.c.l.b16 %v1773
    %v6574 = vunpack.c.l.b16 %v1774
    %v6575 = vunpack.c.l.b16 %v1775
    %v6576 = vunpack.c.l.b16 %v1776
    %v6577 = vunpack.c.l.b16 %v1777
    %v6578 = vunpack.c.l.b16 %v1778
    %v6579 = vunpack.c.l.b16 %v1779
    %v6580 = vunpack.c.l.b16 %v1780
    %v6581 = vunpack.c.l.b16 %v1781
    %v6582 = vunpack.c.l.b16 %v1782
    %v6583 = vunpack.c.l.b16 %v1783
    %v6584 = vunpack.c.l.b16 %v1784
    %v6585 = vunpack.c.l.b16 %v1785
    %v6586 = vunpack.c.l.b16 %v1786
    %v6587 = vunpack.c.l.b16 %v1787
    %v6588 = vunpack.c.l.b16 %v1788
    %v6589 = vunpack.c.l.b16 %v1789
    %v6590 = vunpack.c.l.b16 %v1790
    %v6591 = vunpack.c.l.b16 %v1791
    %v6592 = vunpack.c.l.b16 %v1792
    %v6593 = vunpack.c.l.b16 %v1793
    %v6594 = vunpack.c.l.b16 %v1794
    %v6595 = vunpack.c.l.b16 %v1795
    %v6596 = vunpack.c.l.b16 %v1796
    %v6597 = vunpack.c.l.b16 %v1797
    %v6598 = vunpack.c.l.b16 %v1798
    %v6599 = vunpack.c.l.b16 %v1799
    %v6600 = vunpack.c.l.b16 %v1800
    %v6601 = vunpack.c.l.b16 %v1801
    %v6602 = vunpack.c.l.b16 %v1802
    %v6603 = vunpack.c.l.b16 %v1803
    %v6604 = vunpack.c.l.b16 %v1804
    %v6605 = vunpack.c.l.b16 %v1805
    %v6606 = vunpack.c.l.b16 %v1806
    %v6607 = vunpack.c.l.b16 %v1807
    %v6608 = vunpack.c.l.b16 %v1808
    %v6609 = vunpack.c.l.b16 %v1809
    %v6610 = vunpack.c.l.b16 %v1810
    %v6611 = vunpack.c.l.b16 %v1811
    %v6612 = vunpack.c.l.b16 %v1812
    %v6613 = vunpack.c.l.b16 %v1813
    %v6614 = vunpack.c.l.b16 %v1814
    %v6615 = vunpack.c.l.b16 %v1815
    %v6616 = vunpack.c.l.b16 %v1816
    %v6617 = vunpack.c.l.b16 %v1817
    %v6618 = vunpack.c.l.b16 %v1818
    %v6619 = vunpack.c.l.b16 %v1819
    %v6620 = vunpack.c.l.b16 %v1820
    %v6621 = vunpack.c.l.b16 %v1821
    %v6622 = vunpack.c.l.b16 %v1822
    %v6623 = vunpack.c.l.b16 %v1823
    %v6624 = vunpack.c.l.b16 %v1824
    %v6625 = vunpack.c.l.b16 %v1825
    %v6626 = vunpack.c.l.b16 %v1826
    %v6627 = vunpack.c.l.b16 %v1827
    %v6628 = vunpack.c.l.b16 %v1828
    %v6629 = vunpack.c.l.b16 %v1829
    %v6630 = vunpack.c.l.b16 %v1830
    %v6631 = vunpack.c.l.b16 %v1831
    %v6632 = vunpack.c.l.b16 %v1832
    %v6633 = vunpack.c.l.b16 %v1833
    %v6634 = vunpack.c.l.b16 %v1834
    %v6635 = vunpack.c.l.b16 %v1835
    %v6636 = vunpack.c.l.b16 %v1836
    %v6637 = vunpack.c.l.b16 %v1837
    %v6638 = vunpack.c.l.b16 %v1838
    %v6639 = vunpack.c.l.b16 %v1839
    %v6640 = vunpack.c.l.b16 %v1840
    %v6641 = vunpack.c.l.b16 %v1841
    %v6642 = vunpack.c.l.b16 %v1842
    %v6643 = vunpack.c.l.b16 %v1843
    %v6644 = vunpack.c.l.b16 %v1844
    %v6645 = vunpack.c.l.b16 %v1845
    %v6646 = vunpack.c.l.b16 %v1846
    %v6647 = vunpack.c.l.b16 %v1847
    %v6648 = vunpack.c.l.b16 %v1848
    %v6649 = vunpack.c.l.b16 %v1849
    %v6650 = vunpack.c.l.b16 %v1850
    %v6651 = vunpack.c.l.b16 %v1851
    %v6652 = vunpack.c.l.b16 %v1852
    %v6653 = vunpack.c.l.b16 %v1853
    %v6654 = vunpack.c.l.b16 %v1854
    %v6655 = vunpack.c.l.b16 %v1855
    %v6656 = vunpack.c.l.b16 %v1856
    %v6657 = vunpack.c.l.b16 %v1857
    %v6658 = vunpack.c.l.b16 %v1858
    %v6659 = vunpack.c.l.b16 %v1859
    %v6660 = vunpack.c.l.b16 %v1860
    %v6661 = vunpack.c.l.b16 %v1861
    %v6662 = vunpack.c.l.b16 %v1862
    %v6663 = vunpack.c.l.b16 %v1863
    %v6664 = vunpack.c.l.b16 %v1864
    %v6665 = vunpack.c.l.b16 %v1865
    %v6666 = vunpack.c.l.b16 %v1866
    %v6667 = vunpack.c.l.b16 %v1867
    %v6668 = vunpack.c.l.b16 %v1868
    %v6669 = vunpack.c.l.b16 %v1869
    %v6670 = vunpack.c.l.b16 %v1870
    %v6671 = vunpack.c.l.b16 %v1871
    %v6672 = vunpack.c.l.b16 %v1872
    %v6673 = vunpack.c.l.b16 %v1873
    %v6674 = vunpack.c.l.b16 %v1874
    %v6675 = vunpack.c.l.b16 %v1875
    %v6676 = vunpack.c.l.b16 %v1876
    %v6677 = vunpack.c.l.b16 %v1877
    %v6678 = vunpack.c.l.b16 %v1878
    %v6679 = vunpack.c.l.b16 %v1879
    %v6680 = vunpack.c.l.b16 %v1880
    %v6681 = vunpack.c.l.b16 %v1881
    %v6682 = vunpack.c.l.b16 %v1882
    %v6683 = vunpack.c.l.b16 %v1883
    %v6684 = vunpack.c.l.b16 %v1884
    %v6685 = vunpack.c.l.b16 %v1885
    %v6686 = vunpack.c.l.b16 %v1886
    %v6687 = vunpack.c.l.b16 %v1887
    %v6688 = vunpack.c.l.b16 %v1888
    %v6689 = vunpack.c.l.b16 %v1889
    %v6690 = vunpack.c.l.b16 %v1890
    %v6691 = vunpack.c.l.b16 %v1891
    %v6692 = vunpack.c.l.b16 %v1892
    %v6693 = vunpack.c.l.b16 %v1893
    %v6694 = vunpack.c.l.b16 %v1894
    %v6695 = vunpack.c.l.b16 %v1895
    %v6696 = vunpack.c.l.b16 %v1896
    %v6697 = vunpack.c.l.b16 %v1897
    %v6698 = vunpack.c.l.b16 %v1898
    %v6699 = vunpack.c.l.b16 %v1899
    %v6700 = vunpack.c.l.b16 %v1900
    %v6701 = vunpack.c.l.b16 %v1901
    %v6702 = vunpack.c.l.b16 %v1902
    %v6703 = vunpack.c.l.b16 %v1903
    %v6704 = vunpack.c.l.b16 %v1904
    %v6705 = vunpack.c.l.b16 %v1905
    %v6706 = vunpack.c.l.b16 %v1906
    %v6707 = vunpack.c.l.b16 %v1907
    %v6708 = vunpack.c.l.b16 %v1908
    %v6709 = vunpack.c.l.b16 %v1909
    %v6710 = vunpack.c.l.b16 %v1910
    %v6711 = vunpack.c.l.b16 %v1911
    %v6712 = vunpack.c.l.b16 %v1912
    %v6713 = vunpack.c.l.b16 %v1913
    %v6714 = vunpack.c.l.b16 %v1914
    %v6715 = vunpack.c.l.b16 %v1915
    %v6716 = vunpack.c.l.b16 %v1916
    %v6717 = vunpack.c.l.b16 %v1917
    %v6718 = vunpack.c.l.b16 %v1918
    %v6719 = vunpack.c.l.b16 %v1919
    %v6720 = vunpack.c.l.b16 %v1920
    %v6721 = vunpack.c.l.b16 %v1921
    %v6722 = vunpack.c.l.b16 %v1922
    %v6723 = vunpack.c.l.b16 %v1923
    %v6724 = vunpack.c.l.b16 %v1924
    %v6725 = vunpack.c.l.b16 %v1925
    %v6726 = vunpack.c.l.b16 %v1926
    %v6727 = vunpack.c.l.b16 %v1927
    %v6728 = vunpack.c.l.b16 %v1928
    %v6729 = vunpack.c.l.b16 %v1929
    %v6730 = vunpack.c.l.b16 %v1930
    %v6731 = vunpack.c.l.b16 %v1931
    %v6732 = vunpack.c.l.b16 %v1932
    %v6733 = vunpack.c.l.b16 %v1933
    %v6734 = vunpack.c.l.b16 %v1934
    %v6735 = vunpack.c.l.b16 %v1935
    %v6736 = vunpack.c.l.b16 %v1936
    %v6737 = vunpack.c.l.b16 %v1937
    %v6738 = vunpack.c.l.b16 %v1938
    %v6739 = vunpack.c.l.b16 %v1939
    %v6740 = vunpack.c.l.b16 %v1940
    %v6741 = vunpack.c.l.b16 %v1941
    %v6742 = vunpack.c.l.b16 %v1942
    %v6743 = vunpack.c.l.b16 %v1943
    %v6744 = vunpack.c.l.b16 %v1944
    %v6745 = vunpack.c.l.b16 %v1945
    %v6746 = vunpack.c.l.b16 %v1946
    %v6747 = vunpack.c.l.b16 %v1947
    %v6748 = vunpack.c.l.b16 %v1948
    %v6749 = vunpack.c.l.b16 %v1949
    %v6750 = vunpack.c.l.b16 %v1950
    %v6751 = vunpack.c.l.b16 %v1951
    %v6752 = vunpack.c.l.b16 %v1952
    %v6753 = vunpack.c.l.b16 %v1953
    %v6754 = vunpack.c.l.b16 %v1954
    %v6755 = vunpack.c.l.b16 %v1955
    %v6756 = vunpack.c.l.b16 %v1956
    %v6757 = vunpack.c.l.b16 %v1957
    %v6758 = vunpack.c.l.b16 %v1958
    %v6759 = vunpack.c.l.b16 %v1959
    %v6760 = vunpack.c.l.b16 %v1960
    %v6761 = vunpack.c.l.b16 %v1961
    %v6762 = vunpack.c.l.b16 %v1962
    %v6763 = vunpack.c.l.b16 %v1963
    %v6764 = vunpack.c.l.b16 %v1964
    %v6765 = vunpack.c.l.b16 %v1965
    %v6766 = vunpack.c.l.b16 %v1966
    %v6767 = vunpack.c.l.b16 %v1967
    %v6768 = vunpack.c.l.b16 %v1968
    %v6769 = vunpack.c.l.b16 %v1969
    %v6770 = vunpack.c.l.b16 %v1970
    %v6771 = vunpack.c.l.b16 %v1971
    %v6772 = vunpack.c.l.b16 %v1972
    %v6773 = vunpack.c.l.b16 %v1973
    %v6774 = vunpack.c.l.b16 %v1974
    %v6775 = vunpack.c.l.b16 %v1975
    %v6776 = vunpack.c.l.b16 %v1976
    %v6777 = vunpack.c.l.b16 %v1977
    %v6778 = vunpack.c.l.b16 %v1978
    %v6779 = vunpack.c.l.b16 %v1979
    %v6780 = vunpack.c.l.b16 %v1980
    %v6781 = vunpack.c.l.b16 %v1981
    %v6782 = vunpack.c.l.b16 %v1982
    %v6783 = vunpack.c.l.b16 %v1983
    %v6784 = vunpack.c.l.b16 %v1984
    %v6785 = vunpack.c.l.b16 %v1985
    %v6786 = vunpack.c.l.b16 %v1986
    %v6787 = vunpack.c.l.b16 %v1987
    %v6788 = vunpack.c.l.b16 %v1988
    %v6789 = vunpack.c.l.b16 %v1989
    %v6790 = vunpack.c.l.b16 %v1990
    %v6791 = vunpack.c.l.b16 %v1991
    %v6792 = vunpack.c.l.b16 %v1992
    %v6793 = vunpack.c.l.b16 %v1993
    %v6794 = vunpack.c.l.b16 %v1994
    %v6795 = vunpack.c.l.b16 %v1995
    %v6796 = vunpack.c.l.b16 %v1996
    %v6797 = vunpack.c.l.b16 %v1997
    %v6798 = vunpack.c.l.b16 %v1998
    %v6799 = vunpack.c.l.b16 %v1999
    %v6800 = vunpack.c.l.b16 %v2000
    %v6801 = vunpack.c.l.b16 %v2001
    %v6802 = vunpack.c.l.b16 %v2002
    %v6803 = vunpack.c.l.b16 %v2003
    %v6804 = vunpack.c.l.b16 %v2004
    %v6805 = vunpack.c.l.b16 %v2005
    %v6806 = vunpack.c.l.b16 %v2006
    %v6807 = vunpack.c.l.b16 %v2007
    %v6808 = vunpack.c.l.b16 %v2008
    %v6809 = vunpack.c.l.b16 %v2009
    %v6810 = vunpack.c.l.b16 %v2010
    %v6811 = vunpack.c.l.b16 %v2011
    %v6812 = vunpack.c.l.b16 %v2012
    %v6813 = vunpack.c.l.b16 %v2013
    %v6814 = vunpack.c.l.b16 %v2014
    %v6815 = vunpack.c.l.b16 %v2015
    %v6816 = vunpack.c.l.b16 %v2016
    %v6817 = vunpack.c.l.b16 %v2017
    %v6818 = vunpack.c.l.b16 %v2018
    %v6819 = vunpack.c.l.b16 %v2019
    %v6820 = vunpack.c.l.b16 %v2020
    %v6821 = vunpack.c.l.b16 %v2021
    %v6822 = vunpack.c.l.b16 %v2022
    %v6823 = vunpack.c.l.b16 %v2023
    %v6824 = vunpack.c.l.b16 %v2024
    %v6825 = vunpack.c.l.b16 %v2025
    %v6826 = vunpack.c.l.b16 %v2026
    %v6827 = vunpack.c.l.b16 %v2027
    %v6828 = vunpack.c.l.b16 %v2028
    %v6829 = vunpack.c.l.b16 %v2029
    %v6830 = vunpack.c.l.b16 %v2030
    %v6831 = vunpack.c.l.b16 %v2031
    %v6832 = vunpack.c.l.b16 %v2032
    %v6833 = vunpack.c.l.b16 %v2033
    %v6834 = vunpack.c.l.b16 %v2034
    %v6835 = vunpack.c.l.b16 %v2035
    %v6836 = vunpack.c.l.b16 %v2036
    %v6837 = vunpack.c.l.b16 %v2037
    %v6838 = vunpack.c.l.b16 %v2038
    %v6839 = vunpack.c.l.b16 %v2039
    %v6840 = vunpack.c.l.b16 %v2040
    %v6841 = vunpack.c.l.b16 %v2041
    %v6842 = vunpack.c.l.b16 %v2042
    %v6843 = vunpack.c.l.b16 %v2043
    %v6844 = vunpack.c.l.b16 %v2044
    %v6845 = vunpack.c.l.b16 %v2045
    %v6846 = vunpack.c.l.b16 %v2046
    %v6847 = vunpack.c.l.b16 %v2047
    %v6848 = vunpack.c.l.b16 %v2048
    %v6849 = vunpack.c.l.b16 %v2049
    %v6850 = vunpack.c.l.b16 %v2050
    %v6851 = vunpack.c.l.b16 %v2051
    %v6852 = vunpack.c.l.b16 %v2052
    %v6853 = vunpack.c.l.b16 %v2053
    %v6854 = vunpack.c.l.b16 %v2054
    %v6855 = vunpack.c.l.b16 %v2055
    %v6856 = vunpack.c.l.b16 %v2056
    %v6857 = vunpack.c.l.b16 %v2057
    %v6858 = vunpack.c.l.b16 %v2058
    %v6859 = vunpack.c.l.b16 %v2059
    %v6860 = vunpack.c.l.b16 %v2060
    %v6861 = vunpack.c.l.b16 %v2061
    %v6862 = vunpack.c.l.b16 %v2062
    %v6863 = vunpack.c.l.b16 %v2063
    %v6864 = vunpack.c.l.b16 %v2064
    %v6865 = vunpack.c.l.b16 %v2065
    %v6866 = vunpack.c.l.b16 %v2066
    %v6867 = vunpack.c.l.b16 %v2067
    %v6868 = vunpack.c.l.b16 %v2068
    %v6869 = vunpack.c.l.b16 %v2069
    %v6870 = vunpack.c.l.b16 %v2070
    %v6871 = vunpack.c.l.b16 %v2071
    %v6872 = vunpack.c.l.b16 %v2072
    %v6873 = vunpack.c.l.b16 %v2073
    %v6874 = vunpack.c.l.b16 %v2074
    %v6875 = vunpack.c.l.b16 %v2075
    %v6876 = vunpack.c.l.b16 %v2076
    %v6877 = vunpack.c.l.b16 %v2077
    %v6878 = vunpack.c.l.b16 %v2078
    %v6879 = vunpack.c.l.b16 %v2079
    %v6880 = vunpack.c.l.b16 %v2080
    %v6881 = vunpack.c.l.b16 %v2081
    %v6882 = vunpack.c.l.b16 %v2082
    %v6883 = vunpack.c.l.b16 %v2083
    %v6884 = vunpack.c.l.b16 %v2084
    %v6885 = vunpack.c.l.b16 %v2085
    %v6886 = vunpack.c.l.b16 %v2086
    %v6887 = vunpack.c.l.b16 %v2087
    %v6888 = vunpack.c.l.b16 %v2088
    %v6889 = vunpack.c.l.b16 %v2089
    %v6890 = vunpack.c.l.b16 %v2090
    %v6891 = vunpack.c.l.b16 %v2091
    %v6892 = vunpack.c.l.b16 %v2092
    %v6893 = vunpack.c.l.b16 %v2093
    %v6894 = vunpack.c.l.b16 %v2094
    %v6895 = vunpack.c.l.b16 %v2095
    %v6896 = vunpack.c.l.b16 %v2096
    %v6897 = vunpack.c.l.b16 %v2097
    %v6898 = vunpack.c.l.b16 %v2098
    %v6899 = vunpack.c.l.b16 %v2099
    %v6900 = vunpack.c.l.b16 %v2100
    %v6901 = vunpack.c.l.b16 %v2101
    %v6902 = vunpack.c.l.b16 %v2102
    %v6903 = vunpack.c.l.b16 %v2103
    %v6904 = vunpack.c.l.b16 %v2104
    %v6905 = vunpack.c.l.b16 %v2105
    %v6906 = vpack.c.b16 %v4859, %v4858
    %v6907 = vpack.c.b16 %v4861, %v4860
    %v6908 = vpack.c.b16 %v4863, %v4862
    %v6909 = vpack.c.b16 %v4865, %v4864
    %v6910 = vpack.c.b16 %v4867, %v4866
    %v6911 = vpack.c.b16 %v4869, %v4868
    %v6912 = vpack.c.b16 %v4871, %v4870
    %v6913 = vpack.c.b16 %v4873, %v4872
    %v6914 = vpack.c.b16 %v4875, %v4874
    %v6915 = vpack.c.b16 %v4877, %v4876
    %v6916 = vpack.c.b16 %v4879, %v4878
    %v6917 = vpack.c.b16 %v4881, %v4880
    %v6918 = vpack.c.b16 %v4883, %v4882
    %v6919 = vpack.c.b16 %v4885, %v4884
    %v6920 = vpack.c.b16 %v4887, %v4886
    %v6921 = vpack.c.b16 %v4889, %v4888
    %v6922 = vpack.c.b16 %v4891, %v4890
    %v6923 = vpack.c.b16 %v4893, %v4892
    %v6924 = vpack.c.b16 %v4895, %v4894
    %v6925 = vpack.c.b16 %v4897, %v4896
    %v6926 = vpack.c.b16 %v4899, %v4898
    %v6927 = vpack.c.b16 %v4901, %v4900
    %v6928 = vpack.c.b16 %v4903, %v4902
    %v6929 = vpack.c.b16 %v4905, %v4904
    %v6930 = vpack.c.b16 %v4907, %v4906
    %v6931 = vpack.c.b16 %v4909, %v4908
    %v6932 = vpack.c.b16 %v4911, %v4910
    %v6933 = vpack.c.b16 %v4913, %v4912
    %v6934 = vpack.c.b16 %v4915, %v4914
    %v6935 = vpack.c.b16 %v4917, %v4916
    %v6936 = vpack.c.b16 %v4919, %v4918
    %v6937 = vpack.c.b16 %v4921, %v4920
    %v6938 = vpack.c.b16 %v4923, %v4922
    %v6939 = vpack.c.b16 %v4925, %v4924
    %v6940 = vpack.c.b16 %v4927, %v4926
    %v6941 = vpack.c.b16 %v4929, %v4928
    %v6942 = vpack.c.b16 %v4931, %v4930
    %v6943 = vpack.c.b16 %v4933, %v4932
    %v6944 = vpack.c.b16 %v4935, %v4934
    %v6945 = vpack.c.b16 %v4937, %v4936
    %v6946 = vpack.c.b16 %v4939, %v4938
    %v6947 = vpack.c.b16 %v4941, %v4940
    %v6948 = vpack.c.b16 %v4943, %v4942
    %v6949 = vpack.c.b16 %v4945, %v4944
    %v6950 = vpack.c.b16 %v4947, %v4946
    %v6951 = vpack.c.b16 %v4949, %v4948
    %v6952 = vpack.c.b16 %v4951, %v4950
    %v6953 = vpack.c.b16 %v4953, %v4952
    %v6954 = vpack.c.b16 %v4955, %v4954
    %v6955 = vpack.c.b16 %v4957, %v4956
    %v6956 = vpack.c.b16 %v4959, %v4958
    %v6957 = vpack.c.b16 %v4961, %v4960
    %v6958 = vpack.c.b16 %v4963, %v4962
    %v6959 = vpack.c.b16 %v4965, %v4964
    %v6960 = vpack.c.b16 %v4967, %v4966
    %v6961 = vpack.c.b16 %v4969, %v4968
    %v6962 = vpack.c.b16 %v4971, %v4970
    %v6963 = vpack.c.b16 %v4973, %v4972
    %v6964 = vpack.c.b16 %v4975, %v4974
    %v6965 = vpack.c.b16 %v4977, %v4976
    %v6966 = vpack.c.b16 %v4979, %v4978
    %v6967 = vpack.c.b16 %v4981, %v4980
    %v6968 = vpack.c.b16 %v4983, %v4982
    %v6969 = vpack.c.b16 %v4985, %v4984
    %v6970 = vpack.c.b16 %v4987, %v4986
    %v6971 = vpack.c.b16 %v4989, %v4988
    %v6972 = vpack.c.b16 %v4991, %v4990
    %v6973 = vpack.c.b16 %v4993, %v4992
    %v6974 = vpack.c.b16 %v4995, %v4994
    %v6975 = vpack.c.b16 %v4997, %v4996
    %v6976 = vpack.c.b16 %v4999, %v4998
    %v6977 = vpack.c.b16 %v5001, %v5000
    %v6978 = vpack.c.b16 %v5003, %v5002
    %v6979 = vpack.c.b16 %v5005, %v5004
    %v6980 = vpack.c.b16 %v5007, %v5006
    %v6981 = vpack.c.b16 %v5009, %v5008
    %v6982 = vpack.c.b16 %v5011, %v5010
    %v6983 = vpack.c.b16 %v5013, %v5012
    %v6984 = vpack.c.b16 %v5015, %v5014
    %v6985 = vpack.c.b16 %v5017, %v5016
    %v6986 = vpack.c.b16 %v5019, %v5018
    %v6987 = vpack.c.b16 %v5021, %v5020
    %v6988 = vpack.c.b16 %v5023, %v5022
    %v6989 = vpack.c.b16 %v5025, %v5024
    %v6990 = vpack.c.b16 %v5027, %v5026
    %v6991 = vpack.c.b16 %v5029, %v5028
    %v6992 = vpack.c.b16 %v5031, %v5030
    %v6993 = vpack.c.b16 %v5033, %v5032
    %v6994 = vpack.c.b16 %v5035, %v5034
    %v6995 = vpack.c.b16 %v5037, %v5036
    %v6996 = vpack.c.b16 %v5039, %v5038
    %v6997 = vpack.c.b16 %v5041, %v5040
    %v6998 = vpack.c.b16 %v5043, %v5042
    %v6999 = vpack.c.b16 %v5045, %v5044
    %v7000 = vpack.c.b16 %v5047, %v5046
    %v7001 = vpack.c.b16 %v5049, %v5048
    %v7002 = vpack.c.b16 %v5051, %v5050
    %v7003 = vpack.c.b16 %v5053, %v5052
    %v7004 = vpack.c.b16 %v5055, %v5054
    %v7005 = vpack.c.b16 %v5057, %v5056
    %v7006 = vpack.c.b16 %v5059, %v5058
    %v7007 = vpack.c.b16 %v5061, %v5060
    %v7008 = vpack.c.b16 %v5063, %v5062
    %v7009 = vpack.c.b16 %v5065, %v5064
    %v7010 = vpack.c.b16 %v5067, %v5066
    %v7011 = vpack.c.b16 %v5069, %v5068
    %v7012 = vpack.c.b16 %v5071, %v5070
    %v7013 = vpack.c.b16 %v5073, %v5072
    %v7014 = vpack.c.b16 %v5075, %v5074
    %v7015 = vpack.c.b16 %v5077, %v5076
    %v7016 = vpack.c.b16 %v5079, %v5078
    %v7017 = vpack.c.b16 %v5081, %v5080
    %v7018 = vpack.c.b16 %v5083, %v5082
    %v7019 = vpack.c.b16 %v5085, %v5084
    %v7020 = vpack.c.b16 %v5087, %v5086
    %v7021 = vpack.c.b16 %v5089, %v5088
    %v7022 = vpack.c.b16 %v5091, %v5090
    %v7023 = vpack.c.b16 %v5093, %v5092
    %v7024 = vpack.c.b16 %v5095, %v5094
    %v7025 = vpack.c.b16 %v5097, %v5096
    %v7026 = vpack.c.b16 %v5099, %v5098
    %v7027 = vpack.c.b16 %v5101, %v5100
    %v7028 = vpack.c.b16 %v5103, %v5102
    %v7029 = vpack.c.b16 %v5105, %v5104
    %v7030 = vpack.c.b16 %v5107, %v5106
    %v7031 = vpack.c.b16 %v5109, %v5108
    %v7032 = vpack.c.b16 %v5111, %v5110
    %v7033 = vpack.c.b16 %v5113, %v5112
    %v7034 = vpack.c.b16 %v5115, %v5114
    %v7035 = vpack.c.b16 %v5117, %v5116
    %v7036 = vpack.c.b16 %v5119, %v5118
    %v7037 = vpack.c.b16 %v5121, %v5120
    %v7038 = vpack.c.b16 %v5123, %v5122
    %v7039 = vpack.c.b16 %v5125, %v5124
    %v7040 = vpack.c.b16 %v5127, %v5126
    %v7041 = vpack.c.b16 %v5129, %v5128
    %v7042 = vpack.c.b16 %v5131, %v5130
    %v7043 = vpack.c.b16 %v5133, %v5132
    %v7044 = vpack.c.b16 %v5135, %v5134
    %v7045 = vpack.c.b16 %v5137, %v5136
    %v7046 = vpack.c.b16 %v5139, %v5138
    %v7047 = vpack.c.b16 %v5141, %v5140
    %v7048 = vpack.c.b16 %v5143, %v5142
    %v7049 = vpack.c.b16 %v5145, %v5144
    %v7050 = vpack.c.b16 %v5147, %v5146
    %v7051 = vpack.c.b16 %v5149, %v5148
    %v7052 = vpack.c.b16 %v5151, %v5150
    %v7053 = vpack.c.b16 %v5153, %v5152
    %v7054 = vpack.c.b16 %v5155, %v5154
    %v7055 = vpack.c.b16 %v5157, %v5156
    %v7056 = vpack.c.b16 %v5159, %v5158
    %v7057 = vpack.c.b16 %v5161, %v5160
    %v7058 = vpack.c.b16 %v5163, %v5162
    %v7059 = vpack.c.b16 %v5165, %v5164
    %v7060 = vpack.c.b16 %v5167, %v5166
    %v7061 = vpack.c.b16 %v5169, %v5168
    %v7062 = vpack.c.b16 %v5171, %v5170
    %v7063 = vpack.c.b16 %v5173, %v5172
    %v7064 = vpack.c.b16 %v5175, %v5174
    %v7065 = vpack.c.b16 %v5177, %v5176
    %v7066 = vpack.c.b16 %v5179, %v5178
    %v7067 = vpack.c.b16 %v5181, %v5180
    %v7068 = vpack.c.b16 %v5183, %v5182
    %v7069 = vpack.c.b16 %v5185, %v5184
    %v7070 = vpack.c.b16 %v5187, %v5186
    %v7071 = vpack.c.b16 %v5189, %v5188
    %v7072 = vpack.c.b16 %v5191, %v5190
    %v7073 = vpack.c.b16 %v5193, %v5192
    %v7074 = vpack.c.b16 %v5195, %v5194
    %v7075 = vpack.c.b16 %v5197, %v5196
    %v7076 = vpack.c.b16 %v5199, %v5198
    %v7077 = vpack.c.b16 %v5201, %v5200
    %v7078 = vpack.c.b16 %v5203, %v5202
    %v7079 = vpack.c.b16 %v5205, %v5204
    %v7080 = vpack.c.b16 %v5207, %v5206
    %v7081 = vpack.c.b16 %v5209, %v5208
    %v7082 = vpack.c.b16 %v5211, %v5210
    %v7083 = vpack.c.b16 %v5213, %v5212
    %v7084 = vpack.c.b16 %v5215, %v5214
    %v7085 = vpack.c.b16 %v5217, %v5216
    %v7086 = vpack.c.b16 %v5219, %v5218
    %v7087 = vpack.c.b16 %v5221, %v5220
    %v7088 = vpack.c.b16 %v5223, %v5222
    %v7089 = vpack.c.b16 %v5225, %v5224
    %v7090 = vpack.c.b16 %v5227, %v5226
    %v7091 = vpack.c.b16 %v5229, %v5228
    %v7092 = vpack.c.b16 %v5231, %v5230
    %v7093 = vpack.c.b16 %v5233, %v5232
    %v7094 = vpack.c.b16 %v5235, %v5234
    %v7095 = vpack.c.b16 %v5237, %v5236
    %v7096 = vpack.c.b16 %v5239, %v5238
    %v7097 = vpack.c.b16 %v5241, %v5240
    %v7098 = vpack.c.b16 %v5243, %v5242
    %v7099 = vpack.c.b16 %v5245, %v5244
    %v7100 = vpack.c.b16 %v5247, %v5246
    %v7101 = vpack.c.b16 %v5249, %v5248
    %v7102 = vpack.c.b16 %v5251, %v5250
    %v7103 = vpack.c.b16 %v5253, %v5252
    %v7104 = vpack.c.b16 %v5255, %v5254
    %v7105 = vpack.c.b16 %v5257, %v5256
    %v7106 = vpack.c.b16 %v5259, %v5258
    %v7107 = vpack.c.b16 %v5261, %v5260
    %v7108 = vpack.c.b16 %v5263, %v5262
    %v7109 = vpack.c.b16 %v5265, %v5264
    %v7110 = vpack.c.b16 %v5267, %v5266
    %v7111 = vpack.c.b16 %v5269, %v5268
    %v7112 = vpack.c.b16 %v5271, %v5270
    %v7113 = vpack.c.b16 %v5273, %v5272
    %v7114 = vpack.c.b16 %v5275, %v5274
    %v7115 = vpack.c.b16 %v5277, %v5276
    %v7116 = vpack.c.b16 %v5279, %v5278
    %v7117 = vpack.c.b16 %v5281, %v5280
    %v7118 = vpack.c.b16 %v5283, %v5282
    %v7119 = vpack.c.b16 %v5285, %v5284
    %v7120 = vpack.c.b16 %v5287, %v5286
    %v7121 = vpack.c.b16 %v5289, %v5288
    %v7122 = vpack.c.b16 %v5291, %v5290
    %v7123 = vpack.c.b16 %v5293, %v5292
    %v7124 = vpack.c.b16 %v5295, %v5294
    %v7125 = vpack.c.b16 %v5297, %v5296
    %v7126 = vpack.c.b16 %v5299, %v5298
    %v7127 = vpack.c.b16 %v5301, %v5300
    %v7128 = vpack.c.b16 %v5303, %v5302
    %v7129 = vpack.c.b16 %v5305, %v5304
    %v7130 = vpack.c.b16 %v5307, %v5306
    %v7131 = vpack.c.b16 %v5309, %v5308
    %v7132 = vpack.c.b16 %v5311, %v5310
    %v7133 = vpack.c.b16 %v5313, %v5312
    %v7134 = vpack.c.b16 %v5315, %v5314
    %v7135 = vpack.c.b16 %v5317, %v5316
    %v7136 = vpack.c.b16 %v5319, %v5318
    %v7137 = vpack.c.b16 %v5321, %v5320
    %v7138 = vpack.c.b16 %v5323, %v5322
    %v7139 = vpack.c.b16 %v5325, %v5324
    %v7140 = vpack.c.b16 %v5327, %v5326
    %v7141 = vpack.c.b16 %v5329, %v5328
    %v7142 = vpack.c.b16 %v5331, %v5330
    %v7143 = vpack.c.b16 %v5333, %v5332
    %v7144 = vpack.c.b16 %v5335, %v5334
    %v7145 = vpack.c.b16 %v5337, %v5336
    %v7146 = vpack.c.b16 %v5339, %v5338
    %v7147 = vpack.c.b16 %v5341, %v5340
    %v7148 = vpack.c.b16 %v5343, %v5342
    %v7149 = vpack.c.b16 %v5345, %v5344
    %v7150 = vpack.c.b16 %v5347, %v5346
    %v7151 = vpack.c.b16 %v5349, %v5348
    %v7152 = vpack.c.b16 %v5351, %v5350
    %v7153 = vpack.c.b16 %v5353, %v5352
    %v7154 = vpack.c.b16 %v5355, %v5354
    %v7155 = vpack.c.b16 %v5357, %v5356
    %v7156 = vpack.c.b16 %v5359, %v5358
    %v7157 = vpack.c.b16 %v5361, %v5360
    %v7158 = vpack.c.b16 %v5363, %v5362
    %v7159 = vpack.c.b16 %v5365, %v5364
    %v7160 = vpack.c.b16 %v5367, %v5366
    %v7161 = vpack.c.b16 %v5369, %v5368
    %v7162 = vpack.c.b16 %v5371, %v5370
    %v7163 = vpack.c.b16 %v5373, %v5372
    %v7164 = vpack.c.b16 %v5375, %v5374
    %v7165 = vpack.c.b16 %v5377, %v5376
    %v7166 = vpack.c.b16 %v5379, %v5378
    %v7167 = vpack.c.b16 %v5381, %v5380
    %v7168 = vpack.c.b16 %v5383, %v5382
    %v7169 = vpack.c.b16 %v5385, %v5384
    %v7170 = vpack.c.b16 %v5387, %v5386
    %v7171 = vpack.c.b16 %v5389, %v5388
    %v7172 = vpack.c.b16 %v5391, %v5390
    %v7173 = vpack.c.b16 %v5393, %v5392
    %v7174 = vpack.c.b16 %v5395, %v5394
    %v7175 = vpack.c.b16 %v5397, %v5396
    %v7176 = vpack.c.b16 %v5399, %v5398
    %v7177 = vpack.c.b16 %v5401, %v5400
    %v7178 = vpack.c.b16 %v5403, %v5402
    %v7179 = vpack.c.b16 %v5405, %v5404
    %v7180 = vpack.c.b16 %v5407, %v5406
    %v7181 = vpack.c.b16 %v5409, %v5408
    %v7182 = vpack.c.b16 %v5411, %v5410
    %v7183 = vpack.c.b16 %v5413, %v5412
    %v7184 = vpack.c.b16 %v5415, %v5414
    %v7185 = vpack.c.b16 %v5417, %v5416
    %v7186 = vpack.c.b16 %v5419, %v5418
    %v7187 = vpack.c.b16 %v5421, %v5420
    %v7188 = vpack.c.b16 %v5423, %v5422
    %v7189 = vpack.c.b16 %v5425, %v5424
    %v7190 = vpack.c.b16 %v5427, %v5426
    %v7191 = vpack.c.b16 %v5429, %v5428
    %v7192 = vpack.c.b16 %v5431, %v5430
    %v7193 = vpack.c.b16 %v5433, %v5432
    %v7194 = vpack.c.b16 %v5435, %v5434
    %v7195 = vpack.c.b16 %v5437, %v5436
    %v7196 = vpack.c.b16 %v5439, %v5438
    %v7197 = vpack.c.b16 %v5441, %v5440
    %v7198 = vpack.c.b16 %v5443, %v5442
    %v7199 = vpack.c.b16 %v5445, %v5444
    %v7200 = vpack.c.b16 %v5447, %v5446
    %v7201 = vpack.c.b16 %v5449, %v5448
    %v7202 = vpack.c.b16 %v5451, %v5450
    %v7203 = vpack.c.b16 %v5453, %v5452
    %v7204 = vpack.c.b16 %v5455, %v5454
    %v7205 = vpack.c.b16 %v5457, %v5456
    %v7206 = vpack.c.b16 %v5459, %v5458
    %v7207 = vpack.c.b16 %v5461, %v5460
    %v7208 = vpack.c.b16 %v5463, %v5462
    %v7209 = vpack.c.b16 %v5465, %v5464
    %v7210 = vpack.c.b16 %v5467, %v5466
    %v7211 = vpack.c.b16 %v5469, %v5468
    %v7212 = vpack.c.b16 %v5471, %v5470
    %v7213 = vpack.c.b16 %v5473, %v5472
    %v7214 = vpack.c.b16 %v5475, %v5474
    %v7215 = vpack.c.b16 %v5477, %v5476
    %v7216 = vpack.c.b16 %v5479, %v5478
    %v7217 = vpack.c.b16 %v5481, %v5480
    %v7218 = vpack.c.b16 %v5483, %v5482
    %v7219 = vpack.c.b16 %v5485, %v5484
    %v7220 = vpack.c.b16 %v5487, %v5486
    %v7221 = vpack.c.b16 %v5489, %v5488
    %v7222 = vpack.c.b16 %v5491, %v5490
    %v7223 = vpack.c.b16 %v5493, %v5492
    %v7224 = vpack.c.b16 %v5495, %v5494
    %v7225 = vpack.c.b16 %v5497, %v5496
    %v7226 = vpack.c.b16 %v5499, %v5498
    %v7227 = vpack.c.b16 %v5501, %v5500
    %v7228 = vpack.c.b16 %v5503, %v5502
    %v7229 = vpack.c.b16 %v5505, %v5504
    %v7230 = vpack.c.b16 %v5507, %v5506
    %v7231 = vpack.c.b16 %v5509, %v5508
    %v7232 = vpack.c.b16 %v5511, %v5510
    %v7233 = vpack.c.b16 %v5513, %v5512
    %v7234 = vpack.c.b16 %v5515, %v5514
    %v7235 = vpack.c.b16 %v5517, %v5516
    %v7236 = vpack.c.b16 %v5519, %v5518
    %v7237 = vpack.c.b16 %v5521, %v5520
    %v7238 = vpack.c.b16 %v5523, %v5522
    %v7239 = vpack.c.b16 %v5525, %v5524
    %v7240 = vpack.c.b16 %v5527, %v5526
    %v7241 = vpack.c.b16 %v5529, %v5528
    %v7242 = vpack.c.b16 %v5531, %v5530
    %v7243 = vpack.c.b16 %v5533, %v5532
    %v7244 = vpack.c.b16 %v5535, %v5534
    %v7245 = vpack.c.b16 %v5537, %v5536
    %v7246 = vpack.c.b16 %v5539, %v5538
    %v7247 = vpack.c.b16 %v5541, %v5540
    %v7248 = vpack.c.b16 %v5543, %v5542
    %v7249 = vpack.c.b16 %v5545, %v5544
    %v7250 = vpack.c.b16 %v5547, %v5546
    %v7251 = vpack.c.b16 %v5549, %v5548
    %v7252 = vpack.c.b16 %v5551, %v5550
    %v7253 = vpack.c.b16 %v5553, %v5552
    %v7254 = vpack.c.b16 %v5555, %v5554
    %v7255 = vpack.c.b16 %v5557, %v5556
    %v7256 = vpack.c.b16 %v5559, %v5558
    %v7257 = vpack.c.b16 %v5561, %v5560
    %v7258 = vpack.c.b16 %v5563, %v5562
    %v7259 = vpack.c.b16 %v5565, %v5564
    %v7260 = vpack.c.b16 %v5567, %v5566
    %v7261 = vpack.c.b16 %v5569, %v5568
    %v7262 = vpack.c.b16 %v5571, %v5570
    %v7263 = vpack.c.b16 %v5573, %v5572
    %v7264 = vpack.c.b16 %v5575, %v5574
    %v7265 = vpack.c.b16 %v5577, %v5576
    %v7266 = vpack.c.b16 %v5579, %v5578
    %v7267 = vpack.c.b16 %v5581, %v5580
    %v7268 = vpack.c.b16 %v5583, %v5582
    %v7269 = vpack.c.b16 %v5585, %v5584
    %v7270 = vpack.c.b16 %v5587, %v5586
    %v7271 = vpack.c.b16 %v5589, %v5588
    %v7272 = vpack.c.b16 %v5591, %v5590
    %v7273 = vpack.c.b16 %v5593, %v5592
    %v7274 = vpack.c.b16 %v5595, %v5594
    %v7275 = vpack.c.b16 %v5597, %v5596
    %v7276 = vpack.c.b16 %v5599, %v5598
    %v7277 = vpack.c.b16 %v5601, %v5600
    %v7278 = vpack.c.b16 %v5603, %v5602
    %v7279 = vpack.c.b16 %v5605, %v5604
    %v7280 = vpack.c.b16 %v5607, %v5606
    %v7281 = vpack.c.b16 %v5609, %v5608
    %v7282 = vpack.c.b16 %v5611, %v5610
    %v7283 = vpack.c.b16 %v5613, %v5612
    %v7284 = vpack.c.b16 %v5615, %v5614
    %v7285 = vpack.c.b16 %v5617, %v5616
    %v7286 = vpack.c.b16 %v5619, %v5618
    %v7287 = vpack.c.b16 %v5621, %v5620
    %v7288 = vpack.c.b16 %v5623, %v5622
    %v7289 = vpack.c.b16 %v5625, %v5624
    %v7290 = vpack.c.b16 %v5627, %v5626
    %v7291 = vpack.c.b16 %v5629, %v5628
    %v7292 = vpack.c.b16 %v5631, %v5630
    %v7293 = vpack.c.b16 %v5633, %v5632
    %v7294 = vpack.c.b16 %v5635, %v5634
    %v7295 = vpack.c.b16 %v5637, %v5636
    %v7296 = vpack.c.b16 %v5639, %v5638
    %v7297 = vpack.c.b16 %v5641, %v5640
    %v7298 = vpack.c.b16 %v5643, %v5642
    %v7299 = vpack.c.b16 %v5645, %v5644
    %v7300 = vpack.c.b16 %v5647, %v5646
    %v7301 = vpack.c.b16 %v5649, %v5648
    %v7302 = vpack.c.b16 %v5651, %v5650
    %v7303 = vpack.c.b16 %v5653, %v5652
    %v7304 = vpack.c.b16 %v5655, %v5654
    %v7305 = vpack.c.b16 %v5657, %v5656
    %v7306 = vpack.c.b16 %v5659, %v5658
    %v7307 = vpack.c.b16 %v5661, %v5660
    %v7308 = vpack.c.b16 %v5663, %v5662
    %v7309 = vpack.c.b16 %v5665, %v5664
    %v7310 = vpack.c.b16 %v5667, %v5666
    %v7311 = vpack.c.b16 %v5669, %v5668
    %v7312 = vpack.c.b16 %v5671, %v5670
    %v7313 = vpack.c.b16 %v5673, %v5672
    %v7314 = vpack.c.b16 %v5675, %v5674
    %v7315 = vpack.c.b16 %v5677, %v5676
    %v7316 = vpack.c.b16 %v5679, %v5678
    %v7317 = vpack.c.b16 %v5681, %v5680
    %v7318 = vpack.c.b16 %v5683, %v5682
    %v7319 = vpack.c.b16 %v5685, %v5684
    %v7320 = vpack.c.b16 %v5687, %v5686
    %v7321 = vpack.c.b16 %v5689, %v5688
    %v7322 = vpack.c.b16 %v5691, %v5690
    %v7323 = vpack.c.b16 %v5693, %v5692
    %v7324 = vpack.c.b16 %v5695, %v5694
    %v7325 = vpack.c.b16 %v5697, %v5696
    %v7326 = vpack.c.b16 %v5699, %v5698
    %v7327 = vpack.c.b16 %v5701, %v5700
    %v7328 = vpack.c.b16 %v5703, %v5702
    %v7329 = vpack.c.b16 %v5705, %v5704
    %v7330 = vpack.c.b16 %v5707, %v5706
    %v7331 = vpack.c.b16 %v5709, %v5708
    %v7332 = vpack.c.b16 %v5711, %v5710
    %v7333 = vpack.c.b16 %v5713, %v5712
    %v7334 = vpack.c.b16 %v5715, %v5714
    %v7335 = vpack.c.b16 %v5717, %v5716
    %v7336 = vpack.c.b16 %v5719, %v5718
    %v7337 = vpack.c.b16 %v5721, %v5720
    %v7338 = vpack.c.b16 %v5723, %v5722
    %v7339 = vpack.c.b16 %v5725, %v5724
    %v7340 = vpack.c.b16 %v5727, %v5726
    %v7341 = vpack.c.b16 %v5729, %v5728
    %v7342 = vpack.c.b16 %v5731, %v5730
    %v7343 = vpack.c.b16 %v5733, %v5732
    %v7344 = vpack.c.b16 %v5735, %v5734
    %v7345 = vpack.c.b16 %v5737, %v5736
    %v7346 = vpack.c.b16 %v5739, %v5738
    %v7347 = vpack.c.b16 %v5741, %v5740
    %v7348 = vpack.c.b16 %v5743, %v5742
    %v7349 = vpack.c.b16 %v5745, %v5744
    %v7350 = vpack.c.b16 %v5747, %v5746
    %v7351 = vpack.c.b16 %v5749, %v5748
    %v7352 = vpack.c.b16 %v5751, %v5750
    %v7353 = vpack.c.b16 %v5753, %v5752
    %v7354 = vpack.c.b16 %v5755, %v5754
    %v7355 = vpack.c.b16 %v5757, %v5756
    %v7356 = vpack.c.b16 %v5759, %v5758
    %v7357 = vpack.c.b16 %v5761, %v5760
    %v7358 = vpack.c.b16 %v5763, %v5762
    %v7359 = vpack.c.b16 %v5765, %v5764
    %v7360 = vpack.c.b16 %v5767, %v5766
    %v7361 = vpack.c.b16 %v5769, %v5768
    %v7362 = vpack.c.b16 %v5771, %v5770
    %v7363 = vpack.c.b16 %v5773, %v5772
    %v7364 = vpack.c.b16 %v5775, %v5774
    %v7365 = vpack.c.b16 %v5777, %v5776
    %v7366 = vpack.c.b16 %v5779, %v5778
    %v7367 = vpack.c.b16 %v5781, %v5780
    %v7368 = vpack.c.b16 %v5783, %v5782
    %v7369 = vpack.c.b16 %v5785, %v5784
    %v7370 = vpack.c.b16 %v5787, %v5786
    %v7371 = vpack.c.b16 %v5789, %v5788
    %v7372 = vpack.c.b16 %v5791, %v5790
    %v7373 = vpack.c.b16 %v5793, %v5792
    %v7374 = vpack.c.b16 %v5795, %v5794
    %v7375 = vpack.c.b16 %v5797, %v5796
    %v7376 = vpack.c.b16 %v5799, %v5798
    %v7377 = vpack.c.b16 %v5801, %v5800
    %v7378 = vpack.c.b16 %v5803, %v5802
    %v7379 = vpack.c.b16 %v5805, %v5804
    %v7380 = vpack.c.b16 %v5807, %v5806
    %v7381 = vpack.c.b16 %v5809, %v5808
    %v7382 = vpack.c.b16 %v5811, %v5810
    %v7383 = vpack.c.b16 %v5813, %v5812
    %v7384 = vpack.c.b16 %v5815, %v5814
    %v7385 = vpack.c.b16 %v5817, %v5816
    %v7386 = vpack.c.b16 %v5819, %v5818
    %v7387 = vpack.c.b16 %v5821, %v5820
    %v7388 = vpack.c.b16 %v5823, %v5822
    %v7389 = vpack.c.b16 %v5825, %v5824
    %v7390 = vpack.c.b16 %v5827, %v5826
    %v7391 = vpack.c.b16 %v5829, %v5828
    %v7392 = vpack.c.b16 %v5831, %v5830
    %v7393 = vpack.c.b16 %v5833, %v5832
    %v7394 = vpack.c.b16 %v5835, %v5834
    %v7395 = vpack.c.b16 %v5837, %v5836
    %v7396 = vpack.c.b16 %v5839, %v5838
    %v7397 = vpack.c.b16 %v5841, %v5840
    %v7398 = vpack.c.b16 %v5843, %v5842
    %v7399 = vpack.c.b16 %v5845, %v5844
    %v7400 = vpack.c.b16 %v5847, %v5846
    %v7401 = vpack.c.b16 %v5849, %v5848
    %v7402 = vpack.c.b16 %v5851, %v5850
    %v7403 = vpack.c.b16 %v5853, %v5852
    %v7404 = vpack.c.b16 %v5855, %v5854
    %v7405 = vpack.c.b16 %v5857, %v5856
    %v7406 = vpack.c.b16 %v5859, %v5858
    %v7407 = vpack.c.b16 %v5861, %v5860
    %v7408 = vpack.c.b16 %v5863, %v5862
    %v7409 = vpack.c.b16 %v5865, %v5864
    %v7410 = vpack.c.b16 %v5867, %v5866
    %v7411 = vpack.c.b16 %v5869, %v5868
    %v7412 = vpack.c.b16 %v5871, %v5870
    %v7413 = vpack.c.b16 %v5873, %v5872
    %v7414 = vpack.c.b16 %v5875, %v5874
    %v7415 = vpack.c.b16 %v5877, %v5876
    %v7416 = vpack.c.b16 %v5879, %v5878
    %v7417 = vpack.c.b16 %v5881, %v5880
    %v7418 = vpack.c.b16 %v5883, %v5882
    %v7419 = vpack.c.b16 %v5885, %v5884
    %v7420 = vpack.c.b16 %v5887, %v5886
    %v7421 = vpack.c.b16 %v5889, %v5888
    %v7422 = vpack.c.b16 %v5891, %v5890
    %v7423 = vpack.c.b16 %v5893, %v5892
    %v7424 = vpack.c.b16 %v5895, %v5894
    %v7425 = vpack.c.b16 %v5897, %v5896
    %v7426 = vpack.c.b16 %v5899, %v5898
    %v7427 = vpack.c.b16 %v5901, %v5900
    %v7428 = vpack.c.b16 %v5903, %v5902
    %v7429 = vpack.c.b16 %v5905, %v5904
    %v7430 = vpack.c.b16 %v5907, %v5906
    %v7431 = vpack.c.b16 %v5909, %v5908
    %v7432 = vpack.c.b16 %v5911, %v5910
    %v7433 = vpack.c.b16 %v5913, %v5912
    %v7434 = vpack.c.b16 %v5915, %v5914
    %v7435 = vpack.c.b16 %v5917, %v5916
    %v7436 = vpack.c.b16 %v5919, %v5918
    %v7437 = vpack.c.b16 %v5921, %v5920
    %v7438 = vpack.c.b16 %v5923, %v5922
    %v7439 = vpack.c.b16 %v5925, %v5924
    %v7440 = vpack.c.b16 %v5927, %v5926
    %v7441 = vpack.c.b16 %v5929, %v5928
    %v7442 = vpack.c.b16 %v5931, %v5930
    %v7443 = vpack.c.b16 %v5933, %v5932
    %v7444 = vpack.c.b16 %v5935, %v5934
    %v7445 = vpack.c.b16 %v5937, %v5936
    %v7446 = vpack.c.b16 %v5939, %v5938
    %v7447 = vpack.c.b16 %v5941, %v5940
    %v7448 = vpack.c.b16 %v5943, %v5942
    %v7449 = vpack.c.b16 %v5945, %v5944
    %v7450 = vpack.c.b16 %v5947, %v5946
    %v7451 = vpack.c.b16 %v5949, %v5948
    %v7452 = vpack.c.b16 %v5951, %v5950
    %v7453 = vpack.c.b16 %v5953, %v5952
    %v7454 = vpack.c.b16 %v5955, %v5954
    %v7455 = vpack.c.b16 %v5957, %v5956
    %v7456 = vpack.c.b16 %v5959, %v5958
    %v7457 = vpack.c.b16 %v5961, %v5960
    %v7458 = vpack.c.b16 %v5963, %v5962
    %v7459 = vpack.c.b16 %v5965, %v5964
    %v7460 = vpack.c.b16 %v5967, %v5966
    %v7461 = vpack.c.b16 %v5969, %v5968
    %v7462 = vpack.c.b16 %v5971, %v5970
    %v7463 = vpack.c.b16 %v5973, %v5972
    %v7464 = vpack.c.b16 %v5975, %v5974
    %v7465 = vpack.c.b16 %v5977, %v5976
    %v7466 = vpack.c.b16 %v5979, %v5978
    %v7467 = vpack.c.b16 %v5981, %v5980
    %v7468 = vpack.c.b16 %v5983, %v5982
    %v7469 = vpack.c.b16 %v5985, %v5984
    %v7470 = vpack.c.b16 %v5987, %v5986
    %v7471 = vpack.c.b16 %v5989, %v5988
    %v7472 = vpack.c.b16 %v5991, %v5990
    %v7473 = vpack.c.b16 %v5993, %v5992
    %v7474 = vpack.c.b16 %v5995, %v5994
    %v7475 = vpack.c.b16 %v5997, %v5996
    %v7476 = vpack.c.b16 %v5999, %v5998
    %v7477 = vpack.c.b16 %v6001, %v6000
    %v7478 = vpack.c.b16 %v6003, %v6002
    %v7479 = vpack.c.b16 %v6005, %v6004
    %v7480 = vpack.c.b16 %v6007, %v6006
    %v7481 = vpack.c.b16 %v6009, %v6008
    %v7482 = vpack.c.b16 %v6011, %v6010
    %v7483 = vpack.c.b16 %v6013, %v6012
    %v7484 = vpack.c.b16 %v6015, %v6014
    %v7485 = vpack.c.b16 %v6017, %v6016
    %v7486 = vpack.c.b16 %v6019, %v6018
    %v7487 = vpack.c.b16 %v6021, %v6020
    %v7488 = vpack.c.b16 %v6023, %v6022
    %v7489 = vpack.c.b16 %v6025, %v6024
    %v7490 = vpack.c.b16 %v6027, %v6026
    %v7491 = vpack.c.b16 %v6029, %v6028
    %v7492 = vpack.c.b16 %v6031, %v6030
    %v7493 = vpack.c.b16 %v6033, %v6032
    %v7494 = vpack.c.b16 %v6035, %v6034
    %v7495 = vpack.c.b16 %v6037, %v6036
    %v7496 = vpack.c.b16 %v6039, %v6038
    %v7497 = vpack.c.b16 %v6041, %v6040
    %v7498 = vpack.c.b16 %v6043, %v6042
    %v7499 = vpack.c.b16 %v6045, %v6044
    %v7500 = vpack.c.b16 %v6047, %v6046
    %v7501 = vpack.c.b16 %v6049, %v6048
    %v7502 = vpack.c.b16 %v6051, %v6050
    %v7503 = vpack.c.b16 %v6053, %v6052
    %v7504 = vpack.c.b16 %v6055, %v6054
    %v7505 = vpack.c.b16 %v6057, %v6056
    %v7506 = vpack.c.b16 %v6059, %v6058
    %v7507 = vpack.c.b16 %v6061, %v6060
    %v7508 = vpack.c.b16 %v6063, %v6062
    %v7509 = vpack.c.b16 %v6065, %v6064
    %v7510 = vpack.c.b16 %v6067, %v6066
    %v7511 = vpack.c.b16 %v6069, %v6068
    %v7512 = vpack.c.b16 %v6071, %v6070
    %v7513 = vpack.c.b16 %v6073, %v6072
    %v7514 = vpack.c.b16 %v6075, %v6074
    %v7515 = vpack.c.b16 %v6077, %v6076
    %v7516 = vpack.c.b16 %v6079, %v6078
    %v7517 = vpack.c.b16 %v6081, %v6080
    %v7518 = vpack.c.b16 %v6083, %v6082
    %v7519 = vpack.c.b16 %v6085, %v6084
    %v7520 = vpack.c.b16 %v6087, %v6086
    %v7521 = vpack.c.b16 %v6089, %v6088
    %v7522 = vpack.c.b16 %v6091, %v6090
    %v7523 = vpack.c.b16 %v6093, %v6092
    %v7524 = vpack.c.b16 %v6095, %v6094
    %v7525 = vpack.c.b16 %v6097, %v6096
    %v7526 = vpack.c.b16 %v6099, %v6098
    %v7527 = vpack.c.b16 %v6101, %v6100
    %v7528 = vpack.c.b16 %v6103, %v6102
    %v7529 = vpack.c.b16 %v6105, %v6104
    %v7530 = vpack.c.b16 %v6107, %v6106
    %v7531 = vpack.c.b16 %v6109, %v6108
    %v7532 = vpack.c.b16 %v6111, %v6110
    %v7533 = vpack.c.b16 %v6113, %v6112
    %v7534 = vpack.c.b16 %v6115, %v6114
    %v7535 = vpack.c.b16 %v6117, %v6116
    %v7536 = vpack.c.b16 %v6119, %v6118
    %v7537 = vpack.c.b16 %v6121, %v6120
    %v7538 = vpack.c.b16 %v6123, %v6122
    %v7539 = vpack.c.b16 %v6125, %v6124
    %v7540 = vpack.c.b16 %v6127, %v6126
    %v7541 = vpack.c.b16 %v6129, %v6128
    %v7542 = vpack.c.b16 %v6131, %v6130
    %v7543 = vpack.c.b16 %v6133, %v6132
    %v7544 = vpack.c.b16 %v6135, %v6134
    %v7545 = vpack.c.b16 %v6137, %v6136
    %v7546 = vpack.c.b16 %v6139, %v6138
    %v7547 = vpack.c.b16 %v6141, %v6140
    %v7548 = vpack.c.b16 %v6143, %v6142
    %v7549 = vpack.c.b16 %v6145, %v6144
    %v7550 = vpack.c.b16 %v6147, %v6146
    %v7551 = vpack.c.b16 %v6149, %v6148
    %v7552 = vpack.c.b16 %v6151, %v6150
    %v7553 = vpack.c.b16 %v6153, %v6152
    %v7554 = vpack.c.b16 %v6155, %v6154
    %v7555 = vpack.c.b16 %v6157, %v6156
    %v7556 = vpack.c.b16 %v6159, %v6158
    %v7557 = vpack.c.b16 %v6161, %v6160
    %v7558 = vpack.c.b16 %v6163, %v6162
    %v7559 = vpack.c.b16 %v6165, %v6164
    %v7560 = vpack.c.b16 %v6167, %v6166
    %v7561 = vpack.c.b16 %v6169, %v6168
    %v7562 = vpack.c.b16 %v6171, %v6170
    %v7563 = vpack.c.b16 %v6173, %v6172
    %v7564 = vpack.c.b16 %v6175, %v6174
    %v7565 = vpack.c.b16 %v6177, %v6176
    %v7566 = vpack.c.b16 %v6179, %v6178
    %v7567 = vpack.c.b16 %v6181, %v6180
    %v7568 = vpack.c.b16 %v6183, %v6182
    %v7569 = vpack.c.b16 %v6185, %v6184
    %v7570 = vpack.c.b16 %v6187, %v6186
    %v7571 = vpack.c.b16 %v6189, %v6188
    %v7572 = vpack.c.b16 %v6191, %v6190
    %v7573 = vpack.c.b16 %v6193, %v6192
    %v7574 = vpack.c.b16 %v6195, %v6194
    %v7575 = vpack.c.b16 %v6197, %v6196
    %v7576 = vpack.c.b16 %v6199, %v6198
    %v7577 = vpack.c.b16 %v6201, %v6200
    %v7578 = vpack.c.b16 %v6203, %v6202
    %v7579 = vpack.c.b16 %v6205, %v6204
    %v7580 = vpack.c.b16 %v6207, %v6206
    %v7581 = vpack.c.b16 %v6209, %v6208
    %v7582 = vpack.c.b16 %v6211, %v6210
    %v7583 = vpack.c.b16 %v6213, %v6212
    %v7584 = vpack.c.b16 %v6215, %v6214
    %v7585 = vpack.c.b16 %v6217, %v6216
    %v7586 = vpack.c.b16 %v6219, %v6218
    %v7587 = vpack.c.b16 %v6221, %v6220
    %v7588 = vpack.c.b16 %v6223, %v6222
    %v7589 = vpack.c.b16 %v6225, %v6224
    %v7590 = vpack.c.b16 %v6227, %v6226
    %v7591 = vpack.c.b16 %v6229, %v6228
    %v7592 = vpack.c.b16 %v6231, %v6230
    %v7593 = vpack.c.b16 %v6233, %v6232
    %v7594 = vpack.c.b16 %v6235, %v6234
    %v7595 = vpack.c.b16 %v6237, %v6236
    %v7596 = vpack.c.b16 %v6239, %v6238
    %v7597 = vpack.c.b16 %v6241, %v6240
    %v7598 = vpack.c.b16 %v6243, %v6242
    %v7599 = vpack.c.b16 %v6245, %v6244
    %v7600 = vpack.c.b16 %v6247, %v6246
    %v7601 = vpack.c.b16 %v6249, %v6248
    %v7602 = vpack.c.b16 %v6251, %v6250
    %v7603 = vpack.c.b16 %v6253, %v6252
    %v7604 = vpack.c.b16 %v6255, %v6254
    %v7605 = vpack.c.b16 %v6257, %v6256
    %v7606 = vpack.c.b16 %v6259, %v6258
    %v7607 = vpack.c.b16 %v6261, %v6260
    %v7608 = vpack.c.b16 %v6263, %v6262
    %v7609 = vpack.c.b16 %v6265, %v6264
    %v7610 = vpack.c.b16 %v6267, %v6266
    %v7611 = vpack.c.b16 %v6269, %v6268
    %v7612 = vpack.c.b16 %v6271, %v6270
    %v7613 = vpack.c.b16 %v6273, %v6272
    %v7614 = vpack.c.b16 %v6275, %v6274
    %v7615 = vpack.c.b16 %v6277, %v6276
    %v7616 = vpack.c.b16 %v6279, %v6278
    %v7617 = vpack.c.b16 %v6281, %v6280
    %v7618 = vpack.c.b16 %v6283, %v6282
    %v7619 = vpack.c.b16 %v6285, %v6284
    %v7620 = vpack.c.b16 %v6287, %v6286
    %v7621 = vpack.c.b16 %v6289, %v6288
    %v7622 = vpack.c.b16 %v6291, %v6290
    %v7623 = vpack.c.b16 %v6293, %v6292
    %v7624 = vpack.c.b16 %v6295, %v6294
    %v7625 = vpack.c.b16 %v6297, %v6296
    %v7626 = vpack.c.b16 %v6299, %v6298
    %v7627 = vpack.c.b16 %v6301, %v6300
    %v7628 = vpack.c.b16 %v6303, %v6302
    %v7629 = vpack.c.b16 %v6305, %v6304
    %v7630 = vpack.c.b16 %v6307, %v6306
    %v7631 = vpack.c.b16 %v6309, %v6308
    %v7632 = vpack.c.b16 %v6311, %v6310
    %v7633 = vpack.c.b16 %v6313, %v6312
    %v7634 = vpack.c.b16 %v6315, %v6314
    %v7635 = vpack.c.b16 %v6317, %v6316
    %v7636 = vpack.c.b16 %v6319, %v6318
    %v7637 = vpack.c.b16 %v6321, %v6320
    %v7638 = vpack.c.b16 %v6323, %v6322
    %v7639 = vpack.c.b16 %v6325, %v6324
    %v7640 = vpack.c.b16 %v6327, %v6326
    %v7641 = vpack.c.b16 %v6329, %v6328
    %v7642 = vpack.c.b16 %v6331, %v6330
    %v7643 = vpack.c.b16 %v6333, %v6332
    %v7644 = vpack.c.b16 %v6335, %v6334
    %v7645 = vpack.c.b16 %v6337, %v6336
    %v7646 = vpack.c.b16 %v6339, %v6338
    %v7647 = vpack.c.b16 %v6341, %v6340
    %v7648 = vpack.c.b16 %v6343, %v6342
    %v7649 = vpack.c.b16 %v6345, %v6344
    %v7650 = vpack.c.b16 %v6347, %v6346
    %v7651 = vpack.c.b16 %v6349, %v6348
    %v7652 = vpack.c.b16 %v6351, %v6350
    %v7653 = vpack.c.b16 %v6353, %v6352
    %v7654 = vpack.c.b16 %v6355, %v6354
    %v7655 = vpack.c.b16 %v6357, %v6356
    %v7656 = vpack.c.b16 %v6359, %v6358
    %v7657 = vpack.c.b16 %v6361, %v6360
    %v7658 = vpack.c.b16 %v6363, %v6362
    %v7659 = vpack.c.b16 %v6365, %v6364
    %v7660 = vpack.c.b16 %v6367, %v6366
    %v7661 = vpack.c.b16 %v6369, %v6368
    %v7662 = vpack.c.b16 %v6371, %v6370
    %v7663 = vpack.c.b16 %v6373, %v6372
    %v7664 = vpack.c.b16 %v6375, %v6374
    %v7665 = vpack.c.b16 %v6377, %v6376
    %v7666 = vpack.c.b16 %v6379, %v6378
    %v7667 = vpack.c.b16 %v6381, %v6380
    %v7668 = vpack.c.b16 %v6383, %v6382
    %v7669 = vpack.c.b16 %v6385, %v6384
    %v7670 = vpack.c.b16 %v6387, %v6386
    %v7671 = vpack.c.b16 %v6389, %v6388
    %v7672 = vpack.c.b16 %v6391, %v6390
    %v7673 = vpack.c.b16 %v6393, %v6392
    %v7674 = vpack.c.b16 %v6395, %v6394
    %v7675 = vpack.c.b16 %v6397, %v6396
    %v7676 = vpack.c.b16 %v6399, %v6398
    %v7677 = vpack.c.b16 %v6401, %v6400
    %v7678 = vpack.c.b16 %v6403, %v6402
    %v7679 = vpack.c.b16 %v6405, %v6404
    %v7680 = vpack.c.b16 %v6407, %v6406
    %v7681 = vpack.c.b16 %v6409, %v6408
    %v7682 = vpack.c.b16 %v6411, %v6410
    %v7683 = vpack.c.b16 %v6413, %v6412
    %v7684 = vpack.c.b16 %v6415, %v6414
    %v7685 = vpack.c.b16 %v6417, %v6416
    %v7686 = vpack.c.b16 %v6419, %v6418
    %v7687 = vpack.c.b16 %v6421, %v6420
    %v7688 = vpack.c.b16 %v6423, %v6422
    %v7689 = vpack.c.b16 %v6425, %v6424
    %v7690 = vpack.c.b16 %v6427, %v6426
    %v7691 = vpack.c.b16 %v6429, %v6428
    %v7692 = vpack.c.b16 %v6431, %v6430
    %v7693 = vpack.c.b16 %v6433, %v6432
    %v7694 = vpack.c.b16 %v6435, %v6434
    %v7695 = vpack.c.b16 %v6437, %v6436
    %v7696 = vpack.c.b16 %v6439, %v6438
    %v7697 = vpack.c.b16 %v6441, %v6440
    %v7698 = vpack.c.b16 %v6443, %v6442
    %v7699 = vpack.c.b16 %v6445, %v6444
    %v7700 = vpack.c.b16 %v6447, %v6446
    %v7701 = vpack.c.b16 %v6449, %v6448
    %v7702 = vpack.c.b16 %v6451, %v6450
    %v7703 = vpack.c.b16 %v6453, %v6452
    %v7704 = vpack.c.b16 %v6455, %v6454
    %v7705 = vpack.c.b16 %v6457, %v6456
    %v7706 = vpack.c.b16 %v6459, %v6458
    %v7707 = vpack.c.b16 %v6461, %v6460
    %v7708 = vpack.c.b16 %v6463, %v6462
    %v7709 = vpack.c.b16 %v6465, %v6464
    %v7710 = vpack.c.b16 %v6467, %v6466
    %v7711 = vpack.c.b16 %v6469, %v6468
    %v7712 = vpack.c.b16 %v6471, %v6470
    %v7713 = vpack.c.b16 %v6473, %v6472
    %v7714 = vpack.c.b16 %v6475, %v6474
    %v7715 = vpack.c.b16 %v6477, %v6476
    %v7716 = vpack.c.b16 %v6479, %v6478
    %v7717 = vpack.c.b16 %v6481, %v6480
    %v7718 = vpack.c.b16 %v6483, %v6482
    %v7719 = vpack.c.b16 %v6485, %v6484
    %v7720 = vpack.c.b16 %v6487, %v6486
    %v7721 = vpack.c.b16 %v6489, %v6488
    %v7722 = vpack.c.b16 %v6491, %v6490
    %v7723 = vpack.c.b16 %v6493, %v6492
    %v7724 = vpack.c.b16 %v6495, %v6494
    %v7725 = vpack.c.b16 %v6497, %v6496
    %v7726 = vpack.c.b16 %v6499, %v6498
    %v7727 = vpack.c.b16 %v6501, %v6500
    %v7728 = vpack.c.b16 %v6503, %v6502
    %v7729 = vpack.c.b16 %v6505, %v6504
    %v7730 = vpack.c.b16 %v6507, %v6506
    %v7731 = vpack.c.b16 %v6509, %v6508
    %v7732 = vpack.c.b16 %v6511, %v6510
    %v7733 = vpack.c.b16 %v6513, %v6512
    %v7734 = vpack.c.b16 %v6515, %v6514
    %v7735 = vpack.c.b16 %v6517, %v6516
    %v7736 = vpack.c.b16 %v6519, %v6518
    %v7737 = vpack.c.b16 %v6521, %v6520
    %v7738 = vpack.c.b16 %v6523, %v6522
    %v7739 = vpack.c.b16 %v6525, %v6524
    %v7740 = vpack.c.b16 %v6527, %v6526
    %v7741 = vpack.c.b16 %v6529, %v6528
    %v7742 = vpack.c.b16 %v6531, %v6530
    %v7743 = vpack.c.b16 %v6533, %v6532
    %v7744 = vpack.c.b16 %v6535, %v6534
    %v7745 = vpack.c.b16 %v6537, %v6536
    %v7746 = vpack.c.b16 %v6539, %v6538
    %v7747 = vpack.c.b16 %v6541, %v6540
    %v7748 = vpack.c.b16 %v6543, %v6542
    %v7749 = vpack.c.b16 %v6545, %v6544
    %v7750 = vpack.c.b16 %v6547, %v6546
    %v7751 = vpack.c.b16 %v6549, %v6548
    %v7752 = vpack.c.b16 %v6551, %v6550
    %v7753 = vpack.c.b16 %v6553, %v6552
    %v7754 = vpack.c.b16 %v6555, %v6554
    %v7755 = vpack.c.b16 %v6557, %v6556
    %v7756 = vpack.c.b16 %v6559, %v6558
    %v7757 = vpack.c.b16 %v6561, %v6560
    %v7758 = vpack.c.b16 %v6563, %v6562
    %v7759 = vpack.c.b16 %v6565, %v6564
    %v7760 = vpack.c.b16 %v6567, %v6566
    %v7761 = vpack.c.b16 %v6569, %v6568
    %v7762 = vpack.c.b16 %v6571, %v6570
    %v7763 = vpack.c.b16 %v6573, %v6572
    %v7764 = vpack.c.b16 %v6575, %v6574
    %v7765 = vpack.c.b16 %v6577, %v6576
    %v7766 = vpack.c.b16 %v6579, %v6578
    %v7767 = vpack.c.b16 %v6581, %v6580
    %v7768 = vpack.c.b16 %v6583, %v6582
    %v7769 = vpack.c.b16 %v6585, %v6584
    %v7770 = vpack.c.b16 %v6587, %v6586
    %v7771 = vpack.c.b16 %v6589, %v6588
    %v7772 = vpack.c.b16 %v6591, %v6590
    %v7773 = vpack.c.b16 %v6593, %v6592
    %v7774 = vpack.c.b16 %v6595, %v6594
    %v7775 = vpack.c.b16 %v6597, %v6596
    %v7776 = vpack.c.b16 %v6599, %v6598
    %v7777 = vpack.c.b16 %v6601, %v6600
    %v7778 = vpack.c.b16 %v6603, %v6602
    %v7779 = vpack.c.b16 %v6605, %v6604
    %v7780 = vpack.c.b16 %v6607, %v6606
    %v7781 = vpack.c.b16 %v6609, %v6608
    %v7782 = vpack.c.b16 %v6611, %v6610
    %v7783 = vpack.c.b16 %v6613, %v6612
    %v7784 = vpack.c.b16 %v6615, %v6614
    %v7785 = vpack.c.b16 %v6617, %v6616
    %v7786 = vpack.c.b16 %v6619, %v6618
    %v7787 = vpack.c.b16 %v6621, %v6620
    %v7788 = vpack.c.b16 %v6623, %v6622
    %v7789 = vpack.c.b16 %v6625, %v6624
    %v7790 = vpack.c.b16 %v6627, %v6626
    %v7791 = vpack.c.b16 %v6629, %v6628
    %v7792 = vpack.c.b16 %v6631, %v6630
    %v7793 = vpack.c.b16 %v6633, %v6632
    %v7794 = vpack.c.b16 %v6635, %v6634
    %v7795 = vpack.c.b16 %v6637, %v6636
    %v7796 = vpack.c.b16 %v6639, %v6638
    %v7797 = vpack.c.b16 %v6641, %v6640
    %v7798 = vpack.c.b16 %v6643, %v6642
    %v7799 = vpack.c.b16 %v6645, %v6644
    %v7800 = vpack.c.b16 %v6647, %v6646
    %v7801 = vpack.c.b16 %v6649, %v6648
    %v7802 = vpack.c.b16 %v6651, %v6650
    %v7803 = vpack.c.b16 %v6653, %v6652
    %v7804 = vpack.c.b16 %v6655, %v6654
    %v7805 = vpack.c.b16 %v6657, %v6656
    %v7806 = vpack.c.b16 %v6659, %v6658
    %v7807 = vpack.c.b16 %v6661, %v6660
    %v7808 = vpack.c.b16 %v6663, %v6662
    %v7809 = vpack.c.b16 %v6665, %v6664
    %v7810 = vpack.c.b16 %v6667, %v6666
    %v7811 = vpack.c.b16 %v6669, %v6668
    %v7812 = vpack.c.b16 %v6671, %v6670
    %v7813 = vpack.c.b16 %v6673, %v6672
    %v7814 = vpack.c.b16 %v6675, %v6674
    %v7815 = vpack.c.b16 %v6677, %v6676
    %v7816 = vpack.c.b16 %v6679, %v6678
    %v7817 = vpack.c.b16 %v6681, %v6680
    %v7818 = vpack.c.b16 %v6683, %v6682
    %v7819 = vpack.c.b16 %v6685, %v6684
    %v7820 = vpack.c.b16 %v6687, %v6686
    %v7821 = vpack.c.b16 %v6689, %v6688
    %v7822 = vpack.c.b16 %v6691, %v6690
    %v7823 = vpack.c.b16 %v6693, %v6692
    %v7824 = vpack.c.b16 %v6695, %v6694
    %v7825 = vpack.c.b16 %v6697, %v6696
    %v7826 = vpack.c.b16 %v6699, %v6698
    %v7827 = vpack.c.b16 %v6701, %v6700
    %v7828 = vpack.c.b16 %v6703, %v6702
    %v7829 = vpack.c.b16 %v6705, %v6704
    %v7830 = vpack.c.b16 %v6707, %v6706
    %v7831 = vpack.c.b16 %v6709, %v6708
    %v7832 = vpack.c.b16 %v6711, %v6710
    %v7833 = vpack.c.b16 %v6713, %v6712
    %v7834 = vpack.c.b16 %v6715, %v6714
    %v7835 = vpack.c.b16 %v6717, %v6716
    %v7836 = vpack.c.b16 %v6719, %v6718
    %v7837 = vpack.c.b16 %v6721, %v6720
    %v7838 = vpack.c.b16 %v6723, %v6722
    %v7839 = vpack.c.b16 %v6725, %v6724
    %v7840 = vpack.c.b16 %v6727, %v6726
    %v7841 = vpack.c.b16 %v6729, %v6728
    %v7842 = vpack.c.b16 %v6731, %v6730
    %v7843 = vpack.c.b16 %v6733, %v6732
    %v7844 = vpack.c.b16 %v6735, %v6734
    %v7845 = vpack.c.b16 %v6737, %v6736
    %v7846 = vpack.c.b16 %v6739, %v6738
    %v7847 = vpack.c.b16 %v6741, %v6740
    %v7848 = vpack.c.b16 %v6743, %v6742
    %v7849 = vpack.c.b16 %v6745, %v6744
    %v7850 = vpack.c.b16 %v6747, %v6746
    %v7851 = vpack.c.b16 %v6749, %v6748
    %v7852 = vpack.c.b16 %v6751, %v6750
    %v7853 = vpack.c.b16 %v6753, %v6752
    %v7854 = vpack.c.b16 %v6755, %v6754
    %v7855 = vpack.c.b16 %v6757, %v6756
    %v7856 = vpack.c.b16 %v6759, %v6758
    %v7857 = vpack.c.b16 %v6761, %v6760
    %v7858 = vpack.c.b16 %v6763, %v6762
    %v7859 = vpack.c.b16 %v6765, %v6764
    %v7860 = vpack.c.b16 %v6767, %v6766
    %v7861 = vpack.c.b16 %v6769, %v6768
    %v7862 = vpack.c.b16 %v6771, %v6770
    %v7863 = vpack.c.b16 %v6773, %v6772
    %v7864 = vpack.c.b16 %v6775, %v6774
    %v7865 = vpack.c.b16 %v6777, %v6776
    %v7866 = vpack.c.b16 %v6779, %v6778
    %v7867 = vpack.c.b16 %v6781, %v6780
    %v7868 = vpack.c.b16 %v6783, %v6782
    %v7869 = vpack.c.b16 %v6785, %v6784
    %v7870 = vpack.c.b16 %v6787, %v6786
    %v7871 = vpack.c.b16 %v6789, %v6788
    %v7872 = vpack.c.b16 %v6791, %v6790
    %v7873 = vpack.c.b16 %v6793, %v6792
    %v7874 = vpack.c.b16 %v6795, %v6794
    %v7875 = vpack.c.b16 %v6797, %v6796
    %v7876 = vpack.c.b16 %v6799, %v6798
    %v7877 = vpack.c.b16 %v6801, %v6800
    %v7878 = vpack.c.b16 %v6803, %v6802
    %v7879 = vpack.c.b16 %v6805, %v6804
    %v7880 = vpack.c.b16 %v6807, %v6806
    %v7881 = vpack.c.b16 %v6809, %v6808
    %v7882 = vpack.c.b16 %v6811, %v6810
    %v7883 = vpack.c.b16 %v6813, %v6812
    %v7884 = vpack.c.b16 %v6815, %v6814
    %v7885 = vpack.c.b16 %v6817, %v6816
    %v7886 = vpack.c.b16 %v6819, %v6818
    %v7887 = vpack.c.b16 %v6821, %v6820
    %v7888 = vpack.c.b16 %v6823, %v6822
    %v7889 = vpack.c.b16 %v6825, %v6824
    %v7890 = vpack.c.b16 %v6827, %v6826
    %v7891 = vpack.c.b16 %v6829, %v6828
    %v7892 = vpack.c.b16 %v6831, %v6830
    %v7893 = vpack.c.b16 %v6833, %v6832
    %v7894 = vpack.c.b16 %v6835, %v6834
    %v7895 = vpack.c.b16 %v6837, %v6836
    %v7896 = vpack.c.b16 %v6839, %v6838
    %v7897 = vpack.c.b16 %v6841, %v6840
    %v7898 = vpack.c.b16 %v6843, %v6842
    %v7899 = vpack.c.b16 %v6845, %v6844
    %v7900 = vpack.c.b16 %v6847, %v6846
    %v7901 = vpack.c.b16 %v6849, %v6848
    %v7902 = vpack.c.b16 %v6851, %v6850
    %v7903 = vpack.c.b16 %v6853, %v6852
    %v7904 = vpack.c.b16 %v6855, %v6854
    %v7905 = vpack.c.b16 %v6857, %v6856
    %v7906 = vpack.c.b16 %v6859, %v6858
    %v7907 = vpack.c.b16 %v6861, %v6860
    %v7908 = vpack.c.b16 %v6863, %v6862
    %v7909 = vpack.c.b16 %v6865, %v6864
    %v7910 = vpack.c.b16 %v6867, %v6866
    %v7911 = vpack.c.b16 %v6869, %v6868
    %v7912 = vpack.c.b16 %v6871, %v6870
    %v7913 = vpack.c.b16 %v6873, %v6872
    %v7914 = vpack.c.b16 %v6875, %v6874
    %v7915 = vpack.c.b16 %v6877, %v6876
    %v7916 = vpack.c.b16 %v6879, %v6878
    %v7917 = vpack.c.b16 %v6881, %v6880
    %v7918 = vpack.c.b16 %v6883, %v6882
    %v7919 = vpack.c.b16 %v6885, %v6884
    %v7920 = vpack.c.b16 %v6887, %v6886
    %v7921 = vpack.c.b16 %v6889, %v6888
    %v7922 = vpack.c.b16 %v6891, %v6890
    %v7923 = vpack.c.b16 %v6893, %v6892
    %v7924 = vpack.c.b16 %v6895, %v6894
    %v7925 = vpack.c.b16 %v6897, %v6896
    %v7926 = vpack.c.b16 %v6899, %v6898
    %v7927 = vpack.c.b16 %v6901, %v6900
    %v7928 = vpack.c.b16 %v6903, %v6902
    %v7929 = vpack.c.b16 %v6905, %v6904
    %8954 = vmatprep.subr.bf16.mxu0 0
    %8955 = vmatpush1.bf16.msra.mxu0 %v6906
    %8956 = vmatprep.subr.bf16.mxu0 0
    %8957 = vmatpush1.bf16.msra.mxu0 %v6907
    %8958 = vmatprep.subr.bf16.mxu0 0
    %8959 = vmatpush1.bf16.msra.mxu0 %v6908
    %8960 = vmatprep.subr.bf16.mxu0 0
    %8961 = vmatpush1.bf16.msra.mxu0 %v6909
    %8962 = vmatprep.subr.bf16.mxu0 0
    %8963 = vmatpush1.bf16.msra.mxu0 %v6910
    %8964 = vmatprep.subr.bf16.mxu0 0
    %8965 = vmatpush1.bf16.msra.mxu0 %v6911
    %8966 = vmatprep.subr.bf16.mxu0 0
    %8967 = vmatpush1.bf16.msra.mxu0 %v6912
    %8968 = vmatprep.subr.bf16.mxu0 0
    %8969 = vmatpush1.bf16.msra.mxu0 %v6913
    %8970 = vmatprep.subr.bf16.mxu0 0
    %8971 = vmatpush1.bf16.msra.mxu0 %v6914
    %8972 = vmatprep.subr.bf16.mxu0 0
    %8973 = vmatpush1.bf16.msra.mxu0 %v6915
    %8974 = vmatprep.subr.bf16.mxu0 0
    %8975 = vmatpush1.bf16.msra.mxu0 %v6916
    %8976 = vmatprep.subr.bf16.mxu0 0
    %8977 = vmatpush1.bf16.msra.mxu0 %v6917
    %8978 = vmatprep.subr.bf16.mxu0 0
    %8979 = vmatpush1.bf16.msra.mxu0 %v6918
    %8980 = vmatprep.subr.bf16.mxu0 0
    %8981 = vmatpush1.bf16.msra.mxu0 %v6919
    %8982 = vmatprep.subr.bf16.mxu0 0
    %8983 = vmatpush1.bf16.msra.mxu0 %v6920
    %8984 = vmatprep.subr.bf16.mxu0 0
    %8985 = vmatpush1.bf16.msra.mxu0 %v6921
    %8986 = vmatprep.mubr.bf16.mxu0 %v2153
    %8987 = vmatmul.mubr.bf16.gmra.mrb[0].mxu0 %v2145
    %v8988 = vpop.f32.mrb[0].mxu0
    %v8989 = vadd.f32 0.0, %v8988
    %v8990 = vpop.f32.mrb[0].mxu0
    %v8991 = vpop.f32.mrb[0].mxu0
    %v8992 = vpop.f32.mrb[0].mxu0
    %8993 = vdwg.mxu0
    %8994 = vmatprep.subr.bf16.mxu0 0
    %8995 = vmatpush1.bf16.msra.mxu0 %v6922
    %8996 = vmatprep.subr.bf16.mxu0 0
    %8997 = vmatpush1.bf16.msra.mxu0 %v6923
    %8998 = vmatprep.subr.bf16.mxu0 0
    %8999 = vmatpush1.bf16.msra.mxu0 %v6924
    %9000 = vmatprep.subr.bf16.mxu0 0
    %9001 = vmatpush1.bf16.msra.mxu0 %v6925
    %9002 = vmatprep.subr.bf16.mxu0 0
    %9003 = vmatpush1.bf16.msra.mxu0 %v6926
    %9004 = vmatprep.subr.bf16.mxu0 0
    %9005 = vmatpush1.bf16.msra.mxu0 %v6927
    %9006 = vmatprep.subr.bf16.mxu0 0
    %9007 = vmatpush1.bf16.msra.mxu0 %v6928
    %9008 = vmatprep.subr.bf16.mxu0 0
    %9009 = vmatpush1.bf16.msra.mxu0 %v6929
    %9010 = vmatprep.subr.bf16.mxu0 0
    %9011 = vmatpush1.bf16.msra.mxu0 %v6930
    %9012 = vmatprep.subr.bf16.mxu0 0
    %9013 = vmatpush1.bf16.msra.mxu0 %v6931
    %9014 = vmatprep.subr.bf16.mxu0 0
    %9015 = vmatpush1.bf16.msra.mxu0 %v6932
    %9016 = vmatprep.subr.bf16.mxu0 0
    %9017 = vmatpush1.bf16.msra.mxu0 %v6933
    %9018 = vmatprep.subr.bf16.mxu0 0
    %9019 = vmatpush1.bf16.msra.mxu0 %v6934
    %9020 = vmatprep.subr.bf16.mxu0 0
    %9021 = vmatpush1.bf16.msra.mxu0 %v6935
    %9022 = vmatprep.subr.bf16.mxu0 0
    %9023 = vmatpush1.bf16.msra.mxu0 %v6936
    %9024 = vmatprep.subr.bf16.mxu0 0
    %9025 = vmatpush1.bf16.msra.mxu0 %v6937
    %9026 = vmatprep.mubr.bf16.mxu0 %v2154
    %9027 = vmatmul.mubr.bf16.gmra.mrb[0].mxu0 %v2152
    %v9028 = vpop.f32.mrb[0].mxu0
    %v9029 = vadd.f32 %v8989, %v9028
    %v9030 = vpop.f32.mrb[0].mxu0
    %v9031 = vpop.f32.mrb[0].mxu0
    %v9032 = vpop.f32.mrb[0].mxu0
    %9033 = vdwg.mxu0
    %9034 = vmatprep.subr.bf16.mxu0 0
    %9035 = vmatpush1.bf16.msra.mxu0 %v6938
    %9036 = vmatprep.subr.bf16.mxu0 0
    %9037 = vmatpush1.bf16.msra.mxu0 %v6939
    %9038 = vmatprep.subr.bf16.mxu0 0
    %9039 = vmatpush1.bf16.msra.mxu0 %v6940
    %9040 = vmatprep.subr.bf16.mxu0 0
    %9041 = vmatpush1.bf16.msra.mxu0 %v6941
    %9042 = vmatprep.subr.bf16.mxu0 0
    %9043 = vmatpush1.bf16.msra.mxu0 %v6942
    %9044 = vmatprep.subr.bf16.mxu0 0
    %9045 = vmatpush1.bf16.msra.mxu0 %v6943
    %9046 = vmatprep.subr.bf16.mxu0 0
    %9047 = vmatpush1.bf16.msra.mxu0 %v6944
    %9048 = vmatprep.subr.bf16.mxu0 0
    %9049 = vmatpush1.bf16.msra.mxu0 %v6945
    %9050 = vmatprep.subr.bf16.mxu0 0
    %9051 = vmatpush1.bf16.msra.mxu0 %v6946
    %9052 = vmatprep.subr.bf16.mxu0 0
    %9053 = vmatpush1.bf16.msra.mxu0 %v6947
    %9054 = vmatprep.subr.bf16.mxu0 0
    %9055 = vmatpush1.bf16.msra.mxu0 %v6948
    %9056 = vmatprep.subr.bf16.mxu0 0
    %9057 = vmatpush1.bf16.msra.mxu0 %v6949
    %9058 = vmatprep.subr.bf16.mxu0 0
    %9059 = vmatpush1.bf16.msra.mxu0 %v6950
    %9060 = vmatprep.subr.bf16.mxu0 0
    %9061 = vmatpush1.bf16.msra.mxu0 %v6951
    %9062 = vmatprep.subr.bf16.mxu0 0
    %9063 = vmatpush1.bf16.msra.mxu0 %v6952
    %9064 = vmatprep.subr.bf16.mxu0 0
    %9065 = vmatpush1.bf16.msra.mxu0 %v6953
    %9066 = vmatprep.mubr.bf16.mxu0 %v2170
    %9067 = vmatmul.mubr.bf16.gmra.mrb[0].mxu0 %v2162
    %v9068 = vpop.f32.mrb[0].mxu0
    %v9069 = vadd.f32 %v9029, %v9068
    %v9070 = vpop.f32.mrb[0].mxu0
    %v9071 = vpop.f32.mrb[0].mxu0
    %v9072 = vpop.f32.mrb[0].mxu0
    %9073 = vdwg.mxu0
    %9074 = vmatprep.subr.bf16.mxu0 0
    %9075 = vmatpush1.bf16.msra.mxu0 %v6954
    %9076 = vmatprep.subr.bf16.mxu0 0
    %9077 = vmatpush1.bf16.msra.mxu0 %v6955
    %9078 = vmatprep.subr.bf16.mxu0 0
    %9079 = vmatpush1.bf16.msra.mxu0 %v6956
    %9080 = vmatprep.subr.bf16.mxu0 0
    %9081 = vmatpush1.bf16.msra.mxu0 %v6957
    %9082 = vmatprep.subr.bf16.mxu0 0
    %9083 = vmatpush1.bf16.msra.mxu0 %v6958
    %9084 = vmatprep.subr.bf16.mxu0 0
    %9085 = vmatpush1.bf16.msra.mxu0 %v6959
    %9086 = vmatprep.subr.bf16.mxu0 0
    %9087 = vmatpush1.bf16.msra.mxu0 %v6960
    %9088 = vmatprep.subr.bf16.mxu0 0
    %9089 = vmatpush1.bf16.msra.mxu0 %v6961
    %9090 = vmatprep.subr.bf16.mxu0 0
    %9091 = vmatpush1.bf16.msra.mxu0 %v6962
    %9092 = vmatprep.subr.bf16.mxu0 0
    %9093 = vmatpush1.bf16.msra.mxu0 %v6963
    %9094 = vmatprep.subr.bf16.mxu0 0
    %9095 = vmatpush1.bf16.msra.mxu0 %v6964
    %9096 = vmatprep.subr.bf16.mxu0 0
    %9097 = vmatpush1.bf16.msra.mxu0 %v6965
    %9098 = vmatprep.subr.bf16.mxu0 0
    %9099 = vmatpush1.bf16.msra.mxu0 %v6966
    %9100 = vmatprep.subr.bf16.mxu0 0
    %9101 = vmatpush1.bf16.msra.mxu0 %v6967
    %9102 = vmatprep.subr.bf16.mxu0 0
    %9103 = vmatpush1.bf16.msra.mxu0 %v6968
    %9104 = vmatprep.subr.bf16.mxu0 0
    %9105 = vmatpush1.bf16.msra.mxu0 %v6969
    %9106 = vmatprep.mubr.bf16.mxu0 %v2171
    %9107 = vmatmul.mubr.bf16.gmra.mrb[0].mxu0 %v2169
    %v9108 = vpop.f32.mrb[0].mxu0
    %v9109 = vadd.f32 %v9069, %v9108
    %v9110 = vpop.f32.mrb[0].mxu0
    %v9111 = vpop.f32.mrb[0].mxu0
    %v9112 = vpop.f32.mrb[0].mxu0
    %9113 = vdwg.mxu0
    %9114 = vmatprep.subr.bf16.mxu0 0
    %9115 = vmatpush1.bf16.msra.mxu0 %v6970
    %9116 = vmatprep.subr.bf16.mxu0 0
    %9117 = vmatpush1.bf16.msra.mxu0 %v6971
    %9118 = vmatprep.subr.bf16.mxu0 0
    %9119 = vmatpush1.bf16.msra.mxu0 %v6972
    %9120 = vmatprep.subr.bf16.mxu0 0
    %9121 = vmatpush1.bf16.msra.mxu0 %v6973
    %9122 = vmatprep.subr.bf16.mxu0 0
    %9123 = vmatpush1.bf16.msra.mxu0 %v6974
    %9124 = vmatprep.subr.bf16.mxu0 0
    %9125 = vmatpush1.bf16.msra.mxu0 %v6975
    %9126 = vmatprep.subr.bf16.mxu0 0
    %9127 = vmatpush1.bf16.msra.mxu0 %v6976
    %9128 = vmatprep.subr.bf16.mxu0 0
    %9129 = vmatpush1.bf16.msra.mxu0 %v6977
    %9130 = vmatprep.subr.bf16.mxu0 0
    %9131 = vmatpush1.bf16.msra.mxu0 %v6978
    %9132 = vmatprep.subr.bf16.mxu0 0
    %9133 = vmatpush1.bf16.msra.mxu0 %v6979
    %9134 = vmatprep.subr.bf16.mxu0 0
    %9135 = vmatpush1.bf16.msra.mxu0 %v6980
    %9136 = vmatprep.subr.bf16.mxu0 0
    %9137 = vmatpush1.bf16.msra.mxu0 %v6981
    %9138 = vmatprep.subr.bf16.mxu0 0
    %9139 = vmatpush1.bf16.msra.mxu0 %v6982
    %9140 = vmatprep.subr.bf16.mxu0 0
    %9141 = vmatpush1.bf16.msra.mxu0 %v6983
    %9142 = vmatprep.subr.bf16.mxu0 0
    %9143 = vmatpush1.bf16.msra.mxu0 %v6984
    %9144 = vmatprep.subr.bf16.mxu0 0
    %9145 = vmatpush1.bf16.msra.mxu0 %v6985
    %9146 = vmatprep.mubr.bf16.mxu0 %v2187
    %9147 = vmatmul.mubr.bf16.gmra.mrb[0].mxu0 %v2179
    %v9148 = vpop.f32.mrb[0].mxu0
    %v9149 = vadd.f32 %v9109, %v9148
    %v9150 = vpop.f32.mrb[0].mxu0
    %v9151 = vpop.f32.mrb[0].mxu0
    %v9152 = vpop.f32.mrb[0].mxu0
    %9153 = vdwg.mxu0
    %9154 = vmatprep.subr.bf16.mxu0 0
    %9155 = vmatpush1.bf16.msra.mxu0 %v6986
    %9156 = vmatprep.subr.bf16.mxu0 0
    %9157 = vmatpush1.bf16.msra.mxu0 %v6987
    %9158 = vmatprep.subr.bf16.mxu0 0
    %9159 = vmatpush1.bf16.msra.mxu0 %v6988
    %9160 = vmatprep.subr.bf16.mxu0 0
    %9161 = vmatpush1.bf16.msra.mxu0 %v6989
    %9162 = vmatprep.subr.bf16.mxu0 0
    %9163 = vmatpush1.bf16.msra.mxu0 %v6990
    %9164 = vmatprep.subr.bf16.mxu0 0
    %9165 = vmatpush1.bf16.msra.mxu0 %v6991
    %9166 = vmatprep.subr.bf16.mxu0 0
    %9167 = vmatpush1.bf16.msra.mxu0 %v6992
    %9168 = vmatprep.subr.bf16.mxu0 0
    %9169 = vmatpush1.bf16.msra.mxu0 %v6993
    %9170 = vmatprep.subr.bf16.mxu0 0
    %9171 = vmatpush1.bf16.msra.mxu0 %v6994
    %9172 = vmatprep.subr.bf16.mxu0 0
    %9173 = vmatpush1.bf16.msra.mxu0 %v6995
    %9174 = vmatprep.subr.bf16.mxu0 0
    %9175 = vmatpush1.bf16.msra.mxu0 %v6996
    %9176 = vmatprep.subr.bf16.mxu0 0
    %9177 = vmatpush1.bf16.msra.mxu0 %v6997
    %9178 = vmatprep.subr.bf16.mxu0 0
    %9179 = vmatpush1.bf16.msra.mxu0 %v6998
    %9180 = vmatprep.subr.bf16.mxu0 0
    %9181 = vmatpush1.bf16.msra.mxu0 %v6999
    %9182 = vmatprep.subr.bf16.mxu0 0
    %9183 = vmatpush1.bf16.msra.mxu0 %v7000
    %9184 = vmatprep.subr.bf16.mxu0 0
    %9185 = vmatpush1.bf16.msra.mxu0 %v7001
    %9186 = vmatprep.mubr.bf16.mxu0 %v2188
    %9187 = vmatmul.mubr.bf16.gmra.mrb[0].mxu0 %v2186
    %v9188 = vpop.f32.mrb[0].mxu0
    %v9189 = vadd.f32 %v9149, %v9188
    %v9190 = vpop.f32.mrb[0].mxu0
    %v9191 = vpop.f32.mrb[0].mxu0
    %v9192 = vpop.f32.mrb[0].mxu0
    %9193 = vdwg.mxu0
    %9194 = vmatprep.subr.bf16.mxu0 0
    %9195 = vmatpush1.bf16.msra.mxu0 %v7002
    %9196 = vmatprep.subr.bf16.mxu0 0
    %9197 = vmatpush1.bf16.msra.mxu0 %v7003
    %9198 = vmatprep.subr.bf16.mxu0 0
    %9199 = vmatpush1.bf16.msra.mxu0 %v7004
    %9200 = vmatprep.subr.bf16.mxu0 0
    %9201 = vmatpush1.bf16.msra.mxu0 %v7005
    %9202 = vmatprep.subr.bf16.mxu0 0
    %9203 = vmatpush1.bf16.msra.mxu0 %v7006
    %9204 = vmatprep.subr.bf16.mxu0 0
    %9205 = vmatpush1.bf16.msra.mxu0 %v7007
    %9206 = vmatprep.subr.bf16.mxu0 0
    %9207 = vmatpush1.bf16.msra.mxu0 %v7008
    %9208 = vmatprep.subr.bf16.mxu0 0
    %9209 = vmatpush1.bf16.msra.mxu0 %v7009
    %9210 = vmatprep.subr.bf16.mxu0 0
    %9211 = vmatpush1.bf16.msra.mxu0 %v7010
    %9212 = vmatprep.subr.bf16.mxu0 0
    %9213 = vmatpush1.bf16.msra.mxu0 %v7011
    %9214 = vmatprep.subr.bf16.mxu0 0
    %9215 = vmatpush1.bf16.msra.mxu0 %v7012
    %9216 = vmatprep.subr.bf16.mxu0 0
    %9217 = vmatpush1.bf16.msra.mxu0 %v7013
    %9218 = vmatprep.subr.bf16.mxu0 0
    %9219 = vmatpush1.bf16.msra.mxu0 %v7014
    %9220 = vmatprep.subr.bf16.mxu0 0
    %9221 = vmatpush1.bf16.msra.mxu0 %v7015
    %9222 = vmatprep.subr.bf16.mxu0 0
    %9223 = vmatpush1.bf16.msra.mxu0 %v7016
    %9224 = vmatprep.subr.bf16.mxu0 0
    %9225 = vmatpush1.bf16.msra.mxu0 %v7017
    %9226 = vmatprep.mubr.bf16.mxu0 %v2204
    %9227 = vmatmul.mubr.bf16.gmra.mrb[0].mxu0 %v2196
    %v9228 = vpop.f32.mrb[0].mxu0
    %v9229 = vadd.f32 %v9189, %v9228
    %v9230 = vpop.f32.mrb[0].mxu0
    %v9231 = vpop.f32.mrb[0].mxu0
    %v9232 = vpop.f32.mrb[0].mxu0
    %9233 = vdwg.mxu0
    %9234 = vmatprep.subr.bf16.mxu0 0
    %9235 = vmatpush1.bf16.msra.mxu0 %v7018
    %9236 = vmatprep.subr.bf16.mxu0 0
    %9237 = vmatpush1.bf16.msra.mxu0 %v7019
    %9238 = vmatprep.subr.bf16.mxu0 0
    %9239 = vmatpush1.bf16.msra.mxu0 %v7020
    %9240 = vmatprep.subr.bf16.mxu0 0
    %9241 = vmatpush1.bf16.msra.mxu0 %v7021
    %9242 = vmatprep.subr.bf16.mxu0 0
    %9243 = vmatpush1.bf16.msra.mxu0 %v7022
    %9244 = vmatprep.subr.bf16.mxu0 0
    %9245 = vmatpush1.bf16.msra.mxu0 %v7023
    %9246 = vmatprep.subr.bf16.mxu0 0
    %9247 = vmatpush1.bf16.msra.mxu0 %v7024
    %9248 = vmatprep.subr.bf16.mxu0 0
    %9249 = vmatpush1.bf16.msra.mxu0 %v7025
    %9250 = vmatprep.subr.bf16.mxu0 0
    %9251 = vmatpush1.bf16.msra.mxu0 %v7026
    %9252 = vmatprep.subr.bf16.mxu0 0
    %9253 = vmatpush1.bf16.msra.mxu0 %v7027
    %9254 = vmatprep.subr.bf16.mxu0 0
    %9255 = vmatpush1.bf16.msra.mxu0 %v7028
    %9256 = vmatprep.subr.bf16.mxu0 0
    %9257 = vmatpush1.bf16.msra.mxu0 %v7029
    %9258 = vmatprep.subr.bf16.mxu0 0
    %9259 = vmatpush1.bf16.msra.mxu0 %v7030
    %9260 = vmatprep.subr.bf16.mxu0 0
    %9261 = vmatpush1.bf16.msra.mxu0 %v7031
    %9262 = vmatprep.subr.bf16.mxu0 0
    %9263 = vmatpush1.bf16.msra.mxu0 %v7032
    %9264 = vmatprep.subr.bf16.mxu0 0
    %9265 = vmatpush1.bf16.msra.mxu0 %v7033
    %9266 = vmatprep.mubr.bf16.mxu0 %v2205
    %9267 = vmatmul.mubr.bf16.gmra.mrb[0].mxu0 %v2203
    %v9268 = vpop.f32.mrb[0].mxu0
    %v9269 = vadd.f32 %v9229, %v9268
    %v9270 = vpop.f32.mrb[0].mxu0
    %v9271 = vpop.f32.mrb[0].mxu0
    %v9272 = vpop.f32.mrb[0].mxu0
    %9273 = vdwg.mxu0
    %9274 = vmatprep.subr.bf16.mxu0 0
    %9275 = vmatpush1.bf16.msra.mxu0 %v7034
    %9276 = vmatprep.subr.bf16.mxu0 0
    %9277 = vmatpush1.bf16.msra.mxu0 %v7035
    %9278 = vmatprep.subr.bf16.mxu0 0
    %9279 = vmatpush1.bf16.msra.mxu0 %v7036
    %9280 = vmatprep.subr.bf16.mxu0 0
    %9281 = vmatpush1.bf16.msra.mxu0 %v7037
    %9282 = vmatprep.subr.bf16.mxu0 0
    %9283 = vmatpush1.bf16.msra.mxu0 %v7038
    %9284 = vmatprep.subr.bf16.mxu0 0
    %9285 = vmatpush1.bf16.msra.mxu0 %v7039
    %9286 = vmatprep.subr.bf16.mxu0 0
    %9287 = vmatpush1.bf16.msra.mxu0 %v7040
    %9288 = vmatprep.subr.bf16.mxu0 0
    %9289 = vmatpush1.bf16.msra.mxu0 %v7041
    %9290 = vmatprep.subr.bf16.mxu0 0
    %9291 = vmatpush1.bf16.msra.mxu0 %v7042
    %9292 = vmatprep.subr.bf16.mxu0 0
    %9293 = vmatpush1.bf16.msra.mxu0 %v7043
    %9294 = vmatprep.subr.bf16.mxu0 0
    %9295 = vmatpush1.bf16.msra.mxu0 %v7044
    %9296 = vmatprep.subr.bf16.mxu0 0
    %9297 = vmatpush1.bf16.msra.mxu0 %v7045
    %9298 = vmatprep.subr.bf16.mxu0 0
    %9299 = vmatpush1.bf16.msra.mxu0 %v7046
    %9300 = vmatprep.subr.bf16.mxu0 0
    %9301 = vmatpush1.bf16.msra.mxu0 %v7047
    %9302 = vmatprep.subr.bf16.mxu0 0
    %9303 = vmatpush1.bf16.msra.mxu0 %v7048
    %9304 = vmatprep.subr.bf16.mxu0 0
    %9305 = vmatpush1.bf16.msra.mxu0 %v7049
    %9306 = vmatprep.mubr.bf16.mxu0 %v2221
    %9307 = vmatmul.mubr.bf16.gmra.mrb[0].mxu0 %v2213
    %v9308 = vpop.f32.mrb[0].mxu0
    %v9309 = vadd.f32 %v9269, %v9308
    %v9310 = vpop.f32.mrb[0].mxu0
    %v9311 = vpop.f32.mrb[0].mxu0
    %v9312 = vpop.f32.mrb[0].mxu0
    %9313 = vdwg.mxu0
    %9314 = vmatprep.subr.bf16.mxu0 0
    %9315 = vmatpush1.bf16.msra.mxu0 %v7050
    %9316 = vmatprep.subr.bf16.mxu0 0
    %9317 = vmatpush1.bf16.msra.mxu0 %v7051
    %9318 = vmatprep.subr.bf16.mxu0 0
    %9319 = vmatpush1.bf16.msra.mxu0 %v7052
    %9320 = vmatprep.subr.bf16.mxu0 0
    %9321 = vmatpush1.bf16.msra.mxu0 %v7053
    %9322 = vmatprep.subr.bf16.mxu0 0
    %9323 = vmatpush1.bf16.msra.mxu0 %v7054
    %9324 = vmatprep.subr.bf16.mxu0 0
    %9325 = vmatpush1.bf16.msra.mxu0 %v7055
    %9326 = vmatprep.subr.bf16.mxu0 0
    %9327 = vmatpush1.bf16.msra.mxu0 %v7056
    %9328 = vmatprep.subr.bf16.mxu0 0
    %9329 = vmatpush1.bf16.msra.mxu0 %v7057
    %9330 = vmatprep.subr.bf16.mxu0 0
    %9331 = vmatpush1.bf16.msra.mxu0 %v7058
    %9332 = vmatprep.subr.bf16.mxu0 0
    %9333 = vmatpush1.bf16.msra.mxu0 %v7059
    %9334 = vmatprep.subr.bf16.mxu0 0
    %9335 = vmatpush1.bf16.msra.mxu0 %v7060
    %9336 = vmatprep.subr.bf16.mxu0 0
    %9337 = vmatpush1.bf16.msra.mxu0 %v7061
    %9338 = vmatprep.subr.bf16.mxu0 0
    %9339 = vmatpush1.bf16.msra.mxu0 %v7062
    %9340 = vmatprep.subr.bf16.mxu0 0
    %9341 = vmatpush1.bf16.msra.mxu0 %v7063
    %9342 = vmatprep.subr.bf16.mxu0 0
    %9343 = vmatpush1.bf16.msra.mxu0 %v7064
    %9344 = vmatprep.subr.bf16.mxu0 0
    %9345 = vmatpush1.bf16.msra.mxu0 %v7065
    %9346 = vmatprep.mubr.bf16.mxu0 %v2222
    %9347 = vmatmul.mubr.bf16.gmra.mrb[0].mxu0 %v2220
    %v9348 = vpop.f32.mrb[0].mxu0
    %v9349 = vadd.f32 %v9309, %v9348
    %v9350 = vpop.f32.mrb[0].mxu0
    %v9351 = vpop.f32.mrb[0].mxu0
    %v9352 = vpop.f32.mrb[0].mxu0
    %9353 = vdwg.mxu0
    %9354 = vmatprep.subr.bf16.mxu0 0
    %9355 = vmatpush1.bf16.msra.mxu0 %v7066
    %9356 = vmatprep.subr.bf16.mxu0 0
    %9357 = vmatpush1.bf16.msra.mxu0 %v7067
    %9358 = vmatprep.subr.bf16.mxu0 0
    %9359 = vmatpush1.bf16.msra.mxu0 %v7068
    %9360 = vmatprep.subr.bf16.mxu0 0
    %9361 = vmatpush1.bf16.msra.mxu0 %v7069
    %9362 = vmatprep.subr.bf16.mxu0 0
    %9363 = vmatpush1.bf16.msra.mxu0 %v7070
    %9364 = vmatprep.subr.bf16.mxu0 0
    %9365 = vmatpush1.bf16.msra.mxu0 %v7071
    %9366 = vmatprep.subr.bf16.mxu0 0
    %9367 = vmatpush1.bf16.msra.mxu0 %v7072
    %9368 = vmatprep.subr.bf16.mxu0 0
    %9369 = vmatpush1.bf16.msra.mxu0 %v7073
    %9370 = vmatprep.subr.bf16.mxu0 0
    %9371 = vmatpush1.bf16.msra.mxu0 %v7074
    %9372 = vmatprep.subr.bf16.mxu0 0
    %9373 = vmatpush1.bf16.msra.mxu0 %v7075
    %9374 = vmatprep.subr.bf16.mxu0 0
    %9375 = vmatpush1.bf16.msra.mxu0 %v7076
    %9376 = vmatprep.subr.bf16.mxu0 0
    %9377 = vmatpush1.bf16.msra.mxu0 %v7077
    %9378 = vmatprep.subr.bf16.mxu0 0
    %9379 = vmatpush1.bf16.msra.mxu0 %v7078
    %9380 = vmatprep.subr.bf16.mxu0 0
    %9381 = vmatpush1.bf16.msra.mxu0 %v7079
    %9382 = vmatprep.subr.bf16.mxu0 0
    %9383 = vmatpush1.bf16.msra.mxu0 %v7080
    %9384 = vmatprep.subr.bf16.mxu0 0
    %9385 = vmatpush1.bf16.msra.mxu0 %v7081
    %9386 = vmatprep.mubr.bf16.mxu0 %v2238
    %9387 = vmatmul.mubr.bf16.gmra.mrb[0].mxu0 %v2230
    %v9388 = vpop.f32.mrb[0].mxu0
    %v9389 = vadd.f32 %v9349, %v9388
    %v9390 = vpop.f32.mrb[0].mxu0
    %v9391 = vpop.f32.mrb[0].mxu0
    %v9392 = vpop.f32.mrb[0].mxu0
    %9393 = vdwg.mxu0
    %9394 = vmatprep.subr.bf16.mxu0 0
    %9395 = vmatpush1.bf16.msra.mxu0 %v7082
    %9396 = vmatprep.subr.bf16.mxu0 0
    %9397 = vmatpush1.bf16.msra.mxu0 %v7083
    %9398 = vmatprep.subr.bf16.mxu0 0
    %9399 = vmatpush1.bf16.msra.mxu0 %v7084
    %9400 = vmatprep.subr.bf16.mxu0 0
    %9401 = vmatpush1.bf16.msra.mxu0 %v7085
    %9402 = vmatprep.subr.bf16.mxu0 0
    %9403 = vmatpush1.bf16.msra.mxu0 %v7086
    %9404 = vmatprep.subr.bf16.mxu0 0
    %9405 = vmatpush1.bf16.msra.mxu0 %v7087
    %9406 = vmatprep.subr.bf16.mxu0 0
    %9407 = vmatpush1.bf16.msra.mxu0 %v7088
    %9408 = vmatprep.subr.bf16.mxu0 0
    %9409 = vmatpush1.bf16.msra.mxu0 %v7089
    %9410 = vmatprep.subr.bf16.mxu0 0
    %9411 = vmatpush1.bf16.msra.mxu0 %v7090
    %9412 = vmatprep.subr.bf16.mxu0 0
    %9413 = vmatpush1.bf16.msra.mxu0 %v7091
    %9414 = vmatprep.subr.bf16.mxu0 0
    %9415 = vmatpush1.bf16.msra.mxu0 %v7092
    %9416 = vmatprep.subr.bf16.mxu0 0
    %9417 = vmatpush1.bf16.msra.mxu0 %v7093
    %9418 = vmatprep.subr.bf16.mxu0 0
    %9419 = vmatpush1.bf16.msra.mxu0 %v7094
    %9420 = vmatprep.subr.bf16.mxu0 0
    %9421 = vmatpush1.bf16.msra.mxu0 %v7095
    %9422 = vmatprep.subr.bf16.mxu0 0
    %9423 = vmatpush1.bf16.msra.mxu0 %v7096
    %9424 = vmatprep.subr.bf16.mxu0 0
    %9425 = vmatpush1.bf16.msra.mxu0 %v7097
    %9426 = vmatprep.mubr.bf16.mxu0 %v2239
    %9427 = vmatmul.mubr.bf16.gmra.mrb[0].mxu0 %v2237
    %v9428 = vpop.f32.mrb[0].mxu0
    %v9429 = vadd.f32 %v9389, %v9428
    %v9430 = vpop.f32.mrb[0].mxu0
    %v9431 = vpop.f32.mrb[0].mxu0
    %v9432 = vpop.f32.mrb[0].mxu0
    %9433 = vdwg.mxu0
    %9434 = vmatprep.subr.bf16.mxu0 0
    %9435 = vmatpush1.bf16.msra.mxu0 %v7098
    %9436 = vmatprep.subr.bf16.mxu0 0
    %9437 = vmatpush1.bf16.msra.mxu0 %v7099
    %9438 = vmatprep.subr.bf16.mxu0 0
    %9439 = vmatpush1.bf16.msra.mxu0 %v7100
    %9440 = vmatprep.subr.bf16.mxu0 0
    %9441 = vmatpush1.bf16.msra.mxu0 %v7101
    %9442 = vmatprep.subr.bf16.mxu0 0
    %9443 = vmatpush1.bf16.msra.mxu0 %v7102
    %9444 = vmatprep.subr.bf16.mxu0 0
    %9445 = vmatpush1.bf16.msra.mxu0 %v7103
    %9446 = vmatprep.subr.bf16.mxu0 0
    %9447 = vmatpush1.bf16.msra.mxu0 %v7104
    %9448 = vmatprep.subr.bf16.mxu0 0
    %9449 = vmatpush1.bf16.msra.mxu0 %v7105
    %9450 = vmatprep.subr.bf16.mxu0 0
    %9451 = vmatpush1.bf16.msra.mxu0 %v7106
    %9452 = vmatprep.subr.bf16.mxu0 0
    %9453 = vmatpush1.bf16.msra.mxu0 %v7107
    %9454 = vmatprep.subr.bf16.mxu0 0
    %9455 = vmatpush1.bf16.msra.mxu0 %v7108
    %9456 = vmatprep.subr.bf16.mxu0 0
    %9457 = vmatpush1.bf16.msra.mxu0 %v7109
    %9458 = vmatprep.subr.bf16.mxu0 0
    %9459 = vmatpush1.bf16.msra.mxu0 %v7110
    %9460 = vmatprep.subr.bf16.mxu0 0
    %9461 = vmatpush1.bf16.msra.mxu0 %v7111
    %9462 = vmatprep.subr.bf16.mxu0 0
    %9463 = vmatpush1.bf16.msra.mxu0 %v7112
    %9464 = vmatprep.subr.bf16.mxu0 0
    %9465 = vmatpush1.bf16.msra.mxu0 %v7113
    %9466 = vmatprep.mubr.bf16.mxu0 %v2255
    %9467 = vmatmul.mubr.bf16.gmra.mrb[0].mxu0 %v2247
    %v9468 = vpop.f32.mrb[0].mxu0
    %v9469 = vadd.f32 %v9429, %v9468
    %v9470 = vpop.f32.mrb[0].mxu0
    %v9471 = vpop.f32.mrb[0].mxu0
    %v9472 = vpop.f32.mrb[0].mxu0
    %9473 = vdwg.mxu0
    %9474 = vmatprep.subr.bf16.mxu0 0
    %9475 = vmatpush1.bf16.msra.mxu0 %v7114
    %9476 = vmatprep.subr.bf16.mxu0 0
    %9477 = vmatpush1.bf16.msra.mxu0 %v7115
    %9478 = vmatprep.subr.bf16.mxu0 0
    %9479 = vmatpush1.bf16.msra.mxu0 %v7116
    %9480 = vmatprep.subr.bf16.mxu0 0
    %9481 = vmatpush1.bf16.msra.mxu0 %v7117
    %9482 = vmatprep.subr.bf16.mxu0 0
    %9483 = vmatpush1.bf16.msra.mxu0 %v7118
    %9484 = vmatprep.subr.bf16.mxu0 0
    %9485 = vmatpush1.bf16.msra.mxu0 %v7119
    %9486 = vmatprep.subr.bf16.mxu0 0
    %9487 = vmatpush1.bf16.msra.mxu0 %v7120
    %9488 = vmatprep.subr.bf16.mxu0 0
    %9489 = vmatpush1.bf16.msra.mxu0 %v7121
    %9490 = vmatprep.subr.bf16.mxu0 0
    %9491 = vmatpush1.bf16.msra.mxu0 %v7122
    %9492 = vmatprep.subr.bf16.mxu0 0
    %9493 = vmatpush1.bf16.msra.mxu0 %v7123
    %9494 = vmatprep.subr.bf16.mxu0 0
    %9495 = vmatpush1.bf16.msra.mxu0 %v7124
    %9496 = vmatprep.subr.bf16.mxu0 0
    %9497 = vmatpush1.bf16.msra.mxu0 %v7125
    %9498 = vmatprep.subr.bf16.mxu0 0
    %9499 = vmatpush1.bf16.msra.mxu0 %v7126
    %9500 = vmatprep.subr.bf16.mxu0 0
    %9501 = vmatpush1.bf16.msra.mxu0 %v7127
    %9502 = vmatprep.subr.bf16.mxu0 0
    %9503 = vmatpush1.bf16.msra.mxu0 %v7128
    %9504 = vmatprep.subr.bf16.mxu0 0
    %9505 = vmatpush1.bf16.msra.mxu0 %v7129
    %9506 = vmatprep.mubr.bf16.mxu0 %v2256
    %9507 = vmatmul.mubr.bf16.gmra.mrb[0].mxu0 %v2254
    %v9508 = vpop.f32.mrb[0].mxu0
    %v9509 = vadd.f32 %v9469, %v9508
    %v9510 = vpop.f32.mrb[0].mxu0
    %v9511 = vpop.f32.mrb[0].mxu0
    %v9512 = vpop.f32.mrb[0].mxu0
    %9513 = vdwg.mxu0
    %9514 = vmatprep.subr.bf16.mxu0 0
    %9515 = vmatpush1.bf16.msra.mxu0 %v7130
    %9516 = vmatprep.subr.bf16.mxu0 0
    %9517 = vmatpush1.bf16.msra.mxu0 %v7131
    %9518 = vmatprep.subr.bf16.mxu0 0
    %9519 = vmatpush1.bf16.msra.mxu0 %v7132
    %9520 = vmatprep.subr.bf16.mxu0 0
    %9521 = vmatpush1.bf16.msra.mxu0 %v7133
    %9522 = vmatprep.subr.bf16.mxu0 0
    %9523 = vmatpush1.bf16.msra.mxu0 %v7134
    %9524 = vmatprep.subr.bf16.mxu0 0
    %9525 = vmatpush1.bf16.msra.mxu0 %v7135
    %9526 = vmatprep.subr.bf16.mxu0 0
    %9527 = vmatpush1.bf16.msra.mxu0 %v7136
    %9528 = vmatprep.subr.bf16.mxu0 0
    %9529 = vmatpush1.bf16.msra.mxu0 %v7137
    %9530 = vmatprep.subr.bf16.mxu0 0
    %9531 = vmatpush1.bf16.msra.mxu0 %v7138
    %9532 = vmatprep.subr.bf16.mxu0 0
    %9533 = vmatpush1.bf16.msra.mxu0 %v7139
    %9534 = vmatprep.subr.bf16.mxu0 0
    %9535 = vmatpush1.bf16.msra.mxu0 %v7140
    %9536 = vmatprep.subr.bf16.mxu0 0
    %9537 = vmatpush1.bf16.msra.mxu0 %v7141
    %9538 = vmatprep.subr.bf16.mxu0 0
    %9539 = vmatpush1.bf16.msra.mxu0 %v7142
    %9540 = vmatprep.subr.bf16.mxu0 0
    %9541 = vmatpush1.bf16.msra.mxu0 %v7143
    %9542 = vmatprep.subr.bf16.mxu0 0
    %9543 = vmatpush1.bf16.msra.mxu0 %v7144
    %9544 = vmatprep.subr.bf16.mxu0 0
    %9545 = vmatpush1.bf16.msra.mxu0 %v7145
    %9546 = vmatprep.mubr.bf16.mxu0 %v2272
    %9547 = vmatmul.mubr.bf16.gmra.mrb[0].mxu0 %v2264
    %v9548 = vpop.f32.mrb[0].mxu0
    %v9549 = vadd.f32 %v9509, %v9548
    %v9550 = vpop.f32.mrb[0].mxu0
    %v9551 = vpop.f32.mrb[0].mxu0
    %v9552 = vpop.f32.mrb[0].mxu0
    %9553 = vdwg.mxu0
    %9554 = vmatprep.subr.bf16.mxu0 0
    %9555 = vmatpush1.bf16.msra.mxu0 %v7146
    %9556 = vmatprep.subr.bf16.mxu0 0
    %9557 = vmatpush1.bf16.msra.mxu0 %v7147
    %9558 = vmatprep.subr.bf16.mxu0 0
    %9559 = vmatpush1.bf16.msra.mxu0 %v7148
    %9560 = vmatprep.subr.bf16.mxu0 0
    %9561 = vmatpush1.bf16.msra.mxu0 %v7149
    %9562 = vmatprep.subr.bf16.mxu0 0
    %9563 = vmatpush1.bf16.msra.mxu0 %v7150
    %9564 = vmatprep.subr.bf16.mxu0 0
    %9565 = vmatpush1.bf16.msra.mxu0 %v7151
    %9566 = vmatprep.subr.bf16.mxu0 0
    %9567 = vmatpush1.bf16.msra.mxu0 %v7152
    %9568 = vmatprep.subr.bf16.mxu0 0
    %9569 = vmatpush1.bf16.msra.mxu0 %v7153
    %9570 = vmatprep.subr.bf16.mxu0 0
    %9571 = vmatpush1.bf16.msra.mxu0 %v7154
    %9572 = vmatprep.subr.bf16.mxu0 0
    %9573 = vmatpush1.bf16.msra.mxu0 %v7155
    %9574 = vmatprep.subr.bf16.mxu0 0
    %9575 = vmatpush1.bf16.msra.mxu0 %v7156
    %9576 = vmatprep.subr.bf16.mxu0 0
    %9577 = vmatpush1.bf16.msra.mxu0 %v7157
    %9578 = vmatprep.subr.bf16.mxu0 0
    %9579 = vmatpush1.bf16.msra.mxu0 %v7158
    %9580 = vmatprep.subr.bf16.mxu0 0
    %9581 = vmatpush1.bf16.msra.mxu0 %v7159
    %9582 = vmatprep.subr.bf16.mxu0 0
    %9583 = vmatpush1.bf16.msra.mxu0 %v7160
    %9584 = vmatprep.subr.bf16.mxu0 0
    %9585 = vmatpush1.bf16.msra.mxu0 %v7161
    %9586 = vmatprep.mubr.bf16.mxu0 %v2273
    %9587 = vmatmul.mubr.bf16.gmra.mrb[0].mxu0 %v2271
    %v9588 = vpop.f32.mrb[0].mxu0
    %v9589 = vadd.f32 %v9549, %v9588
    %v9590 = vpop.f32.mrb[0].mxu0
    %v9591 = vpop.f32.mrb[0].mxu0
    %v9592 = vpop.f32.mrb[0].mxu0
    %9593 = vdwg.mxu0
    %9594 = vmatprep.subr.bf16.mxu0 0
    %9595 = vmatpush1.bf16.msra.mxu0 %v7162
    %9596 = vmatprep.subr.bf16.mxu0 0
    %9597 = vmatpush1.bf16.msra.mxu0 %v7163
    %9598 = vmatprep.subr.bf16.mxu0 0
    %9599 = vmatpush1.bf16.msra.mxu0 %v7164
    %9600 = vmatprep.subr.bf16.mxu0 0
    %9601 = vmatpush1.bf16.msra.mxu0 %v7165
    %9602 = vmatprep.subr.bf16.mxu0 0
    %9603 = vmatpush1.bf16.msra.mxu0 %v7166
    %9604 = vmatprep.subr.bf16.mxu0 0
    %9605 = vmatpush1.bf16.msra.mxu0 %v7167
    %9606 = vmatprep.subr.bf16.mxu0 0
    %9607 = vmatpush1.bf16.msra.mxu0 %v7168
    %9608 = vmatprep.subr.bf16.mxu0 0
    %9609 = vmatpush1.bf16.msra.mxu0 %v7169
    %9610 = vmatprep.subr.bf16.mxu0 0
    %9611 = vmatpush1.bf16.msra.mxu0 %v7170
    %9612 = vmatprep.subr.bf16.mxu0 0
    %9613 = vmatpush1.bf16.msra.mxu0 %v7171
    %9614 = vmatprep.subr.bf16.mxu0 0
    %9615 = vmatpush1.bf16.msra.mxu0 %v7172
    %9616 = vmatprep.subr.bf16.mxu0 0
    %9617 = vmatpush1.bf16.msra.mxu0 %v7173
    %9618 = vmatprep.subr.bf16.mxu0 0
    %9619 = vmatpush1.bf16.msra.mxu0 %v7174
    %9620 = vmatprep.subr.bf16.mxu0 0
    %9621 = vmatpush1.bf16.msra.mxu0 %v7175
    %9622 = vmatprep.subr.bf16.mxu0 0
    %9623 = vmatpush1.bf16.msra.mxu0 %v7176
    %9624 = vmatprep.subr.bf16.mxu0 0
    %9625 = vmatpush1.bf16.msra.mxu0 %v7177
    %9626 = vmatprep.mubr.bf16.mxu0 %v2289
    %9627 = vmatmul.mubr.bf16.gmra.mrb[0].mxu0 %v2281
    %v9628 = vpop.f32.mrb[0].mxu0
    %v9629 = vadd.f32 %v9589, %v9628
    %v9630 = vpop.f32.mrb[0].mxu0
    %v9631 = vpop.f32.mrb[0].mxu0
    %v9632 = vpop.f32.mrb[0].mxu0
    %9633 = vdwg.mxu0
    %9634 = vmatprep.subr.bf16.mxu0 0
    %9635 = vmatpush1.bf16.msra.mxu0 %v7178
    %9636 = vmatprep.subr.bf16.mxu0 0
    %9637 = vmatpush1.bf16.msra.mxu0 %v7179
    %9638 = vmatprep.subr.bf16.mxu0 0
    %9639 = vmatpush1.bf16.msra.mxu0 %v7180
    %9640 = vmatprep.subr.bf16.mxu0 0
    %9641 = vmatpush1.bf16.msra.mxu0 %v7181
    %9642 = vmatprep.subr.bf16.mxu0 0
    %9643 = vmatpush1.bf16.msra.mxu0 %v7182
    %9644 = vmatprep.subr.bf16.mxu0 0
    %9645 = vmatpush1.bf16.msra.mxu0 %v7183
    %9646 = vmatprep.subr.bf16.mxu0 0
    %9647 = vmatpush1.bf16.msra.mxu0 %v7184
    %9648 = vmatprep.subr.bf16.mxu0 0
    %9649 = vmatpush1.bf16.msra.mxu0 %v7185
    %9650 = vmatprep.subr.bf16.mxu0 0
    %9651 = vmatpush1.bf16.msra.mxu0 %v7186
    %9652 = vmatprep.subr.bf16.mxu0 0
    %9653 = vmatpush1.bf16.msra.mxu0 %v7187
    %9654 = vmatprep.subr.bf16.mxu0 0
    %9655 = vmatpush1.bf16.msra.mxu0 %v7188
    %9656 = vmatprep.subr.bf16.mxu0 0
    %9657 = vmatpush1.bf16.msra.mxu0 %v7189
    %9658 = vmatprep.subr.bf16.mxu0 0
    %9659 = vmatpush1.bf16.msra.mxu0 %v7190
    %9660 = vmatprep.subr.bf16.mxu0 0
    %9661 = vmatpush1.bf16.msra.mxu0 %v7191
    %9662 = vmatprep.subr.bf16.mxu0 0
    %9663 = vmatpush1.bf16.msra.mxu0 %v7192
    %9664 = vmatprep.subr.bf16.mxu0 0
    %9665 = vmatpush1.bf16.msra.mxu0 %v7193
    %9666 = vmatprep.mubr.bf16.mxu0 %v2290
    %9667 = vmatmul.mubr.bf16.gmra.mrb[0].mxu0 %v2288
    %v9668 = vpop.f32.mrb[0].mxu0
    %v9669 = vadd.f32 %v9629, %v9668
    %v9670 = vpop.f32.mrb[0].mxu0
    %v9671 = vpop.f32.mrb[0].mxu0
    %v9672 = vpop.f32.mrb[0].mxu0
    %9673 = vdwg.mxu0
    %9674 = vmatprep.subr.bf16.mxu0 0
    %9675 = vmatpush1.bf16.msra.mxu0 %v7194
    %9676 = vmatprep.subr.bf16.mxu0 0
    %9677 = vmatpush1.bf16.msra.mxu0 %v7195
    %9678 = vmatprep.subr.bf16.mxu0 0
    %9679 = vmatpush1.bf16.msra.mxu0 %v7196
    %9680 = vmatprep.subr.bf16.mxu0 0
    %9681 = vmatpush1.bf16.msra.mxu0 %v7197
    %9682 = vmatprep.subr.bf16.mxu0 0
    %9683 = vmatpush1.bf16.msra.mxu0 %v7198
    %9684 = vmatprep.subr.bf16.mxu0 0
    %9685 = vmatpush1.bf16.msra.mxu0 %v7199
    %9686 = vmatprep.subr.bf16.mxu0 0
    %9687 = vmatpush1.bf16.msra.mxu0 %v7200
    %9688 = vmatprep.subr.bf16.mxu0 0
    %9689 = vmatpush1.bf16.msra.mxu0 %v7201
    %9690 = vmatprep.subr.bf16.mxu0 0
    %9691 = vmatpush1.bf16.msra.mxu0 %v7202
    %9692 = vmatprep.subr.bf16.mxu0 0
    %9693 = vmatpush1.bf16.msra.mxu0 %v7203
    %9694 = vmatprep.subr.bf16.mxu0 0
    %9695 = vmatpush1.bf16.msra.mxu0 %v7204
    %9696 = vmatprep.subr.bf16.mxu0 0
    %9697 = vmatpush1.bf16.msra.mxu0 %v7205
    %9698 = vmatprep.subr.bf16.mxu0 0
    %9699 = vmatpush1.bf16.msra.mxu0 %v7206
    %9700 = vmatprep.subr.bf16.mxu0 0
    %9701 = vmatpush1.bf16.msra.mxu0 %v7207
    %9702 = vmatprep.subr.bf16.mxu0 0
    %9703 = vmatpush1.bf16.msra.mxu0 %v7208
    %9704 = vmatprep.subr.bf16.mxu0 0
    %9705 = vmatpush1.bf16.msra.mxu0 %v7209
    %9706 = vmatprep.mubr.bf16.mxu0 %v2306
    %9707 = vmatmul.mubr.bf16.gmra.mrb[0].mxu0 %v2298
    %v9708 = vpop.f32.mrb[0].mxu0
    %v9709 = vadd.f32 %v9669, %v9708
    %v9710 = vpop.f32.mrb[0].mxu0
    %v9711 = vpop.f32.mrb[0].mxu0
    %v9712 = vpop.f32.mrb[0].mxu0
    %9713 = vdwg.mxu0
    %9714 = vmatprep.subr.bf16.mxu0 0
    %9715 = vmatpush1.bf16.msra.mxu0 %v7210
    %9716 = vmatprep.subr.bf16.mxu0 0
    %9717 = vmatpush1.bf16.msra.mxu0 %v7211
    %9718 = vmatprep.subr.bf16.mxu0 0
    %9719 = vmatpush1.bf16.msra.mxu0 %v7212
    %9720 = vmatprep.subr.bf16.mxu0 0
    %9721 = vmatpush1.bf16.msra.mxu0 %v7213
    %9722 = vmatprep.subr.bf16.mxu0 0
    %9723 = vmatpush1.bf16.msra.mxu0 %v7214
    %9724 = vmatprep.subr.bf16.mxu0 0
    %9725 = vmatpush1.bf16.msra.mxu0 %v7215
    %9726 = vmatprep.subr.bf16.mxu0 0
    %9727 = vmatpush1.bf16.msra.mxu0 %v7216
    %9728 = vmatprep.subr.bf16.mxu0 0
    %9729 = vmatpush1.bf16.msra.mxu0 %v7217
    %9730 = vmatprep.subr.bf16.mxu0 0
    %9731 = vmatpush1.bf16.msra.mxu0 %v7218
    %9732 = vmatprep.subr.bf16.mxu0 0
    %9733 = vmatpush1.bf16.msra.mxu0 %v7219
    %9734 = vmatprep.subr.bf16.mxu0 0
    %9735 = vmatpush1.bf16.msra.mxu0 %v7220
    %9736 = vmatprep.subr.bf16.mxu0 0
    %9737 = vmatpush1.bf16.msra.mxu0 %v7221
    %9738 = vmatprep.subr.bf16.mxu0 0
    %9739 = vmatpush1.bf16.msra.mxu0 %v7222
    %9740 = vmatprep.subr.bf16.mxu0 0
    %9741 = vmatpush1.bf16.msra.mxu0 %v7223
    %9742 = vmatprep.subr.bf16.mxu0 0
    %9743 = vmatpush1.bf16.msra.mxu0 %v7224
    %9744 = vmatprep.subr.bf16.mxu0 0
    %9745 = vmatpush1.bf16.msra.mxu0 %v7225
    %9746 = vmatprep.mubr.bf16.mxu0 %v2307
    %9747 = vmatmul.mubr.bf16.gmra.mrb[0].mxu0 %v2305
    %v9748 = vpop.f32.mrb[0].mxu0
    %v9749 = vadd.f32 %v9709, %v9748
    %v9750 = vpop.f32.mrb[0].mxu0
    %v9751 = vpop.f32.mrb[0].mxu0
    %v9752 = vpop.f32.mrb[0].mxu0
    %9753 = vdwg.mxu0
    %9754 = vmatprep.subr.bf16.mxu0 0
    %9755 = vmatpush1.bf16.msra.mxu0 %v7226
    %9756 = vmatprep.subr.bf16.mxu0 0
    %9757 = vmatpush1.bf16.msra.mxu0 %v7227
    %9758 = vmatprep.subr.bf16.mxu0 0
    %9759 = vmatpush1.bf16.msra.mxu0 %v7228
    %9760 = vmatprep.subr.bf16.mxu0 0
    %9761 = vmatpush1.bf16.msra.mxu0 %v7229
    %9762 = vmatprep.subr.bf16.mxu0 0
    %9763 = vmatpush1.bf16.msra.mxu0 %v7230
    %9764 = vmatprep.subr.bf16.mxu0 0
    %9765 = vmatpush1.bf16.msra.mxu0 %v7231
    %9766 = vmatprep.subr.bf16.mxu0 0
    %9767 = vmatpush1.bf16.msra.mxu0 %v7232
    %9768 = vmatprep.subr.bf16.mxu0 0
    %9769 = vmatpush1.bf16.msra.mxu0 %v7233
    %9770 = vmatprep.subr.bf16.mxu0 0
    %9771 = vmatpush1.bf16.msra.mxu0 %v7234
    %9772 = vmatprep.subr.bf16.mxu0 0
    %9773 = vmatpush1.bf16.msra.mxu0 %v7235
    %9774 = vmatprep.subr.bf16.mxu0 0
    %9775 = vmatpush1.bf16.msra.mxu0 %v7236
    %9776 = vmatprep.subr.bf16.mxu0 0
    %9777 = vmatpush1.bf16.msra.mxu0 %v7237
    %9778 = vmatprep.subr.bf16.mxu0 0
    %9779 = vmatpush1.bf16.msra.mxu0 %v7238
    %9780 = vmatprep.subr.bf16.mxu0 0
    %9781 = vmatpush1.bf16.msra.mxu0 %v7239
    %9782 = vmatprep.subr.bf16.mxu0 0
    %9783 = vmatpush1.bf16.msra.mxu0 %v7240
    %9784 = vmatprep.subr.bf16.mxu0 0
    %9785 = vmatpush1.bf16.msra.mxu0 %v7241
    %9786 = vmatprep.mubr.bf16.mxu0 %v2323
    %9787 = vmatmul.mubr.bf16.gmra.mrb[0].mxu0 %v2315
    %v9788 = vpop.f32.mrb[0].mxu0
    %v9789 = vadd.f32 %v9749, %v9788
    %v9790 = vpop.f32.mrb[0].mxu0
    %v9791 = vpop.f32.mrb[0].mxu0
    %v9792 = vpop.f32.mrb[0].mxu0
    %9793 = vdwg.mxu0
    %9794 = vmatprep.subr.bf16.mxu0 0
    %9795 = vmatpush1.bf16.msra.mxu0 %v7242
    %9796 = vmatprep.subr.bf16.mxu0 0
    %9797 = vmatpush1.bf16.msra.mxu0 %v7243
    %9798 = vmatprep.subr.bf16.mxu0 0
    %9799 = vmatpush1.bf16.msra.mxu0 %v7244
    %9800 = vmatprep.subr.bf16.mxu0 0
    %9801 = vmatpush1.bf16.msra.mxu0 %v7245
    %9802 = vmatprep.subr.bf16.mxu0 0
    %9803 = vmatpush1.bf16.msra.mxu0 %v7246
    %9804 = vmatprep.subr.bf16.mxu0 0
    %9805 = vmatpush1.bf16.msra.mxu0 %v7247
    %9806 = vmatprep.subr.bf16.mxu0 0
    %9807 = vmatpush1.bf16.msra.mxu0 %v7248
    %9808 = vmatprep.subr.bf16.mxu0 0
    %9809 = vmatpush1.bf16.msra.mxu0 %v7249
    %9810 = vmatprep.subr.bf16.mxu0 0
    %9811 = vmatpush1.bf16.msra.mxu0 %v7250
    %9812 = vmatprep.subr.bf16.mxu0 0
    %9813 = vmatpush1.bf16.msra.mxu0 %v7251
    %9814 = vmatprep.subr.bf16.mxu0 0
    %9815 = vmatpush1.bf16.msra.mxu0 %v7252
    %9816 = vmatprep.subr.bf16.mxu0 0
    %9817 = vmatpush1.bf16.msra.mxu0 %v7253
    %9818 = vmatprep.subr.bf16.mxu0 0
    %9819 = vmatpush1.bf16.msra.mxu0 %v7254
    %9820 = vmatprep.subr.bf16.mxu0 0
    %9821 = vmatpush1.bf16.msra.mxu0 %v7255
    %9822 = vmatprep.subr.bf16.mxu0 0
    %9823 = vmatpush1.bf16.msra.mxu0 %v7256
    %9824 = vmatprep.subr.bf16.mxu0 0
    %9825 = vmatpush1.bf16.msra.mxu0 %v7257
    %9826 = vmatprep.mubr.bf16.mxu0 %v2324
    %9827 = vmatmul.mubr.bf16.gmra.mrb[0].mxu0 %v2322
    %v9828 = vpop.f32.mrb[0].mxu0
    %v9829 = vadd.f32 %v9789, %v9828
    %v9830 = vpop.f32.mrb[0].mxu0
    %v9831 = vpop.f32.mrb[0].mxu0
    %v9832 = vpop.f32.mrb[0].mxu0
    %9833 = vdwg.mxu0
    %9834 = vmatprep.subr.bf16.mxu0 0
    %9835 = vmatpush1.bf16.msra.mxu0 %v7258
    %9836 = vmatprep.subr.bf16.mxu0 0
    %9837 = vmatpush1.bf16.msra.mxu0 %v7259
    %9838 = vmatprep.subr.bf16.mxu0 0
    %9839 = vmatpush1.bf16.msra.mxu0 %v7260
    %9840 = vmatprep.subr.bf16.mxu0 0
    %9841 = vmatpush1.bf16.msra.mxu0 %v7261
    %9842 = vmatprep.subr.bf16.mxu0 0
    %9843 = vmatpush1.bf16.msra.mxu0 %v7262
    %9844 = vmatprep.subr.bf16.mxu0 0
    %9845 = vmatpush1.bf16.msra.mxu0 %v7263
    %9846 = vmatprep.subr.bf16.mxu0 0
    %9847 = vmatpush1.bf16.msra.mxu0 %v7264
    %9848 = vmatprep.subr.bf16.mxu0 0
    %9849 = vmatpush1.bf16.msra.mxu0 %v7265
    %9850 = vmatprep.subr.bf16.mxu0 0
    %9851 = vmatpush1.bf16.msra.mxu0 %v7266
    %9852 = vmatprep.subr.bf16.mxu0 0
    %9853 = vmatpush1.bf16.msra.mxu0 %v7267
    %9854 = vmatprep.subr.bf16.mxu0 0
    %9855 = vmatpush1.bf16.msra.mxu0 %v7268
    %9856 = vmatprep.subr.bf16.mxu0 0
    %9857 = vmatpush1.bf16.msra.mxu0 %v7269
    %9858 = vmatprep.subr.bf16.mxu0 0
    %9859 = vmatpush1.bf16.msra.mxu0 %v7270
    %9860 = vmatprep.subr.bf16.mxu0 0
    %9861 = vmatpush1.bf16.msra.mxu0 %v7271
    %9862 = vmatprep.subr.bf16.mxu0 0
    %9863 = vmatpush1.bf16.msra.mxu0 %v7272
    %9864 = vmatprep.subr.bf16.mxu0 0
    %9865 = vmatpush1.bf16.msra.mxu0 %v7273
    %9866 = vmatprep.mubr.bf16.mxu0 %v2340
    %9867 = vmatmul.mubr.bf16.gmra.mrb[0].mxu0 %v2332
    %v9868 = vpop.f32.mrb[0].mxu0
    %v9869 = vadd.f32 %v9829, %v9868
    %v9870 = vpop.f32.mrb[0].mxu0
    %v9871 = vpop.f32.mrb[0].mxu0
    %v9872 = vpop.f32.mrb[0].mxu0
    %9873 = vdwg.mxu0
    %9874 = vmatprep.subr.bf16.mxu0 0
    %9875 = vmatpush1.bf16.msra.mxu0 %v7274
    %9876 = vmatprep.subr.bf16.mxu0 0
    %9877 = vmatpush1.bf16.msra.mxu0 %v7275
    %9878 = vmatprep.subr.bf16.mxu0 0
    %9879 = vmatpush1.bf16.msra.mxu0 %v7276
    %9880 = vmatprep.subr.bf16.mxu0 0
    %9881 = vmatpush1.bf16.msra.mxu0 %v7277
    %9882 = vmatprep.subr.bf16.mxu0 0
    %9883 = vmatpush1.bf16.msra.mxu0 %v7278
    %9884 = vmatprep.subr.bf16.mxu0 0
    %9885 = vmatpush1.bf16.msra.mxu0 %v7279
    %9886 = vmatprep.subr.bf16.mxu0 0
    %9887 = vmatpush1.bf16.msra.mxu0 %v7280
    %9888 = vmatprep.subr.bf16.mxu0 0
    %9889 = vmatpush1.bf16.msra.mxu0 %v7281
    %9890 = vmatprep.subr.bf16.mxu0 0
    %9891 = vmatpush1.bf16.msra.mxu0 %v7282
    %9892 = vmatprep.subr.bf16.mxu0 0
    %9893 = vmatpush1.bf16.msra.mxu0 %v7283
    %9894 = vmatprep.subr.bf16.mxu0 0
    %9895 = vmatpush1.bf16.msra.mxu0 %v7284
    %9896 = vmatprep.subr.bf16.mxu0 0
    %9897 = vmatpush1.bf16.msra.mxu0 %v7285
    %9898 = vmatprep.subr.bf16.mxu0 0
    %9899 = vmatpush1.bf16.msra.mxu0 %v7286
    %9900 = vmatprep.subr.bf16.mxu0 0
    %9901 = vmatpush1.bf16.msra.mxu0 %v7287
    %9902 = vmatprep.subr.bf16.mxu0 0
    %9903 = vmatpush1.bf16.msra.mxu0 %v7288
    %9904 = vmatprep.subr.bf16.mxu0 0
    %9905 = vmatpush1.bf16.msra.mxu0 %v7289
    %9906 = vmatprep.mubr.bf16.mxu0 %v2341
    %9907 = vmatmul.mubr.bf16.gmra.mrb[0].mxu0 %v2339
    %v9908 = vpop.f32.mrb[0].mxu0
    %v9909 = vadd.f32 %v9869, %v9908
    %v9910 = vpop.f32.mrb[0].mxu0
    %v9911 = vpop.f32.mrb[0].mxu0
    %v9912 = vpop.f32.mrb[0].mxu0
    %9913 = vdwg.mxu0
    %9914 = vmatprep.subr.bf16.mxu0 0
    %9915 = vmatpush1.bf16.msra.mxu0 %v7290
    %9916 = vmatprep.subr.bf16.mxu0 0
    %9917 = vmatpush1.bf16.msra.mxu0 %v7291
    %9918 = vmatprep.subr.bf16.mxu0 0
    %9919 = vmatpush1.bf16.msra.mxu0 %v7292
    %9920 = vmatprep.subr.bf16.mxu0 0
    %9921 = vmatpush1.bf16.msra.mxu0 %v7293
    %9922 = vmatprep.subr.bf16.mxu0 0
    %9923 = vmatpush1.bf16.msra.mxu0 %v7294
    %9924 = vmatprep.subr.bf16.mxu0 0
    %9925 = vmatpush1.bf16.msra.mxu0 %v7295
    %9926 = vmatprep.subr.bf16.mxu0 0
    %9927 = vmatpush1.bf16.msra.mxu0 %v7296
    %9928 = vmatprep.subr.bf16.mxu0 0
    %9929 = vmatpush1.bf16.msra.mxu0 %v7297
    %9930 = vmatprep.subr.bf16.mxu0 0
    %9931 = vmatpush1.bf16.msra.mxu0 %v7298
    %9932 = vmatprep.subr.bf16.mxu0 0
    %9933 = vmatpush1.bf16.msra.mxu0 %v7299
    %9934 = vmatprep.subr.bf16.mxu0 0
    %9935 = vmatpush1.bf16.msra.mxu0 %v7300
    %9936 = vmatprep.subr.bf16.mxu0 0
    %9937 = vmatpush1.bf16.msra.mxu0 %v7301
    %9938 = vmatprep.subr.bf16.mxu0 0
    %9939 = vmatpush1.bf16.msra.mxu0 %v7302
    %9940 = vmatprep.subr.bf16.mxu0 0
    %9941 = vmatpush1.bf16.msra.mxu0 %v7303
    %9942 = vmatprep.subr.bf16.mxu0 0
    %9943 = vmatpush1.bf16.msra.mxu0 %v7304
    %9944 = vmatprep.subr.bf16.mxu0 0
    %9945 = vmatpush1.bf16.msra.mxu0 %v7305
    %9946 = vmatprep.mubr.bf16.mxu0 %v2357
    %9947 = vmatmul.mubr.bf16.gmra.mrb[0].mxu0 %v2349
    %v9948 = vpop.f32.mrb[0].mxu0
    %v9949 = vadd.f32 %v9909, %v9948
    %v9950 = vpop.f32.mrb[0].mxu0
    %v9951 = vpop.f32.mrb[0].mxu0
    %v9952 = vpop.f32.mrb[0].mxu0
    %9953 = vdwg.mxu0
    %9954 = vmatprep.subr.bf16.mxu0 0
    %9955 = vmatpush1.bf16.msra.mxu0 %v7306
    %9956 = vmatprep.subr.bf16.mxu0 0
    %9957 = vmatpush1.bf16.msra.mxu0 %v7307
    %9958 = vmatprep.subr.bf16.mxu0 0
    %9959 = vmatpush1.bf16.msra.mxu0 %v7308
    %9960 = vmatprep.subr.bf16.mxu0 0
    %9961 = vmatpush1.bf16.msra.mxu0 %v7309
    %9962 = vmatprep.subr.bf16.mxu0 0
    %9963 = vmatpush1.bf16.msra.mxu0 %v7310
    %9964 = vmatprep.subr.bf16.mxu0 0
    %9965 = vmatpush1.bf16.msra.mxu0 %v7311
    %9966 = vmatprep.subr.bf16.mxu0 0
    %9967 = vmatpush1.bf16.msra.mxu0 %v7312
    %9968 = vmatprep.subr.bf16.mxu0 0
    %9969 = vmatpush1.bf16.msra.mxu0 %v7313
    %9970 = vmatprep.subr.bf16.mxu0 0
    %9971 = vmatpush1.bf16.msra.mxu0 %v7314
    %9972 = vmatprep.subr.bf16.mxu0 0
    %9973 = vmatpush1.bf16.msra.mxu0 %v7315
    %9974 = vmatprep.subr.bf16.mxu0 0
    %9975 = vmatpush1.bf16.msra.mxu0 %v7316
    %9976 = vmatprep.subr.bf16.mxu0 0
    %9977 = vmatpush1.bf16.msra.mxu0 %v7317
    %9978 = vmatprep.subr.bf16.mxu0 0
    %9979 = vmatpush1.bf16.msra.mxu0 %v7318
    %9980 = vmatprep.subr.bf16.mxu0 0
    %9981 = vmatpush1.bf16.msra.mxu0 %v7319
    %9982 = vmatprep.subr.bf16.mxu0 0
    %9983 = vmatpush1.bf16.msra.mxu0 %v7320
    %9984 = vmatprep.subr.bf16.mxu0 0
    %9985 = vmatpush1.bf16.msra.mxu0 %v7321
    %9986 = vmatprep.mubr.bf16.mxu0 %v2358
    %9987 = vmatmul.mubr.bf16.gmra.mrb[0].mxu0 %v2356
    %v9988 = vpop.f32.mrb[0].mxu0
    %v9989 = vadd.f32 %v9949, %v9988
    %v9990 = vpop.f32.mrb[0].mxu0
    %v9991 = vpop.f32.mrb[0].mxu0
    %v9992 = vpop.f32.mrb[0].mxu0
    %9993 = vdwg.mxu0
    %9994 = vmatprep.subr.bf16.mxu0 0
    %9995 = vmatpush1.bf16.msra.mxu0 %v7322
    %9996 = vmatprep.subr.bf16.mxu0 0
    %9997 = vmatpush1.bf16.msra.mxu0 %v7323
    %9998 = vmatprep.subr.bf16.mxu0 0
    %9999 = vmatpush1.bf16.msra.mxu0 %v7324
    %10000 = vmatprep.subr.bf16.mxu0 0
    %10001 = vmatpush1.bf16.msra.mxu0 %v7325
    %10002 = vmatprep.subr.bf16.mxu0 0
    %10003 = vmatpush1.bf16.msra.mxu0 %v7326
    %10004 = vmatprep.subr.bf16.mxu0 0
    %10005 = vmatpush1.bf16.msra.mxu0 %v7327
    %10006 = vmatprep.subr.bf16.mxu0 0
    %10007 = vmatpush1.bf16.msra.mxu0 %v7328
    %10008 = vmatprep.subr.bf16.mxu0 0
    %10009 = vmatpush1.bf16.msra.mxu0 %v7329
    %10010 = vmatprep.subr.bf16.mxu0 0
    %10011 = vmatpush1.bf16.msra.mxu0 %v7330
    %10012 = vmatprep.subr.bf16.mxu0 0
    %10013 = vmatpush1.bf16.msra.mxu0 %v7331
    %10014 = vmatprep.subr.bf16.mxu0 0
    %10015 = vmatpush1.bf16.msra.mxu0 %v7332
    %10016 = vmatprep.subr.bf16.mxu0 0
    %10017 = vmatpush1.bf16.msra.mxu0 %v7333
    %10018 = vmatprep.subr.bf16.mxu0 0
    %10019 = vmatpush1.bf16.msra.mxu0 %v7334
    %10020 = vmatprep.subr.bf16.mxu0 0
    %10021 = vmatpush1.bf16.msra.mxu0 %v7335
    %10022 = vmatprep.subr.bf16.mxu0 0
    %10023 = vmatpush1.bf16.msra.mxu0 %v7336
    %10024 = vmatprep.subr.bf16.mxu0 0
    %10025 = vmatpush1.bf16.msra.mxu0 %v7337
    %10026 = vmatprep.mubr.bf16.mxu0 %v2374
    %10027 = vmatmul.mubr.bf16.gmra.mrb[0].mxu0 %v2366
    %v10028 = vpop.f32.mrb[0].mxu0
    %v10029 = vadd.f32 %v9989, %v10028
    %v10030 = vpop.f32.mrb[0].mxu0
    %v10031 = vpop.f32.mrb[0].mxu0
    %v10032 = vpop.f32.mrb[0].mxu0
    %10033 = vdwg.mxu0
    %10034 = vmatprep.subr.bf16.mxu0 0
    %10035 = vmatpush1.bf16.msra.mxu0 %v7338
    %10036 = vmatprep.subr.bf16.mxu0 0
    %10037 = vmatpush1.bf16.msra.mxu0 %v7339
    %10038 = vmatprep.subr.bf16.mxu0 0
    %10039 = vmatpush1.bf16.msra.mxu0 %v7340
    %10040 = vmatprep.subr.bf16.mxu0 0
    %10041 = vmatpush1.bf16.msra.mxu0 %v7341
    %10042 = vmatprep.subr.bf16.mxu0 0
    %10043 = vmatpush1.bf16.msra.mxu0 %v7342
    %10044 = vmatprep.subr.bf16.mxu0 0
    %10045 = vmatpush1.bf16.msra.mxu0 %v7343
    %10046 = vmatprep.subr.bf16.mxu0 0
    %10047 = vmatpush1.bf16.msra.mxu0 %v7344
    %10048 = vmatprep.subr.bf16.mxu0 0
    %10049 = vmatpush1.bf16.msra.mxu0 %v7345
    %10050 = vmatprep.subr.bf16.mxu0 0
    %10051 = vmatpush1.bf16.msra.mxu0 %v7346
    %10052 = vmatprep.subr.bf16.mxu0 0
    %10053 = vmatpush1.bf16.msra.mxu0 %v7347
    %10054 = vmatprep.subr.bf16.mxu0 0
    %10055 = vmatpush1.bf16.msra.mxu0 %v7348
    %10056 = vmatprep.subr.bf16.mxu0 0
    %10057 = vmatpush1.bf16.msra.mxu0 %v7349
    %10058 = vmatprep.subr.bf16.mxu0 0
    %10059 = vmatpush1.bf16.msra.mxu0 %v7350
    %10060 = vmatprep.subr.bf16.mxu0 0
    %10061 = vmatpush1.bf16.msra.mxu0 %v7351
    %10062 = vmatprep.subr.bf16.mxu0 0
    %10063 = vmatpush1.bf16.msra.mxu0 %v7352
    %10064 = vmatprep.subr.bf16.mxu0 0
    %10065 = vmatpush1.bf16.msra.mxu0 %v7353
    %10066 = vmatprep.mubr.bf16.mxu0 %v2375
    %10067 = vmatmul.mubr.bf16.gmra.mrb[0].mxu0 %v2373
    %v10068 = vpop.f32.mrb[0].mxu0
    %v10069 = vadd.f32 %v10029, %v10068
    %v10070 = vpop.f32.mrb[0].mxu0
    %v10071 = vpop.f32.mrb[0].mxu0
    %v10072 = vpop.f32.mrb[0].mxu0
    %10073 = vdwg.mxu0
    %10074 = vmatprep.subr.bf16.mxu0 0
    %10075 = vmatpush1.bf16.msra.mxu0 %v7354
    %10076 = vmatprep.subr.bf16.mxu0 0
    %10077 = vmatpush1.bf16.msra.mxu0 %v7355
    %10078 = vmatprep.subr.bf16.mxu0 0
    %10079 = vmatpush1.bf16.msra.mxu0 %v7356
    %10080 = vmatprep.subr.bf16.mxu0 0
    %10081 = vmatpush1.bf16.msra.mxu0 %v7357
    %10082 = vmatprep.subr.bf16.mxu0 0
    %10083 = vmatpush1.bf16.msra.mxu0 %v7358
    %10084 = vmatprep.subr.bf16.mxu0 0
    %10085 = vmatpush1.bf16.msra.mxu0 %v7359
    %10086 = vmatprep.subr.bf16.mxu0 0
    %10087 = vmatpush1.bf16.msra.mxu0 %v7360
    %10088 = vmatprep.subr.bf16.mxu0 0
    %10089 = vmatpush1.bf16.msra.mxu0 %v7361
    %10090 = vmatprep.subr.bf16.mxu0 0
    %10091 = vmatpush1.bf16.msra.mxu0 %v7362
    %10092 = vmatprep.subr.bf16.mxu0 0
    %10093 = vmatpush1.bf16.msra.mxu0 %v7363
    %10094 = vmatprep.subr.bf16.mxu0 0
    %10095 = vmatpush1.bf16.msra.mxu0 %v7364
    %10096 = vmatprep.subr.bf16.mxu0 0
    %10097 = vmatpush1.bf16.msra.mxu0 %v7365
    %10098 = vmatprep.subr.bf16.mxu0 0
    %10099 = vmatpush1.bf16.msra.mxu0 %v7366
    %10100 = vmatprep.subr.bf16.mxu0 0
    %10101 = vmatpush1.bf16.msra.mxu0 %v7367
    %10102 = vmatprep.subr.bf16.mxu0 0
    %10103 = vmatpush1.bf16.msra.mxu0 %v7368
    %10104 = vmatprep.subr.bf16.mxu0 0
    %10105 = vmatpush1.bf16.msra.mxu0 %v7369
    %10106 = vmatprep.mubr.bf16.mxu0 %v2391
    %10107 = vmatmul.mubr.bf16.gmra.mrb[0].mxu0 %v2383
    %v10108 = vpop.f32.mrb[0].mxu0
    %v10109 = vadd.f32 %v10069, %v10108
    %v10110 = vpop.f32.mrb[0].mxu0
    %v10111 = vpop.f32.mrb[0].mxu0
    %v10112 = vpop.f32.mrb[0].mxu0
    %10113 = vdwg.mxu0
    %10114 = vmatprep.subr.bf16.mxu0 0
    %10115 = vmatpush1.bf16.msra.mxu0 %v7370
    %10116 = vmatprep.subr.bf16.mxu0 0
    %10117 = vmatpush1.bf16.msra.mxu0 %v7371
    %10118 = vmatprep.subr.bf16.mxu0 0
    %10119 = vmatpush1.bf16.msra.mxu0 %v7372
    %10120 = vmatprep.subr.bf16.mxu0 0
    %10121 = vmatpush1.bf16.msra.mxu0 %v7373
    %10122 = vmatprep.subr.bf16.mxu0 0
    %10123 = vmatpush1.bf16.msra.mxu0 %v7374
    %10124 = vmatprep.subr.bf16.mxu0 0
    %10125 = vmatpush1.bf16.msra.mxu0 %v7375
    %10126 = vmatprep.subr.bf16.mxu0 0
    %10127 = vmatpush1.bf16.msra.mxu0 %v7376
    %10128 = vmatprep.subr.bf16.mxu0 0
    %10129 = vmatpush1.bf16.msra.mxu0 %v7377
    %10130 = vmatprep.subr.bf16.mxu0 0
    %10131 = vmatpush1.bf16.msra.mxu0 %v7378
    %10132 = vmatprep.subr.bf16.mxu0 0
    %10133 = vmatpush1.bf16.msra.mxu0 %v7379
    %10134 = vmatprep.subr.bf16.mxu0 0
    %10135 = vmatpush1.bf16.msra.mxu0 %v7380
    %10136 = vmatprep.subr.bf16.mxu0 0
    %10137 = vmatpush1.bf16.msra.mxu0 %v7381
    %10138 = vmatprep.subr.bf16.mxu0 0
    %10139 = vmatpush1.bf16.msra.mxu0 %v7382
    %10140 = vmatprep.subr.bf16.mxu0 0
    %10141 = vmatpush1.bf16.msra.mxu0 %v7383
    %10142 = vmatprep.subr.bf16.mxu0 0
    %10143 = vmatpush1.bf16.msra.mxu0 %v7384
    %10144 = vmatprep.subr.bf16.mxu0 0
    %10145 = vmatpush1.bf16.msra.mxu0 %v7385
    %10146 = vmatprep.mubr.bf16.mxu0 %v2392
    %10147 = vmatmul.mubr.bf16.gmra.mrb[0].mxu0 %v2390
    %v10148 = vpop.f32.mrb[0].mxu0
    %v10149 = vadd.f32 %v10109, %v10148
    %v10150 = vpop.f32.mrb[0].mxu0
    %v10151 = vpop.f32.mrb[0].mxu0
    %v10152 = vpop.f32.mrb[0].mxu0
    %10153 = vdwg.mxu0
    %10154 = vmatprep.subr.bf16.mxu0 0
    %10155 = vmatpush1.bf16.msra.mxu0 %v7386
    %10156 = vmatprep.subr.bf16.mxu0 0
    %10157 = vmatpush1.bf16.msra.mxu0 %v7387
    %10158 = vmatprep.subr.bf16.mxu0 0
    %10159 = vmatpush1.bf16.msra.mxu0 %v7388
    %10160 = vmatprep.subr.bf16.mxu0 0
    %10161 = vmatpush1.bf16.msra.mxu0 %v7389
    %10162 = vmatprep.subr.bf16.mxu0 0
    %10163 = vmatpush1.bf16.msra.mxu0 %v7390
    %10164 = vmatprep.subr.bf16.mxu0 0
    %10165 = vmatpush1.bf16.msra.mxu0 %v7391
    %10166 = vmatprep.subr.bf16.mxu0 0
    %10167 = vmatpush1.bf16.msra.mxu0 %v7392
    %10168 = vmatprep.subr.bf16.mxu0 0
    %10169 = vmatpush1.bf16.msra.mxu0 %v7393
    %10170 = vmatprep.subr.bf16.mxu0 0
    %10171 = vmatpush1.bf16.msra.mxu0 %v7394
    %10172 = vmatprep.subr.bf16.mxu0 0
    %10173 = vmatpush1.bf16.msra.mxu0 %v7395
    %10174 = vmatprep.subr.bf16.mxu0 0
    %10175 = vmatpush1.bf16.msra.mxu0 %v7396
    %10176 = vmatprep.subr.bf16.mxu0 0
    %10177 = vmatpush1.bf16.msra.mxu0 %v7397
    %10178 = vmatprep.subr.bf16.mxu0 0
    %10179 = vmatpush1.bf16.msra.mxu0 %v7398
    %10180 = vmatprep.subr.bf16.mxu0 0
    %10181 = vmatpush1.bf16.msra.mxu0 %v7399
    %10182 = vmatprep.subr.bf16.mxu0 0
    %10183 = vmatpush1.bf16.msra.mxu0 %v7400
    %10184 = vmatprep.subr.bf16.mxu0 0
    %10185 = vmatpush1.bf16.msra.mxu0 %v7401
    %10186 = vmatprep.mubr.bf16.mxu0 %v2408
    %10187 = vmatmul.mubr.bf16.gmra.mrb[0].mxu0 %v2400
    %v10188 = vpop.f32.mrb[0].mxu0
    %v10189 = vadd.f32 %v10149, %v10188
    %v10190 = vpop.f32.mrb[0].mxu0
    %v10191 = vpop.f32.mrb[0].mxu0
    %v10192 = vpop.f32.mrb[0].mxu0
    %10193 = vdwg.mxu0
    %10194 = vmatprep.subr.bf16.mxu0 0
    %10195 = vmatpush1.bf16.msra.mxu0 %v7402
    %10196 = vmatprep.subr.bf16.mxu0 0
    %10197 = vmatpush1.bf16.msra.mxu0 %v7403
    %10198 = vmatprep.subr.bf16.mxu0 0
    %10199 = vmatpush1.bf16.msra.mxu0 %v7404
    %10200 = vmatprep.subr.bf16.mxu0 0
    %10201 = vmatpush1.bf16.msra.mxu0 %v7405
    %10202 = vmatprep.subr.bf16.mxu0 0
    %10203 = vmatpush1.bf16.msra.mxu0 %v7406
    %10204 = vmatprep.subr.bf16.mxu0 0
    %10205 = vmatpush1.bf16.msra.mxu0 %v7407
    %10206 = vmatprep.subr.bf16.mxu0 0
    %10207 = vmatpush1.bf16.msra.mxu0 %v7408
    %10208 = vmatprep.subr.bf16.mxu0 0
    %10209 = vmatpush1.bf16.msra.mxu0 %v7409
    %10210 = vmatprep.subr.bf16.mxu0 0
    %10211 = vmatpush1.bf16.msra.mxu0 %v7410
    %10212 = vmatprep.subr.bf16.mxu0 0
    %10213 = vmatpush1.bf16.msra.mxu0 %v7411
    %10214 = vmatprep.subr.bf16.mxu0 0
    %10215 = vmatpush1.bf16.msra.mxu0 %v7412
    %10216 = vmatprep.subr.bf16.mxu0 0
    %10217 = vmatpush1.bf16.msra.mxu0 %v7413
    %10218 = vmatprep.subr.bf16.mxu0 0
    %10219 = vmatpush1.bf16.msra.mxu0 %v7414
    %10220 = vmatprep.subr.bf16.mxu0 0
    %10221 = vmatpush1.bf16.msra.mxu0 %v7415
    %10222 = vmatprep.subr.bf16.mxu0 0
    %10223 = vmatpush1.bf16.msra.mxu0 %v7416
    %10224 = vmatprep.subr.bf16.mxu0 0
    %10225 = vmatpush1.bf16.msra.mxu0 %v7417
    %10226 = vmatprep.mubr.bf16.mxu0 %v2409
    %10227 = vmatmul.mubr.bf16.gmra.mrb[0].mxu0 %v2407
    %v10228 = vpop.f32.mrb[0].mxu0
    %v10229 = vadd.f32 %v10189, %v10228
    %v10230 = vpop.f32.mrb[0].mxu0
    %v10231 = vpop.f32.mrb[0].mxu0
    %v10232 = vpop.f32.mrb[0].mxu0
    %10233 = vdwg.mxu0
    %10234 = vmatprep.subr.bf16.mxu0 0
    %10235 = vmatpush1.bf16.msra.mxu0 %v7418
    %10236 = vmatprep.subr.bf16.mxu0 0
    %10237 = vmatpush1.bf16.msra.mxu0 %v7419
    %10238 = vmatprep.subr.bf16.mxu0 0
    %10239 = vmatpush1.bf16.msra.mxu0 %v7420
    %10240 = vmatprep.subr.bf16.mxu0 0
    %10241 = vmatpush1.bf16.msra.mxu0 %v7421
    %10242 = vmatprep.subr.bf16.mxu0 0
    %10243 = vmatpush1.bf16.msra.mxu0 %v7422
    %10244 = vmatprep.subr.bf16.mxu0 0
    %10245 = vmatpush1.bf16.msra.mxu0 %v7423
    %10246 = vmatprep.subr.bf16.mxu0 0
    %10247 = vmatpush1.bf16.msra.mxu0 %v7424
    %10248 = vmatprep.subr.bf16.mxu0 0
    %10249 = vmatpush1.bf16.msra.mxu0 %v7425
    %10250 = vmatprep.subr.bf16.mxu0 0
    %10251 = vmatpush1.bf16.msra.mxu0 %v7426
    %10252 = vmatprep.subr.bf16.mxu0 0
    %10253 = vmatpush1.bf16.msra.mxu0 %v7427
    %10254 = vmatprep.subr.bf16.mxu0 0
    %10255 = vmatpush1.bf16.msra.mxu0 %v7428
    %10256 = vmatprep.subr.bf16.mxu0 0
    %10257 = vmatpush1.bf16.msra.mxu0 %v7429
    %10258 = vmatprep.subr.bf16.mxu0 0
    %10259 = vmatpush1.bf16.msra.mxu0 %v7430
    %10260 = vmatprep.subr.bf16.mxu0 0
    %10261 = vmatpush1.bf16.msra.mxu0 %v7431
    %10262 = vmatprep.subr.bf16.mxu0 0
    %10263 = vmatpush1.bf16.msra.mxu0 %v7432
    %10264 = vmatprep.subr.bf16.mxu0 0
    %10265 = vmatpush1.bf16.msra.mxu0 %v7433
    %10266 = vmatprep.mubr.bf16.mxu0 %v2425
    %10267 = vmatmul.mubr.bf16.gmra.mrb[0].mxu0 %v2417
    %v10268 = vpop.f32.mrb[0].mxu0
    %v10269 = vadd.f32 %v10229, %v10268
    %v10270 = vpop.f32.mrb[0].mxu0
    %v10271 = vpop.f32.mrb[0].mxu0
    %v10272 = vpop.f32.mrb[0].mxu0
    %10273 = vdwg.mxu0
    %10274 = vmatprep.subr.bf16.mxu0 0
    %10275 = vmatpush1.bf16.msra.mxu0 %v7434
    %10276 = vmatprep.subr.bf16.mxu0 0
    %10277 = vmatpush1.bf16.msra.mxu0 %v7435
    %10278 = vmatprep.subr.bf16.mxu0 0
    %10279 = vmatpush1.bf16.msra.mxu0 %v7436
    %10280 = vmatprep.subr.bf16.mxu0 0
    %10281 = vmatpush1.bf16.msra.mxu0 %v7437
    %10282 = vmatprep.subr.bf16.mxu0 0
    %10283 = vmatpush1.bf16.msra.mxu0 %v7438
    %10284 = vmatprep.subr.bf16.mxu0 0
    %10285 = vmatpush1.bf16.msra.mxu0 %v7439
    %10286 = vmatprep.subr.bf16.mxu0 0
    %10287 = vmatpush1.bf16.msra.mxu0 %v7440
    %10288 = vmatprep.subr.bf16.mxu0 0
    %10289 = vmatpush1.bf16.msra.mxu0 %v7441
    %10290 = vmatprep.subr.bf16.mxu0 0
    %10291 = vmatpush1.bf16.msra.mxu0 %v7442
    %10292 = vmatprep.subr.bf16.mxu0 0
    %10293 = vmatpush1.bf16.msra.mxu0 %v7443
    %10294 = vmatprep.subr.bf16.mxu0 0
    %10295 = vmatpush1.bf16.msra.mxu0 %v7444
    %10296 = vmatprep.subr.bf16.mxu0 0
    %10297 = vmatpush1.bf16.msra.mxu0 %v7445
    %10298 = vmatprep.subr.bf16.mxu0 0
    %10299 = vmatpush1.bf16.msra.mxu0 %v7446
    %10300 = vmatprep.subr.bf16.mxu0 0
    %10301 = vmatpush1.bf16.msra.mxu0 %v7447
    %10302 = vmatprep.subr.bf16.mxu0 0
    %10303 = vmatpush1.bf16.msra.mxu0 %v7448
    %10304 = vmatprep.subr.bf16.mxu0 0
    %10305 = vmatpush1.bf16.msra.mxu0 %v7449
    %10306 = vmatprep.mubr.bf16.mxu0 %v2426
    %10307 = vmatmul.mubr.bf16.gmra.mrb[0].mxu0 %v2424
    %v10308 = vpop.f32.mrb[0].mxu0
    %v10309 = vadd.f32 %v10269, %v10308
    %v10310 = vpop.f32.mrb[0].mxu0
    %v10311 = vpop.f32.mrb[0].mxu0
    %v10312 = vpop.f32.mrb[0].mxu0
    %10313 = vdwg.mxu0
    %10314 = vmatprep.subr.bf16.mxu0 0
    %10315 = vmatpush1.bf16.msra.mxu0 %v7450
    %10316 = vmatprep.subr.bf16.mxu0 0
    %10317 = vmatpush1.bf16.msra.mxu0 %v7451
    %10318 = vmatprep.subr.bf16.mxu0 0
    %10319 = vmatpush1.bf16.msra.mxu0 %v7452
    %10320 = vmatprep.subr.bf16.mxu0 0
    %10321 = vmatpush1.bf16.msra.mxu0 %v7453
    %10322 = vmatprep.subr.bf16.mxu0 0
    %10323 = vmatpush1.bf16.msra.mxu0 %v7454
    %10324 = vmatprep.subr.bf16.mxu0 0
    %10325 = vmatpush1.bf16.msra.mxu0 %v7455
    %10326 = vmatprep.subr.bf16.mxu0 0
    %10327 = vmatpush1.bf16.msra.mxu0 %v7456
    %10328 = vmatprep.subr.bf16.mxu0 0
    %10329 = vmatpush1.bf16.msra.mxu0 %v7457
    %10330 = vmatprep.subr.bf16.mxu0 0
    %10331 = vmatpush1.bf16.msra.mxu0 %v7458
    %10332 = vmatprep.subr.bf16.mxu0 0
    %10333 = vmatpush1.bf16.msra.mxu0 %v7459
    %10334 = vmatprep.subr.bf16.mxu0 0
    %10335 = vmatpush1.bf16.msra.mxu0 %v7460
    %10336 = vmatprep.subr.bf16.mxu0 0
    %10337 = vmatpush1.bf16.msra.mxu0 %v7461
    %10338 = vmatprep.subr.bf16.mxu0 0
    %10339 = vmatpush1.bf16.msra.mxu0 %v7462
    %10340 = vmatprep.subr.bf16.mxu0 0
    %10341 = vmatpush1.bf16.msra.mxu0 %v7463
    %10342 = vmatprep.subr.bf16.mxu0 0
    %10343 = vmatpush1.bf16.msra.mxu0 %v7464
    %10344 = vmatprep.subr.bf16.mxu0 0
    %10345 = vmatpush1.bf16.msra.mxu0 %v7465
    %10346 = vmatprep.mubr.bf16.mxu0 %v2442
    %10347 = vmatmul.mubr.bf16.gmra.mrb[0].mxu0 %v2434
    %v10348 = vpop.f32.mrb[0].mxu0
    %v10349 = vadd.f32 %v10309, %v10348
    %v10350 = vpop.f32.mrb[0].mxu0
    %v10351 = vpop.f32.mrb[0].mxu0
    %v10352 = vpop.f32.mrb[0].mxu0
    %10353 = vdwg.mxu0
    %10354 = vmatprep.subr.bf16.mxu0 0
    %10355 = vmatpush1.bf16.msra.mxu0 %v7466
    %10356 = vmatprep.subr.bf16.mxu0 0
    %10357 = vmatpush1.bf16.msra.mxu0 %v7467
    %10358 = vmatprep.subr.bf16.mxu0 0
    %10359 = vmatpush1.bf16.msra.mxu0 %v7468
    %10360 = vmatprep.subr.bf16.mxu0 0
    %10361 = vmatpush1.bf16.msra.mxu0 %v7469
    %10362 = vmatprep.subr.bf16.mxu0 0
    %10363 = vmatpush1.bf16.msra.mxu0 %v7470
    %10364 = vmatprep.subr.bf16.mxu0 0
    %10365 = vmatpush1.bf16.msra.mxu0 %v7471
    %10366 = vmatprep.subr.bf16.mxu0 0
    %10367 = vmatpush1.bf16.msra.mxu0 %v7472
    %10368 = vmatprep.subr.bf16.mxu0 0
    %10369 = vmatpush1.bf16.msra.mxu0 %v7473
    %10370 = vmatprep.subr.bf16.mxu0 0
    %10371 = vmatpush1.bf16.msra.mxu0 %v7474
    %10372 = vmatprep.subr.bf16.mxu0 0
    %10373 = vmatpush1.bf16.msra.mxu0 %v7475
    %10374 = vmatprep.subr.bf16.mxu0 0
    %10375 = vmatpush1.bf16.msra.mxu0 %v7476
    %10376 = vmatprep.subr.bf16.mxu0 0
    %10377 = vmatpush1.bf16.msra.mxu0 %v7477
    %10378 = vmatprep.subr.bf16.mxu0 0
    %10379 = vmatpush1.bf16.msra.mxu0 %v7478
    %10380 = vmatprep.subr.bf16.mxu0 0
    %10381 = vmatpush1.bf16.msra.mxu0 %v7479
    %10382 = vmatprep.subr.bf16.mxu0 0
    %10383 = vmatpush1.bf16.msra.mxu0 %v7480
    %10384 = vmatprep.subr.bf16.mxu0 0
    %10385 = vmatpush1.bf16.msra.mxu0 %v7481
    %10386 = vmatprep.mubr.bf16.mxu0 %v2443
    %10387 = vmatmul.mubr.bf16.gmra.mrb[0].mxu0 %v2441
    %v10388 = vpop.f32.mrb[0].mxu0
    %v10389 = vadd.f32 %v10349, %v10388
    %v10390 = vpop.f32.mrb[0].mxu0
    %v10391 = vpop.f32.mrb[0].mxu0
    %v10392 = vpop.f32.mrb[0].mxu0
    %10393 = vdwg.mxu0
    %10394 = vmatprep.subr.bf16.mxu0 0
    %10395 = vmatpush1.bf16.msra.mxu0 %v7482
    %10396 = vmatprep.subr.bf16.mxu0 0
    %10397 = vmatpush1.bf16.msra.mxu0 %v7483
    %10398 = vmatprep.subr.bf16.mxu0 0
    %10399 = vmatpush1.bf16.msra.mxu0 %v7484
    %10400 = vmatprep.subr.bf16.mxu0 0
    %10401 = vmatpush1.bf16.msra.mxu0 %v7485
    %10402 = vmatprep.subr.bf16.mxu0 0
    %10403 = vmatpush1.bf16.msra.mxu0 %v7486
    %10404 = vmatprep.subr.bf16.mxu0 0
    %10405 = vmatpush1.bf16.msra.mxu0 %v7487
    %10406 = vmatprep.subr.bf16.mxu0 0
    %10407 = vmatpush1.bf16.msra.mxu0 %v7488
    %10408 = vmatprep.subr.bf16.mxu0 0
    %10409 = vmatpush1.bf16.msra.mxu0 %v7489
    %10410 = vmatprep.subr.bf16.mxu0 0
    %10411 = vmatpush1.bf16.msra.mxu0 %v7490
    %10412 = vmatprep.subr.bf16.mxu0 0
    %10413 = vmatpush1.bf16.msra.mxu0 %v7491
    %10414 = vmatprep.subr.bf16.mxu0 0
    %10415 = vmatpush1.bf16.msra.mxu0 %v7492
    %10416 = vmatprep.subr.bf16.mxu0 0
    %10417 = vmatpush1.bf16.msra.mxu0 %v7493
    %10418 = vmatprep.subr.bf16.mxu0 0
    %10419 = vmatpush1.bf16.msra.mxu0 %v7494
    %10420 = vmatprep.subr.bf16.mxu0 0
    %10421 = vmatpush1.bf16.msra.mxu0 %v7495
    %10422 = vmatprep.subr.bf16.mxu0 0
    %10423 = vmatpush1.bf16.msra.mxu0 %v7496
    %10424 = vmatprep.subr.bf16.mxu0 0
    %10425 = vmatpush1.bf16.msra.mxu0 %v7497
    %10426 = vmatprep.mubr.bf16.mxu0 %v2459
    %10427 = vmatmul.mubr.bf16.gmra.mrb[0].mxu0 %v2451
    %v10428 = vpop.f32.mrb[0].mxu0
    %v10429 = vadd.f32 %v10389, %v10428
    %v10430 = vpop.f32.mrb[0].mxu0
    %v10431 = vpop.f32.mrb[0].mxu0
    %v10432 = vpop.f32.mrb[0].mxu0
    %10433 = vdwg.mxu0
    %10434 = vmatprep.subr.bf16.mxu0 0
    %10435 = vmatpush1.bf16.msra.mxu0 %v7498
    %10436 = vmatprep.subr.bf16.mxu0 0
    %10437 = vmatpush1.bf16.msra.mxu0 %v7499
    %10438 = vmatprep.subr.bf16.mxu0 0
    %10439 = vmatpush1.bf16.msra.mxu0 %v7500
    %10440 = vmatprep.subr.bf16.mxu0 0
    %10441 = vmatpush1.bf16.msra.mxu0 %v7501
    %10442 = vmatprep.subr.bf16.mxu0 0
    %10443 = vmatpush1.bf16.msra.mxu0 %v7502
    %10444 = vmatprep.subr.bf16.mxu0 0
    %10445 = vmatpush1.bf16.msra.mxu0 %v7503
    %10446 = vmatprep.subr.bf16.mxu0 0
    %10447 = vmatpush1.bf16.msra.mxu0 %v7504
    %10448 = vmatprep.subr.bf16.mxu0 0
    %10449 = vmatpush1.bf16.msra.mxu0 %v7505
    %10450 = vmatprep.subr.bf16.mxu0 0
    %10451 = vmatpush1.bf16.msra.mxu0 %v7506
    %10452 = vmatprep.subr.bf16.mxu0 0
    %10453 = vmatpush1.bf16.msra.mxu0 %v7507
    %10454 = vmatprep.subr.bf16.mxu0 0
    %10455 = vmatpush1.bf16.msra.mxu0 %v7508
    %10456 = vmatprep.subr.bf16.mxu0 0
    %10457 = vmatpush1.bf16.msra.mxu0 %v7509
    %10458 = vmatprep.subr.bf16.mxu0 0
    %10459 = vmatpush1.bf16.msra.mxu0 %v7510
    %10460 = vmatprep.subr.bf16.mxu0 0
    %10461 = vmatpush1.bf16.msra.mxu0 %v7511
    %10462 = vmatprep.subr.bf16.mxu0 0
    %10463 = vmatpush1.bf16.msra.mxu0 %v7512
    %10464 = vmatprep.subr.bf16.mxu0 0
    %10465 = vmatpush1.bf16.msra.mxu0 %v7513
    %10466 = vmatprep.mubr.bf16.mxu0 %v2460
    %10467 = vmatmul.mubr.bf16.gmra.mrb[0].mxu0 %v2458
    %v10468 = vpop.f32.mrb[0].mxu0
    %v10469 = vadd.f32 %v10429, %v10468
    %v10470 = vpop.f32.mrb[0].mxu0
    %v10471 = vpop.f32.mrb[0].mxu0
    %v10472 = vpop.f32.mrb[0].mxu0
    %10473 = vdwg.mxu0
    %10474 = vmatprep.subr.bf16.mxu0 0
    %10475 = vmatpush1.bf16.msra.mxu0 %v7514
    %10476 = vmatprep.subr.bf16.mxu0 0
    %10477 = vmatpush1.bf16.msra.mxu0 %v7515
    %10478 = vmatprep.subr.bf16.mxu0 0
    %10479 = vmatpush1.bf16.msra.mxu0 %v7516
    %10480 = vmatprep.subr.bf16.mxu0 0
    %10481 = vmatpush1.bf16.msra.mxu0 %v7517
    %10482 = vmatprep.subr.bf16.mxu0 0
    %10483 = vmatpush1.bf16.msra.mxu0 %v7518
    %10484 = vmatprep.subr.bf16.mxu0 0
    %10485 = vmatpush1.bf16.msra.mxu0 %v7519
    %10486 = vmatprep.subr.bf16.mxu0 0
    %10487 = vmatpush1.bf16.msra.mxu0 %v7520
    %10488 = vmatprep.subr.bf16.mxu0 0
    %10489 = vmatpush1.bf16.msra.mxu0 %v7521
    %10490 = vmatprep.subr.bf16.mxu0 0
    %10491 = vmatpush1.bf16.msra.mxu0 %v7522
    %10492 = vmatprep.subr.bf16.mxu0 0
    %10493 = vmatpush1.bf16.msra.mxu0 %v7523
    %10494 = vmatprep.subr.bf16.mxu0 0
    %10495 = vmatpush1.bf16.msra.mxu0 %v7524
    %10496 = vmatprep.subr.bf16.mxu0 0
    %10497 = vmatpush1.bf16.msra.mxu0 %v7525
    %10498 = vmatprep.subr.bf16.mxu0 0
    %10499 = vmatpush1.bf16.msra.mxu0 %v7526
    %10500 = vmatprep.subr.bf16.mxu0 0
    %10501 = vmatpush1.bf16.msra.mxu0 %v7527
    %10502 = vmatprep.subr.bf16.mxu0 0
    %10503 = vmatpush1.bf16.msra.mxu0 %v7528
    %10504 = vmatprep.subr.bf16.mxu0 0
    %10505 = vmatpush1.bf16.msra.mxu0 %v7529
    %10506 = vmatprep.mubr.bf16.mxu0 %v2476
    %10507 = vmatmul.mubr.bf16.gmra.mrb[0].mxu0 %v2468
    %v10508 = vpop.f32.mrb[0].mxu0
    %v10509 = vadd.f32 %v10469, %v10508
    %v10510 = vpop.f32.mrb[0].mxu0
    %v10511 = vpop.f32.mrb[0].mxu0
    %v10512 = vpop.f32.mrb[0].mxu0
    %10513 = vdwg.mxu0
    %10514 = vmatprep.subr.bf16.mxu0 0
    %10515 = vmatpush1.bf16.msra.mxu0 %v7530
    %10516 = vmatprep.subr.bf16.mxu0 0
    %10517 = vmatpush1.bf16.msra.mxu0 %v7531
    %10518 = vmatprep.subr.bf16.mxu0 0
    %10519 = vmatpush1.bf16.msra.mxu0 %v7532
    %10520 = vmatprep.subr.bf16.mxu0 0
    %10521 = vmatpush1.bf16.msra.mxu0 %v7533
    %10522 = vmatprep.subr.bf16.mxu0 0
    %10523 = vmatpush1.bf16.msra.mxu0 %v7534
    %10524 = vmatprep.subr.bf16.mxu0 0
    %10525 = vmatpush1.bf16.msra.mxu0 %v7535
    %10526 = vmatprep.subr.bf16.mxu0 0
    %10527 = vmatpush1.bf16.msra.mxu0 %v7536
    %10528 = vmatprep.subr.bf16.mxu0 0
    %10529 = vmatpush1.bf16.msra.mxu0 %v7537
    %10530 = vmatprep.subr.bf16.mxu0 0
    %10531 = vmatpush1.bf16.msra.mxu0 %v7538
    %10532 = vmatprep.subr.bf16.mxu0 0
    %10533 = vmatpush1.bf16.msra.mxu0 %v7539
    %10534 = vmatprep.subr.bf16.mxu0 0
    %10535 = vmatpush1.bf16.msra.mxu0 %v7540
    %10536 = vmatprep.subr.bf16.mxu0 0
    %10537 = vmatpush1.bf16.msra.mxu0 %v7541
    %10538 = vmatprep.subr.bf16.mxu0 0
    %10539 = vmatpush1.bf16.msra.mxu0 %v7542
    %10540 = vmatprep.subr.bf16.mxu0 0
    %10541 = vmatpush1.bf16.msra.mxu0 %v7543
    %10542 = vmatprep.subr.bf16.mxu0 0
    %10543 = vmatpush1.bf16.msra.mxu0 %v7544
    %10544 = vmatprep.subr.bf16.mxu0 0
    %10545 = vmatpush1.bf16.msra.mxu0 %v7545
    %10546 = vmatprep.mubr.bf16.mxu0 %v2477
    %10547 = vmatmul.mubr.bf16.gmra.mrb[0].mxu0 %v2475
    %v10548 = vpop.f32.mrb[0].mxu0
    %v10549 = vadd.f32 %v10509, %v10548
    %v10550 = vpop.f32.mrb[0].mxu0
    %v10551 = vpop.f32.mrb[0].mxu0
    %v10552 = vpop.f32.mrb[0].mxu0
    %10553 = vdwg.mxu0
    %10554 = vmatprep.subr.bf16.mxu0 0
    %10555 = vmatpush1.bf16.msra.mxu0 %v7546
    %10556 = vmatprep.subr.bf16.mxu0 0
    %10557 = vmatpush1.bf16.msra.mxu0 %v7547
    %10558 = vmatprep.subr.bf16.mxu0 0
    %10559 = vmatpush1.bf16.msra.mxu0 %v7548
    %10560 = vmatprep.subr.bf16.mxu0 0
    %10561 = vmatpush1.bf16.msra.mxu0 %v7549
    %10562 = vmatprep.subr.bf16.mxu0 0
    %10563 = vmatpush1.bf16.msra.mxu0 %v7550
    %10564 = vmatprep.subr.bf16.mxu0 0
    %10565 = vmatpush1.bf16.msra.mxu0 %v7551
    %10566 = vmatprep.subr.bf16.mxu0 0
    %10567 = vmatpush1.bf16.msra.mxu0 %v7552
    %10568 = vmatprep.subr.bf16.mxu0 0
    %10569 = vmatpush1.bf16.msra.mxu0 %v7553
    %10570 = vmatprep.subr.bf16.mxu0 0
    %10571 = vmatpush1.bf16.msra.mxu0 %v7554
    %10572 = vmatprep.subr.bf16.mxu0 0
    %10573 = vmatpush1.bf16.msra.mxu0 %v7555
    %10574 = vmatprep.subr.bf16.mxu0 0
    %10575 = vmatpush1.bf16.msra.mxu0 %v7556
    %10576 = vmatprep.subr.bf16.mxu0 0
    %10577 = vmatpush1.bf16.msra.mxu0 %v7557
    %10578 = vmatprep.subr.bf16.mxu0 0
    %10579 = vmatpush1.bf16.msra.mxu0 %v7558
    %10580 = vmatprep.subr.bf16.mxu0 0
    %10581 = vmatpush1.bf16.msra.mxu0 %v7559
    %10582 = vmatprep.subr.bf16.mxu0 0
    %10583 = vmatpush1.bf16.msra.mxu0 %v7560
    %10584 = vmatprep.subr.bf16.mxu0 0
    %10585 = vmatpush1.bf16.msra.mxu0 %v7561
    %10586 = vmatprep.mubr.bf16.mxu0 %v2493
    %10587 = vmatmul.mubr.bf16.gmra.mrb[0].mxu0 %v2485
    %v10588 = vpop.f32.mrb[0].mxu0
    %v10589 = vadd.f32 %v10549, %v10588
    %v10590 = vpop.f32.mrb[0].mxu0
    %v10591 = vpop.f32.mrb[0].mxu0
    %v10592 = vpop.f32.mrb[0].mxu0
    %10593 = vdwg.mxu0
    %10594 = vmatprep.subr.bf16.mxu0 0
    %10595 = vmatpush1.bf16.msra.mxu0 %v7562
    %10596 = vmatprep.subr.bf16.mxu0 0
    %10597 = vmatpush1.bf16.msra.mxu0 %v7563
    %10598 = vmatprep.subr.bf16.mxu0 0
    %10599 = vmatpush1.bf16.msra.mxu0 %v7564
    %10600 = vmatprep.subr.bf16.mxu0 0
    %10601 = vmatpush1.bf16.msra.mxu0 %v7565
    %10602 = vmatprep.subr.bf16.mxu0 0
    %10603 = vmatpush1.bf16.msra.mxu0 %v7566
    %10604 = vmatprep.subr.bf16.mxu0 0
    %10605 = vmatpush1.bf16.msra.mxu0 %v7567
    %10606 = vmatprep.subr.bf16.mxu0 0
    %10607 = vmatpush1.bf16.msra.mxu0 %v7568
    %10608 = vmatprep.subr.bf16.mxu0 0
    %10609 = vmatpush1.bf16.msra.mxu0 %v7569
    %10610 = vmatprep.subr.bf16.mxu0 0
    %10611 = vmatpush1.bf16.msra.mxu0 %v7570
    %10612 = vmatprep.subr.bf16.mxu0 0
    %10613 = vmatpush1.bf16.msra.mxu0 %v7571
    %10614 = vmatprep.subr.bf16.mxu0 0
    %10615 = vmatpush1.bf16.msra.mxu0 %v7572
    %10616 = vmatprep.subr.bf16.mxu0 0
    %10617 = vmatpush1.bf16.msra.mxu0 %v7573
    %10618 = vmatprep.subr.bf16.mxu0 0
    %10619 = vmatpush1.bf16.msra.mxu0 %v7574
    %10620 = vmatprep.subr.bf16.mxu0 0
    %10621 = vmatpush1.bf16.msra.mxu0 %v7575
    %10622 = vmatprep.subr.bf16.mxu0 0
    %10623 = vmatpush1.bf16.msra.mxu0 %v7576
    %10624 = vmatprep.subr.bf16.mxu0 0
    %10625 = vmatpush1.bf16.msra.mxu0 %v7577
    %10626 = vmatprep.mubr.bf16.mxu0 %v2494
    %10627 = vmatmul.mubr.bf16.gmra.mrb[0].mxu0 %v2492
    %v10628 = vpop.f32.mrb[0].mxu0
    %v10629 = vadd.f32 %v10589, %v10628
    %v10630 = vpop.f32.mrb[0].mxu0
    %v10631 = vpop.f32.mrb[0].mxu0
    %v10632 = vpop.f32.mrb[0].mxu0
    %10633 = vdwg.mxu0
    %10634 = vmatprep.subr.bf16.mxu0 0
    %10635 = vmatpush1.bf16.msra.mxu0 %v7578
    %10636 = vmatprep.subr.bf16.mxu0 0
    %10637 = vmatpush1.bf16.msra.mxu0 %v7579
    %10638 = vmatprep.subr.bf16.mxu0 0
    %10639 = vmatpush1.bf16.msra.mxu0 %v7580
    %10640 = vmatprep.subr.bf16.mxu0 0
    %10641 = vmatpush1.bf16.msra.mxu0 %v7581
    %10642 = vmatprep.subr.bf16.mxu0 0
    %10643 = vmatpush1.bf16.msra.mxu0 %v7582
    %10644 = vmatprep.subr.bf16.mxu0 0
    %10645 = vmatpush1.bf16.msra.mxu0 %v7583
    %10646 = vmatprep.subr.bf16.mxu0 0
    %10647 = vmatpush1.bf16.msra.mxu0 %v7584
    %10648 = vmatprep.subr.bf16.mxu0 0
    %10649 = vmatpush1.bf16.msra.mxu0 %v7585
    %10650 = vmatprep.subr.bf16.mxu0 0
    %10651 = vmatpush1.bf16.msra.mxu0 %v7586
    %10652 = vmatprep.subr.bf16.mxu0 0
    %10653 = vmatpush1.bf16.msra.mxu0 %v7587
    %10654 = vmatprep.subr.bf16.mxu0 0
    %10655 = vmatpush1.bf16.msra.mxu0 %v7588
    %10656 = vmatprep.subr.bf16.mxu0 0
    %10657 = vmatpush1.bf16.msra.mxu0 %v7589
    %10658 = vmatprep.subr.bf16.mxu0 0
    %10659 = vmatpush1.bf16.msra.mxu0 %v7590
    %10660 = vmatprep.subr.bf16.mxu0 0
    %10661 = vmatpush1.bf16.msra.mxu0 %v7591
    %10662 = vmatprep.subr.bf16.mxu0 0
    %10663 = vmatpush1.bf16.msra.mxu0 %v7592
    %10664 = vmatprep.subr.bf16.mxu0 0
    %10665 = vmatpush1.bf16.msra.mxu0 %v7593
    %10666 = vmatprep.mubr.bf16.mxu0 %v2510
    %10667 = vmatmul.mubr.bf16.gmra.mrb[0].mxu0 %v2502
    %v10668 = vpop.f32.mrb[0].mxu0
    %v10669 = vadd.f32 %v10629, %v10668
    %v10670 = vpop.f32.mrb[0].mxu0
    %v10671 = vpop.f32.mrb[0].mxu0
    %v10672 = vpop.f32.mrb[0].mxu0
    %10673 = vdwg.mxu0
    %10674 = vmatprep.subr.bf16.mxu0 0
    %10675 = vmatpush1.bf16.msra.mxu0 %v7594
    %10676 = vmatprep.subr.bf16.mxu0 0
    %10677 = vmatpush1.bf16.msra.mxu0 %v7595
    %10678 = vmatprep.subr.bf16.mxu0 0
    %10679 = vmatpush1.bf16.msra.mxu0 %v7596
    %10680 = vmatprep.subr.bf16.mxu0 0
    %10681 = vmatpush1.bf16.msra.mxu0 %v7597
    %10682 = vmatprep.subr.bf16.mxu0 0
    %10683 = vmatpush1.bf16.msra.mxu0 %v7598
    %10684 = vmatprep.subr.bf16.mxu0 0
    %10685 = vmatpush1.bf16.msra.mxu0 %v7599
    %10686 = vmatprep.subr.bf16.mxu0 0
    %10687 = vmatpush1.bf16.msra.mxu0 %v7600
    %10688 = vmatprep.subr.bf16.mxu0 0
    %10689 = vmatpush1.bf16.msra.mxu0 %v7601
    %10690 = vmatprep.subr.bf16.mxu0 0
    %10691 = vmatpush1.bf16.msra.mxu0 %v7602
    %10692 = vmatprep.subr.bf16.mxu0 0
    %10693 = vmatpush1.bf16.msra.mxu0 %v7603
    %10694 = vmatprep.subr.bf16.mxu0 0
    %10695 = vmatpush1.bf16.msra.mxu0 %v7604
    %10696 = vmatprep.subr.bf16.mxu0 0
    %10697 = vmatpush1.bf16.msra.mxu0 %v7605
    %10698 = vmatprep.subr.bf16.mxu0 0
    %10699 = vmatpush1.bf16.msra.mxu0 %v7606
    %10700 = vmatprep.subr.bf16.mxu0 0
    %10701 = vmatpush1.bf16.msra.mxu0 %v7607
    %10702 = vmatprep.subr.bf16.mxu0 0
    %10703 = vmatpush1.bf16.msra.mxu0 %v7608
    %10704 = vmatprep.subr.bf16.mxu0 0
    %10705 = vmatpush1.bf16.msra.mxu0 %v7609
    %10706 = vmatprep.mubr.bf16.mxu0 %v2511
    %10707 = vmatmul.mubr.bf16.gmra.mrb[0].mxu0 %v2509
    %v10708 = vpop.f32.mrb[0].mxu0
    %v10709 = vadd.f32 %v10669, %v10708
    %v10710 = vpop.f32.mrb[0].mxu0
    %v10711 = vpop.f32.mrb[0].mxu0
    %v10712 = vpop.f32.mrb[0].mxu0
    %10713 = vdwg.mxu0
    %10714 = vmatprep.subr.bf16.mxu0 0
    %10715 = vmatpush1.bf16.msra.mxu0 %v7610
    %10716 = vmatprep.subr.bf16.mxu0 0
    %10717 = vmatpush1.bf16.msra.mxu0 %v7611
    %10718 = vmatprep.subr.bf16.mxu0 0
    %10719 = vmatpush1.bf16.msra.mxu0 %v7612
    %10720 = vmatprep.subr.bf16.mxu0 0
    %10721 = vmatpush1.bf16.msra.mxu0 %v7613
    %10722 = vmatprep.subr.bf16.mxu0 0
    %10723 = vmatpush1.bf16.msra.mxu0 %v7614
    %10724 = vmatprep.subr.bf16.mxu0 0
    %10725 = vmatpush1.bf16.msra.mxu0 %v7615
    %10726 = vmatprep.subr.bf16.mxu0 0
    %10727 = vmatpush1.bf16.msra.mxu0 %v7616
    %10728 = vmatprep.subr.bf16.mxu0 0
    %10729 = vmatpush1.bf16.msra.mxu0 %v7617
    %10730 = vmatprep.subr.bf16.mxu0 0
    %10731 = vmatpush1.bf16.msra.mxu0 %v7618
    %10732 = vmatprep.subr.bf16.mxu0 0
    %10733 = vmatpush1.bf16.msra.mxu0 %v7619
    %10734 = vmatprep.subr.bf16.mxu0 0
    %10735 = vmatpush1.bf16.msra.mxu0 %v7620
    %10736 = vmatprep.subr.bf16.mxu0 0
    %10737 = vmatpush1.bf16.msra.mxu0 %v7621
    %10738 = vmatprep.subr.bf16.mxu0 0
    %10739 = vmatpush1.bf16.msra.mxu0 %v7622
    %10740 = vmatprep.subr.bf16.mxu0 0
    %10741 = vmatpush1.bf16.msra.mxu0 %v7623
    %10742 = vmatprep.subr.bf16.mxu0 0
    %10743 = vmatpush1.bf16.msra.mxu0 %v7624
    %10744 = vmatprep.subr.bf16.mxu0 0
    %10745 = vmatpush1.bf16.msra.mxu0 %v7625
    %10746 = vmatprep.mubr.bf16.mxu0 %v2527
    %10747 = vmatmul.mubr.bf16.gmra.mrb[0].mxu0 %v2519
    %v10748 = vpop.f32.mrb[0].mxu0
    %v10749 = vadd.f32 %v10709, %v10748
    %v10750 = vpop.f32.mrb[0].mxu0
    %v10751 = vpop.f32.mrb[0].mxu0
    %v10752 = vpop.f32.mrb[0].mxu0
    %10753 = vdwg.mxu0
    %10754 = vmatprep.subr.bf16.mxu0 0
    %10755 = vmatpush1.bf16.msra.mxu0 %v7626
    %10756 = vmatprep.subr.bf16.mxu0 0
    %10757 = vmatpush1.bf16.msra.mxu0 %v7627
    %10758 = vmatprep.subr.bf16.mxu0 0
    %10759 = vmatpush1.bf16.msra.mxu0 %v7628
    %10760 = vmatprep.subr.bf16.mxu0 0
    %10761 = vmatpush1.bf16.msra.mxu0 %v7629
    %10762 = vmatprep.subr.bf16.mxu0 0
    %10763 = vmatpush1.bf16.msra.mxu0 %v7630
    %10764 = vmatprep.subr.bf16.mxu0 0
    %10765 = vmatpush1.bf16.msra.mxu0 %v7631
    %10766 = vmatprep.subr.bf16.mxu0 0
    %10767 = vmatpush1.bf16.msra.mxu0 %v7632
    %10768 = vmatprep.subr.bf16.mxu0 0
    %10769 = vmatpush1.bf16.msra.mxu0 %v7633
    %10770 = vmatprep.subr.bf16.mxu0 0
    %10771 = vmatpush1.bf16.msra.mxu0 %v7634
    %10772 = vmatprep.subr.bf16.mxu0 0
    %10773 = vmatpush1.bf16.msra.mxu0 %v7635
    %10774 = vmatprep.subr.bf16.mxu0 0
    %10775 = vmatpush1.bf16.msra.mxu0 %v7636
    %10776 = vmatprep.subr.bf16.mxu0 0
    %10777 = vmatpush1.bf16.msra.mxu0 %v7637
    %10778 = vmatprep.subr.bf16.mxu0 0
    %10779 = vmatpush1.bf16.msra.mxu0 %v7638
    %10780 = vmatprep.subr.bf16.mxu0 0
    %10781 = vmatpush1.bf16.msra.mxu0 %v7639
    %10782 = vmatprep.subr.bf16.mxu0 0
    %10783 = vmatpush1.bf16.msra.mxu0 %v7640
    %10784 = vmatprep.subr.bf16.mxu0 0
    %10785 = vmatpush1.bf16.msra.mxu0 %v7641
    %10786 = vmatprep.mubr.bf16.mxu0 %v2528
    %10787 = vmatmul.mubr.bf16.gmra.mrb[0].mxu0 %v2526
    %v10788 = vpop.f32.mrb[0].mxu0
    %v10789 = vadd.f32 %v10749, %v10788
    %v10790 = vpop.f32.mrb[0].mxu0
    %v10791 = vpop.f32.mrb[0].mxu0
    %v10792 = vpop.f32.mrb[0].mxu0
    %10793 = vdwg.mxu0
    %10794 = vmatprep.subr.bf16.mxu0 0
    %10795 = vmatpush1.bf16.msra.mxu0 %v7642
    %10796 = vmatprep.subr.bf16.mxu0 0
    %10797 = vmatpush1.bf16.msra.mxu0 %v7643
    %10798 = vmatprep.subr.bf16.mxu0 0
    %10799 = vmatpush1.bf16.msra.mxu0 %v7644
    %10800 = vmatprep.subr.bf16.mxu0 0
    %10801 = vmatpush1.bf16.msra.mxu0 %v7645
    %10802 = vmatprep.subr.bf16.mxu0 0
    %10803 = vmatpush1.bf16.msra.mxu0 %v7646
    %10804 = vmatprep.subr.bf16.mxu0 0
    %10805 = vmatpush1.bf16.msra.mxu0 %v7647
    %10806 = vmatprep.subr.bf16.mxu0 0
    %10807 = vmatpush1.bf16.msra.mxu0 %v7648
    %10808 = vmatprep.subr.bf16.mxu0 0
    %10809 = vmatpush1.bf16.msra.mxu0 %v7649
    %10810 = vmatprep.subr.bf16.mxu0 0
    %10811 = vmatpush1.bf16.msra.mxu0 %v7650
    %10812 = vmatprep.subr.bf16.mxu0 0
    %10813 = vmatpush1.bf16.msra.mxu0 %v7651
    %10814 = vmatprep.subr.bf16.mxu0 0
    %10815 = vmatpush1.bf16.msra.mxu0 %v7652
    %10816 = vmatprep.subr.bf16.mxu0 0
    %10817 = vmatpush1.bf16.msra.mxu0 %v7653
    %10818 = vmatprep.subr.bf16.mxu0 0
    %10819 = vmatpush1.bf16.msra.mxu0 %v7654
    %10820 = vmatprep.subr.bf16.mxu0 0
    %10821 = vmatpush1.bf16.msra.mxu0 %v7655
    %10822 = vmatprep.subr.bf16.mxu0 0
    %10823 = vmatpush1.bf16.msra.mxu0 %v7656
    %10824 = vmatprep.subr.bf16.mxu0 0
    %10825 = vmatpush1.bf16.msra.mxu0 %v7657
    %10826 = vmatprep.mubr.bf16.mxu0 %v2544
    %10827 = vmatmul.mubr.bf16.gmra.mrb[0].mxu0 %v2536
    %v10828 = vpop.f32.mrb[0].mxu0
    %v10829 = vadd.f32 %v10789, %v10828
    %v10830 = vpop.f32.mrb[0].mxu0
    %v10831 = vpop.f32.mrb[0].mxu0
    %v10832 = vpop.f32.mrb[0].mxu0
    %10833 = vdwg.mxu0
    %10834 = vmatprep.subr.bf16.mxu0 0
    %10835 = vmatpush1.bf16.msra.mxu0 %v7658
    %10836 = vmatprep.subr.bf16.mxu0 0
    %10837 = vmatpush1.bf16.msra.mxu0 %v7659
    %10838 = vmatprep.subr.bf16.mxu0 0
    %10839 = vmatpush1.bf16.msra.mxu0 %v7660
    %10840 = vmatprep.subr.bf16.mxu0 0
    %10841 = vmatpush1.bf16.msra.mxu0 %v7661
    %10842 = vmatprep.subr.bf16.mxu0 0
    %10843 = vmatpush1.bf16.msra.mxu0 %v7662
    %10844 = vmatprep.subr.bf16.mxu0 0
    %10845 = vmatpush1.bf16.msra.mxu0 %v7663
    %10846 = vmatprep.subr.bf16.mxu0 0
    %10847 = vmatpush1.bf16.msra.mxu0 %v7664
    %10848 = vmatprep.subr.bf16.mxu0 0
    %10849 = vmatpush1.bf16.msra.mxu0 %v7665
    %10850 = vmatprep.subr.bf16.mxu0 0
    %10851 = vmatpush1.bf16.msra.mxu0 %v7666
    %10852 = vmatprep.subr.bf16.mxu0 0
    %10853 = vmatpush1.bf16.msra.mxu0 %v7667
    %10854 = vmatprep.subr.bf16.mxu0 0
    %10855 = vmatpush1.bf16.msra.mxu0 %v7668
    %10856 = vmatprep.subr.bf16.mxu0 0
    %10857 = vmatpush1.bf16.msra.mxu0 %v7669
    %10858 = vmatprep.subr.bf16.mxu0 0
    %10859 = vmatpush1.bf16.msra.mxu0 %v7670
    %10860 = vmatprep.subr.bf16.mxu0 0
    %10861 = vmatpush1.bf16.msra.mxu0 %v7671
    %10862 = vmatprep.subr.bf16.mxu0 0
    %10863 = vmatpush1.bf16.msra.mxu0 %v7672
    %10864 = vmatprep.subr.bf16.mxu0 0
    %10865 = vmatpush1.bf16.msra.mxu0 %v7673
    %10866 = vmatprep.mubr.bf16.mxu0 %v2545
    %10867 = vmatmul.mubr.bf16.gmra.mrb[0].mxu0 %v2543
    %v10868 = vpop.f32.mrb[0].mxu0
    %v10869 = vadd.f32 %v10829, %v10868
    %v10870 = vpop.f32.mrb[0].mxu0
    %v10871 = vpop.f32.mrb[0].mxu0
    %v10872 = vpop.f32.mrb[0].mxu0
    %10873 = vdwg.mxu0
    %10874 = vmatprep.subr.bf16.mxu0 0
    %10875 = vmatpush1.bf16.msra.mxu0 %v7674
    %10876 = vmatprep.subr.bf16.mxu0 0
    %10877 = vmatpush1.bf16.msra.mxu0 %v7675
    %10878 = vmatprep.subr.bf16.mxu0 0
    %10879 = vmatpush1.bf16.msra.mxu0 %v7676
    %10880 = vmatprep.subr.bf16.mxu0 0
    %10881 = vmatpush1.bf16.msra.mxu0 %v7677
    %10882 = vmatprep.subr.bf16.mxu0 0
    %10883 = vmatpush1.bf16.msra.mxu0 %v7678
    %10884 = vmatprep.subr.bf16.mxu0 0
    %10885 = vmatpush1.bf16.msra.mxu0 %v7679
    %10886 = vmatprep.subr.bf16.mxu0 0
    %10887 = vmatpush1.bf16.msra.mxu0 %v7680
    %10888 = vmatprep.subr.bf16.mxu0 0
    %10889 = vmatpush1.bf16.msra.mxu0 %v7681
    %10890 = vmatprep.subr.bf16.mxu0 0
    %10891 = vmatpush1.bf16.msra.mxu0 %v7682
    %10892 = vmatprep.subr.bf16.mxu0 0
    %10893 = vmatpush1.bf16.msra.mxu0 %v7683
    %10894 = vmatprep.subr.bf16.mxu0 0
    %10895 = vmatpush1.bf16.msra.mxu0 %v7684
    %10896 = vmatprep.subr.bf16.mxu0 0
    %10897 = vmatpush1.bf16.msra.mxu0 %v7685
    %10898 = vmatprep.subr.bf16.mxu0 0
    %10899 = vmatpush1.bf16.msra.mxu0 %v7686
    %10900 = vmatprep.subr.bf16.mxu0 0
    %10901 = vmatpush1.bf16.msra.mxu0 %v7687
    %10902 = vmatprep.subr.bf16.mxu0 0
    %10903 = vmatpush1.bf16.msra.mxu0 %v7688
    %10904 = vmatprep.subr.bf16.mxu0 0
    %10905 = vmatpush1.bf16.msra.mxu0 %v7689
    %10906 = vmatprep.mubr.bf16.mxu0 %v2561
    %10907 = vmatmul.mubr.bf16.gmra.mrb[0].mxu0 %v2553
    %v10908 = vpop.f32.mrb[0].mxu0
    %v10909 = vadd.f32 %v10869, %v10908
    %v10910 = vpop.f32.mrb[0].mxu0
    %v10911 = vpop.f32.mrb[0].mxu0
    %v10912 = vpop.f32.mrb[0].mxu0
    %10913 = vdwg.mxu0
    %10914 = vmatprep.subr.bf16.mxu0 0
    %10915 = vmatpush1.bf16.msra.mxu0 %v7690
    %10916 = vmatprep.subr.bf16.mxu0 0
    %10917 = vmatpush1.bf16.msra.mxu0 %v7691
    %10918 = vmatprep.subr.bf16.mxu0 0
    %10919 = vmatpush1.bf16.msra.mxu0 %v7692
    %10920 = vmatprep.subr.bf16.mxu0 0
    %10921 = vmatpush1.bf16.msra.mxu0 %v7693
    %10922 = vmatprep.subr.bf16.mxu0 0
    %10923 = vmatpush1.bf16.msra.mxu0 %v7694
    %10924 = vmatprep.subr.bf16.mxu0 0
    %10925 = vmatpush1.bf16.msra.mxu0 %v7695
    %10926 = vmatprep.subr.bf16.mxu0 0
    %10927 = vmatpush1.bf16.msra.mxu0 %v7696
    %10928 = vmatprep.subr.bf16.mxu0 0
    %10929 = vmatpush1.bf16.msra.mxu0 %v7697
    %10930 = vmatprep.subr.bf16.mxu0 0
    %10931 = vmatpush1.bf16.msra.mxu0 %v7698
    %10932 = vmatprep.subr.bf16.mxu0 0
    %10933 = vmatpush1.bf16.msra.mxu0 %v7699
    %10934 = vmatprep.subr.bf16.mxu0 0
    %10935 = vmatpush1.bf16.msra.mxu0 %v7700
    %10936 = vmatprep.subr.bf16.mxu0 0
    %10937 = vmatpush1.bf16.msra.mxu0 %v7701
    %10938 = vmatprep.subr.bf16.mxu0 0
    %10939 = vmatpush1.bf16.msra.mxu0 %v7702
    %10940 = vmatprep.subr.bf16.mxu0 0
    %10941 = vmatpush1.bf16.msra.mxu0 %v7703
    %10942 = vmatprep.subr.bf16.mxu0 0
    %10943 = vmatpush1.bf16.msra.mxu0 %v7704
    %10944 = vmatprep.subr.bf16.mxu0 0
    %10945 = vmatpush1.bf16.msra.mxu0 %v7705
    %10946 = vmatprep.mubr.bf16.mxu0 %v2562
    %10947 = vmatmul.mubr.bf16.gmra.mrb[0].mxu0 %v2560
    %v10948 = vpop.f32.mrb[0].mxu0
    %v10949 = vadd.f32 %v10909, %v10948
    %v10950 = vpop.f32.mrb[0].mxu0
    %v10951 = vpop.f32.mrb[0].mxu0
    %v10952 = vpop.f32.mrb[0].mxu0
    %10953 = vdwg.mxu0
    %10954 = vmatprep.subr.bf16.mxu0 0
    %10955 = vmatpush1.bf16.msra.mxu0 %v7706
    %10956 = vmatprep.subr.bf16.mxu0 0
    %10957 = vmatpush1.bf16.msra.mxu0 %v7707
    %10958 = vmatprep.subr.bf16.mxu0 0
    %10959 = vmatpush1.bf16.msra.mxu0 %v7708
    %10960 = vmatprep.subr.bf16.mxu0 0
    %10961 = vmatpush1.bf16.msra.mxu0 %v7709
    %10962 = vmatprep.subr.bf16.mxu0 0
    %10963 = vmatpush1.bf16.msra.mxu0 %v7710
    %10964 = vmatprep.subr.bf16.mxu0 0
    %10965 = vmatpush1.bf16.msra.mxu0 %v7711
    %10966 = vmatprep.subr.bf16.mxu0 0
    %10967 = vmatpush1.bf16.msra.mxu0 %v7712
    %10968 = vmatprep.subr.bf16.mxu0 0
    %10969 = vmatpush1.bf16.msra.mxu0 %v7713
    %10970 = vmatprep.subr.bf16.mxu0 0
    %10971 = vmatpush1.bf16.msra.mxu0 %v7714
    %10972 = vmatprep.subr.bf16.mxu0 0
    %10973 = vmatpush1.bf16.msra.mxu0 %v7715
    %10974 = vmatprep.subr.bf16.mxu0 0
    %10975 = vmatpush1.bf16.msra.mxu0 %v7716
    %10976 = vmatprep.subr.bf16.mxu0 0
    %10977 = vmatpush1.bf16.msra.mxu0 %v7717
    %10978 = vmatprep.subr.bf16.mxu0 0
    %10979 = vmatpush1.bf16.msra.mxu0 %v7718
    %10980 = vmatprep.subr.bf16.mxu0 0
    %10981 = vmatpush1.bf16.msra.mxu0 %v7719
    %10982 = vmatprep.subr.bf16.mxu0 0
    %10983 = vmatpush1.bf16.msra.mxu0 %v7720
    %10984 = vmatprep.subr.bf16.mxu0 0
    %10985 = vmatpush1.bf16.msra.mxu0 %v7721
    %10986 = vmatprep.mubr.bf16.mxu0 %v2578
    %10987 = vmatmul.mubr.bf16.gmra.mrb[0].mxu0 %v2570
    %v10988 = vpop.f32.mrb[0].mxu0
    %v10989 = vadd.f32 %v10949, %v10988
    %v10990 = vpop.f32.mrb[0].mxu0
    %v10991 = vpop.f32.mrb[0].mxu0
    %v10992 = vpop.f32.mrb[0].mxu0
    %10993 = vdwg.mxu0
    %10994 = vmatprep.subr.bf16.mxu0 0
    %10995 = vmatpush1.bf16.msra.mxu0 %v7722
    %10996 = vmatprep.subr.bf16.mxu0 0
    %10997 = vmatpush1.bf16.msra.mxu0 %v7723
    %10998 = vmatprep.subr.bf16.mxu0 0
    %10999 = vmatpush1.bf16.msra.mxu0 %v7724
    %11000 = vmatprep.subr.bf16.mxu0 0
    %11001 = vmatpush1.bf16.msra.mxu0 %v7725
    %11002 = vmatprep.subr.bf16.mxu0 0
    %11003 = vmatpush1.bf16.msra.mxu0 %v7726
    %11004 = vmatprep.subr.bf16.mxu0 0
    %11005 = vmatpush1.bf16.msra.mxu0 %v7727
    %11006 = vmatprep.subr.bf16.mxu0 0
    %11007 = vmatpush1.bf16.msra.mxu0 %v7728
    %11008 = vmatprep.subr.bf16.mxu0 0
    %11009 = vmatpush1.bf16.msra.mxu0 %v7729
    %11010 = vmatprep.subr.bf16.mxu0 0
    %11011 = vmatpush1.bf16.msra.mxu0 %v7730
    %11012 = vmatprep.subr.bf16.mxu0 0
    %11013 = vmatpush1.bf16.msra.mxu0 %v7731
    %11014 = vmatprep.subr.bf16.mxu0 0
    %11015 = vmatpush1.bf16.msra.mxu0 %v7732
    %11016 = vmatprep.subr.bf16.mxu0 0
    %11017 = vmatpush1.bf16.msra.mxu0 %v7733
    %11018 = vmatprep.subr.bf16.mxu0 0
    %11019 = vmatpush1.bf16.msra.mxu0 %v7734
    %11020 = vmatprep.subr.bf16.mxu0 0
    %11021 = vmatpush1.bf16.msra.mxu0 %v7735
    %11022 = vmatprep.subr.bf16.mxu0 0
    %11023 = vmatpush1.bf16.msra.mxu0 %v7736
    %11024 = vmatprep.subr.bf16.mxu0 0
    %11025 = vmatpush1.bf16.msra.mxu0 %v7737
    %11026 = vmatprep.mubr.bf16.mxu0 %v2579
    %11027 = vmatmul.mubr.bf16.gmra.mrb[0].mxu0 %v2577
    %v11028 = vpop.f32.mrb[0].mxu0
    %v11029 = vadd.f32 %v10989, %v11028
    %v11030 = vpop.f32.mrb[0].mxu0
    %v11031 = vpop.f32.mrb[0].mxu0
    %v11032 = vpop.f32.mrb[0].mxu0
    %11033 = vdwg.mxu0
    %11034 = vmatprep.subr.bf16.mxu0 0
    %11035 = vmatpush1.bf16.msra.mxu0 %v7738
    %11036 = vmatprep.subr.bf16.mxu0 0
    %11037 = vmatpush1.bf16.msra.mxu0 %v7739
    %11038 = vmatprep.subr.bf16.mxu0 0
    %11039 = vmatpush1.bf16.msra.mxu0 %v7740
    %11040 = vmatprep.subr.bf16.mxu0 0
    %11041 = vmatpush1.bf16.msra.mxu0 %v7741
    %11042 = vmatprep.subr.bf16.mxu0 0
    %11043 = vmatpush1.bf16.msra.mxu0 %v7742
    %11044 = vmatprep.subr.bf16.mxu0 0
    %11045 = vmatpush1.bf16.msra.mxu0 %v7743
    %11046 = vmatprep.subr.bf16.mxu0 0
    %11047 = vmatpush1.bf16.msra.mxu0 %v7744
    %11048 = vmatprep.subr.bf16.mxu0 0
    %11049 = vmatpush1.bf16.msra.mxu0 %v7745
    %11050 = vmatprep.subr.bf16.mxu0 0
    %11051 = vmatpush1.bf16.msra.mxu0 %v7746
    %11052 = vmatprep.subr.bf16.mxu0 0
    %11053 = vmatpush1.bf16.msra.mxu0 %v7747
    %11054 = vmatprep.subr.bf16.mxu0 0
    %11055 = vmatpush1.bf16.msra.mxu0 %v7748
    %11056 = vmatprep.subr.bf16.mxu0 0
    %11057 = vmatpush1.bf16.msra.mxu0 %v7749
    %11058 = vmatprep.subr.bf16.mxu0 0
    %11059 = vmatpush1.bf16.msra.mxu0 %v7750
    %11060 = vmatprep.subr.bf16.mxu0 0
    %11061 = vmatpush1.bf16.msra.mxu0 %v7751
    %11062 = vmatprep.subr.bf16.mxu0 0
    %11063 = vmatpush1.bf16.msra.mxu0 %v7752
    %11064 = vmatprep.subr.bf16.mxu0 0
    %11065 = vmatpush1.bf16.msra.mxu0 %v7753
    %11066 = vmatprep.mubr.bf16.mxu0 %v2595
    %11067 = vmatmul.mubr.bf16.gmra.mrb[0].mxu0 %v2587
    %v11068 = vpop.f32.mrb[0].mxu0
    %v11069 = vadd.f32 %v11029, %v11068
    %v11070 = vpop.f32.mrb[0].mxu0
    %v11071 = vpop.f32.mrb[0].mxu0
    %v11072 = vpop.f32.mrb[0].mxu0
    %11073 = vdwg.mxu0
    %11074 = vmatprep.subr.bf16.mxu0 0
    %11075 = vmatpush1.bf16.msra.mxu0 %v7754
    %11076 = vmatprep.subr.bf16.mxu0 0
    %11077 = vmatpush1.bf16.msra.mxu0 %v7755
    %11078 = vmatprep.subr.bf16.mxu0 0
    %11079 = vmatpush1.bf16.msra.mxu0 %v7756
    %11080 = vmatprep.subr.bf16.mxu0 0
    %11081 = vmatpush1.bf16.msra.mxu0 %v7757
    %11082 = vmatprep.subr.bf16.mxu0 0
    %11083 = vmatpush1.bf16.msra.mxu0 %v7758
    %11084 = vmatprep.subr.bf16.mxu0 0
    %11085 = vmatpush1.bf16.msra.mxu0 %v7759
    %11086 = vmatprep.subr.bf16.mxu0 0
    %11087 = vmatpush1.bf16.msra.mxu0 %v7760
    %11088 = vmatprep.subr.bf16.mxu0 0
    %11089 = vmatpush1.bf16.msra.mxu0 %v7761
    %11090 = vmatprep.subr.bf16.mxu0 0
    %11091 = vmatpush1.bf16.msra.mxu0 %v7762
    %11092 = vmatprep.subr.bf16.mxu0 0
    %11093 = vmatpush1.bf16.msra.mxu0 %v7763
    %11094 = vmatprep.subr.bf16.mxu0 0
    %11095 = vmatpush1.bf16.msra.mxu0 %v7764
    %11096 = vmatprep.subr.bf16.mxu0 0
    %11097 = vmatpush1.bf16.msra.mxu0 %v7765
    %11098 = vmatprep.subr.bf16.mxu0 0
    %11099 = vmatpush1.bf16.msra.mxu0 %v7766
    %11100 = vmatprep.subr.bf16.mxu0 0
    %11101 = vmatpush1.bf16.msra.mxu0 %v7767
    %11102 = vmatprep.subr.bf16.mxu0 0
    %11103 = vmatpush1.bf16.msra.mxu0 %v7768
    %11104 = vmatprep.subr.bf16.mxu0 0
    %11105 = vmatpush1.bf16.msra.mxu0 %v7769
    %11106 = vmatprep.mubr.bf16.mxu0 %v2596
    %11107 = vmatmul.mubr.bf16.gmra.mrb[0].mxu0 %v2594
    %v11108 = vpop.f32.mrb[0].mxu0
    %v11109 = vadd.f32 %v11069, %v11108
    %v11110 = vpop.f32.mrb[0].mxu0
    %v11111 = vpop.f32.mrb[0].mxu0
    %v11112 = vpop.f32.mrb[0].mxu0
    %11113 = vdwg.mxu0
    %11114 = vmatprep.subr.bf16.mxu0 0
    %11115 = vmatpush1.bf16.msra.mxu0 %v7770
    %11116 = vmatprep.subr.bf16.mxu0 0
    %11117 = vmatpush1.bf16.msra.mxu0 %v7771
    %11118 = vmatprep.subr.bf16.mxu0 0
    %11119 = vmatpush1.bf16.msra.mxu0 %v7772
    %11120 = vmatprep.subr.bf16.mxu0 0
    %11121 = vmatpush1.bf16.msra.mxu0 %v7773
    %11122 = vmatprep.subr.bf16.mxu0 0
    %11123 = vmatpush1.bf16.msra.mxu0 %v7774
    %11124 = vmatprep.subr.bf16.mxu0 0
    %11125 = vmatpush1.bf16.msra.mxu0 %v7775
    %11126 = vmatprep.subr.bf16.mxu0 0
    %11127 = vmatpush1.bf16.msra.mxu0 %v7776
    %11128 = vmatprep.subr.bf16.mxu0 0
    %11129 = vmatpush1.bf16.msra.mxu0 %v7777
    %11130 = vmatprep.subr.bf16.mxu0 0
    %11131 = vmatpush1.bf16.msra.mxu0 %v7778
    %11132 = vmatprep.subr.bf16.mxu0 0
    %11133 = vmatpush1.bf16.msra.mxu0 %v7779
    %11134 = vmatprep.subr.bf16.mxu0 0
    %11135 = vmatpush1.bf16.msra.mxu0 %v7780
    %11136 = vmatprep.subr.bf16.mxu0 0
    %11137 = vmatpush1.bf16.msra.mxu0 %v7781
    %11138 = vmatprep.subr.bf16.mxu0 0
    %11139 = vmatpush1.bf16.msra.mxu0 %v7782
    %11140 = vmatprep.subr.bf16.mxu0 0
    %11141 = vmatpush1.bf16.msra.mxu0 %v7783
    %11142 = vmatprep.subr.bf16.mxu0 0
    %11143 = vmatpush1.bf16.msra.mxu0 %v7784
    %11144 = vmatprep.subr.bf16.mxu0 0
    %11145 = vmatpush1.bf16.msra.mxu0 %v7785
    %11146 = vmatprep.mubr.bf16.mxu0 %v2612
    %11147 = vmatmul.mubr.bf16.gmra.mrb[0].mxu0 %v2604
    %v11148 = vpop.f32.mrb[0].mxu0
    %v11149 = vadd.f32 %v11109, %v11148
    %v11150 = vpop.f32.mrb[0].mxu0
    %v11151 = vpop.f32.mrb[0].mxu0
    %v11152 = vpop.f32.mrb[0].mxu0
    %11153 = vdwg.mxu0
    %11154 = vmatprep.subr.bf16.mxu0 0
    %11155 = vmatpush1.bf16.msra.mxu0 %v7786
    %11156 = vmatprep.subr.bf16.mxu0 0
    %11157 = vmatpush1.bf16.msra.mxu0 %v7787
    %11158 = vmatprep.subr.bf16.mxu0 0
    %11159 = vmatpush1.bf16.msra.mxu0 %v7788
    %11160 = vmatprep.subr.bf16.mxu0 0
    %11161 = vmatpush1.bf16.msra.mxu0 %v7789
    %11162 = vmatprep.subr.bf16.mxu0 0
    %11163 = vmatpush1.bf16.msra.mxu0 %v7790
    %11164 = vmatprep.subr.bf16.mxu0 0
    %11165 = vmatpush1.bf16.msra.mxu0 %v7791
    %11166 = vmatprep.subr.bf16.mxu0 0
    %11167 = vmatpush1.bf16.msra.mxu0 %v7792
    %11168 = vmatprep.subr.bf16.mxu0 0
    %11169 = vmatpush1.bf16.msra.mxu0 %v7793
    %11170 = vmatprep.subr.bf16.mxu0 0
    %11171 = vmatpush1.bf16.msra.mxu0 %v7794
    %11172 = vmatprep.subr.bf16.mxu0 0
    %11173 = vmatpush1.bf16.msra.mxu0 %v7795
    %11174 = vmatprep.subr.bf16.mxu0 0
    %11175 = vmatpush1.bf16.msra.mxu0 %v7796
    %11176 = vmatprep.subr.bf16.mxu0 0
    %11177 = vmatpush1.bf16.msra.mxu0 %v7797
    %11178 = vmatprep.subr.bf16.mxu0 0
    %11179 = vmatpush1.bf16.msra.mxu0 %v7798
    %11180 = vmatprep.subr.bf16.mxu0 0
    %11181 = vmatpush1.bf16.msra.mxu0 %v7799
    %11182 = vmatprep.subr.bf16.mxu0 0
    %11183 = vmatpush1.bf16.msra.mxu0 %v7800
    %11184 = vmatprep.subr.bf16.mxu0 0
    %11185 = vmatpush1.bf16.msra.mxu0 %v7801
    %11186 = vmatprep.mubr.bf16.mxu0 %v2613
    %11187 = vmatmul.mubr.bf16.gmra.mrb[0].mxu0 %v2611
    %v11188 = vpop.f32.mrb[0].mxu0
    %v11189 = vadd.f32 %v11149, %v11188
    %v11190 = vpop.f32.mrb[0].mxu0
    %v11191 = vpop.f32.mrb[0].mxu0
    %v11192 = vpop.f32.mrb[0].mxu0
    %11193 = vdwg.mxu0
    %11194 = vmatprep.subr.bf16.mxu0 0
    %11195 = vmatpush1.bf16.msra.mxu0 %v7802
    %11196 = vmatprep.subr.bf16.mxu0 0
    %11197 = vmatpush1.bf16.msra.mxu0 %v7803
    %11198 = vmatprep.subr.bf16.mxu0 0
    %11199 = vmatpush1.bf16.msra.mxu0 %v7804
    %11200 = vmatprep.subr.bf16.mxu0 0
    %11201 = vmatpush1.bf16.msra.mxu0 %v7805
    %11202 = vmatprep.subr.bf16.mxu0 0
    %11203 = vmatpush1.bf16.msra.mxu0 %v7806
    %11204 = vmatprep.subr.bf16.mxu0 0
    %11205 = vmatpush1.bf16.msra.mxu0 %v7807
    %11206 = vmatprep.subr.bf16.mxu0 0
    %11207 = vmatpush1.bf16.msra.mxu0 %v7808
    %11208 = vmatprep.subr.bf16.mxu0 0
    %11209 = vmatpush1.bf16.msra.mxu0 %v7809
    %11210 = vmatprep.subr.bf16.mxu0 0
    %11211 = vmatpush1.bf16.msra.mxu0 %v7810
    %11212 = vmatprep.subr.bf16.mxu0 0
    %11213 = vmatpush1.bf16.msra.mxu0 %v7811
    %11214 = vmatprep.subr.bf16.mxu0 0
    %11215 = vmatpush1.bf16.msra.mxu0 %v7812
    %11216 = vmatprep.subr.bf16.mxu0 0
    %11217 = vmatpush1.bf16.msra.mxu0 %v7813
    %11218 = vmatprep.subr.bf16.mxu0 0
    %11219 = vmatpush1.bf16.msra.mxu0 %v7814
    %11220 = vmatprep.subr.bf16.mxu0 0
    %11221 = vmatpush1.bf16.msra.mxu0 %v7815
    %11222 = vmatprep.subr.bf16.mxu0 0
    %11223 = vmatpush1.bf16.msra.mxu0 %v7816
    %11224 = vmatprep.subr.bf16.mxu0 0
    %11225 = vmatpush1.bf16.msra.mxu0 %v7817
    %11226 = vmatprep.mubr.bf16.mxu0 %v2629
    %11227 = vmatmul.mubr.bf16.gmra.mrb[0].mxu0 %v2621
    %v11228 = vpop.f32.mrb[0].mxu0
    %v11229 = vadd.f32 %v11189, %v11228
    %v11230 = vpop.f32.mrb[0].mxu0
    %v11231 = vpop.f32.mrb[0].mxu0
    %v11232 = vpop.f32.mrb[0].mxu0
    %11233 = vdwg.mxu0
    %11234 = vmatprep.subr.bf16.mxu0 0
    %11235 = vmatpush1.bf16.msra.mxu0 %v7818
    %11236 = vmatprep.subr.bf16.mxu0 0
    %11237 = vmatpush1.bf16.msra.mxu0 %v7819
    %11238 = vmatprep.subr.bf16.mxu0 0
    %11239 = vmatpush1.bf16.msra.mxu0 %v7820
    %11240 = vmatprep.subr.bf16.mxu0 0
    %11241 = vmatpush1.bf16.msra.mxu0 %v7821
    %11242 = vmatprep.subr.bf16.mxu0 0
    %11243 = vmatpush1.bf16.msra.mxu0 %v7822
    %11244 = vmatprep.subr.bf16.mxu0 0
    %11245 = vmatpush1.bf16.msra.mxu0 %v7823
    %11246 = vmatprep.subr.bf16.mxu0 0
    %11247 = vmatpush1.bf16.msra.mxu0 %v7824
    %11248 = vmatprep.subr.bf16.mxu0 0
    %11249 = vmatpush1.bf16.msra.mxu0 %v7825
    %11250 = vmatprep.subr.bf16.mxu0 0
    %11251 = vmatpush1.bf16.msra.mxu0 %v7826
    %11252 = vmatprep.subr.bf16.mxu0 0
    %11253 = vmatpush1.bf16.msra.mxu0 %v7827
    %11254 = vmatprep.subr.bf16.mxu0 0
    %11255 = vmatpush1.bf16.msra.mxu0 %v7828
    %11256 = vmatprep.subr.bf16.mxu0 0
    %11257 = vmatpush1.bf16.msra.mxu0 %v7829
    %11258 = vmatprep.subr.bf16.mxu0 0
    %11259 = vmatpush1.bf16.msra.mxu0 %v7830
    %11260 = vmatprep.subr.bf16.mxu0 0
    %11261 = vmatpush1.bf16.msra.mxu0 %v7831
    %11262 = vmatprep.subr.bf16.mxu0 0
    %11263 = vmatpush1.bf16.msra.mxu0 %v7832
    %11264 = vmatprep.subr.bf16.mxu0 0
    %11265 = vmatpush1.bf16.msra.mxu0 %v7833
    %11266 = vmatprep.mubr.bf16.mxu0 %v2630
    %11267 = vmatmul.mubr.bf16.gmra.mrb[0].mxu0 %v2628
    %v11268 = vpop.f32.mrb[0].mxu0
    %v11269 = vadd.f32 %v11229, %v11268
    %v11270 = vpop.f32.mrb[0].mxu0
    %v11271 = vpop.f32.mrb[0].mxu0
    %v11272 = vpop.f32.mrb[0].mxu0
    %11273 = vdwg.mxu0
    %11274 = vmatprep.subr.bf16.mxu0 0
    %11275 = vmatpush1.bf16.msra.mxu0 %v7834
    %11276 = vmatprep.subr.bf16.mxu0 0
    %11277 = vmatpush1.bf16.msra.mxu0 %v7835
    %11278 = vmatprep.subr.bf16.mxu0 0
    %11279 = vmatpush1.bf16.msra.mxu0 %v7836
    %11280 = vmatprep.subr.bf16.mxu0 0
    %11281 = vmatpush1.bf16.msra.mxu0 %v7837
    %11282 = vmatprep.subr.bf16.mxu0 0
    %11283 = vmatpush1.bf16.msra.mxu0 %v7838
    %11284 = vmatprep.subr.bf16.mxu0 0
    %11285 = vmatpush1.bf16.msra.mxu0 %v7839
    %11286 = vmatprep.subr.bf16.mxu0 0
    %11287 = vmatpush1.bf16.msra.mxu0 %v7840
    %11288 = vmatprep.subr.bf16.mxu0 0
    %11289 = vmatpush1.bf16.msra.mxu0 %v7841
    %11290 = vmatprep.subr.bf16.mxu0 0
    %11291 = vmatpush1.bf16.msra.mxu0 %v7842
    %11292 = vmatprep.subr.bf16.mxu0 0
    %11293 = vmatpush1.bf16.msra.mxu0 %v7843
    %11294 = vmatprep.subr.bf16.mxu0 0
    %11295 = vmatpush1.bf16.msra.mxu0 %v7844
    %11296 = vmatprep.subr.bf16.mxu0 0
    %11297 = vmatpush1.bf16.msra.mxu0 %v7845
    %11298 = vmatprep.subr.bf16.mxu0 0
    %11299 = vmatpush1.bf16.msra.mxu0 %v7846
    %11300 = vmatprep.subr.bf16.mxu0 0
    %11301 = vmatpush1.bf16.msra.mxu0 %v7847
    %11302 = vmatprep.subr.bf16.mxu0 0
    %11303 = vmatpush1.bf16.msra.mxu0 %v7848
    %11304 = vmatprep.subr.bf16.mxu0 0
    %11305 = vmatpush1.bf16.msra.mxu0 %v7849
    %11306 = vmatprep.mubr.bf16.mxu0 %v2646
    %11307 = vmatmul.mubr.bf16.gmra.mrb[0].mxu0 %v2638
    %v11308 = vpop.f32.mrb[0].mxu0
    %v11309 = vadd.f32 %v11269, %v11308
    %v11310 = vpop.f32.mrb[0].mxu0
    %v11311 = vpop.f32.mrb[0].mxu0
    %v11312 = vpop.f32.mrb[0].mxu0
    %11313 = vdwg.mxu0
    %11314 = vmatprep.subr.bf16.mxu0 0
    %11315 = vmatpush1.bf16.msra.mxu0 %v7850
    %11316 = vmatprep.subr.bf16.mxu0 0
    %11317 = vmatpush1.bf16.msra.mxu0 %v7851
    %11318 = vmatprep.subr.bf16.mxu0 0
    %11319 = vmatpush1.bf16.msra.mxu0 %v7852
    %11320 = vmatprep.subr.bf16.mxu0 0
    %11321 = vmatpush1.bf16.msra.mxu0 %v7853
    %11322 = vmatprep.subr.bf16.mxu0 0
    %11323 = vmatpush1.bf16.msra.mxu0 %v7854
    %11324 = vmatprep.subr.bf16.mxu0 0
    %11325 = vmatpush1.bf16.msra.mxu0 %v7855
    %11326 = vmatprep.subr.bf16.mxu0 0
    %11327 = vmatpush1.bf16.msra.mxu0 %v7856
    %11328 = vmatprep.subr.bf16.mxu0 0
    %11329 = vmatpush1.bf16.msra.mxu0 %v7857
    %11330 = vmatprep.subr.bf16.mxu0 0
    %11331 = vmatpush1.bf16.msra.mxu0 %v7858
    %11332 = vmatprep.subr.bf16.mxu0 0
    %11333 = vmatpush1.bf16.msra.mxu0 %v7859
    %11334 = vmatprep.subr.bf16.mxu0 0
    %11335 = vmatpush1.bf16.msra.mxu0 %v7860
    %11336 = vmatprep.subr.bf16.mxu0 0
    %11337 = vmatpush1.bf16.msra.mxu0 %v7861
    %11338 = vmatprep.subr.bf16.mxu0 0
    %11339 = vmatpush1.bf16.msra.mxu0 %v7862
    %11340 = vmatprep.subr.bf16.mxu0 0
    %11341 = vmatpush1.bf16.msra.mxu0 %v7863
    %11342 = vmatprep.subr.bf16.mxu0 0
    %11343 = vmatpush1.bf16.msra.mxu0 %v7864
    %11344 = vmatprep.subr.bf16.mxu0 0
    %11345 = vmatpush1.bf16.msra.mxu0 %v7865
    %11346 = vmatprep.mubr.bf16.mxu0 %v2647
    %11347 = vmatmul.mubr.bf16.gmra.mrb[0].mxu0 %v2645
    %v11348 = vpop.f32.mrb[0].mxu0
    %v11349 = vadd.f32 %v11309, %v11348
    %v11350 = vpop.f32.mrb[0].mxu0
    %v11351 = vpop.f32.mrb[0].mxu0
    %v11352 = vpop.f32.mrb[0].mxu0
    %11353 = vdwg.mxu0
    %11354 = vmatprep.subr.bf16.mxu0 0
    %11355 = vmatpush1.bf16.msra.mxu0 %v7866
    %11356 = vmatprep.subr.bf16.mxu0 0
    %11357 = vmatpush1.bf16.msra.mxu0 %v7867
    %11358 = vmatprep.subr.bf16.mxu0 0
    %11359 = vmatpush1.bf16.msra.mxu0 %v7868
    %11360 = vmatprep.subr.bf16.mxu0 0
    %11361 = vmatpush1.bf16.msra.mxu0 %v7869
    %11362 = vmatprep.subr.bf16.mxu0 0
    %11363 = vmatpush1.bf16.msra.mxu0 %v7870
    %11364 = vmatprep.subr.bf16.mxu0 0
    %11365 = vmatpush1.bf16.msra.mxu0 %v7871
    %11366 = vmatprep.subr.bf16.mxu0 0
    %11367 = vmatpush1.bf16.msra.mxu0 %v7872
    %11368 = vmatprep.subr.bf16.mxu0 0
    %11369 = vmatpush1.bf16.msra.mxu0 %v7873
    %11370 = vmatprep.subr.bf16.mxu0 0
    %11371 = vmatpush1.bf16.msra.mxu0 %v7874
    %11372 = vmatprep.subr.bf16.mxu0 0
    %11373 = vmatpush1.bf16.msra.mxu0 %v7875
    %11374 = vmatprep.subr.bf16.mxu0 0
    %11375 = vmatpush1.bf16.msra.mxu0 %v7876
    %11376 = vmatprep.subr.bf16.mxu0 0
    %11377 = vmatpush1.bf16.msra.mxu0 %v7877
    %11378 = vmatprep.subr.bf16.mxu0 0
    %11379 = vmatpush1.bf16.msra.mxu0 %v7878
    %11380 = vmatprep.subr.bf16.mxu0 0
    %11381 = vmatpush1.bf16.msra.mxu0 %v7879
    %11382 = vmatprep.subr.bf16.mxu0 0
    %11383 = vmatpush1.bf16.msra.mxu0 %v7880
    %11384 = vmatprep.subr.bf16.mxu0 0
    %11385 = vmatpush1.bf16.msra.mxu0 %v7881
    %11386 = vmatprep.mubr.bf16.mxu0 %v2663
    %11387 = vmatmul.mubr.bf16.gmra.mrb[0].mxu0 %v2655
    %v11388 = vpop.f32.mrb[0].mxu0
    %v11389 = vadd.f32 %v11349, %v11388
    %v11390 = vpop.f32.mrb[0].mxu0
    %v11391 = vpop.f32.mrb[0].mxu0
    %v11392 = vpop.f32.mrb[0].mxu0
    %11393 = vdwg.mxu0
    %11394 = vmatprep.subr.bf16.mxu0 0
    %11395 = vmatpush1.bf16.msra.mxu0 %v7882
    %11396 = vmatprep.subr.bf16.mxu0 0
    %11397 = vmatpush1.bf16.msra.mxu0 %v7883
    %11398 = vmatprep.subr.bf16.mxu0 0
    %11399 = vmatpush1.bf16.msra.mxu0 %v7884
    %11400 = vmatprep.subr.bf16.mxu0 0
    %11401 = vmatpush1.bf16.msra.mxu0 %v7885
    %11402 = vmatprep.subr.bf16.mxu0 0
    %11403 = vmatpush1.bf16.msra.mxu0 %v7886
    %11404 = vmatprep.subr.bf16.mxu0 0
    %11405 = vmatpush1.bf16.msra.mxu0 %v7887
    %11406 = vmatprep.subr.bf16.mxu0 0
    %11407 = vmatpush1.bf16.msra.mxu0 %v7888
    %11408 = vmatprep.subr.bf16.mxu0 0
    %11409 = vmatpush1.bf16.msra.mxu0 %v7889
    %11410 = vmatprep.subr.bf16.mxu0 0
    %11411 = vmatpush1.bf16.msra.mxu0 %v7890
    %11412 = vmatprep.subr.bf16.mxu0 0
    %11413 = vmatpush1.bf16.msra.mxu0 %v7891
    %11414 = vmatprep.subr.bf16.mxu0 0
    %11415 = vmatpush1.bf16.msra.mxu0 %v7892
    %11416 = vmatprep.subr.bf16.mxu0 0
    %11417 = vmatpush1.bf16.msra.mxu0 %v7893
    %11418 = vmatprep.subr.bf16.mxu0 0
    %11419 = vmatpush1.bf16.msra.mxu0 %v7894
    %11420 = vmatprep.subr.bf16.mxu0 0
    %11421 = vmatpush1.bf16.msra.mxu0 %v7895
    %11422 = vmatprep.subr.bf16.mxu0 0
    %11423 = vmatpush1.bf16.msra.mxu0 %v7896
    %11424 = vmatprep.subr.bf16.mxu0 0
    %11425 = vmatpush1.bf16.msra.mxu0 %v7897
    %11426 = vmatprep.mubr.bf16.mxu0 %v2664
    %11427 = vmatmul.mubr.bf16.gmra.mrb[0].mxu0 %v2662
    %v11428 = vpop.f32.mrb[0].mxu0
    %v11429 = vadd.f32 %v11389, %v11428
    %v11430 = vpop.f32.mrb[0].mxu0
    %v11431 = vpop.f32.mrb[0].mxu0
    %v11432 = vpop.f32.mrb[0].mxu0
    %11433 = vdwg.mxu0
    %11434 = vmatprep.subr.bf16.mxu0 0
    %11435 = vmatpush1.bf16.msra.mxu0 %v7898
    %11436 = vmatprep.subr.bf16.mxu0 0
    %11437 = vmatpush1.bf16.msra.mxu0 %v7899
    %11438 = vmatprep.subr.bf16.mxu0 0
    %11439 = vmatpush1.bf16.msra.mxu0 %v7900
    %11440 = vmatprep.subr.bf16.mxu0 0
    %11441 = vmatpush1.bf16.msra.mxu0 %v7901
    %11442 = vmatprep.subr.bf16.mxu0 0
    %11443 = vmatpush1.bf16.msra.mxu0 %v7902
    %11444 = vmatprep.subr.bf16.mxu0 0
    %11445 = vmatpush1.bf16.msra.mxu0 %v7903
    %11446 = vmatprep.subr.bf16.mxu0 0
    %11447 = vmatpush1.bf16.msra.mxu0 %v7904
    %11448 = vmatprep.subr.bf16.mxu0 0
    %11449 = vmatpush1.bf16.msra.mxu0 %v7905
    %11450 = vmatprep.subr.bf16.mxu0 0
    %11451 = vmatpush1.bf16.msra.mxu0 %v7906
    %11452 = vmatprep.subr.bf16.mxu0 0
    %11453 = vmatpush1.bf16.msra.mxu0 %v7907
    %11454 = vmatprep.subr.bf16.mxu0 0
    %11455 = vmatpush1.bf16.msra.mxu0 %v7908
    %11456 = vmatprep.subr.bf16.mxu0 0
    %11457 = vmatpush1.bf16.msra.mxu0 %v7909
    %11458 = vmatprep.subr.bf16.mxu0 0
    %11459 = vmatpush1.bf16.msra.mxu0 %v7910
    %11460 = vmatprep.subr.bf16.mxu0 0
    %11461 = vmatpush1.bf16.msra.mxu0 %v7911
    %11462 = vmatprep.subr.bf16.mxu0 0
    %11463 = vmatpush1.bf16.msra.mxu0 %v7912
    %11464 = vmatprep.subr.bf16.mxu0 0
    %11465 = vmatpush1.bf16.msra.mxu0 %v7913
    %11466 = vmatprep.mubr.bf16.mxu0 %v2680
    %11467 = vmatmul.mubr.bf16.gmra.mrb[0].mxu0 %v2672
    %v11468 = vpop.f32.mrb[0].mxu0
    %v11469 = vadd.f32 %v11429, %v11468
    %v11470 = vpop.f32.mrb[0].mxu0
    %v11471 = vpop.f32.mrb[0].mxu0
    %v11472 = vpop.f32.mrb[0].mxu0
    %11473 = vdwg.mxu0
    %11474 = vmatprep.subr.bf16.mxu0 0
    %11475 = vmatpush1.bf16.msra.mxu0 %v7914
    %11476 = vmatprep.subr.bf16.mxu0 0
    %11477 = vmatpush1.bf16.msra.mxu0 %v7915
    %11478 = vmatprep.subr.bf16.mxu0 0
    %11479 = vmatpush1.bf16.msra.mxu0 %v7916
    %11480 = vmatprep.subr.bf16.mxu0 0
    %11481 = vmatpush1.bf16.msra.mxu0 %v7917
    %11482 = vmatprep.subr.bf16.mxu0 0
    %11483 = vmatpush1.bf16.msra.mxu0 %v7918
    %11484 = vmatprep.subr.bf16.mxu0 0
    %11485 = vmatpush1.bf16.msra.mxu0 %v7919
    %11486 = vmatprep.subr.bf16.mxu0 0
    %11487 = vmatpush1.bf16.msra.mxu0 %v7920
    %11488 = vmatprep.subr.bf16.mxu0 0
    %11489 = vmatpush1.bf16.msra.mxu0 %v7921
    %11490 = vmatprep.subr.bf16.mxu0 0
    %11491 = vmatpush1.bf16.msra.mxu0 %v7922
    %11492 = vmatprep.subr.bf16.mxu0 0
    %11493 = vmatpush1.bf16.msra.mxu0 %v7923
    %11494 = vmatprep.subr.bf16.mxu0 0
    %11495 = vmatpush1.bf16.msra.mxu0 %v7924
    %11496 = vmatprep.subr.bf16.mxu0 0
    %11497 = vmatpush1.bf16.msra.mxu0 %v7925
    %11498 = vmatprep.subr.bf16.mxu0 0
    %11499 = vmatpush1.bf16.msra.mxu0 %v7926
    %11500 = vmatprep.subr.bf16.mxu0 0
    %11501 = vmatpush1.bf16.msra.mxu0 %v7927
    %11502 = vmatprep.subr.bf16.mxu0 0
    %11503 = vmatpush1.bf16.msra.mxu0 %v7928
    %11504 = vmatprep.subr.bf16.mxu0 0
    %11505 = vmatpush1.bf16.msra.mxu0 %v7929
    %11506 = vmatprep.mubr.bf16.mxu0 %v2681
    %11507 = vmatmul.mubr.bf16.gmra.mrb[0].mxu0 %v2679
    %v11508 = vpop.f32.mrb[0].mxu0
    %v11509 = vadd.f32 %v11469, %v11508
    %v11510 = vpop.f32.mrb[0].mxu0
    %v11511 = vpop.f32.mrb[0].mxu0
    %v11512 = vpop.f32.mrb[0].mxu0
    %11513 = vdwg.mxu0
    %v11514 = vadd.f32 %v25, %v11509
    %vm11515 = vcmask 519168
    %11516 = vst.msk [vmem:[#allocation2] sm:$0xf] %vm11515, %v11514
    // Predicated region
    $region22: #{_matmul_epi_impl.1} parent=1 // pred_check
      %p11517 = pneg %p19
    $region23: #{_matmul_epi_impl.1} parent=1 // pred_check_branch
      %11519 = sbr.rel (%p11517) target = $region25
    $region24: #{_matmul_epi_impl.1} parent=1 // pred_region
      %v11520 = vld [vmem:[#allocation2] sm:$0xf]
      %v11521 = vld [vmem:[%s2] sm:$0x1]
      %v11523 = vlaneseq
      %v11524 = vshrl.u32 %v11523, 7
      %v11525 = vsub.s32 0, %v11524
      %v11526 = vrot.slane %v11521, %v11525
      %v11528 = vmul.f32 %v11520, %v11526
      %v11529 = vld [vmem:[%s3] sm:$0x1]
      %v11531 = vlaneseq
      %v11532 = vshrl.u32 %v11531, 7
      %v11533 = vsub.s32 0, %v11532
      %v11534 = vrot.slane %v11529, %v11533
      %v11536 = vadd.f32 %v11528, %v11534
      %11537 = vst.msk [vmem:[#allocation3] sm:$0xf] %vm11515, %v11536
    $region25: #{_matmul_epi_impl.1} parent=1 // pred_fallthru
      _
    // Predicated region
    $region26: #{_matmul_epi_impl.1} parent=1 // pred_check
      _
    $region27: #{_matmul_epi_impl.1} parent=1 // pred_check_branch
      %11539 = sbr.rel (0) target = $region29
    $region28: #{_matmul_epi_impl.1} parent=1 // pred_region
      %s11541 = ssub.s32 64, 64
      %11542 = vsyncadd [#allocation4], %s11541
      %s11544 = sshll.u32 [#allocation3], 4
      %s11545 = int_to_ptr.vmem [resolvable:$true] %s11544
      %11547 = dma.vmem_to_hbm [thread:$0]  %s11545, 64, %s4, [#allocation4]
    $region29: #{_matmul_epi_impl.1} parent=1 // pred_fallthru
      _
    // Predicated region
    $region30: #{_matmul_epi_impl.1} parent=1 // pred_check
      _
    $region31: #{_matmul_epi_impl.1} parent=1 // pred_check_branch
      %11549 = sbr.rel (0) target = $region33
    $region32: #{_matmul_epi_impl.1} parent=1 // pred_region
      %11550 = dma.done [#allocation4], 64
    $region33: #{_matmul_epi_impl.1} parent=1 // pred_fallthru
      _
    %11551 = vsyncpa [#allocation4], 1

</llo_original>
